<compile_context>
chip_gen: v7x
topology: tpu7x:2x2x1
jax: 0.10.0
libtpu: 0.0.40
codegen_flags: <defaults>
</compile_context>

<pallas_src>
import numpy as np
import jax
import jax.numpy as jnp
from jax.experimental import pallas as pl
from jax.experimental.pallas import tpu as pltpu

# ---------------- script-level "globals" (mirror the PyTorch script) --------
batch = 1
src_len = 5
n_heads = 2
d_k = d_q = d_v = 8
d_model = 16
d_ff = 32
kernel_size = 1
src_vocab_size = 8
tgt_vocab_size = 9
Layer_Num = 2
LN_EPS = 1e-5

# ---------------- packed-slab layout (all static Python ints) ---------------
_N_MHA = 3 * Layer_Num          # 2 encoder + 2 decoder-self + 2 decoder-cross
_N_FFN = 2 * Layer_Num          # 2 encoder + 2 decoder

# slab A: row dim d_model; columns = [MHA blocks | FFN w1 blocks | proj W]
_A_MHA_STRIDE = 4 * d_model                       # W_q | W_k | W_v | W_last
_A_FFN_BASE = _N_MHA * _A_MHA_STRIDE
_A_PROJ_BASE = _A_FFN_BASE + _N_FFN * d_ff
_A_COLS = _A_PROJ_BASE + tgt_vocab_size

# slab B: row dim d_ff; columns = FFN w2 blocks
_B_COLS = _N_FFN * d_model

# slab C: one bias/LN vector per row, padded to width 32
_C_WIDTH = 32
_C_MHA_ROWS = 6                                   # b_q, b_k, b_v, b_last, g, b
_C_FFN_BASE = _N_MHA * _C_MHA_ROWS
_C_FFN_ROWS = 4                                   # b1, b2, g, b
_C_PROJ_ROW = _C_FFN_BASE + _N_FFN * _C_FFN_ROWS
_C_ROWS = _C_PROJ_ROW + 1

_N_ATTN_MAPS = _N_MHA * n_heads                   # 12 (S, S) maps total

_VMEM = pl.BlockSpec(memory_space=pltpu.MemorySpace.VMEM)


# ======================= fused whole-model kernel ============================
def _layernorm(y, gamma, beta):
    mean = jnp.mean(y, axis=-1, keepdims=True)
    var = jnp.mean(jnp.square(y - mean), axis=-1, keepdims=True)
    return (y - mean) * jax.lax.rsqrt(var + LN_EPS) * gamma + beta


def _transformer_kernel(enc_emb_ref, dec_emb_ref,
                        enc_mask_ref, dec_pad_ref, dec_sub_ref,
                        A_ref, B_ref, C_ref,
                        logits_ref, attn_ref):
    f32 = jnp.float32

    # Hoisted once per distinct mask (shared across all layers and heads).
    enc_mask = enc_mask_ref[...] > 0.5
    dec_pad_mask = dec_pad_ref[...] > 0.5
    dec_sub_mask = dec_sub_ref[...] > 0.5

    def mha(q_in, k_in, v_in, mask_bool, mha_idx, attn_base):
        a0 = mha_idx * _A_MHA_STRIDE
        c0 = mha_idx * _C_MHA_ROWS
        residual = q_in
        ctx = C_ref[c0 + 3:c0 + 4, 0:d_model]          # b_last  (1, d_model)
        for h in range(n_heads):                       # static unroll
            # Per-head weights via static ref slices (zero-cost views).
            Wq = A_ref[:, a0 + h * d_q: a0 + (h + 1) * d_q]
            Wk = A_ref[:, a0 + d_model + h * d_k: a0 + d_model + (h + 1) * d_k]
            Wv = A_ref[:, a0 + 2 * d_model + h * d_v:
                          a0 + 2 * d_model + (h + 1) * d_v]
            Wl = A_ref[h * d_v:(h + 1) * d_v, a0 + 3 * d_model: a0 + 4 * d_model]
            bq = C_ref[c0 + 0:c0 + 1, h * d_q:(h + 1) * d_q]
            bk = C_ref[c0 + 1:c0 + 2, h * d_k:(h + 1) * d_k]
            bv = C_ref[c0 + 2:c0 + 3, h * d_v:(h + 1) * d_v]

            q_h = jnp.dot(q_in, Wq, preferred_element_type=f32) + bq
            k_h = jnp.dot(k_in, Wk, preferred_element_type=f32) + bk
            v_h = jnp.dot(v_in, Wv, preferred_element_type=f32) + bv

            # NOTE: reference divides by sqrt(default d_k=64) == 8.0
            score = jnp.dot(q_h, k_h.T, preferred_element_type=f32) * 0.125
            score = jnp.where(mask_bool, -1.0e9, score)
            s_max = jnp.max(score, axis=-1, keepdims=True)
            e = jnp.exp(score - s_max)
            attn_ref[attn_base + h] = e / jnp.sum(e, axis=-1, keepdims=True)

            # NOTE: reference multiplies the MASKED scores (not softmax) by V
            head_out = jnp.dot(score, v_h, preferred_element_type=f32)
            # concat-over-heads @ W_last == sum_h head_out_h @ W_last[h block]
            ctx = ctx + jnp.dot(head_out, Wl, preferred_element_type=f32)

        gamma = C_ref[c0 + 4:c0 + 5, 0:d_model]
        beta = C_ref[c0 + 5:c0 + 6, 0:d_model]
        return _layernorm(ctx + residual, gamma, beta)

    def ffn(x, ffn_idx):
        a0 = _A_FFN_BASE + ffn_idx * d_ff
        b0 = ffn_idx * d_model
        c0 = _C_FFN_BASE + ffn_idx * _C_FFN_ROWS
        w1 = A_ref[:, a0:a0 + d_ff]
        b1 = C_ref[c0 + 0:c0 + 1, 0:d_ff]
        w2 = B_ref[:, b0:b0 + d_model]
        b2 = C_ref[c0 + 1:c0 + 2, 0:d_model]
        gamma = C_ref[c0 + 2:c0 + 3, 0:d_model]
        beta = C_ref[c0 + 3:c0 + 4, 0:d_model]
        h = jnp.dot(x, w1, preferred_element_type=f32) + b1
        h = jnp.dot(h, w2, preferred_element_type=f32) + b2
        h = jnp.maximum(h, 0.0)              # ReLU after conv2 (reference quirk)
        return _layernorm(h + x, gamma, beta)

    # ---------------- encoder (activations never leave the kernel) ----------
    h = enc_emb_ref[...]
    for l in range(Layer_Num):
        h = mha(h, h, h, enc_mask, mha_idx=l, attn_base=l * n_heads)
        h = ffn(h, ffn_idx=l)
    enc_out = h

    # ---------------- decoder -----------------------------------------------
    d = dec_emb_ref[...]
    for l in range(Layer_Num):
        # reference quirk: self-attn gets the pad mask, cross-attn the
        # subsequent mask
        d = mha(d, d, d, dec_pad_mask,
                mha_idx=Layer_Num + 2 * l,
                attn_base=Layer_Num * n_heads + l * n_heads)
        d = mha(d, enc_out, enc_out, dec_sub_mask,
                mha_idx=Layer_Num + 2 * l + 1,
                attn_base=2 * Layer_Num * n_heads + l * n_heads)
        d = ffn(d, ffn_idx=Layer_Num + l)

    # ---------------- final vocabulary projection ----------------------------
    Wp = A_ref[:, _A_PROJ_BASE:_A_PROJ_BASE + tgt_vocab_size]
    bp = C_ref[_C_PROJ_ROW:_C_PROJ_ROW + 1, 0:tgt_vocab_size]
    logits_ref[...] = jnp.dot(d, Wp, preferred_element_type=f32) + bp


def fused_transformer_call(enc_emb, dec_emb, enc_mask, dec_pad, dec_sub,
                           slabA, slabB, slabC):
    """Single pallas_call for the whole encoder-decoder-projection stack."""
    logits, attn = pl.pallas_call(
        _transformer_kernel,
        out_shape=(jax.ShapeDtypeStruct((batch * src_len, tgt_vocab_size),
                                        jnp.float32),
                   jax.ShapeDtypeStruct((_N_ATTN_MAPS, src_len, src_len),
                                        jnp.float32)),
        in_specs=[_VMEM] * 8,
        out_specs=(_VMEM, _VMEM),
    )(enc_emb, dec_emb, enc_mask, dec_pad, dec_sub, slabA, slabB, slabC)
    return logits, attn


# ============================ parameter init =================================
def init_linear(key, fan_in, fan_out):
    kw, kb = jax.random.split(key)
    bound = 1.0 / np.sqrt(fan_in)
    w = jax.random.uniform(kw, (fan_in, fan_out), jnp.float32, -bound, bound)
    b = jax.random.uniform(kb, (fan_out,), jnp.float32, -bound, bound)
    return w, b


def init_mha(key):
    ks = jax.random.split(key, 4)
    W_k, b_k = init_linear(ks[0], d_model, d_k * n_heads)
    W_q, b_q = init_linear(ks[1], d_model, d_q * n_heads)
    W_v, b_v = init_linear(ks[2], d_model, d_v * n_heads)
    W_l, b_l = init_linear(ks[3], d_v * n_heads, d_model)
    return dict(W_k=W_k, b_k=b_k, W_q=W_q, b_q=b_q, W_v=W_v, b_v=b_v,
                W_last=W_l, b_last=b_l,
                ln_g=jnp.ones((d_model,), jnp.float32),
                ln_b=jnp.zeros((d_model,), jnp.float32))


def init_ffn(key):
    k1, k2 = jax.random.split(key)
    w1, b1 = init_linear(k1, d_model, d_ff)   # Conv1d(d_model->d_ff, k=1)
    w2, b2 = init_linear(k2, d_ff, d_model)   # Conv1d(d_ff->d_model, k=1)
    return dict(w1=w1, b1=b1, w2=w2, b2=b2,
                ln_g=jnp.ones((d_model,), jnp.float32),
                ln_b=jnp.zeros((d_model,), jnp.float32))


def get_sinusoid_encoding_table(n_position, dim):
    pos = np.arange(n_position)[:, None].astype(np.float64)
    idx = np.arange(dim)[None, :]
    angle = pos / np.power(10000.0, 2 * (idx // 2) / dim)
    table = np.zeros((n_position, dim), dtype=np.float32)
    table[:, 0::2] = np.sin(angle[:, 0::2])
    table[:, 1::2] = np.cos(angle[:, 1::2])
    return jnp.asarray(table)


def init_transformer(key):
    keys = jax.random.split(key, 16)
    params = {}
    params["enc_src_emb"] = jax.random.normal(keys[0], (src_vocab_size, d_model), jnp.float32)
    params["dec_src_emb"] = jax.random.normal(keys[1], (src_vocab_size + 1, d_model), jnp.float32)
    params["pos_table"] = get_sinusoid_encoding_table(src_len + 1, d_model)
    enc_layers, dec_layers = [], []
    for i in range(Layer_Num):
        ke = jax.random.fold_in(keys[2], i)
        ka, kf = jax.random.split(ke)
        enc_layers.append(dict(attn=init_mha(ka), ffn=init_ffn(kf)))
        kd = jax.random.fold_in(keys[3], i)
        k1, k2, k3 = jax.random.split(kd, 3)
        dec_layers.append(dict(self_attn=init_mha(k1), cross_attn=init_mha(k2),
                               ffn=init_ffn(k3)))
    params["enc_layers"] = enc_layers
    params["dec_layers"] = dec_layers
    wproj, bproj = init_linear(keys[4], d_model, tgt_vocab_size)
    params["W_proj"], params["b_proj"] = wproj, bproj
    return params


def pack_transformer_params(params):
    """Pack every weight into three slabs (done ONCE, outside the forward)."""
    def pad_row(v):
        v = jnp.asarray(v, jnp.float32).reshape(-1)
        return jnp.pad(v, (0, _C_WIDTH - v.shape[0]))

    mha_blocks = [params["enc_layers"][l]["attn"] for l in range(Layer_Num)]
    for l in range(Layer_Num):
        mha_blocks.append(params["dec_layers"][l]["self_attn"])
        mha_blocks.append(params["dec_layers"][l]["cross_attn"])
    ffn_blocks = ([params["enc_layers"][l]["ffn"] for l in range(Layer_Num)]
                  + [params["dec_layers"][l]["ffn"] for l in range(Layer_Num)])

    a_cols, b_cols, c_rows = [], [], []
    for p in mha_blocks:
        a_cols += [p["W_q"], p["W_k"], p["W_v"], p["W_last"]]
        c_rows += [pad_row(p["b_q"]), pad_row(p["b_k"]), pad_row(p["b_v"]),
                   pad_row(p["b_last"]), pad_row(p["ln_g"]), pad_row(p["ln_b"])]
    for p in ffn_blocks:
        a_cols.append(p["w1"])
        b_cols.append(p["w2"])
        c_rows += [pad_row(p["b1"]), pad_row(p["b2"]),
                   pad_row(p["ln_g"]), pad_row(p["ln_b"])]
    a_cols.append(params["W_proj"])
    c_rows.append(pad_row(params["b_proj"]))

    slabA = jnp.concatenate(a_cols, axis=1)
    slabB = jnp.concatenate(b_cols, axis=1)
    slabC = jnp.stack(c_rows, axis=0)
    assert slabA.shape == (d_model, _A_COLS)
    assert slabB.shape == (d_ff, _B_COLS)
    assert slabC.shape == (_C_ROWS, _C_WIDTH)
    return dict(slabA=slabA, slabB=slabB, slabC=slabC,
                enc_src_emb=params["enc_src_emb"],
                dec_src_emb=params["dec_src_emb"],
                pos_table=params["pos_table"])


# ============================ model forward ==================================
_ENC_POS = np.array([1, 2, 3, 4, 0], np.int32)
_DEC_POS = np.array([5, 1, 2, 3, 4], np.int32)


def get_attn_pad_mask(seq_q, seq_k):
    B, Lq = seq_q.shape
    _, Lk = seq_k.shape
    pad = (seq_k == 0).astype(jnp.float32)[:, None, :]       # (B, 1, Lk)
    return jnp.broadcast_to(pad, (B, Lq, Lk))                 # 1.0 where masked


def get_attn_subsequent_mask(seq):
    B, L = seq.shape
    tri = jnp.triu(jnp.ones((L, L), jnp.float32), k=1)
    return jnp.broadcast_to(tri[None], (B, L, L))


def transformer_forward(packed, enc_tokens, dec_tokens):
    # Embedding gathers / positional add / mask build stay in XLA — they sit
    # entirely BEFORE the single fused kernel call, so no inter-kernel glue.
    # TODO(synk): could be pulled in-kernel via scalar-prefetched token ids.
    enc_emb = packed["enc_src_emb"][enc_tokens[0]] + packed["pos_table"][jnp.asarray(_ENC_POS)]
    dec_emb = packed["dec_src_emb"][dec_tokens[0]] + packed["pos_table"][jnp.asarray(_DEC_POS)]
    enc_mask = get_attn_pad_mask(enc_tokens, enc_tokens)[0]
    dec_pad = get_attn_pad_mask(dec_tokens, dec_tokens)[0]
    dec_sub = get_attn_subsequent_mask(dec_tokens)[0]

    logits, attn = fused_transformer_call(
        enc_emb, dec_emb, enc_mask, dec_pad, dec_sub,
        packed["slabA"], packed["slabB"], packed["slabC"])

    H = n_heads
    enc_attns = [attn[l * H:(l + 1) * H][None] for l in range(Layer_Num)]
    bs = Layer_Num * H
    dec_self_attns = [attn[bs + l * H: bs + (l + 1) * H][None]
                      for l in range(Layer_Num)]
    be = 2 * Layer_Num * H
    dec_enc_attns = [attn[be + l * H: be + (l + 1) * H][None]
                     for l in range(Layer_Num)]
    return logits, enc_attns, dec_self_attns, dec_enc_attns


# ============================ main ===========================================
if __name__ == "__main__":
    assert batch == 1  # reference mask.repeat semantics only valid for batch=1
    key = jax.random.PRNGKey(0)
    params = init_transformer(key)
    packed = pack_transformer_params(params)

    # Deterministic token inputs (batch=1, seq=5) consistent with the
    # hard-coded positional indices in the reference module.
    encoder_input = jnp.array([[1, 2, 3, 4, 0]], jnp.int32)   # 0 = pad token
    decoder_input = jnp.array([[5, 1, 2, 3, 4]], jnp.int32)

    fwd = jax.jit(transformer_forward)
    logits, enc_attns, dec_self_attns, dec_enc_attns = fwd(
        packed, encoder_input, decoder_input)
    jax.block_until_ready(logits)
    for a in enc_attns + dec_self_attns + dec_enc_attns:
        jax.block_until_ready(a)

    assert logits.shape == (batch * src_len, tgt_vocab_size)
    assert enc_attns[0].shape == (batch, n_heads, src_len, src_len)
    assert dec_self_attns[0].shape == (batch, n_heads, src_len, src_len)
    assert dec_enc_attns[0].shape == (batch, n_heads, src_len, src_len)
    assert bool(jnp.all(jnp.isfinite(logits)))
    print("KERNEL_OK")
</pallas_src>

<mosaic_0001>
module attributes {stable_mosaic.version = 11 : i64} {
  func.func @_transformer_kernel(%arg0: memref<5x16xf32, #tpu.memory_space<vmem>>, %arg1: memref<5x16xf32, #tpu.memory_space<vmem>>, %arg2: memref<5x5xf32, #tpu.memory_space<vmem>>, %arg3: memref<5x5xf32, #tpu.memory_space<vmem>>, %arg4: memref<5x5xf32, #tpu.memory_space<vmem>>, %arg5: memref<16x521xf32, #tpu.memory_space<vmem>>, %arg6: memref<32x64xf32, #tpu.memory_space<vmem>>, %arg7: memref<53x32xf32, #tpu.memory_space<vmem>>, %arg8: memref<5x9xf32, #tpu.memory_space<vmem>>, %arg9: memref<12x5x5xf32, #tpu.memory_space<vmem>>) attributes {dimension_semantics = [], scalar_prefetch = 0 : i64, scratch_operands = 0 : i64, tpu.core_type = #tpu.core_type<tc>} {
    %c0 = arith.constant 0 : index
    %c0_0 = arith.constant 0 : index
    %0 = vector.load %arg2[%c0, %c0_0] : memref<5x5xf32, #tpu.memory_space<vmem>>, vector<5x5xf32>
    %cst = arith.constant 5.000000e-01 : f32
    %1 = vector.broadcast %cst : f32 to vector<5x5xf32>
    %2 = arith.cmpf ogt, %0, %1 : vector<5x5xf32>
    %c0_1 = arith.constant 0 : index
    %c0_2 = arith.constant 0 : index
    %3 = vector.load %arg3[%c0_1, %c0_2] : memref<5x5xf32, #tpu.memory_space<vmem>>, vector<5x5xf32>
    %cst_3 = arith.constant 5.000000e-01 : f32
    %4 = vector.broadcast %cst_3 : f32 to vector<5x5xf32>
    %5 = arith.cmpf ogt, %3, %4 : vector<5x5xf32>
    %c0_4 = arith.constant 0 : index
    %c0_5 = arith.constant 0 : index
    %6 = vector.load %arg4[%c0_4, %c0_5] : memref<5x5xf32, #tpu.memory_space<vmem>>, vector<5x5xf32>
    %cst_6 = arith.constant 5.000000e-01 : f32
    %7 = vector.broadcast %cst_6 : f32 to vector<5x5xf32>
    %8 = arith.cmpf ogt, %6, %7 : vector<5x5xf32>
    %c0_7 = arith.constant 0 : index
    %c0_8 = arith.constant 0 : index
    %9 = vector.load %arg0[%c0_7, %c0_8] : memref<5x16xf32, #tpu.memory_space<vmem>>, vector<5x16xf32>
    %c3 = arith.constant 3 : index
    %c0_9 = arith.constant 0 : index
    %10 = vector.load %arg7[%c3, %c0_9] : memref<53x32xf32, #tpu.memory_space<vmem>>, vector<1x16xf32>
    %c0_10 = arith.constant 0 : index
    %c0_11 = arith.constant 0 : index
    %11 = vector.load %arg5[%c0_10, %c0_11] : memref<16x521xf32, #tpu.memory_space<vmem>>, vector<16x8xf32>
    %c0_12 = arith.constant 0 : index
    %c16 = arith.constant 16 : index
    %12 = vector.load %arg5[%c0_12, %c16] : memref<16x521xf32, #tpu.memory_space<vmem>>, vector<16x8xf32>
    %c0_13 = arith.constant 0 : index
    %c32 = arith.constant 32 : index
    %13 = vector.load %arg5[%c0_13, %c32] : memref<16x521xf32, #tpu.memory_space<vmem>>, vector<16x8xf32>
    %c0_14 = arith.constant 0 : index
    %c48 = arith.constant 48 : index
    %14 = vector.load %arg5[%c0_14, %c48] : memref<16x521xf32, #tpu.memory_space<vmem>>, vector<8x16xf32>
    %c0_15 = arith.constant 0 : index
    %c0_16 = arith.constant 0 : index
    %15 = vector.load %arg7[%c0_15, %c0_16] : memref<53x32xf32, #tpu.memory_space<vmem>>, vector<1x8xf32>
    %c1 = arith.constant 1 : index
    %c0_17 = arith.constant 0 : index
    %16 = vector.load %arg7[%c1, %c0_17] : memref<53x32xf32, #tpu.memory_space<vmem>>, vector<1x8xf32>
    %c2 = arith.constant 2 : index
    %c0_18 = arith.constant 0 : index
    %17 = vector.load %arg7[%c2, %c0_18] : memref<53x32xf32, #tpu.memory_space<vmem>>, vector<1x8xf32>
    %cst_19 = arith.constant dense<0.000000e+00> : vector<5x8xf32>
    %18 = tpu.matmul %9, %11, %cst_19 {dimension_numbers = #tpu.dot_dimension_numbers<[1], [0], [0], [1], [0, 0, 1, 1], [], []>} : vector<5x16xf32>, vector<16x8xf32>, vector<5x8xf32> -> vector<5x8xf32>
    %19 = vector.broadcast %15 : vector<1x8xf32> to vector<5x8xf32>
    %20 = arith.addf %18, %19 : vector<5x8xf32>
    %cst_20 = arith.constant dense<0.000000e+00> : vector<5x8xf32>
    %21 = tpu.matmul %9, %12, %cst_20 {dimension_numbers = #tpu.dot_dimension_numbers<[1], [0], [0], [1], [0, 0, 1, 1], [], []>} : vector<5x16xf32>, vector<16x8xf32>, vector<5x8xf32> -> vector<5x8xf32>
    %22 = vector.broadcast %16 : vector<1x8xf32> to vector<5x8xf32>
    %23 = arith.addf %21, %22 : vector<5x8xf32>
    %cst_21 = arith.constant dense<0.000000e+00> : vector<5x8xf32>
    %24 = tpu.matmul %9, %13, %cst_21 {dimension_numbers = #tpu.dot_dimension_numbers<[1], [0], [0], [1], [0, 0, 1, 1], [], []>} : vector<5x16xf32>, vector<16x8xf32>, vector<5x8xf32> -> vector<5x8xf32>
    %25 = vector.broadcast %17 : vector<1x8xf32> to vector<5x8xf32>
    %26 = arith.addf %24, %25 : vector<5x8xf32>
    %27 = tpu.transpose %23, [1, 0] : vector<5x8xf32> -> vector<8x5xf32>
    %cst_22 = arith.constant dense<0.000000e+00> : vector<5x5xf32>
    %28 = tpu.matmul %20, %27, %cst_22 {dimension_numbers = #tpu.dot_dimension_numbers<[1], [0], [0], [1], [0, 0, 1, 1], [], []>} : vector<5x8xf32>, vector<8x5xf32>, vector<5x5xf32> -> vector<5x5xf32>
    %cst_23 = arith.constant 1.250000e-01 : f32
    %29 = vector.broadcast %cst_23 : f32 to vector<5x5xf32>
    %30 = arith.mulf %28, %29 : vector<5x5xf32>
    %cst_24 = arith.constant -1.000000e+09 : f32
    %31 = vector.broadcast %cst_24 : f32 to vector<5x5xf32>
    %32 = arith.select %2, %31, %30 : vector<5x5xi1>, vector<5x5xf32>
    %cst_25 = arith.constant dense<0xFF800000> : vector<5xf32>
    %33 = vector.multi_reduction <maximumf>, %32, %cst_25 [1] : vector<5x5xf32> to vector<5xf32>
    %34 = vector.shape_cast %33 : vector<5xf32> to vector<5x1xf32>
    %35 = vector.broadcast %34 : vector<5x1xf32> to vector<5x5xf32>
    %36 = arith.subf %32, %35 : vector<5x5xf32>
    %37 = math.exp %36 : vector<5x5xf32>
    %cst_26 = arith.constant dense<0.000000e+00> : vector<5xf32>
    %38 = vector.multi_reduction <add>, %37, %cst_26 [1] : vector<5x5xf32> to vector<5xf32>
    %39 = vector.shape_cast %38 : vector<5xf32> to vector<5x1xf32>
    %40 = vector.broadcast %39 : vector<5x1xf32> to vector<5x5xf32>
    %41 = arith.divf %37, %40 : vector<5x5xf32>
    %c0_27 = arith.constant 0 : index
    %c0_28 = arith.constant 0 : index
    %c0_29 = arith.constant 0 : index
    %42 = vector.load %arg9[%c0_27, %c0_28, %c0_29] : memref<12x5x5xf32, #tpu.memory_space<vmem>>, vector<1x5x5xf32>
    %43 = vector.shape_cast %42 : vector<1x5x5xf32> to vector<5x5xf32>
    %44 = vector.shape_cast %41 : vector<5x5xf32> to vector<1x5x5xf32>
    tpu.vector_store %arg9[%c0_27, %c0_28, %c0_29], %44 {strides = array<i32>} : memref<12x5x5xf32, #tpu.memory_space<vmem>>, vector<1x5x5xf32>,
    %cst_30 = arith.constant dense<0.000000e+00> : vector<5x8xf32>
    %45 = tpu.matmul %32, %26, %cst_30 {dimension_numbers = #tpu.dot_dimension_numbers<[1], [0], [0], [1], [0, 0, 1, 1], [], []>} : vector<5x5xf32>, vector<5x8xf32>, vector<5x8xf32> -> vector<5x8xf32>
    %cst_31 = arith.constant dense<0.000000e+00> : vector<5x16xf32>
    %46 = tpu.matmul %45, %14, %cst_31 {dimension_numbers = #tpu.dot_dimension_numbers<[1], [0], [0], [1], [0, 0, 1, 1], [], []>} : vector<5x8xf32>, vector<8x16xf32>, vector<5x16xf32> -> vector<5x16xf32>
    %47 = vector.broadcast %10 : vector<1x16xf32> to vector<5x16xf32>
    %48 = arith.addf %47, %46 : vector<5x16xf32>
    %c0_32 = arith.constant 0 : index
    %c8 = arith.constant 8 : index
    %49 = vector.load %arg5[%c0_32, %c8] : memref<16x521xf32, #tpu.memory_space<vmem>>, vector<16x8xf32>
    %c0_33 = arith.constant 0 : index
    %c24 = arith.constant 24 : index
    %50 = vector.load %arg5[%c0_33, %c24] : memref<16x521xf32, #tpu.memory_space<vmem>>, vector<16x8xf32>
    %c0_34 = arith.constant 0 : index
    %c40 = arith.constant 40 : index
    %51 = vector.load %arg5[%c0_34, %c40] : memref<16x521xf32, #tpu.memory_space<vmem>>, vector<16x8xf32>
    %c8_35 = arith.constant 8 : index
    %c48_36 = arith.constant 48 : index
    %52 = vector.load %arg5[%c8_35, %c48_36] : memref<16x521xf32, #tpu.memory_space<vmem>>, vector<8x16xf32>
    %c0_37 = arith.constant 0 : index
    %c8_38 = arith.constant 8 : index
    %53 = vector.load %arg7[%c0_37, %c8_38] : memref<53x32xf32, #tpu.memory_space<vmem>>, vector<1x8xf32>
    %c1_39 = arith.constant 1 : index
    %c8_40 = arith.constant 8 : index
    %54 = vector.load %arg7[%c1_39, %c8_40] : memref<53x32xf32, #tpu.memory_space<vmem>>, vector<1x8xf32>
    %c2_41 = arith.constant 2 : index
    %c8_42 = arith.constant 8 : index
    %55 = vector.load %arg7[%c2_41, %c8_42] : memref<53x32xf32, #tpu.memory_space<vmem>>, vector<1x8xf32>
    %cst_43 = arith.constant dense<0.000000e+00> : vector<5x8xf32>
    %56 = tpu.matmul %9, %49, %cst_43 {dimension_numbers = #tpu.dot_dimension_numbers<[1], [0], [0], [1], [0, 0, 1, 1], [], []>} : vector<5x16xf32>, vector<16x8xf32>, vector<5x8xf32> -> vector<5x8xf32>
    %57 = vector.broadcast %53 : vector<1x8xf32> to vector<5x8xf32>
    %58 = arith.addf %56, %57 : vector<5x8xf32>
    %cst_44 = arith.constant dense<0.000000e+00> : vector<5x8xf32>
    %59 = tpu.matmul %9, %50, %cst_44 {dimension_numbers = #tpu.dot_dimension_numbers<[1], [0], [0], [1], [0, 0, 1, 1], [], []>} : vector<5x16xf32>, vector<16x8xf32>, vector<5x8xf32> -> vector<5x8xf32>
    %60 = vector.broadcast %54 : vector<1x8xf32> to vector<5x8xf32>
    %61 = arith.addf %59, %60 : vector<5x8xf32>
    %cst_45 = arith.constant dense<0.000000e+00> : vector<5x8xf32>
    %62 = tpu.matmul %9, %51, %cst_45 {dimension_numbers = #tpu.dot_dimension_numbers<[1], [0], [0], [1], [0, 0, 1, 1], [], []>} : vector<5x16xf32>, vector<16x8xf32>, vector<5x8xf32> -> vector<5x8xf32>
    %63 = vector.broadcast %55 : vector<1x8xf32> to vector<5x8xf32>
    %64 = arith.addf %62, %63 : vector<5x8xf32>
    %65 = tpu.transpose %61, [1, 0] : vector<5x8xf32> -> vector<8x5xf32>
    %cst_46 = arith.constant dense<0.000000e+00> : vector<5x5xf32>
    %66 = tpu.matmul %58, %65, %cst_46 {dimension_numbers = #tpu.dot_dimension_numbers<[1], [0], [0], [1], [0, 0, 1, 1], [], []>} : vector<5x8xf32>, vector<8x5xf32>, vector<5x5xf32> -> vector<5x5xf32>
    %cst_47 = arith.constant 1.250000e-01 : f32
    %67 = vector.broadcast %cst_47 : f32 to vector<5x5xf32>
    %68 = arith.mulf %66, %67 : vector<5x5xf32>
    %cst_48 = arith.constant -1.000000e+09 : f32
    %69 = vector.broadcast %cst_48 : f32 to vector<5x5xf32>
    %70 = arith.select %2, %69, %68 : vector<5x5xi1>, vector<5x5xf32>
    %cst_49 = arith.constant dense<0xFF800000> : vector<5xf32>
    %71 = vector.multi_reduction <maximumf>, %70, %cst_49 [1] : vector<5x5xf32> to vector<5xf32>
    %72 = vector.shape_cast %71 : vector<5xf32> to vector<5x1xf32>
    %73 = vector.broadcast %72 : vector<5x1xf32> to vector<5x5xf32>
    %74 = arith.subf %70, %73 : vector<5x5xf32>
    %75 = math.exp %74 : vector<5x5xf32>
    %cst_50 = arith.constant dense<0.000000e+00> : vector<5xf32>
    %76 = vector.multi_reduction <add>, %75, %cst_50 [1] : vector<5x5xf32> to vector<5xf32>
    %77 = vector.shape_cast %76 : vector<5xf32> to vector<5x1xf32>
    %78 = vector.broadcast %77 : vector<5x1xf32> to vector<5x5xf32>
    %79 = arith.divf %75, %78 : vector<5x5xf32>
    %c1_51 = arith.constant 1 : index
    %c0_52 = arith.constant 0 : index
    %c0_53 = arith.constant 0 : index
    %80 = vector.load %arg9[%c1_51, %c0_52, %c0_53] : memref<12x5x5xf32, #tpu.memory_space<vmem>>, vector<1x5x5xf32>
    %81 = vector.shape_cast %80 : vector<1x5x5xf32> to vector<5x5xf32>
    %82 = vector.shape_cast %79 : vector<5x5xf32> to vector<1x5x5xf32>
    tpu.vector_store %arg9[%c1_51, %c0_52, %c0_53], %82 {strides = array<i32>} : memref<12x5x5xf32, #tpu.memory_space<vmem>>, vector<1x5x5xf32>,
    %cst_54 = arith.constant dense<0.000000e+00> : vector<5x8xf32>
    %83 = tpu.matmul %70, %64, %cst_54 {dimension_numbers = #tpu.dot_dimension_numbers<[1], [0], [0], [1], [0, 0, 1, 1], [], []>} : vector<5x5xf32>, vector<5x8xf32>, vector<5x8xf32> -> vector<5x8xf32>
    %cst_55 = arith.constant dense<0.000000e+00> : vector<5x16xf32>
    %84 = tpu.matmul %83, %52, %cst_55 {dimension_numbers = #tpu.dot_dimension_numbers<[1], [0], [0], [1], [0, 0, 1, 1], [], []>} : vector<5x8xf32>, vector<8x16xf32>, vector<5x16xf32> -> vector<5x16xf32>
    %85 = arith.addf %48, %84 : vector<5x16xf32>
    %c4 = arith.constant 4 : index
    %c0_56 = arith.constant 0 : index
    %86 = vector.load %arg7[%c4, %c0_56] : memref<53x32xf32, #tpu.memory_space<vmem>>, vector<1x16xf32>
    %c5 = arith.constant 5 : index
    %c0_57 = arith.constant 0 : index
    %87 = vector.load %arg7[%c5, %c0_57] : memref<53x32xf32, #tpu.memory_space<vmem>>, vector<1x16xf32>
    %88 = arith.addf %85, %9 : vector<5x16xf32>
    %cst_58 = arith.constant dense<0.000000e+00> : vector<5xf32>
    %89 = vector.multi_reduction <add>, %88, %cst_58 [1] : vector<5x16xf32> to vector<5xf32>
    %90 = vector.shape_cast %89 : vector<5xf32> to vector<5x1xf32>
    %cst_59 = arith.constant 1.600000e+01 : f32
    %91 = vector.broadcast %cst_59 : f32 to vector<5x1xf32>
    %92 = arith.divf %90, %91 : vector<5x1xf32>
    %93 = vector.broadcast %92 : vector<5x1xf32> to vector<5x16xf32>
    %94 = arith.subf %88, %93 : vector<5x16xf32>
    %95 = arith.mulf %94, %94 : vector<5x16xf32>
    %cst_60 = arith.constant dense<0.000000e+00> : vector<5xf32>
    %96 = vector.multi_reduction <add>, %95, %cst_60 [1] : vector<5x16xf32> to vector<5xf32>
    %97 = vector.shape_cast %96 : vector<5xf32> to vector<5x1xf32>
    %cst_61 = arith.constant 1.600000e+01 : f32
    %98 = vector.broadcast %cst_61 : f32 to vector<5x1xf32>
    %99 = arith.divf %97, %98 : vector<5x1xf32>
    %100 = vector.broadcast %92 : vector<5x1xf32> to vector<5x16xf32>
    %101 = arith.subf %88, %100 : vector<5x16xf32>
    %cst_62 = arith.constant 9.99999974E-6 : f32
    %102 = vector.broadcast %cst_62 : f32 to vector<5x1xf32>
    %103 = arith.addf %99, %102 : vector<5x1xf32>
    %104 = math.rsqrt %103 : vector<5x1xf32>
    %105 = vector.broadcast %104 : vector<5x1xf32> to vector<5x16xf32>
    %106 = arith.mulf %101, %105 : vector<5x16xf32>
    %107 = vector.broadcast %86 : vector<1x16xf32> to vector<5x16xf32>
    %108 = arith.mulf %106, %107 : vector<5x16xf32>
    %109 = vector.broadcast %87 : vector<1x16xf32> to vector<5x16xf32>
    %110 = arith.addf %108, %109 : vector<5x16xf32>
    %c0_63 = arith.constant 0 : index
    %c384 = arith.constant 384 : index
    %111 = vector.load %arg5[%c0_63, %c384] : memref<16x521xf32, #tpu.memory_space<vmem>>, vector<16x32xf32>
    %c36 = arith.constant 36 : index
    %c0_64 = arith.constant 0 : index
    %112 = vector.load %arg7[%c36, %c0_64] : memref<53x32xf32, #tpu.memory_space<vmem>>, vector<1x32xf32>
    %c0_65 = arith.constant 0 : index
    %c0_66 = arith.constant 0 : index
    %113 = vector.load %arg6[%c0_65, %c0_66] : memref<32x64xf32, #tpu.memory_space<vmem>>, vector<32x16xf32>
    %c37 = arith.constant 37 : index
    %c0_67 = arith.constant 0 : index
    %114 = vector.load %arg7[%c37, %c0_67] : memref<53x32xf32, #tpu.memory_space<vmem>>, vector<1x16xf32>
    %c38 = arith.constant 38 : index
    %c0_68 = arith.constant 0 : index
    %115 = vector.load %arg7[%c38, %c0_68] : memref<53x32xf32, #tpu.memory_space<vmem>>, vector<1x16xf32>
    %c39 = arith.constant 39 : index
    %c0_69 = arith.constant 0 : index
    %116 = vector.load %arg7[%c39, %c0_69] : memref<53x32xf32, #tpu.memory_space<vmem>>, vector<1x16xf32>
    %cst_70 = arith.constant dense<0.000000e+00> : vector<5x32xf32>
    %117 = tpu.matmul %110, %111, %cst_70 {dimension_numbers = #tpu.dot_dimension_numbers<[1], [0], [0], [1], [0, 0, 1, 1], [], []>} : vector<5x16xf32>, vector<16x32xf32>, vector<5x32xf32> -> vector<5x32xf32>
    %118 = vector.broadcast %112 : vector<1x32xf32> to vector<5x32xf32>
    %119 = arith.addf %117, %118 : vector<5x32xf32>
    %cst_71 = arith.constant dense<0.000000e+00> : vector<5x16xf32>
    %120 = tpu.matmul %119, %113, %cst_71 {dimension_numbers = #tpu.dot_dimension_numbers<[1], [0], [0], [1], [0, 0, 1, 1], [], []>} : vector<5x32xf32>, vector<32x16xf32>, vector<5x16xf32> -> vector<5x16xf32>
    %121 = vector.broadcast %114 : vector<1x16xf32> to vector<5x16xf32>
    %122 = arith.addf %120, %121 : vector<5x16xf32>
    %cst_72 = arith.constant 0.000000e+00 : f32
    %123 = vector.broadcast %cst_72 : f32 to vector<5x16xf32>
    %124 = arith.maximumf %122, %123 : vector<5x16xf32>
    %125 = arith.addf %124, %110 : vector<5x16xf32>
    %cst_73 = arith.constant dense<0.000000e+00> : vector<5xf32>
    %126 = vector.multi_reduction <add>, %125, %cst_73 [1] : vector<5x16xf32> to vector<5xf32>
    %127 = vector.shape_cast %126 : vector<5xf32> to vector<5x1xf32>
    %cst_74 = arith.constant 1.600000e+01 : f32
    %128 = vector.broadcast %cst_74 : f32 to vector<5x1xf32>
    %129 = arith.divf %127, %128 : vector<5x1xf32>
    %130 = vector.broadcast %129 : vector<5x1xf32> to vector<5x16xf32>
    %131 = arith.subf %125, %130 : vector<5x16xf32>
    %132 = arith.mulf %131, %131 : vector<5x16xf32>
    %cst_75 = arith.constant dense<0.000000e+00> : vector<5xf32>
    %133 = vector.multi_reduction <add>, %132, %cst_75 [1] : vector<5x16xf32> to vector<5xf32>
    %134 = vector.shape_cast %133 : vector<5xf32> to vector<5x1xf32>
    %cst_76 = arith.constant 1.600000e+01 : f32
    %135 = vector.broadcast %cst_76 : f32 to vector<5x1xf32>
    %136 = arith.divf %134, %135 : vector<5x1xf32>
    %137 = vector.broadcast %129 : vector<5x1xf32> to vector<5x16xf32>
    %138 = arith.subf %125, %137 : vector<5x16xf32>
    %cst_77 = arith.constant 9.99999974E-6 : f32
    %139 = vector.broadcast %cst_77 : f32 to vector<5x1xf32>
    %140 = arith.addf %136, %139 : vector<5x1xf32>
    %141 = math.rsqrt %140 : vector<5x1xf32>
    %142 = vector.broadcast %141 : vector<5x1xf32> to vector<5x16xf32>
    %143 = arith.mulf %138, %142 : vector<5x16xf32>
    %144 = vector.broadcast %115 : vector<1x16xf32> to vector<5x16xf32>
    %145 = arith.mulf %143, %144 : vector<5x16xf32>
    %146 = vector.broadcast %116 : vector<1x16xf32> to vector<5x16xf32>
    %147 = arith.addf %145, %146 : vector<5x16xf32>
    %c9 = arith.constant 9 : index
    %c0_78 = arith.constant 0 : index
    %148 = vector.load %arg7[%c9, %c0_78] : memref<53x32xf32, #tpu.memory_space<vmem>>, vector<1x16xf32>
    %c0_79 = arith.constant 0 : index
    %c64 = arith.constant 64 : index
    %149 = vector.load %arg5[%c0_79, %c64] : memref<16x521xf32, #tpu.memory_space<vmem>>, vector<16x8xf32>
    %c0_80 = arith.constant 0 : index
    %c80 = arith.constant 80 : index
    %150 = vector.load %arg5[%c0_80, %c80] : memref<16x521xf32, #tpu.memory_space<vmem>>, vector<16x8xf32>
    %c0_81 = arith.constant 0 : index
    %c96 = arith.constant 96 : index
    %151 = vector.load %arg5[%c0_81, %c96] : memref<16x521xf32, #tpu.memory_space<vmem>>, vector<16x8xf32>
    %c0_82 = arith.constant 0 : index
    %c112 = arith.constant 112 : index
    %152 = vector.load %arg5[%c0_82, %c112] : memref<16x521xf32, #tpu.memory_space<vmem>>, vector<8x16xf32>
    %c6 = arith.constant 6 : index
    %c0_83 = arith.constant 0 : index
    %153 = vector.load %arg7[%c6, %c0_83] : memref<53x32xf32, #tpu.memory_space<vmem>>, vector<1x8xf32>
    %c7 = arith.constant 7 : index
    %c0_84 = arith.constant 0 : index
    %154 = vector.load %arg7[%c7, %c0_84] : memref<53x32xf32, #tpu.memory_space<vmem>>, vector<1x8xf32>
    %c8_85 = arith.constant 8 : index
    %c0_86 = arith.constant 0 : index
    %155 = vector.load %arg7[%c8_85, %c0_86] : memref<53x32xf32, #tpu.memory_space<vmem>>, vector<1x8xf32>
    %cst_87 = arith.constant dense<0.000000e+00> : vector<5x8xf32>
    %156 = tpu.matmul %147, %149, %cst_87 {dimension_numbers = #tpu.dot_dimension_numbers<[1], [0], [0], [1], [0, 0, 1, 1], [], []>} : vector<5x16xf32>, vector<16x8xf32>, vector<5x8xf32> -> vector<5x8xf32>
    %157 = vector.broadcast %153 : vector<1x8xf32> to vector<5x8xf32>
    %158 = arith.addf %156, %157 : vector<5x8xf32>
    %cst_88 = arith.constant dense<0.000000e+00> : vector<5x8xf32>
    %159 = tpu.matmul %147, %150, %cst_88 {dimension_numbers = #tpu.dot_dimension_numbers<[1], [0], [0], [1], [0, 0, 1, 1], [], []>} : vector<5x16xf32>, vector<16x8xf32>, vector<5x8xf32> -> vector<5x8xf32>
    %160 = vector.broadcast %154 : vector<1x8xf32> to vector<5x8xf32>
    %161 = arith.addf %159, %160 : vector<5x8xf32>
    %cst_89 = arith.constant dense<0.000000e+00> : vector<5x8xf32>
    %162 = tpu.matmul %147, %151, %cst_89 {dimension_numbers = #tpu.dot_dimension_numbers<[1], [0], [0], [1], [0, 0, 1, 1], [], []>} : vector<5x16xf32>, vector<16x8xf32>, vector<5x8xf32> -> vector<5x8xf32>
    %163 = vector.broadcast %155 : vector<1x8xf32> to vector<5x8xf32>
    %164 = arith.addf %162, %163 : vector<5x8xf32>
    %165 = tpu.transpose %161, [1, 0] : vector<5x8xf32> -> vector<8x5xf32>
    %cst_90 = arith.constant dense<0.000000e+00> : vector<5x5xf32>
    %166 = tpu.matmul %158, %165, %cst_90 {dimension_numbers = #tpu.dot_dimension_numbers<[1], [0], [0], [1], [0, 0, 1, 1], [], []>} : vector<5x8xf32>, vector<8x5xf32>, vector<5x5xf32> -> vector<5x5xf32>
    %cst_91 = arith.constant 1.250000e-01 : f32
    %167 = vector.broadcast %cst_91 : f32 to vector<5x5xf32>
    %168 = arith.mulf %166, %167 : vector<5x5xf32>
    %cst_92 = arith.constant -1.000000e+09 : f32
    %169 = vector.broadcast %cst_92 : f32 to vector<5x5xf32>
    %170 = arith.select %2, %169, %168 : vector<5x5xi1>, vector<5x5xf32>
    %cst_93 = arith.constant dense<0xFF800000> : vector<5xf32>
    %171 = vector.multi_reduction <maximumf>, %170, %cst_93 [1] : vector<5x5xf32> to vector<5xf32>
    %172 = vector.shape_cast %171 : vector<5xf32> to vector<5x1xf32>
    %173 = vector.broadcast %172 : vector<5x1xf32> to vector<5x5xf32>
    %174 = arith.subf %170, %173 : vector<5x5xf32>
    %175 = math.exp %174 : vector<5x5xf32>
    %cst_94 = arith.constant dense<0.000000e+00> : vector<5xf32>
    %176 = vector.multi_reduction <add>, %175, %cst_94 [1] : vector<5x5xf32> to vector<5xf32>
    %177 = vector.shape_cast %176 : vector<5xf32> to vector<5x1xf32>
    %178 = vector.broadcast %177 : vector<5x1xf32> to vector<5x5xf32>
    %179 = arith.divf %175, %178 : vector<5x5xf32>
    %c2_95 = arith.constant 2 : index
    %c0_96 = arith.constant 0 : index
    %c0_97 = arith.constant 0 : index
    %180 = vector.load %arg9[%c2_95, %c0_96, %c0_97] : memref<12x5x5xf32, #tpu.memory_space<vmem>>, vector<1x5x5xf32>
    %181 = vector.shape_cast %180 : vector<1x5x5xf32> to vector<5x5xf32>
    %182 = vector.shape_cast %179 : vector<5x5xf32> to vector<1x5x5xf32>
    tpu.vector_store %arg9[%c2_95, %c0_96, %c0_97], %182 {strides = array<i32>} : memref<12x5x5xf32, #tpu.memory_space<vmem>>, vector<1x5x5xf32>,
    %cst_98 = arith.constant dense<0.000000e+00> : vector<5x8xf32>
    %183 = tpu.matmul %170, %164, %cst_98 {dimension_numbers = #tpu.dot_dimension_numbers<[1], [0], [0], [1], [0, 0, 1, 1], [], []>} : vector<5x5xf32>, vector<5x8xf32>, vector<5x8xf32> -> vector<5x8xf32>
    %cst_99 = arith.constant dense<0.000000e+00> : vector<5x16xf32>
    %184 = tpu.matmul %183, %152, %cst_99 {dimension_numbers = #tpu.dot_dimension_numbers<[1], [0], [0], [1], [0, 0, 1, 1], [], []>} : vector<5x8xf32>, vector<8x16xf32>, vector<5x16xf32> -> vector<5x16xf32>
    %185 = vector.broadcast %148 : vector<1x16xf32> to vector<5x16xf32>
    %186 = arith.addf %185, %184 : vector<5x16xf32>
    %c0_100 = arith.constant 0 : index
    %c72 = arith.constant 72 : index
    %187 = vector.load %arg5[%c0_100, %c72] : memref<16x521xf32, #tpu.memory_space<vmem>>, vector<16x8xf32>
    %c0_101 = arith.constant 0 : index
    %c88 = arith.constant 88 : index
    %188 = vector.load %arg5[%c0_101, %c88] : memref<16x521xf32, #tpu.memory_space<vmem>>, vector<16x8xf32>
    %c0_102 = arith.constant 0 : index
    %c104 = arith.constant 104 : index
    %189 = vector.load %arg5[%c0_102, %c104] : memref<16x521xf32, #tpu.memory_space<vmem>>, vector<16x8xf32>
    %c8_103 = arith.constant 8 : index
    %c112_104 = arith.constant 112 : index
    %190 = vector.load %arg5[%c8_103, %c112_104] : memref<16x521xf32, #tpu.memory_space<vmem>>, vector<8x16xf32>
    %c6_105 = arith.constant 6 : index
    %c8_106 = arith.constant 8 : index
    %191 = vector.load %arg7[%c6_105, %c8_106] : memref<53x32xf32, #tpu.memory_space<vmem>>, vector<1x8xf32>
    %c7_107 = arith.constant 7 : index
    %c8_108 = arith.constant 8 : index
    %192 = vector.load %arg7[%c7_107, %c8_108] : memref<53x32xf32, #tpu.memory_space<vmem>>, vector<1x8xf32>
    %c8_109 = arith.constant 8 : index
    %c8_110 = arith.constant 8 : index
    %193 = vector.load %arg7[%c8_109, %c8_110] : memref<53x32xf32, #tpu.memory_space<vmem>>, vector<1x8xf32>
    %cst_111 = arith.constant dense<0.000000e+00> : vector<5x8xf32>
    %194 = tpu.matmul %147, %187, %cst_111 {dimension_numbers = #tpu.dot_dimension_numbers<[1], [0], [0], [1], [0, 0, 1, 1], [], []>} : vector<5x16xf32>, vector<16x8xf32>, vector<5x8xf32> -> vector<5x8xf32>
    %195 = vector.broadcast %191 : vector<1x8xf32> to vector<5x8xf32>
    %196 = arith.addf %194, %195 : vector<5x8xf32>
    %cst_112 = arith.constant dense<0.000000e+00> : vector<5x8xf32>
    %197 = tpu.matmul %147, %188, %cst_112 {dimension_numbers = #tpu.dot_dimension_numbers<[1], [0], [0], [1], [0, 0, 1, 1], [], []>} : vector<5x16xf32>, vector<16x8xf32>, vector<5x8xf32> -> vector<5x8xf32>
    %198 = vector.broadcast %192 : vector<1x8xf32> to vector<5x8xf32>
    %199 = arith.addf %197, %198 : vector<5x8xf32>
    %cst_113 = arith.constant dense<0.000000e+00> : vector<5x8xf32>
    %200 = tpu.matmul %147, %189, %cst_113 {dimension_numbers = #tpu.dot_dimension_numbers<[1], [0], [0], [1], [0, 0, 1, 1], [], []>} : vector<5x16xf32>, vector<16x8xf32>, vector<5x8xf32> -> vector<5x8xf32>
    %201 = vector.broadcast %193 : vector<1x8xf32> to vector<5x8xf32>
    %202 = arith.addf %200, %201 : vector<5x8xf32>
    %203 = tpu.transpose %199, [1, 0] : vector<5x8xf32> -> vector<8x5xf32>
    %cst_114 = arith.constant dense<0.000000e+00> : vector<5x5xf32>
    %204 = tpu.matmul %196, %203, %cst_114 {dimension_numbers = #tpu.dot_dimension_numbers<[1], [0], [0], [1], [0, 0, 1, 1], [], []>} : vector<5x8xf32>, vector<8x5xf32>, vector<5x5xf32> -> vector<5x5xf32>
    %cst_115 = arith.constant 1.250000e-01 : f32
    %205 = vector.broadcast %cst_115 : f32 to vector<5x5xf32>
    %206 = arith.mulf %204, %205 : vector<5x5xf32>
    %cst_116 = arith.constant -1.000000e+09 : f32
    %207 = vector.broadcast %cst_116 : f32 to vector<5x5xf32>
    %208 = arith.select %2, %207, %206 : vector<5x5xi1>, vector<5x5xf32>
    %cst_117 = arith.constant dense<0xFF800000> : vector<5xf32>
    %209 = vector.multi_reduction <maximumf>, %208, %cst_117 [1] : vector<5x5xf32> to vector<5xf32>
    %210 = vector.shape_cast %209 : vector<5xf32> to vector<5x1xf32>
    %211 = vector.broadcast %210 : vector<5x1xf32> to vector<5x5xf32>
    %212 = arith.subf %208, %211 : vector<5x5xf32>
    %213 = math.exp %212 : vector<5x5xf32>
    %cst_118 = arith.constant dense<0.000000e+00> : vector<5xf32>
    %214 = vector.multi_reduction <add>, %213, %cst_118 [1] : vector<5x5xf32> to vector<5xf32>
    %215 = vector.shape_cast %214 : vector<5xf32> to vector<5x1xf32>
    %216 = vector.broadcast %215 : vector<5x1xf32> to vector<5x5xf32>
    %217 = arith.divf %213, %216 : vector<5x5xf32>
    %c3_119 = arith.constant 3 : index
    %c0_120 = arith.constant 0 : index
    %c0_121 = arith.constant 0 : index
    %218 = vector.load %arg9[%c3_119, %c0_120, %c0_121] : memref<12x5x5xf32, #tpu.memory_space<vmem>>, vector<1x5x5xf32>
    %219 = vector.shape_cast %218 : vector<1x5x5xf32> to vector<5x5xf32>
    %220 = vector.shape_cast %217 : vector<5x5xf32> to vector<1x5x5xf32>
    tpu.vector_store %arg9[%c3_119, %c0_120, %c0_121], %220 {strides = array<i32>} : memref<12x5x5xf32, #tpu.memory_space<vmem>>, vector<1x5x5xf32>,
    %cst_122 = arith.constant dense<0.000000e+00> : vector<5x8xf32>
    %221 = tpu.matmul %208, %202, %cst_122 {dimension_numbers = #tpu.dot_dimension_numbers<[1], [0], [0], [1], [0, 0, 1, 1], [], []>} : vector<5x5xf32>, vector<5x8xf32>, vector<5x8xf32> -> vector<5x8xf32>
    %cst_123 = arith.constant dense<0.000000e+00> : vector<5x16xf32>
    %222 = tpu.matmul %221, %190, %cst_123 {dimension_numbers = #tpu.dot_dimension_numbers<[1], [0], [0], [1], [0, 0, 1, 1], [], []>} : vector<5x8xf32>, vector<8x16xf32>, vector<5x16xf32> -> vector<5x16xf32>
    %223 = arith.addf %186, %222 : vector<5x16xf32>
    %c10 = arith.constant 10 : index
    %c0_124 = arith.constant 0 : index
    %224 = vector.load %arg7[%c10, %c0_124] : memref<53x32xf32, #tpu.memory_space<vmem>>, vector<1x16xf32>
    %c11 = arith.constant 11 : index
    %c0_125 = arith.constant 0 : index
    %225 = vector.load %arg7[%c11, %c0_125] : memref<53x32xf32, #tpu.memory_space<vmem>>, vector<1x16xf32>
    %226 = arith.addf %223, %147 : vector<5x16xf32>
    %cst_126 = arith.constant dense<0.000000e+00> : vector<5xf32>
    %227 = vector.multi_reduction <add>, %226, %cst_126 [1] : vector<5x16xf32> to vector<5xf32>
    %228 = vector.shape_cast %227 : vector<5xf32> to vector<5x1xf32>
    %cst_127 = arith.constant 1.600000e+01 : f32
    %229 = vector.broadcast %cst_127 : f32 to vector<5x1xf32>
    %230 = arith.divf %228, %229 : vector<5x1xf32>
    %231 = vector.broadcast %230 : vector<5x1xf32> to vector<5x16xf32>
    %232 = arith.subf %226, %231 : vector<5x16xf32>
    %233 = arith.mulf %232, %232 : vector<5x16xf32>
    %cst_128 = arith.constant dense<0.000000e+00> : vector<5xf32>
    %234 = vector.multi_reduction <add>, %233, %cst_128 [1] : vector<5x16xf32> to vector<5xf32>
    %235 = vector.shape_cast %234 : vector<5xf32> to vector<5x1xf32>
    %cst_129 = arith.constant 1.600000e+01 : f32
    %236 = vector.broadcast %cst_129 : f32 to vector<5x1xf32>
    %237 = arith.divf %235, %236 : vector<5x1xf32>
    %238 = vector.broadcast %230 : vector<5x1xf32> to vector<5x16xf32>
    %239 = arith.subf %226, %238 : vector<5x16xf32>
    %cst_130 = arith.constant 9.99999974E-6 : f32
    %240 = vector.broadcast %cst_130 : f32 to vector<5x1xf32>
    %241 = arith.addf %237, %240 : vector<5x1xf32>
    %242 = math.rsqrt %241 : vector<5x1xf32>
    %243 = vector.broadcast %242 : vector<5x1xf32> to vector<5x16xf32>
    %244 = arith.mulf %239, %243 : vector<5x16xf32>
    %245 = vector.broadcast %224 : vector<1x16xf32> to vector<5x16xf32>
    %246 = arith.mulf %244, %245 : vector<5x16xf32>
    %247 = vector.broadcast %225 : vector<1x16xf32> to vector<5x16xf32>
    %248 = arith.addf %246, %247 : vector<5x16xf32>
    %c0_131 = arith.constant 0 : index
    %c416 = arith.constant 416 : index
    %249 = vector.load %arg5[%c0_131, %c416] : memref<16x521xf32, #tpu.memory_space<vmem>>, vector<16x32xf32>
    %c40_132 = arith.constant 40 : index
    %c0_133 = arith.constant 0 : index
    %250 = vector.load %arg7[%c40_132, %c0_133] : memref<53x32xf32, #tpu.memory_space<vmem>>, vector<1x32xf32>
    %c0_134 = arith.constant 0 : index
    %c16_135 = arith.constant 16 : index
    %251 = vector.load %arg6[%c0_134, %c16_135] : memref<32x64xf32, #tpu.memory_space<vmem>>, vector<32x16xf32>
    %c41 = arith.constant 41 : index
    %c0_136 = arith.constant 0 : index
    %252 = vector.load %arg7[%c41, %c0_136] : memref<53x32xf32, #tpu.memory_space<vmem>>, vector<1x16xf32>
    %c42 = arith.constant 42 : index
    %c0_137 = arith.constant 0 : index
    %253 = vector.load %arg7[%c42, %c0_137] : memref<53x32xf32, #tpu.memory_space<vmem>>, vector<1x16xf32>
    %c43 = arith.constant 43 : index
    %c0_138 = arith.constant 0 : index
    %254 = vector.load %arg7[%c43, %c0_138] : memref<53x32xf32, #tpu.memory_space<vmem>>, vector<1x16xf32>
    %cst_139 = arith.constant dense<0.000000e+00> : vector<5x32xf32>
    %255 = tpu.matmul %248, %249, %cst_139 {dimension_numbers = #tpu.dot_dimension_numbers<[1], [0], [0], [1], [0, 0, 1, 1], [], []>} : vector<5x16xf32>, vector<16x32xf32>, vector<5x32xf32> -> vector<5x32xf32>
    %256 = vector.broadcast %250 : vector<1x32xf32> to vector<5x32xf32>
    %257 = arith.addf %255, %256 : vector<5x32xf32>
    %cst_140 = arith.constant dense<0.000000e+00> : vector<5x16xf32>
    %258 = tpu.matmul %257, %251, %cst_140 {dimension_numbers = #tpu.dot_dimension_numbers<[1], [0], [0], [1], [0, 0, 1, 1], [], []>} : vector<5x32xf32>, vector<32x16xf32>, vector<5x16xf32> -> vector<5x16xf32>
    %259 = vector.broadcast %252 : vector<1x16xf32> to vector<5x16xf32>
    %260 = arith.addf %258, %259 : vector<5x16xf32>
    %cst_141 = arith.constant 0.000000e+00 : f32
    %261 = vector.broadcast %cst_141 : f32 to vector<5x16xf32>
    %262 = arith.maximumf %260, %261 : vector<5x16xf32>
    %263 = arith.addf %262, %248 : vector<5x16xf32>
    %cst_142 = arith.constant dense<0.000000e+00> : vector<5xf32>
    %264 = vector.multi_reduction <add>, %263, %cst_142 [1] : vector<5x16xf32> to vector<5xf32>
    %265 = vector.shape_cast %264 : vector<5xf32> to vector<5x1xf32>
    %cst_143 = arith.constant 1.600000e+01 : f32
    %266 = vector.broadcast %cst_143 : f32 to vector<5x1xf32>
    %267 = arith.divf %265, %266 : vector<5x1xf32>
    %268 = vector.broadcast %267 : vector<5x1xf32> to vector<5x16xf32>
    %269 = arith.subf %263, %268 : vector<5x16xf32>
    %270 = arith.mulf %269, %269 : vector<5x16xf32>
    %cst_144 = arith.constant dense<0.000000e+00> : vector<5xf32>
    %271 = vector.multi_reduction <add>, %270, %cst_144 [1] : vector<5x16xf32> to vector<5xf32>
    %272 = vector.shape_cast %271 : vector<5xf32> to vector<5x1xf32>
    %cst_145 = arith.constant 1.600000e+01 : f32
    %273 = vector.broadcast %cst_145 : f32 to vector<5x1xf32>
    %274 = arith.divf %272, %273 : vector<5x1xf32>
    %275 = vector.broadcast %267 : vector<5x1xf32> to vector<5x16xf32>
    %276 = arith.subf %263, %275 : vector<5x16xf32>
    %cst_146 = arith.constant 9.99999974E-6 : f32
    %277 = vector.broadcast %cst_146 : f32 to vector<5x1xf32>
    %278 = arith.addf %274, %277 : vector<5x1xf32>
    %279 = math.rsqrt %278 : vector<5x1xf32>
    %280 = vector.broadcast %279 : vector<5x1xf32> to vector<5x16xf32>
    %281 = arith.mulf %276, %280 : vector<5x16xf32>
    %282 = vector.broadcast %253 : vector<1x16xf32> to vector<5x16xf32>
    %283 = arith.mulf %281, %282 : vector<5x16xf32>
    %284 = vector.broadcast %254 : vector<1x16xf32> to vector<5x16xf32>
    %285 = arith.addf %283, %284 : vector<5x16xf32>
    %c0_147 = arith.constant 0 : index
    %c0_148 = arith.constant 0 : index
    %286 = vector.load %arg1[%c0_147, %c0_148] : memref<5x16xf32, #tpu.memory_space<vmem>>, vector<5x16xf32>
    %c15 = arith.constant 15 : index
    %c0_149 = arith.constant 0 : index
    %287 = vector.load %arg7[%c15, %c0_149] : memref<53x32xf32, #tpu.memory_space<vmem>>, vector<1x16xf32>
    %c0_150 = arith.constant 0 : index
    %c128 = arith.constant 128 : index
    %288 = vector.load %arg5[%c0_150, %c128] : memref<16x521xf32, #tpu.memory_space<vmem>>, vector<16x8xf32>
    %c0_151 = arith.constant 0 : index
    %c144 = arith.constant 144 : index
    %289 = vector.load %arg5[%c0_151, %c144] : memref<16x521xf32, #tpu.memory_space<vmem>>, vector<16x8xf32>
    %c0_152 = arith.constant 0 : index
    %c160 = arith.constant 160 : index
    %290 = vector.load %arg5[%c0_152, %c160] : memref<16x521xf32, #tpu.memory_space<vmem>>, vector<16x8xf32>
    %c0_153 = arith.constant 0 : index
    %c176 = arith.constant 176 : index
    %291 = vector.load %arg5[%c0_153, %c176] : memref<16x521xf32, #tpu.memory_space<vmem>>, vector<8x16xf32>
    %c12 = arith.constant 12 : index
    %c0_154 = arith.constant 0 : index
    %292 = vector.load %arg7[%c12, %c0_154] : memref<53x32xf32, #tpu.memory_space<vmem>>, vector<1x8xf32>
    %c13 = arith.constant 13 : index
    %c0_155 = arith.constant 0 : index
    %293 = vector.load %arg7[%c13, %c0_155] : memref<53x32xf32, #tpu.memory_space<vmem>>, vector<1x8xf32>
    %c14 = arith.constant 14 : index
    %c0_156 = arith.constant 0 : index
    %294 = vector.load %arg7[%c14, %c0_156] : memref<53x32xf32, #tpu.memory_space<vmem>>, vector<1x8xf32>
    %cst_157 = arith.constant dense<0.000000e+00> : vector<5x8xf32>
    %295 = tpu.matmul %286, %288, %cst_157 {dimension_numbers = #tpu.dot_dimension_numbers<[1], [0], [0], [1], [0, 0, 1, 1], [], []>} : vector<5x16xf32>, vector<16x8xf32>, vector<5x8xf32> -> vector<5x8xf32>
    %296 = vector.broadcast %292 : vector<1x8xf32> to vector<5x8xf32>
    %297 = arith.addf %295, %296 : vector<5x8xf32>
    %cst_158 = arith.constant dense<0.000000e+00> : vector<5x8xf32>
    %298 = tpu.matmul %286, %289, %cst_158 {dimension_numbers = #tpu.dot_dimension_numbers<[1], [0], [0], [1], [0, 0, 1, 1], [], []>} : vector<5x16xf32>, vector<16x8xf32>, vector<5x8xf32> -> vector<5x8xf32>
    %299 = vector.broadcast %293 : vector<1x8xf32> to vector<5x8xf32>
    %300 = arith.addf %298, %299 : vector<5x8xf32>
    %cst_159 = arith.constant dense<0.000000e+00> : vector<5x8xf32>
    %301 = tpu.matmul %286, %290, %cst_159 {dimension_numbers = #tpu.dot_dimension_numbers<[1], [0], [0], [1], [0, 0, 1, 1], [], []>} : vector<5x16xf32>, vector<16x8xf32>, vector<5x8xf32> -> vector<5x8xf32>
    %302 = vector.broadcast %294 : vector<1x8xf32> to vector<5x8xf32>
    %303 = arith.addf %301, %302 : vector<5x8xf32>
    %304 = tpu.transpose %300, [1, 0] : vector<5x8xf32> -> vector<8x5xf32>
    %cst_160 = arith.constant dense<0.000000e+00> : vector<5x5xf32>
    %305 = tpu.matmul %297, %304, %cst_160 {dimension_numbers = #tpu.dot_dimension_numbers<[1], [0], [0], [1], [0, 0, 1, 1], [], []>} : vector<5x8xf32>, vector<8x5xf32>, vector<5x5xf32> -> vector<5x5xf32>
    %cst_161 = arith.constant 1.250000e-01 : f32
    %306 = vector.broadcast %cst_161 : f32 to vector<5x5xf32>
    %307 = arith.mulf %305, %306 : vector<5x5xf32>
    %cst_162 = arith.constant -1.000000e+09 : f32
    %308 = vector.broadcast %cst_162 : f32 to vector<5x5xf32>
    %309 = arith.select %5, %308, %307 : vector<5x5xi1>, vector<5x5xf32>
    %cst_163 = arith.constant dense<0xFF800000> : vector<5xf32>
    %310 = vector.multi_reduction <maximumf>, %309, %cst_163 [1] : vector<5x5xf32> to vector<5xf32>
    %311 = vector.shape_cast %310 : vector<5xf32> to vector<5x1xf32>
    %312 = vector.broadcast %311 : vector<5x1xf32> to vector<5x5xf32>
    %313 = arith.subf %309, %312 : vector<5x5xf32>
    %314 = math.exp %313 : vector<5x5xf32>
    %cst_164 = arith.constant dense<0.000000e+00> : vector<5xf32>
    %315 = vector.multi_reduction <add>, %314, %cst_164 [1] : vector<5x5xf32> to vector<5xf32>
    %316 = vector.shape_cast %315 : vector<5xf32> to vector<5x1xf32>
    %317 = vector.broadcast %316 : vector<5x1xf32> to vector<5x5xf32>
    %318 = arith.divf %314, %317 : vector<5x5xf32>
    %c4_165 = arith.constant 4 : index
    %c0_166 = arith.constant 0 : index
    %c0_167 = arith.constant 0 : index
    %319 = vector.load %arg9[%c4_165, %c0_166, %c0_167] : memref<12x5x5xf32, #tpu.memory_space<vmem>>, vector<1x5x5xf32>
    %320 = vector.shape_cast %319 : vector<1x5x5xf32> to vector<5x5xf32>
    %321 = vector.shape_cast %318 : vector<5x5xf32> to vector<1x5x5xf32>
    tpu.vector_store %arg9[%c4_165, %c0_166, %c0_167], %321 {strides = array<i32>} : memref<12x5x5xf32, #tpu.memory_space<vmem>>, vector<1x5x5xf32>,
    %cst_168 = arith.constant dense<0.000000e+00> : vector<5x8xf32>
    %322 = tpu.matmul %309, %303, %cst_168 {dimension_numbers = #tpu.dot_dimension_numbers<[1], [0], [0], [1], [0, 0, 1, 1], [], []>} : vector<5x5xf32>, vector<5x8xf32>, vector<5x8xf32> -> vector<5x8xf32>
    %cst_169 = arith.constant dense<0.000000e+00> : vector<5x16xf32>
    %323 = tpu.matmul %322, %291, %cst_169 {dimension_numbers = #tpu.dot_dimension_numbers<[1], [0], [0], [1], [0, 0, 1, 1], [], []>} : vector<5x8xf32>, vector<8x16xf32>, vector<5x16xf32> -> vector<5x16xf32>
    %324 = vector.broadcast %287 : vector<1x16xf32> to vector<5x16xf32>
    %325 = arith.addf %324, %323 : vector<5x16xf32>
    %c0_170 = arith.constant 0 : index
    %c136 = arith.constant 136 : index
    %326 = vector.load %arg5[%c0_170, %c136] : memref<16x521xf32, #tpu.memory_space<vmem>>, vector<16x8xf32>
    %c0_171 = arith.constant 0 : index
    %c152 = arith.constant 152 : index
    %327 = vector.load %arg5[%c0_171, %c152] : memref<16x521xf32, #tpu.memory_space<vmem>>, vector<16x8xf32>
    %c0_172 = arith.constant 0 : index
    %c168 = arith.constant 168 : index
    %328 = vector.load %arg5[%c0_172, %c168] : memref<16x521xf32, #tpu.memory_space<vmem>>, vector<16x8xf32>
    %c8_173 = arith.constant 8 : index
    %c176_174 = arith.constant 176 : index
    %329 = vector.load %arg5[%c8_173, %c176_174] : memref<16x521xf32, #tpu.memory_space<vmem>>, vector<8x16xf32>
    %c12_175 = arith.constant 12 : index
    %c8_176 = arith.constant 8 : index
    %330 = vector.load %arg7[%c12_175, %c8_176] : memref<53x32xf32, #tpu.memory_space<vmem>>, vector<1x8xf32>
    %c13_177 = arith.constant 13 : index
    %c8_178 = arith.constant 8 : index
    %331 = vector.load %arg7[%c13_177, %c8_178] : memref<53x32xf32, #tpu.memory_space<vmem>>, vector<1x8xf32>
    %c14_179 = arith.constant 14 : index
    %c8_180 = arith.constant 8 : index
    %332 = vector.load %arg7[%c14_179, %c8_180] : memref<53x32xf32, #tpu.memory_space<vmem>>, vector<1x8xf32>
    %cst_181 = arith.constant dense<0.000000e+00> : vector<5x8xf32>
    %333 = tpu.matmul %286, %326, %cst_181 {dimension_numbers = #tpu.dot_dimension_numbers<[1], [0], [0], [1], [0, 0, 1, 1], [], []>} : vector<5x16xf32>, vector<16x8xf32>, vector<5x8xf32> -> vector<5x8xf32>
    %334 = vector.broadcast %330 : vector<1x8xf32> to vector<5x8xf32>
    %335 = arith.addf %333, %334 : vector<5x8xf32>
    %cst_182 = arith.constant dense<0.000000e+00> : vector<5x8xf32>
    %336 = tpu.matmul %286, %327, %cst_182 {dimension_numbers = #tpu.dot_dimension_numbers<[1], [0], [0], [1], [0, 0, 1, 1], [], []>} : vector<5x16xf32>, vector<16x8xf32>, vector<5x8xf32> -> vector<5x8xf32>
    %337 = vector.broadcast %331 : vector<1x8xf32> to vector<5x8xf32>
    %338 = arith.addf %336, %337 : vector<5x8xf32>
    %cst_183 = arith.constant dense<0.000000e+00> : vector<5x8xf32>
    %339 = tpu.matmul %286, %328, %cst_183 {dimension_numbers = #tpu.dot_dimension_numbers<[1], [0], [0], [1], [0, 0, 1, 1], [], []>} : vector<5x16xf32>, vector<16x8xf32>, vector<5x8xf32> -> vector<5x8xf32>
    %340 = vector.broadcast %332 : vector<1x8xf32> to vector<5x8xf32>
    %341 = arith.addf %339, %340 : vector<5x8xf32>
    %342 = tpu.transpose %338, [1, 0] : vector<5x8xf32> -> vector<8x5xf32>
    %cst_184 = arith.constant dense<0.000000e+00> : vector<5x5xf32>
    %343 = tpu.matmul %335, %342, %cst_184 {dimension_numbers = #tpu.dot_dimension_numbers<[1], [0], [0], [1], [0, 0, 1, 1], [], []>} : vector<5x8xf32>, vector<8x5xf32>, vector<5x5xf32> -> vector<5x5xf32>
    %cst_185 = arith.constant 1.250000e-01 : f32
    %344 = vector.broadcast %cst_185 : f32 to vector<5x5xf32>
    %345 = arith.mulf %343, %344 : vector<5x5xf32>
    %cst_186 = arith.constant -1.000000e+09 : f32
    %346 = vector.broadcast %cst_186 : f32 to vector<5x5xf32>
    %347 = arith.select %5, %346, %345 : vector<5x5xi1>, vector<5x5xf32>
    %cst_187 = arith.constant dense<0xFF800000> : vector<5xf32>
    %348 = vector.multi_reduction <maximumf>, %347, %cst_187 [1] : vector<5x5xf32> to vector<5xf32>
    %349 = vector.shape_cast %348 : vector<5xf32> to vector<5x1xf32>
    %350 = vector.broadcast %349 : vector<5x1xf32> to vector<5x5xf32>
    %351 = arith.subf %347, %350 : vector<5x5xf32>
    %352 = math.exp %351 : vector<5x5xf32>
    %cst_188 = arith.constant dense<0.000000e+00> : vector<5xf32>
    %353 = vector.multi_reduction <add>, %352, %cst_188 [1] : vector<5x5xf32> to vector<5xf32>
    %354 = vector.shape_cast %353 : vector<5xf32> to vector<5x1xf32>
    %355 = vector.broadcast %354 : vector<5x1xf32> to vector<5x5xf32>
    %356 = arith.divf %352, %355 : vector<5x5xf32>
    %c5_189 = arith.constant 5 : index
    %c0_190 = arith.constant 0 : index
    %c0_191 = arith.constant 0 : index
    %357 = vector.load %arg9[%c5_189, %c0_190, %c0_191] : memref<12x5x5xf32, #tpu.memory_space<vmem>>, vector<1x5x5xf32>
    %358 = vector.shape_cast %357 : vector<1x5x5xf32> to vector<5x5xf32>
    %359 = vector.shape_cast %356 : vector<5x5xf32> to vector<1x5x5xf32>
    tpu.vector_store %arg9[%c5_189, %c0_190, %c0_191], %359 {strides = array<i32>} : memref<12x5x5xf32, #tpu.memory_space<vmem>>, vector<1x5x5xf32>,
    %cst_192 = arith.constant dense<0.000000e+00> : vector<5x8xf32>
    %360 = tpu.matmul %347, %341, %cst_192 {dimension_numbers = #tpu.dot_dimension_numbers<[1], [0], [0], [1], [0, 0, 1, 1], [], []>} : vector<5x5xf32>, vector<5x8xf32>, vector<5x8xf32> -> vector<5x8xf32>
    %cst_193 = arith.constant dense<0.000000e+00> : vector<5x16xf32>
    %361 = tpu.matmul %360, %329, %cst_193 {dimension_numbers = #tpu.dot_dimension_numbers<[1], [0], [0], [1], [0, 0, 1, 1], [], []>} : vector<5x8xf32>, vector<8x16xf32>, vector<5x16xf32> -> vector<5x16xf32>
    %362 = arith.addf %325, %361 : vector<5x16xf32>
    %c16_194 = arith.constant 16 : index
    %c0_195 = arith.constant 0 : index
    %363 = vector.load %arg7[%c16_194, %c0_195] : memref<53x32xf32, #tpu.memory_space<vmem>>, vector<1x16xf32>
    %c17 = arith.constant 17 : index
    %c0_196 = arith.constant 0 : index
    %364 = vector.load %arg7[%c17, %c0_196] : memref<53x32xf32, #tpu.memory_space<vmem>>, vector<1x16xf32>
    %365 = arith.addf %362, %286 : vector<5x16xf32>
    %cst_197 = arith.constant dense<0.000000e+00> : vector<5xf32>
    %366 = vector.multi_reduction <add>, %365, %cst_197 [1] : vector<5x16xf32> to vector<5xf32>
    %367 = vector.shape_cast %366 : vector<5xf32> to vector<5x1xf32>
    %cst_198 = arith.constant 1.600000e+01 : f32
    %368 = vector.broadcast %cst_198 : f32 to vector<5x1xf32>
    %369 = arith.divf %367, %368 : vector<5x1xf32>
    %370 = vector.broadcast %369 : vector<5x1xf32> to vector<5x16xf32>
    %371 = arith.subf %365, %370 : vector<5x16xf32>
    %372 = arith.mulf %371, %371 : vector<5x16xf32>
    %cst_199 = arith.constant dense<0.000000e+00> : vector<5xf32>
    %373 = vector.multi_reduction <add>, %372, %cst_199 [1] : vector<5x16xf32> to vector<5xf32>
    %374 = vector.shape_cast %373 : vector<5xf32> to vector<5x1xf32>
    %cst_200 = arith.constant 1.600000e+01 : f32
    %375 = vector.broadcast %cst_200 : f32 to vector<5x1xf32>
    %376 = arith.divf %374, %375 : vector<5x1xf32>
    %377 = vector.broadcast %369 : vector<5x1xf32> to vector<5x16xf32>
    %378 = arith.subf %365, %377 : vector<5x16xf32>
    %cst_201 = arith.constant 9.99999974E-6 : f32
    %379 = vector.broadcast %cst_201 : f32 to vector<5x1xf32>
    %380 = arith.addf %376, %379 : vector<5x1xf32>
    %381 = math.rsqrt %380 : vector<5x1xf32>
    %382 = vector.broadcast %381 : vector<5x1xf32> to vector<5x16xf32>
    %383 = arith.mulf %378, %382 : vector<5x16xf32>
    %384 = vector.broadcast %363 : vector<1x16xf32> to vector<5x16xf32>
    %385 = arith.mulf %383, %384 : vector<5x16xf32>
    %386 = vector.broadcast %364 : vector<1x16xf32> to vector<5x16xf32>
    %387 = arith.addf %385, %386 : vector<5x16xf32>
    %c21 = arith.constant 21 : index
    %c0_202 = arith.constant 0 : index
    %388 = vector.load %arg7[%c21, %c0_202] : memref<53x32xf32, #tpu.memory_space<vmem>>, vector<1x16xf32>
    %c0_203 = arith.constant 0 : index
    %c192 = arith.constant 192 : index
    %389 = vector.load %arg5[%c0_203, %c192] : memref<16x521xf32, #tpu.memory_space<vmem>>, vector<16x8xf32>
    %c0_204 = arith.constant 0 : index
    %c208 = arith.constant 208 : index
    %390 = vector.load %arg5[%c0_204, %c208] : memref<16x521xf32, #tpu.memory_space<vmem>>, vector<16x8xf32>
    %c0_205 = arith.constant 0 : index
    %c224 = arith.constant 224 : index
    %391 = vector.load %arg5[%c0_205, %c224] : memref<16x521xf32, #tpu.memory_space<vmem>>, vector<16x8xf32>
    %c0_206 = arith.constant 0 : index
    %c240 = arith.constant 240 : index
    %392 = vector.load %arg5[%c0_206, %c240] : memref<16x521xf32, #tpu.memory_space<vmem>>, vector<8x16xf32>
    %c18 = arith.constant 18 : index
    %c0_207 = arith.constant 0 : index
    %393 = vector.load %arg7[%c18, %c0_207] : memref<53x32xf32, #tpu.memory_space<vmem>>, vector<1x8xf32>
    %c19 = arith.constant 19 : index
    %c0_208 = arith.constant 0 : index
    %394 = vector.load %arg7[%c19, %c0_208] : memref<53x32xf32, #tpu.memory_space<vmem>>, vector<1x8xf32>
    %c20 = arith.constant 20 : index
    %c0_209 = arith.constant 0 : index
    %395 = vector.load %arg7[%c20, %c0_209] : memref<53x32xf32, #tpu.memory_space<vmem>>, vector<1x8xf32>
    %cst_210 = arith.constant dense<0.000000e+00> : vector<5x8xf32>
    %396 = tpu.matmul %387, %389, %cst_210 {dimension_numbers = #tpu.dot_dimension_numbers<[1], [0], [0], [1], [0, 0, 1, 1], [], []>} : vector<5x16xf32>, vector<16x8xf32>, vector<5x8xf32> -> vector<5x8xf32>
    %397 = vector.broadcast %393 : vector<1x8xf32> to vector<5x8xf32>
    %398 = arith.addf %396, %397 : vector<5x8xf32>
    %cst_211 = arith.constant dense<0.000000e+00> : vector<5x8xf32>
    %399 = tpu.matmul %285, %390, %cst_211 {dimension_numbers = #tpu.dot_dimension_numbers<[1], [0], [0], [1], [0, 0, 1, 1], [], []>} : vector<5x16xf32>, vector<16x8xf32>, vector<5x8xf32> -> vector<5x8xf32>
    %400 = vector.broadcast %394 : vector<1x8xf32> to vector<5x8xf32>
    %401 = arith.addf %399, %400 : vector<5x8xf32>
    %cst_212 = arith.constant dense<0.000000e+00> : vector<5x8xf32>
    %402 = tpu.matmul %285, %391, %cst_212 {dimension_numbers = #tpu.dot_dimension_numbers<[1], [0], [0], [1], [0, 0, 1, 1], [], []>} : vector<5x16xf32>, vector<16x8xf32>, vector<5x8xf32> -> vector<5x8xf32>
    %403 = vector.broadcast %395 : vector<1x8xf32> to vector<5x8xf32>
    %404 = arith.addf %402, %403 : vector<5x8xf32>
    %405 = tpu.transpose %401, [1, 0] : vector<5x8xf32> -> vector<8x5xf32>
    %cst_213 = arith.constant dense<0.000000e+00> : vector<5x5xf32>
    %406 = tpu.matmul %398, %405, %cst_213 {dimension_numbers = #tpu.dot_dimension_numbers<[1], [0], [0], [1], [0, 0, 1, 1], [], []>} : vector<5x8xf32>, vector<8x5xf32>, vector<5x5xf32> -> vector<5x5xf32>
    %cst_214 = arith.constant 1.250000e-01 : f32
    %407 = vector.broadcast %cst_214 : f32 to vector<5x5xf32>
    %408 = arith.mulf %406, %407 : vector<5x5xf32>
    %cst_215 = arith.constant -1.000000e+09 : f32
    %409 = vector.broadcast %cst_215 : f32 to vector<5x5xf32>
    %410 = arith.select %8, %409, %408 : vector<5x5xi1>, vector<5x5xf32>
    %cst_216 = arith.constant dense<0xFF800000> : vector<5xf32>
    %411 = vector.multi_reduction <maximumf>, %410, %cst_216 [1] : vector<5x5xf32> to vector<5xf32>
    %412 = vector.shape_cast %411 : vector<5xf32> to vector<5x1xf32>
    %413 = vector.broadcast %412 : vector<5x1xf32> to vector<5x5xf32>
    %414 = arith.subf %410, %413 : vector<5x5xf32>
    %415 = math.exp %414 : vector<5x5xf32>
    %cst_217 = arith.constant dense<0.000000e+00> : vector<5xf32>
    %416 = vector.multi_reduction <add>, %415, %cst_217 [1] : vector<5x5xf32> to vector<5xf32>
    %417 = vector.shape_cast %416 : vector<5xf32> to vector<5x1xf32>
    %418 = vector.broadcast %417 : vector<5x1xf32> to vector<5x5xf32>
    %419 = arith.divf %415, %418 : vector<5x5xf32>
    %c8_218 = arith.constant 8 : index
    %c0_219 = arith.constant 0 : index
    %c0_220 = arith.constant 0 : index
    %420 = vector.load %arg9[%c8_218, %c0_219, %c0_220] : memref<12x5x5xf32, #tpu.memory_space<vmem>>, vector<1x5x5xf32>
    %421 = vector.shape_cast %420 : vector<1x5x5xf32> to vector<5x5xf32>
    %422 = vector.shape_cast %419 : vector<5x5xf32> to vector<1x5x5xf32>
    tpu.vector_store %arg9[%c8_218, %c0_219, %c0_220], %422 {strides = array<i32>} : memref<12x5x5xf32, #tpu.memory_space<vmem>>, vector<1x5x5xf32>,
    %cst_221 = arith.constant dense<0.000000e+00> : vector<5x8xf32>
    %423 = tpu.matmul %410, %404, %cst_221 {dimension_numbers = #tpu.dot_dimension_numbers<[1], [0], [0], [1], [0, 0, 1, 1], [], []>} : vector<5x5xf32>, vector<5x8xf32>, vector<5x8xf32> -> vector<5x8xf32>
    %cst_222 = arith.constant dense<0.000000e+00> : vector<5x16xf32>
    %424 = tpu.matmul %423, %392, %cst_222 {dimension_numbers = #tpu.dot_dimension_numbers<[1], [0], [0], [1], [0, 0, 1, 1], [], []>} : vector<5x8xf32>, vector<8x16xf32>, vector<5x16xf32> -> vector<5x16xf32>
    %425 = vector.broadcast %388 : vector<1x16xf32> to vector<5x16xf32>
    %426 = arith.addf %425, %424 : vector<5x16xf32>
    %c0_223 = arith.constant 0 : index
    %c200 = arith.constant 200 : index
    %427 = vector.load %arg5[%c0_223, %c200] : memref<16x521xf32, #tpu.memory_space<vmem>>, vector<16x8xf32>
    %c0_224 = arith.constant 0 : index
    %c216 = arith.constant 216 : index
    %428 = vector.load %arg5[%c0_224, %c216] : memref<16x521xf32, #tpu.memory_space<vmem>>, vector<16x8xf32>
    %c0_225 = arith.constant 0 : index
    %c232 = arith.constant 232 : index
    %429 = vector.load %arg5[%c0_225, %c232] : memref<16x521xf32, #tpu.memory_space<vmem>>, vector<16x8xf32>
    %c8_226 = arith.constant 8 : index
    %c240_227 = arith.constant 240 : index
    %430 = vector.load %arg5[%c8_226, %c240_227] : memref<16x521xf32, #tpu.memory_space<vmem>>, vector<8x16xf32>
    %c18_228 = arith.constant 18 : index
    %c8_229 = arith.constant 8 : index
    %431 = vector.load %arg7[%c18_228, %c8_229] : memref<53x32xf32, #tpu.memory_space<vmem>>, vector<1x8xf32>
    %c19_230 = arith.constant 19 : index
    %c8_231 = arith.constant 8 : index
    %432 = vector.load %arg7[%c19_230, %c8_231] : memref<53x32xf32, #tpu.memory_space<vmem>>, vector<1x8xf32>
    %c20_232 = arith.constant 20 : index
    %c8_233 = arith.constant 8 : index
    %433 = vector.load %arg7[%c20_232, %c8_233] : memref<53x32xf32, #tpu.memory_space<vmem>>, vector<1x8xf32>
    %cst_234 = arith.constant dense<0.000000e+00> : vector<5x8xf32>
    %434 = tpu.matmul %387, %427, %cst_234 {dimension_numbers = #tpu.dot_dimension_numbers<[1], [0], [0], [1], [0, 0, 1, 1], [], []>} : vector<5x16xf32>, vector<16x8xf32>, vector<5x8xf32> -> vector<5x8xf32>
    %435 = vector.broadcast %431 : vector<1x8xf32> to vector<5x8xf32>
    %436 = arith.addf %434, %435 : vector<5x8xf32>
    %cst_235 = arith.constant dense<0.000000e+00> : vector<5x8xf32>
    %437 = tpu.matmul %285, %428, %cst_235 {dimension_numbers = #tpu.dot_dimension_numbers<[1], [0], [0], [1], [0, 0, 1, 1], [], []>} : vector<5x16xf32>, vector<16x8xf32>, vector<5x8xf32> -> vector<5x8xf32>
    %438 = vector.broadcast %432 : vector<1x8xf32> to vector<5x8xf32>
    %439 = arith.addf %437, %438 : vector<5x8xf32>
    %cst_236 = arith.constant dense<0.000000e+00> : vector<5x8xf32>
    %440 = tpu.matmul %285, %429, %cst_236 {dimension_numbers = #tpu.dot_dimension_numbers<[1], [0], [0], [1], [0, 0, 1, 1], [], []>} : vector<5x16xf32>, vector<16x8xf32>, vector<5x8xf32> -> vector<5x8xf32>
    %441 = vector.broadcast %433 : vector<1x8xf32> to vector<5x8xf32>
    %442 = arith.addf %440, %441 : vector<5x8xf32>
    %443 = tpu.transpose %439, [1, 0] : vector<5x8xf32> -> vector<8x5xf32>
    %cst_237 = arith.constant dense<0.000000e+00> : vector<5x5xf32>
    %444 = tpu.matmul %436, %443, %cst_237 {dimension_numbers = #tpu.dot_dimension_numbers<[1], [0], [0], [1], [0, 0, 1, 1], [], []>} : vector<5x8xf32>, vector<8x5xf32>, vector<5x5xf32> -> vector<5x5xf32>
    %cst_238 = arith.constant 1.250000e-01 : f32
    %445 = vector.broadcast %cst_238 : f32 to vector<5x5xf32>
    %446 = arith.mulf %444, %445 : vector<5x5xf32>
    %cst_239 = arith.constant -1.000000e+09 : f32
    %447 = vector.broadcast %cst_239 : f32 to vector<5x5xf32>
    %448 = arith.select %8, %447, %446 : vector<5x5xi1>, vector<5x5xf32>
    %cst_240 = arith.constant dense<0xFF800000> : vector<5xf32>
    %449 = vector.multi_reduction <maximumf>, %448, %cst_240 [1] : vector<5x5xf32> to vector<5xf32>
    %450 = vector.shape_cast %449 : vector<5xf32> to vector<5x1xf32>
    %451 = vector.broadcast %450 : vector<5x1xf32> to vector<5x5xf32>
    %452 = arith.subf %448, %451 : vector<5x5xf32>
    %453 = math.exp %452 : vector<5x5xf32>
    %cst_241 = arith.constant dense<0.000000e+00> : vector<5xf32>
    %454 = vector.multi_reduction <add>, %453, %cst_241 [1] : vector<5x5xf32> to vector<5xf32>
    %455 = vector.shape_cast %454 : vector<5xf32> to vector<5x1xf32>
    %456 = vector.broadcast %455 : vector<5x1xf32> to vector<5x5xf32>
    %457 = arith.divf %453, %456 : vector<5x5xf32>
    %c9_242 = arith.constant 9 : index
    %c0_243 = arith.constant 0 : index
    %c0_244 = arith.constant 0 : index
    %458 = vector.load %arg9[%c9_242, %c0_243, %c0_244] : memref<12x5x5xf32, #tpu.memory_space<vmem>>, vector<1x5x5xf32>
    %459 = vector.shape_cast %458 : vector<1x5x5xf32> to vector<5x5xf32>
    %460 = vector.shape_cast %457 : vector<5x5xf32> to vector<1x5x5xf32>
    tpu.vector_store %arg9[%c9_242, %c0_243, %c0_244], %460 {strides = array<i32>} : memref<12x5x5xf32, #tpu.memory_space<vmem>>, vector<1x5x5xf32>,
    %cst_245 = arith.constant dense<0.000000e+00> : vector<5x8xf32>
    %461 = tpu.matmul %448, %442, %cst_245 {dimension_numbers = #tpu.dot_dimension_numbers<[1], [0], [0], [1], [0, 0, 1, 1], [], []>} : vector<5x5xf32>, vector<5x8xf32>, vector<5x8xf32> -> vector<5x8xf32>
    %cst_246 = arith.constant dense<0.000000e+00> : vector<5x16xf32>
    %462 = tpu.matmul %461, %430, %cst_246 {dimension_numbers = #tpu.dot_dimension_numbers<[1], [0], [0], [1], [0, 0, 1, 1], [], []>} : vector<5x8xf32>, vector<8x16xf32>, vector<5x16xf32> -> vector<5x16xf32>
    %463 = arith.addf %426, %462 : vector<5x16xf32>
    %c22 = arith.constant 22 : index
    %c0_247 = arith.constant 0 : index
    %464 = vector.load %arg7[%c22, %c0_247] : memref<53x32xf32, #tpu.memory_space<vmem>>, vector<1x16xf32>
    %c23 = arith.constant 23 : index
    %c0_248 = arith.constant 0 : index
    %465 = vector.load %arg7[%c23, %c0_248] : memref<53x32xf32, #tpu.memory_space<vmem>>, vector<1x16xf32>
    %466 = arith.addf %463, %387 : vector<5x16xf32>
    %cst_249 = arith.constant dense<0.000000e+00> : vector<5xf32>
    %467 = vector.multi_reduction <add>, %466, %cst_249 [1] : vector<5x16xf32> to vector<5xf32>
    %468 = vector.shape_cast %467 : vector<5xf32> to vector<5x1xf32>
    %cst_250 = arith.constant 1.600000e+01 : f32
    %469 = vector.broadcast %cst_250 : f32 to vector<5x1xf32>
    %470 = arith.divf %468, %469 : vector<5x1xf32>
    %471 = vector.broadcast %470 : vector<5x1xf32> to vector<5x16xf32>
    %472 = arith.subf %466, %471 : vector<5x16xf32>
    %473 = arith.mulf %472, %472 : vector<5x16xf32>
    %cst_251 = arith.constant dense<0.000000e+00> : vector<5xf32>
    %474 = vector.multi_reduction <add>, %473, %cst_251 [1] : vector<5x16xf32> to vector<5xf32>
    %475 = vector.shape_cast %474 : vector<5xf32> to vector<5x1xf32>
    %cst_252 = arith.constant 1.600000e+01 : f32
    %476 = vector.broadcast %cst_252 : f32 to vector<5x1xf32>
    %477 = arith.divf %475, %476 : vector<5x1xf32>
    %478 = vector.broadcast %470 : vector<5x1xf32> to vector<5x16xf32>
    %479 = arith.subf %466, %478 : vector<5x16xf32>
    %cst_253 = arith.constant 9.99999974E-6 : f32
    %480 = vector.broadcast %cst_253 : f32 to vector<5x1xf32>
    %481 = arith.addf %477, %480 : vector<5x1xf32>
    %482 = math.rsqrt %481 : vector<5x1xf32>
    %483 = vector.broadcast %482 : vector<5x1xf32> to vector<5x16xf32>
    %484 = arith.mulf %479, %483 : vector<5x16xf32>
    %485 = vector.broadcast %464 : vector<1x16xf32> to vector<5x16xf32>
    %486 = arith.mulf %484, %485 : vector<5x16xf32>
    %487 = vector.broadcast %465 : vector<1x16xf32> to vector<5x16xf32>
    %488 = arith.addf %486, %487 : vector<5x16xf32>
    %c0_254 = arith.constant 0 : index
    %c448 = arith.constant 448 : index
    %489 = vector.load %arg5[%c0_254, %c448] : memref<16x521xf32, #tpu.memory_space<vmem>>, vector<16x32xf32>
    %c44 = arith.constant 44 : index
    %c0_255 = arith.constant 0 : index
    %490 = vector.load %arg7[%c44, %c0_255] : memref<53x32xf32, #tpu.memory_space<vmem>>, vector<1x32xf32>
    %c0_256 = arith.constant 0 : index
    %c32_257 = arith.constant 32 : index
    %491 = vector.load %arg6[%c0_256, %c32_257] : memref<32x64xf32, #tpu.memory_space<vmem>>, vector<32x16xf32>
    %c45 = arith.constant 45 : index
    %c0_258 = arith.constant 0 : index
    %492 = vector.load %arg7[%c45, %c0_258] : memref<53x32xf32, #tpu.memory_space<vmem>>, vector<1x16xf32>
    %c46 = arith.constant 46 : index
    %c0_259 = arith.constant 0 : index
    %493 = vector.load %arg7[%c46, %c0_259] : memref<53x32xf32, #tpu.memory_space<vmem>>, vector<1x16xf32>
    %c47 = arith.constant 47 : index
    %c0_260 = arith.constant 0 : index
    %494 = vector.load %arg7[%c47, %c0_260] : memref<53x32xf32, #tpu.memory_space<vmem>>, vector<1x16xf32>
    %cst_261 = arith.constant dense<0.000000e+00> : vector<5x32xf32>
    %495 = tpu.matmul %488, %489, %cst_261 {dimension_numbers = #tpu.dot_dimension_numbers<[1], [0], [0], [1], [0, 0, 1, 1], [], []>} : vector<5x16xf32>, vector<16x32xf32>, vector<5x32xf32> -> vector<5x32xf32>
    %496 = vector.broadcast %490 : vector<1x32xf32> to vector<5x32xf32>
    %497 = arith.addf %495, %496 : vector<5x32xf32>
    %cst_262 = arith.constant dense<0.000000e+00> : vector<5x16xf32>
    %498 = tpu.matmul %497, %491, %cst_262 {dimension_numbers = #tpu.dot_dimension_numbers<[1], [0], [0], [1], [0, 0, 1, 1], [], []>} : vector<5x32xf32>, vector<32x16xf32>, vector<5x16xf32> -> vector<5x16xf32>
    %499 = vector.broadcast %492 : vector<1x16xf32> to vector<5x16xf32>
    %500 = arith.addf %498, %499 : vector<5x16xf32>
    %cst_263 = arith.constant 0.000000e+00 : f32
    %501 = vector.broadcast %cst_263 : f32 to vector<5x16xf32>
    %502 = arith.maximumf %500, %501 : vector<5x16xf32>
    %503 = arith.addf %502, %488 : vector<5x16xf32>
    %cst_264 = arith.constant dense<0.000000e+00> : vector<5xf32>
    %504 = vector.multi_reduction <add>, %503, %cst_264 [1] : vector<5x16xf32> to vector<5xf32>
    %505 = vector.shape_cast %504 : vector<5xf32> to vector<5x1xf32>
    %cst_265 = arith.constant 1.600000e+01 : f32
    %506 = vector.broadcast %cst_265 : f32 to vector<5x1xf32>
    %507 = arith.divf %505, %506 : vector<5x1xf32>
    %508 = vector.broadcast %507 : vector<5x1xf32> to vector<5x16xf32>
    %509 = arith.subf %503, %508 : vector<5x16xf32>
    %510 = arith.mulf %509, %509 : vector<5x16xf32>
    %cst_266 = arith.constant dense<0.000000e+00> : vector<5xf32>
    %511 = vector.multi_reduction <add>, %510, %cst_266 [1] : vector<5x16xf32> to vector<5xf32>
    %512 = vector.shape_cast %511 : vector<5xf32> to vector<5x1xf32>
    %cst_267 = arith.constant 1.600000e+01 : f32
    %513 = vector.broadcast %cst_267 : f32 to vector<5x1xf32>
    %514 = arith.divf %512, %513 : vector<5x1xf32>
    %515 = vector.broadcast %507 : vector<5x1xf32> to vector<5x16xf32>
    %516 = arith.subf %503, %515 : vector<5x16xf32>
    %cst_268 = arith.constant 9.99999974E-6 : f32
    %517 = vector.broadcast %cst_268 : f32 to vector<5x1xf32>
    %518 = arith.addf %514, %517 : vector<5x1xf32>
    %519 = math.rsqrt %518 : vector<5x1xf32>
    %520 = vector.broadcast %519 : vector<5x1xf32> to vector<5x16xf32>
    %521 = arith.mulf %516, %520 : vector<5x16xf32>
    %522 = vector.broadcast %493 : vector<1x16xf32> to vector<5x16xf32>
    %523 = arith.mulf %521, %522 : vector<5x16xf32>
    %524 = vector.broadcast %494 : vector<1x16xf32> to vector<5x16xf32>
    %525 = arith.addf %523, %524 : vector<5x16xf32>
    %c27 = arith.constant 27 : index
    %c0_269 = arith.constant 0 : index
    %526 = vector.load %arg7[%c27, %c0_269] : memref<53x32xf32, #tpu.memory_space<vmem>>, vector<1x16xf32>
    %c0_270 = arith.constant 0 : index
    %c256 = arith.constant 256 : index
    %527 = vector.load %arg5[%c0_270, %c256] : memref<16x521xf32, #tpu.memory_space<vmem>>, vector<16x8xf32>
    %c0_271 = arith.constant 0 : index
    %c272 = arith.constant 272 : index
    %528 = vector.load %arg5[%c0_271, %c272] : memref<16x521xf32, #tpu.memory_space<vmem>>, vector<16x8xf32>
    %c0_272 = arith.constant 0 : index
    %c288 = arith.constant 288 : index
    %529 = vector.load %arg5[%c0_272, %c288] : memref<16x521xf32, #tpu.memory_space<vmem>>, vector<16x8xf32>
    %c0_273 = arith.constant 0 : index
    %c304 = arith.constant 304 : index
    %530 = vector.load %arg5[%c0_273, %c304] : memref<16x521xf32, #tpu.memory_space<vmem>>, vector<8x16xf32>
    %c24_274 = arith.constant 24 : index
    %c0_275 = arith.constant 0 : index
    %531 = vector.load %arg7[%c24_274, %c0_275] : memref<53x32xf32, #tpu.memory_space<vmem>>, vector<1x8xf32>
    %c25 = arith.constant 25 : index
    %c0_276 = arith.constant 0 : index
    %532 = vector.load %arg7[%c25, %c0_276] : memref<53x32xf32, #tpu.memory_space<vmem>>, vector<1x8xf32>
    %c26 = arith.constant 26 : index
    %c0_277 = arith.constant 0 : index
    %533 = vector.load %arg7[%c26, %c0_277] : memref<53x32xf32, #tpu.memory_space<vmem>>, vector<1x8xf32>
    %cst_278 = arith.constant dense<0.000000e+00> : vector<5x8xf32>
    %534 = tpu.matmul %525, %527, %cst_278 {dimension_numbers = #tpu.dot_dimension_numbers<[1], [0], [0], [1], [0, 0, 1, 1], [], []>} : vector<5x16xf32>, vector<16x8xf32>, vector<5x8xf32> -> vector<5x8xf32>
    %535 = vector.broadcast %531 : vector<1x8xf32> to vector<5x8xf32>
    %536 = arith.addf %534, %535 : vector<5x8xf32>
    %cst_279 = arith.constant dense<0.000000e+00> : vector<5x8xf32>
    %537 = tpu.matmul %525, %528, %cst_279 {dimension_numbers = #tpu.dot_dimension_numbers<[1], [0], [0], [1], [0, 0, 1, 1], [], []>} : vector<5x16xf32>, vector<16x8xf32>, vector<5x8xf32> -> vector<5x8xf32>
    %538 = vector.broadcast %532 : vector<1x8xf32> to vector<5x8xf32>
    %539 = arith.addf %537, %538 : vector<5x8xf32>
    %cst_280 = arith.constant dense<0.000000e+00> : vector<5x8xf32>
    %540 = tpu.matmul %525, %529, %cst_280 {dimension_numbers = #tpu.dot_dimension_numbers<[1], [0], [0], [1], [0, 0, 1, 1], [], []>} : vector<5x16xf32>, vector<16x8xf32>, vector<5x8xf32> -> vector<5x8xf32>
    %541 = vector.broadcast %533 : vector<1x8xf32> to vector<5x8xf32>
    %542 = arith.addf %540, %541 : vector<5x8xf32>
    %543 = tpu.transpose %539, [1, 0] : vector<5x8xf32> -> vector<8x5xf32>
    %cst_281 = arith.constant dense<0.000000e+00> : vector<5x5xf32>
    %544 = tpu.matmul %536, %543, %cst_281 {dimension_numbers = #tpu.dot_dimension_numbers<[1], [0], [0], [1], [0, 0, 1, 1], [], []>} : vector<5x8xf32>, vector<8x5xf32>, vector<5x5xf32> -> vector<5x5xf32>
    %cst_282 = arith.constant 1.250000e-01 : f32
    %545 = vector.broadcast %cst_282 : f32 to vector<5x5xf32>
    %546 = arith.mulf %544, %545 : vector<5x5xf32>
    %cst_283 = arith.constant -1.000000e+09 : f32
    %547 = vector.broadcast %cst_283 : f32 to vector<5x5xf32>
    %548 = arith.select %5, %547, %546 : vector<5x5xi1>, vector<5x5xf32>
    %cst_284 = arith.constant dense<0xFF800000> : vector<5xf32>
    %549 = vector.multi_reduction <maximumf>, %548, %cst_284 [1] : vector<5x5xf32> to vector<5xf32>
    %550 = vector.shape_cast %549 : vector<5xf32> to vector<5x1xf32>
    %551 = vector.broadcast %550 : vector<5x1xf32> to vector<5x5xf32>
    %552 = arith.subf %548, %551 : vector<5x5xf32>
    %553 = math.exp %552 : vector<5x5xf32>
    %cst_285 = arith.constant dense<0.000000e+00> : vector<5xf32>
    %554 = vector.multi_reduction <add>, %553, %cst_285 [1] : vector<5x5xf32> to vector<5xf32>
    %555 = vector.shape_cast %554 : vector<5xf32> to vector<5x1xf32>
    %556 = vector.broadcast %555 : vector<5x1xf32> to vector<5x5xf32>
    %557 = arith.divf %553, %556 : vector<5x5xf32>
    %c6_286 = arith.constant 6 : index
    %c0_287 = arith.constant 0 : index
    %c0_288 = arith.constant 0 : index
    %558 = vector.load %arg9[%c6_286, %c0_287, %c0_288] : memref<12x5x5xf32, #tpu.memory_space<vmem>>, vector<1x5x5xf32>
    %559 = vector.shape_cast %558 : vector<1x5x5xf32> to vector<5x5xf32>
    %560 = vector.shape_cast %557 : vector<5x5xf32> to vector<1x5x5xf32>
    tpu.vector_store %arg9[%c6_286, %c0_287, %c0_288], %560 {strides = array<i32>} : memref<12x5x5xf32, #tpu.memory_space<vmem>>, vector<1x5x5xf32>,
    %cst_289 = arith.constant dense<0.000000e+00> : vector<5x8xf32>
    %561 = tpu.matmul %548, %542, %cst_289 {dimension_numbers = #tpu.dot_dimension_numbers<[1], [0], [0], [1], [0, 0, 1, 1], [], []>} : vector<5x5xf32>, vector<5x8xf32>, vector<5x8xf32> -> vector<5x8xf32>
    %cst_290 = arith.constant dense<0.000000e+00> : vector<5x16xf32>
    %562 = tpu.matmul %561, %530, %cst_290 {dimension_numbers = #tpu.dot_dimension_numbers<[1], [0], [0], [1], [0, 0, 1, 1], [], []>} : vector<5x8xf32>, vector<8x16xf32>, vector<5x16xf32> -> vector<5x16xf32>
    %563 = vector.broadcast %526 : vector<1x16xf32> to vector<5x16xf32>
    %564 = arith.addf %563, %562 : vector<5x16xf32>
    %c0_291 = arith.constant 0 : index
    %c264 = arith.constant 264 : index
    %565 = vector.load %arg5[%c0_291, %c264] : memref<16x521xf32, #tpu.memory_space<vmem>>, vector<16x8xf32>
    %c0_292 = arith.constant 0 : index
    %c280 = arith.constant 280 : index
    %566 = vector.load %arg5[%c0_292, %c280] : memref<16x521xf32, #tpu.memory_space<vmem>>, vector<16x8xf32>
    %c0_293 = arith.constant 0 : index
    %c296 = arith.constant 296 : index
    %567 = vector.load %arg5[%c0_293, %c296] : memref<16x521xf32, #tpu.memory_space<vmem>>, vector<16x8xf32>
    %c8_294 = arith.constant 8 : index
    %c304_295 = arith.constant 304 : index
    %568 = vector.load %arg5[%c8_294, %c304_295] : memref<16x521xf32, #tpu.memory_space<vmem>>, vector<8x16xf32>
    %c24_296 = arith.constant 24 : index
    %c8_297 = arith.constant 8 : index
    %569 = vector.load %arg7[%c24_296, %c8_297] : memref<53x32xf32, #tpu.memory_space<vmem>>, vector<1x8xf32>
    %c25_298 = arith.constant 25 : index
    %c8_299 = arith.constant 8 : index
    %570 = vector.load %arg7[%c25_298, %c8_299] : memref<53x32xf32, #tpu.memory_space<vmem>>, vector<1x8xf32>
    %c26_300 = arith.constant 26 : index
    %c8_301 = arith.constant 8 : index
    %571 = vector.load %arg7[%c26_300, %c8_301] : memref<53x32xf32, #tpu.memory_space<vmem>>, vector<1x8xf32>
    %cst_302 = arith.constant dense<0.000000e+00> : vector<5x8xf32>
    %572 = tpu.matmul %525, %565, %cst_302 {dimension_numbers = #tpu.dot_dimension_numbers<[1], [0], [0], [1], [0, 0, 1, 1], [], []>} : vector<5x16xf32>, vector<16x8xf32>, vector<5x8xf32> -> vector<5x8xf32>
    %573 = vector.broadcast %569 : vector<1x8xf32> to vector<5x8xf32>
    %574 = arith.addf %572, %573 : vector<5x8xf32>
    %cst_303 = arith.constant dense<0.000000e+00> : vector<5x8xf32>
    %575 = tpu.matmul %525, %566, %cst_303 {dimension_numbers = #tpu.dot_dimension_numbers<[1], [0], [0], [1], [0, 0, 1, 1], [], []>} : vector<5x16xf32>, vector<16x8xf32>, vector<5x8xf32> -> vector<5x8xf32>
    %576 = vector.broadcast %570 : vector<1x8xf32> to vector<5x8xf32>
    %577 = arith.addf %575, %576 : vector<5x8xf32>
    %cst_304 = arith.constant dense<0.000000e+00> : vector<5x8xf32>
    %578 = tpu.matmul %525, %567, %cst_304 {dimension_numbers = #tpu.dot_dimension_numbers<[1], [0], [0], [1], [0, 0, 1, 1], [], []>} : vector<5x16xf32>, vector<16x8xf32>, vector<5x8xf32> -> vector<5x8xf32>
    %579 = vector.broadcast %571 : vector<1x8xf32> to vector<5x8xf32>
    %580 = arith.addf %578, %579 : vector<5x8xf32>
    %581 = tpu.transpose %577, [1, 0] : vector<5x8xf32> -> vector<8x5xf32>
    %cst_305 = arith.constant dense<0.000000e+00> : vector<5x5xf32>
    %582 = tpu.matmul %574, %581, %cst_305 {dimension_numbers = #tpu.dot_dimension_numbers<[1], [0], [0], [1], [0, 0, 1, 1], [], []>} : vector<5x8xf32>, vector<8x5xf32>, vector<5x5xf32> -> vector<5x5xf32>
    %cst_306 = arith.constant 1.250000e-01 : f32
    %583 = vector.broadcast %cst_306 : f32 to vector<5x5xf32>
    %584 = arith.mulf %582, %583 : vector<5x5xf32>
    %cst_307 = arith.constant -1.000000e+09 : f32
    %585 = vector.broadcast %cst_307 : f32 to vector<5x5xf32>
    %586 = arith.select %5, %585, %584 : vector<5x5xi1>, vector<5x5xf32>
    %cst_308 = arith.constant dense<0xFF800000> : vector<5xf32>
    %587 = vector.multi_reduction <maximumf>, %586, %cst_308 [1] : vector<5x5xf32> to vector<5xf32>
    %588 = vector.shape_cast %587 : vector<5xf32> to vector<5x1xf32>
    %589 = vector.broadcast %588 : vector<5x1xf32> to vector<5x5xf32>
    %590 = arith.subf %586, %589 : vector<5x5xf32>
    %591 = math.exp %590 : vector<5x5xf32>
    %cst_309 = arith.constant dense<0.000000e+00> : vector<5xf32>
    %592 = vector.multi_reduction <add>, %591, %cst_309 [1] : vector<5x5xf32> to vector<5xf32>
    %593 = vector.shape_cast %592 : vector<5xf32> to vector<5x1xf32>
    %594 = vector.broadcast %593 : vector<5x1xf32> to vector<5x5xf32>
    %595 = arith.divf %591, %594 : vector<5x5xf32>
    %c7_310 = arith.constant 7 : index
    %c0_311 = arith.constant 0 : index
    %c0_312 = arith.constant 0 : index
    %596 = vector.load %arg9[%c7_310, %c0_311, %c0_312] : memref<12x5x5xf32, #tpu.memory_space<vmem>>, vector<1x5x5xf32>
    %597 = vector.shape_cast %596 : vector<1x5x5xf32> to vector<5x5xf32>
    %598 = vector.shape_cast %595 : vector<5x5xf32> to vector<1x5x5xf32>
    tpu.vector_store %arg9[%c7_310, %c0_311, %c0_312], %598 {strides = array<i32>} : memref<12x5x5xf32, #tpu.memory_space<vmem>>, vector<1x5x5xf32>,
    %cst_313 = arith.constant dense<0.000000e+00> : vector<5x8xf32>
    %599 = tpu.matmul %586, %580, %cst_313 {dimension_numbers = #tpu.dot_dimension_numbers<[1], [0], [0], [1], [0, 0, 1, 1], [], []>} : vector<5x5xf32>, vector<5x8xf32>, vector<5x8xf32> -> vector<5x8xf32>
    %cst_314 = arith.constant dense<0.000000e+00> : vector<5x16xf32>
    %600 = tpu.matmul %599, %568, %cst_314 {dimension_numbers = #tpu.dot_dimension_numbers<[1], [0], [0], [1], [0, 0, 1, 1], [], []>} : vector<5x8xf32>, vector<8x16xf32>, vector<5x16xf32> -> vector<5x16xf32>
    %601 = arith.addf %564, %600 : vector<5x16xf32>
    %c28 = arith.constant 28 : index
    %c0_315 = arith.constant 0 : index
    %602 = vector.load %arg7[%c28, %c0_315] : memref<53x32xf32, #tpu.memory_space<vmem>>, vector<1x16xf32>
    %c29 = arith.constant 29 : index
    %c0_316 = arith.constant 0 : index
    %603 = vector.load %arg7[%c29, %c0_316] : memref<53x32xf32, #tpu.memory_space<vmem>>, vector<1x16xf32>
    %604 = arith.addf %601, %525 : vector<5x16xf32>
    %cst_317 = arith.constant dense<0.000000e+00> : vector<5xf32>
    %605 = vector.multi_reduction <add>, %604, %cst_317 [1] : vector<5x16xf32> to vector<5xf32>
    %606 = vector.shape_cast %605 : vector<5xf32> to vector<5x1xf32>
    %cst_318 = arith.constant 1.600000e+01 : f32
    %607 = vector.broadcast %cst_318 : f32 to vector<5x1xf32>
    %608 = arith.divf %606, %607 : vector<5x1xf32>
    %609 = vector.broadcast %608 : vector<5x1xf32> to vector<5x16xf32>
    %610 = arith.subf %604, %609 : vector<5x16xf32>
    %611 = arith.mulf %610, %610 : vector<5x16xf32>
    %cst_319 = arith.constant dense<0.000000e+00> : vector<5xf32>
    %612 = vector.multi_reduction <add>, %611, %cst_319 [1] : vector<5x16xf32> to vector<5xf32>
    %613 = vector.shape_cast %612 : vector<5xf32> to vector<5x1xf32>
    %cst_320 = arith.constant 1.600000e+01 : f32
    %614 = vector.broadcast %cst_320 : f32 to vector<5x1xf32>
    %615 = arith.divf %613, %614 : vector<5x1xf32>
    %616 = vector.broadcast %608 : vector<5x1xf32> to vector<5x16xf32>
    %617 = arith.subf %604, %616 : vector<5x16xf32>
    %cst_321 = arith.constant 9.99999974E-6 : f32
    %618 = vector.broadcast %cst_321 : f32 to vector<5x1xf32>
    %619 = arith.addf %615, %618 : vector<5x1xf32>
    %620 = math.rsqrt %619 : vector<5x1xf32>
    %621 = vector.broadcast %620 : vector<5x1xf32> to vector<5x16xf32>
    %622 = arith.mulf %617, %621 : vector<5x16xf32>
    %623 = vector.broadcast %602 : vector<1x16xf32> to vector<5x16xf32>
    %624 = arith.mulf %622, %623 : vector<5x16xf32>
    %625 = vector.broadcast %603 : vector<1x16xf32> to vector<5x16xf32>
    %626 = arith.addf %624, %625 : vector<5x16xf32>
    %c33 = arith.constant 33 : index
    %c0_322 = arith.constant 0 : index
    %627 = vector.load %arg7[%c33, %c0_322] : memref<53x32xf32, #tpu.memory_space<vmem>>, vector<1x16xf32>
    %c0_323 = arith.constant 0 : index
    %c320 = arith.constant 320 : index
    %628 = vector.load %arg5[%c0_323, %c320] : memref<16x521xf32, #tpu.memory_space<vmem>>, vector<16x8xf32>
    %c0_324 = arith.constant 0 : index
    %c336 = arith.constant 336 : index
    %629 = vector.load %arg5[%c0_324, %c336] : memref<16x521xf32, #tpu.memory_space<vmem>>, vector<16x8xf32>
    %c0_325 = arith.constant 0 : index
    %c352 = arith.constant 352 : index
    %630 = vector.load %arg5[%c0_325, %c352] : memref<16x521xf32, #tpu.memory_space<vmem>>, vector<16x8xf32>
    %c0_326 = arith.constant 0 : index
    %c368 = arith.constant 368 : index
    %631 = vector.load %arg5[%c0_326, %c368] : memref<16x521xf32, #tpu.memory_space<vmem>>, vector<8x16xf32>
    %c30 = arith.constant 30 : index
    %c0_327 = arith.constant 0 : index
    %632 = vector.load %arg7[%c30, %c0_327] : memref<53x32xf32, #tpu.memory_space<vmem>>, vector<1x8xf32>
    %c31 = arith.constant 31 : index
    %c0_328 = arith.constant 0 : index
    %633 = vector.load %arg7[%c31, %c0_328] : memref<53x32xf32, #tpu.memory_space<vmem>>, vector<1x8xf32>
    %c32_329 = arith.constant 32 : index
    %c0_330 = arith.constant 0 : index
    %634 = vector.load %arg7[%c32_329, %c0_330] : memref<53x32xf32, #tpu.memory_space<vmem>>, vector<1x8xf32>
    %cst_331 = arith.constant dense<0.000000e+00> : vector<5x8xf32>
    %635 = tpu.matmul %626, %628, %cst_331 {dimension_numbers = #tpu.dot_dimension_numbers<[1], [0], [0], [1], [0, 0, 1, 1], [], []>} : vector<5x16xf32>, vector<16x8xf32>, vector<5x8xf32> -> vector<5x8xf32>
    %636 = vector.broadcast %632 : vector<1x8xf32> to vector<5x8xf32>
    %637 = arith.addf %635, %636 : vector<5x8xf32>
    %cst_332 = arith.constant dense<0.000000e+00> : vector<5x8xf32>
    %638 = tpu.matmul %285, %629, %cst_332 {dimension_numbers = #tpu.dot_dimension_numbers<[1], [0], [0], [1], [0, 0, 1, 1], [], []>} : vector<5x16xf32>, vector<16x8xf32>, vector<5x8xf32> -> vector<5x8xf32>
    %639 = vector.broadcast %633 : vector<1x8xf32> to vector<5x8xf32>
    %640 = arith.addf %638, %639 : vector<5x8xf32>
    %cst_333 = arith.constant dense<0.000000e+00> : vector<5x8xf32>
    %641 = tpu.matmul %285, %630, %cst_333 {dimension_numbers = #tpu.dot_dimension_numbers<[1], [0], [0], [1], [0, 0, 1, 1], [], []>} : vector<5x16xf32>, vector<16x8xf32>, vector<5x8xf32> -> vector<5x8xf32>
    %642 = vector.broadcast %634 : vector<1x8xf32> to vector<5x8xf32>
    %643 = arith.addf %641, %642 : vector<5x8xf32>
    %644 = tpu.transpose %640, [1, 0] : vector<5x8xf32> -> vector<8x5xf32>
    %cst_334 = arith.constant dense<0.000000e+00> : vector<5x5xf32>
    %645 = tpu.matmul %637, %644, %cst_334 {dimension_numbers = #tpu.dot_dimension_numbers<[1], [0], [0], [1], [0, 0, 1, 1], [], []>} : vector<5x8xf32>, vector<8x5xf32>, vector<5x5xf32> -> vector<5x5xf32>
    %cst_335 = arith.constant 1.250000e-01 : f32
    %646 = vector.broadcast %cst_335 : f32 to vector<5x5xf32>
    %647 = arith.mulf %645, %646 : vector<5x5xf32>
    %cst_336 = arith.constant -1.000000e+09 : f32
    %648 = vector.broadcast %cst_336 : f32 to vector<5x5xf32>
    %649 = arith.select %8, %648, %647 : vector<5x5xi1>, vector<5x5xf32>
    %cst_337 = arith.constant dense<0xFF800000> : vector<5xf32>
    %650 = vector.multi_reduction <maximumf>, %649, %cst_337 [1] : vector<5x5xf32> to vector<5xf32>
    %651 = vector.shape_cast %650 : vector<5xf32> to vector<5x1xf32>
    %652 = vector.broadcast %651 : vector<5x1xf32> to vector<5x5xf32>
    %653 = arith.subf %649, %652 : vector<5x5xf32>
    %654 = math.exp %653 : vector<5x5xf32>
    %cst_338 = arith.constant dense<0.000000e+00> : vector<5xf32>
    %655 = vector.multi_reduction <add>, %654, %cst_338 [1] : vector<5x5xf32> to vector<5xf32>
    %656 = vector.shape_cast %655 : vector<5xf32> to vector<5x1xf32>
    %657 = vector.broadcast %656 : vector<5x1xf32> to vector<5x5xf32>
    %658 = arith.divf %654, %657 : vector<5x5xf32>
    %c10_339 = arith.constant 10 : index
    %c0_340 = arith.constant 0 : index
    %c0_341 = arith.constant 0 : index
    %659 = vector.load %arg9[%c10_339, %c0_340, %c0_341] : memref<12x5x5xf32, #tpu.memory_space<vmem>>, vector<1x5x5xf32>
    %660 = vector.shape_cast %659 : vector<1x5x5xf32> to vector<5x5xf32>
    %661 = vector.shape_cast %658 : vector<5x5xf32> to vector<1x5x5xf32>
    tpu.vector_store %arg9[%c10_339, %c0_340, %c0_341], %661 {strides = array<i32>} : memref<12x5x5xf32, #tpu.memory_space<vmem>>, vector<1x5x5xf32>,
    %cst_342 = arith.constant dense<0.000000e+00> : vector<5x8xf32>
    %662 = tpu.matmul %649, %643, %cst_342 {dimension_numbers = #tpu.dot_dimension_numbers<[1], [0], [0], [1], [0, 0, 1, 1], [], []>} : vector<5x5xf32>, vector<5x8xf32>, vector<5x8xf32> -> vector<5x8xf32>
    %cst_343 = arith.constant dense<0.000000e+00> : vector<5x16xf32>
    %663 = tpu.matmul %662, %631, %cst_343 {dimension_numbers = #tpu.dot_dimension_numbers<[1], [0], [0], [1], [0, 0, 1, 1], [], []>} : vector<5x8xf32>, vector<8x16xf32>, vector<5x16xf32> -> vector<5x16xf32>
    %664 = vector.broadcast %627 : vector<1x16xf32> to vector<5x16xf32>
    %665 = arith.addf %664, %663 : vector<5x16xf32>
    %c0_344 = arith.constant 0 : index
    %c328 = arith.constant 328 : index
    %666 = vector.load %arg5[%c0_344, %c328] : memref<16x521xf32, #tpu.memory_space<vmem>>, vector<16x8xf32>
    %c0_345 = arith.constant 0 : index
    %c344 = arith.constant 344 : index
    %667 = vector.load %arg5[%c0_345, %c344] : memref<16x521xf32, #tpu.memory_space<vmem>>, vector<16x8xf32>
    %c0_346 = arith.constant 0 : index
    %c360 = arith.constant 360 : index
    %668 = vector.load %arg5[%c0_346, %c360] : memref<16x521xf32, #tpu.memory_space<vmem>>, vector<16x8xf32>
    %c8_347 = arith.constant 8 : index
    %c368_348 = arith.constant 368 : index
    %669 = vector.load %arg5[%c8_347, %c368_348] : memref<16x521xf32, #tpu.memory_space<vmem>>, vector<8x16xf32>
    %c30_349 = arith.constant 30 : index
    %c8_350 = arith.constant 8 : index
    %670 = vector.load %arg7[%c30_349, %c8_350] : memref<53x32xf32, #tpu.memory_space<vmem>>, vector<1x8xf32>
    %c31_351 = arith.constant 31 : index
    %c8_352 = arith.constant 8 : index
    %671 = vector.load %arg7[%c31_351, %c8_352] : memref<53x32xf32, #tpu.memory_space<vmem>>, vector<1x8xf32>
    %c32_353 = arith.constant 32 : index
    %c8_354 = arith.constant 8 : index
    %672 = vector.load %arg7[%c32_353, %c8_354] : memref<53x32xf32, #tpu.memory_space<vmem>>, vector<1x8xf32>
    %cst_355 = arith.constant dense<0.000000e+00> : vector<5x8xf32>
    %673 = tpu.matmul %626, %666, %cst_355 {dimension_numbers = #tpu.dot_dimension_numbers<[1], [0], [0], [1], [0, 0, 1, 1], [], []>} : vector<5x16xf32>, vector<16x8xf32>, vector<5x8xf32> -> vector<5x8xf32>
    %674 = vector.broadcast %670 : vector<1x8xf32> to vector<5x8xf32>
    %675 = arith.addf %673, %674 : vector<5x8xf32>
    %cst_356 = arith.constant dense<0.000000e+00> : vector<5x8xf32>
    %676 = tpu.matmul %285, %667, %cst_356 {dimension_numbers = #tpu.dot_dimension_numbers<[1], [0], [0], [1], [0, 0, 1, 1], [], []>} : vector<5x16xf32>, vector<16x8xf32>, vector<5x8xf32> -> vector<5x8xf32>
    %677 = vector.broadcast %671 : vector<1x8xf32> to vector<5x8xf32>
    %678 = arith.addf %676, %677 : vector<5x8xf32>
    %cst_357 = arith.constant dense<0.000000e+00> : vector<5x8xf32>
    %679 = tpu.matmul %285, %668, %cst_357 {dimension_numbers = #tpu.dot_dimension_numbers<[1], [0], [0], [1], [0, 0, 1, 1], [], []>} : vector<5x16xf32>, vector<16x8xf32>, vector<5x8xf32> -> vector<5x8xf32>
    %680 = vector.broadcast %672 : vector<1x8xf32> to vector<5x8xf32>
    %681 = arith.addf %679, %680 : vector<5x8xf32>
    %682 = tpu.transpose %678, [1, 0] : vector<5x8xf32> -> vector<8x5xf32>
    %cst_358 = arith.constant dense<0.000000e+00> : vector<5x5xf32>
    %683 = tpu.matmul %675, %682, %cst_358 {dimension_numbers = #tpu.dot_dimension_numbers<[1], [0], [0], [1], [0, 0, 1, 1], [], []>} : vector<5x8xf32>, vector<8x5xf32>, vector<5x5xf32> -> vector<5x5xf32>
    %cst_359 = arith.constant 1.250000e-01 : f32
    %684 = vector.broadcast %cst_359 : f32 to vector<5x5xf32>
    %685 = arith.mulf %683, %684 : vector<5x5xf32>
    %cst_360 = arith.constant -1.000000e+09 : f32
    %686 = vector.broadcast %cst_360 : f32 to vector<5x5xf32>
    %687 = arith.select %8, %686, %685 : vector<5x5xi1>, vector<5x5xf32>
    %cst_361 = arith.constant dense<0xFF800000> : vector<5xf32>
    %688 = vector.multi_reduction <maximumf>, %687, %cst_361 [1] : vector<5x5xf32> to vector<5xf32>
    %689 = vector.shape_cast %688 : vector<5xf32> to vector<5x1xf32>
    %690 = vector.broadcast %689 : vector<5x1xf32> to vector<5x5xf32>
    %691 = arith.subf %687, %690 : vector<5x5xf32>
    %692 = math.exp %691 : vector<5x5xf32>
    %cst_362 = arith.constant dense<0.000000e+00> : vector<5xf32>
    %693 = vector.multi_reduction <add>, %692, %cst_362 [1] : vector<5x5xf32> to vector<5xf32>
    %694 = vector.shape_cast %693 : vector<5xf32> to vector<5x1xf32>
    %695 = vector.broadcast %694 : vector<5x1xf32> to vector<5x5xf32>
    %696 = arith.divf %692, %695 : vector<5x5xf32>
    %c11_363 = arith.constant 11 : index
    %c0_364 = arith.constant 0 : index
    %c0_365 = arith.constant 0 : index
    %697 = vector.load %arg9[%c11_363, %c0_364, %c0_365] : memref<12x5x5xf32, #tpu.memory_space<vmem>>, vector<1x5x5xf32>
    %698 = vector.shape_cast %697 : vector<1x5x5xf32> to vector<5x5xf32>
    %699 = vector.shape_cast %696 : vector<5x5xf32> to vector<1x5x5xf32>
    tpu.vector_store %arg9[%c11_363, %c0_364, %c0_365], %699 {strides = array<i32>} : memref<12x5x5xf32, #tpu.memory_space<vmem>>, vector<1x5x5xf32>,
    %cst_366 = arith.constant dense<0.000000e+00> : vector<5x8xf32>
    %700 = tpu.matmul %687, %681, %cst_366 {dimension_numbers = #tpu.dot_dimension_numbers<[1], [0], [0], [1], [0, 0, 1, 1], [], []>} : vector<5x5xf32>, vector<5x8xf32>, vector<5x8xf32> -> vector<5x8xf32>
    %cst_367 = arith.constant dense<0.000000e+00> : vector<5x16xf32>
    %701 = tpu.matmul %700, %669, %cst_367 {dimension_numbers = #tpu.dot_dimension_numbers<[1], [0], [0], [1], [0, 0, 1, 1], [], []>} : vector<5x8xf32>, vector<8x16xf32>, vector<5x16xf32> -> vector<5x16xf32>
    %702 = arith.addf %665, %701 : vector<5x16xf32>
    %c34 = arith.constant 34 : index
    %c0_368 = arith.constant 0 : index
    %703 = vector.load %arg7[%c34, %c0_368] : memref<53x32xf32, #tpu.memory_space<vmem>>, vector<1x16xf32>
    %c35 = arith.constant 35 : index
    %c0_369 = arith.constant 0 : index
    %704 = vector.load %arg7[%c35, %c0_369] : memref<53x32xf32, #tpu.memory_space<vmem>>, vector<1x16xf32>
    %705 = arith.addf %702, %626 : vector<5x16xf32>
    %cst_370 = arith.constant dense<0.000000e+00> : vector<5xf32>
    %706 = vector.multi_reduction <add>, %705, %cst_370 [1] : vector<5x16xf32> to vector<5xf32>
    %707 = vector.shape_cast %706 : vector<5xf32> to vector<5x1xf32>
    %cst_371 = arith.constant 1.600000e+01 : f32
    %708 = vector.broadcast %cst_371 : f32 to vector<5x1xf32>
    %709 = arith.divf %707, %708 : vector<5x1xf32>
    %710 = vector.broadcast %709 : vector<5x1xf32> to vector<5x16xf32>
    %711 = arith.subf %705, %710 : vector<5x16xf32>
    %712 = arith.mulf %711, %711 : vector<5x16xf32>
    %cst_372 = arith.constant dense<0.000000e+00> : vector<5xf32>
    %713 = vector.multi_reduction <add>, %712, %cst_372 [1] : vector<5x16xf32> to vector<5xf32>
    %714 = vector.shape_cast %713 : vector<5xf32> to vector<5x1xf32>
    %cst_373 = arith.constant 1.600000e+01 : f32
    %715 = vector.broadcast %cst_373 : f32 to vector<5x1xf32>
    %716 = arith.divf %714, %715 : vector<5x1xf32>
    %717 = vector.broadcast %709 : vector<5x1xf32> to vector<5x16xf32>
    %718 = arith.subf %705, %717 : vector<5x16xf32>
    %cst_374 = arith.constant 9.99999974E-6 : f32
    %719 = vector.broadcast %cst_374 : f32 to vector<5x1xf32>
    %720 = arith.addf %716, %719 : vector<5x1xf32>
    %721 = math.rsqrt %720 : vector<5x1xf32>
    %722 = vector.broadcast %721 : vector<5x1xf32> to vector<5x16xf32>
    %723 = arith.mulf %718, %722 : vector<5x16xf32>
    %724 = vector.broadcast %703 : vector<1x16xf32> to vector<5x16xf32>
    %725 = arith.mulf %723, %724 : vector<5x16xf32>
    %726 = vector.broadcast %704 : vector<1x16xf32> to vector<5x16xf32>
    %727 = arith.addf %725, %726 : vector<5x16xf32>
    %c0_375 = arith.constant 0 : index
    %c480 = arith.constant 480 : index
    %728 = vector.load %arg5[%c0_375, %c480] : memref<16x521xf32, #tpu.memory_space<vmem>>, vector<16x32xf32>
    %c48_376 = arith.constant 48 : index
    %c0_377 = arith.constant 0 : index
    %729 = vector.load %arg7[%c48_376, %c0_377] : memref<53x32xf32, #tpu.memory_space<vmem>>, vector<1x32xf32>
    %c0_378 = arith.constant 0 : index
    %c48_379 = arith.constant 48 : index
    %730 = vector.load %arg6[%c0_378, %c48_379] : memref<32x64xf32, #tpu.memory_space<vmem>>, vector<32x16xf32>
    %c49 = arith.constant 49 : index
    %c0_380 = arith.constant 0 : index
    %731 = vector.load %arg7[%c49, %c0_380] : memref<53x32xf32, #tpu.memory_space<vmem>>, vector<1x16xf32>
    %c50 = arith.constant 50 : index
    %c0_381 = arith.constant 0 : index
    %732 = vector.load %arg7[%c50, %c0_381] : memref<53x32xf32, #tpu.memory_space<vmem>>, vector<1x16xf32>
    %c51 = arith.constant 51 : index
    %c0_382 = arith.constant 0 : index
    %733 = vector.load %arg7[%c51, %c0_382] : memref<53x32xf32, #tpu.memory_space<vmem>>, vector<1x16xf32>
    %cst_383 = arith.constant dense<0.000000e+00> : vector<5x32xf32>
    %734 = tpu.matmul %727, %728, %cst_383 {dimension_numbers = #tpu.dot_dimension_numbers<[1], [0], [0], [1], [0, 0, 1, 1], [], []>} : vector<5x16xf32>, vector<16x32xf32>, vector<5x32xf32> -> vector<5x32xf32>
    %735 = vector.broadcast %729 : vector<1x32xf32> to vector<5x32xf32>
    %736 = arith.addf %734, %735 : vector<5x32xf32>
    %cst_384 = arith.constant dense<0.000000e+00> : vector<5x16xf32>
    %737 = tpu.matmul %736, %730, %cst_384 {dimension_numbers = #tpu.dot_dimension_numbers<[1], [0], [0], [1], [0, 0, 1, 1], [], []>} : vector<5x32xf32>, vector<32x16xf32>, vector<5x16xf32> -> vector<5x16xf32>
    %738 = vector.broadcast %731 : vector<1x16xf32> to vector<5x16xf32>
    %739 = arith.addf %737, %738 : vector<5x16xf32>
    %cst_385 = arith.constant 0.000000e+00 : f32
    %740 = vector.broadcast %cst_385 : f32 to vector<5x16xf32>
    %741 = arith.maximumf %739, %740 : vector<5x16xf32>
    %742 = arith.addf %741, %727 : vector<5x16xf32>
    %cst_386 = arith.constant dense<0.000000e+00> : vector<5xf32>
    %743 = vector.multi_reduction <add>, %742, %cst_386 [1] : vector<5x16xf32> to vector<5xf32>
    %744 = vector.shape_cast %743 : vector<5xf32> to vector<5x1xf32>
    %cst_387 = arith.constant 1.600000e+01 : f32
    %745 = vector.broadcast %cst_387 : f32 to vector<5x1xf32>
    %746 = arith.divf %744, %745 : vector<5x1xf32>
    %747 = vector.broadcast %746 : vector<5x1xf32> to vector<5x16xf32>
    %748 = arith.subf %742, %747 : vector<5x16xf32>
    %749 = arith.mulf %748, %748 : vector<5x16xf32>
    %cst_388 = arith.constant dense<0.000000e+00> : vector<5xf32>
    %750 = vector.multi_reduction <add>, %749, %cst_388 [1] : vector<5x16xf32> to vector<5xf32>
    %751 = vector.shape_cast %750 : vector<5xf32> to vector<5x1xf32>
    %cst_389 = arith.constant 1.600000e+01 : f32
    %752 = vector.broadcast %cst_389 : f32 to vector<5x1xf32>
    %753 = arith.divf %751, %752 : vector<5x1xf32>
    %754 = vector.broadcast %746 : vector<5x1xf32> to vector<5x16xf32>
    %755 = arith.subf %742, %754 : vector<5x16xf32>
    %cst_390 = arith.constant 9.99999974E-6 : f32
    %756 = vector.broadcast %cst_390 : f32 to vector<5x1xf32>
    %757 = arith.addf %753, %756 : vector<5x1xf32>
    %758 = math.rsqrt %757 : vector<5x1xf32>
    %759 = vector.broadcast %758 : vector<5x1xf32> to vector<5x16xf32>
    %760 = arith.mulf %755, %759 : vector<5x16xf32>
    %761 = vector.broadcast %732 : vector<1x16xf32> to vector<5x16xf32>
    %762 = arith.mulf %760, %761 : vector<5x16xf32>
    %763 = vector.broadcast %733 : vector<1x16xf32> to vector<5x16xf32>
    %764 = arith.addf %762, %763 : vector<5x16xf32>
    %c0_391 = arith.constant 0 : index
    %c512 = arith.constant 512 : index
    %765 = vector.load %arg5[%c0_391, %c512] : memref<16x521xf32, #tpu.memory_space<vmem>>, vector<16x9xf32>
    %c52 = arith.constant 52 : index
    %c0_392 = arith.constant 0 : index
    %766 = vector.load %arg7[%c52, %c0_392] : memref<53x32xf32, #tpu.memory_space<vmem>>, vector<1x9xf32>
    %cst_393 = arith.constant dense<0.000000e+00> : vector<5x9xf32>
    %767 = tpu.matmul %764, %765, %cst_393 {dimension_numbers = #tpu.dot_dimension_numbers<[1], [0], [0], [1], [0, 0, 1, 1], [], []>} : vector<5x16xf32>, vector<16x9xf32>, vector<5x9xf32> -> vector<5x9xf32>
    %768 = vector.broadcast %766 : vector<1x9xf32> to vector<5x9xf32>
    %769 = arith.addf %767, %768 : vector<5x9xf32>
    %c0_394 = arith.constant 0 : index
    %c0_395 = arith.constant 0 : index
    %770 = vector.load %arg8[%c0_394, %c0_395] : memref<5x9xf32, #tpu.memory_space<vmem>>, vector<5x9xf32>
    tpu.vector_store %arg8[%c0_394, %c0_395], %769 {strides = array<i32>} : memref<5x9xf32, #tpu.memory_space<vmem>>, vector<5x9xf32>,
    return
  }
}

</mosaic_0001>

<llo_original>
// kernel: transformer_forward.1
$region0: #{transformer_forward.1}
  #allocation0 [shape = 'u32[]', space=smem, size = 0x4, offset = 0x4, fixed_abs, tag = 'smem constant byte address 0x4 - core index']
  #allocation1 [shape = 'u32[144,128]{1,0:T(1,128)}', space=vmem, size = 0x12000, scoped, tag = 'internal scratch']
  %s0 = inlined_call_operand.vmem [shape: f32[5,16], index: 0, kind: input, shape index: {}]
  %s1 = inlined_call_operand.vmem [shape: f32[5,16], index: 1, kind: input, shape index: {}]
  %s2 = inlined_call_operand.vmem [shape: f32[5,5], index: 2, kind: input, shape index: {}]
  %s3 = inlined_call_operand.vmem [shape: f32[5,5], index: 3, kind: input, shape index: {}]
  %s4 = inlined_call_operand.vmem [shape: f32[5,5], index: 4, kind: input, shape index: {}]
  %s5 = inlined_call_operand.vmem [shape: f32[16,521], index: 5, kind: input, shape index: {}]
  %s6 = inlined_call_operand.vmem [shape: f32[32,64], index: 6, kind: input, shape index: {}]
  %s7 = inlined_call_operand.vmem [shape: f32[53,32], index: 7, kind: input, shape index: {}]
  %s8 = inlined_call_operand.hbm [shape: f32[5,9], index: 8, kind: output, shape index: {0}]
  %s9 = inlined_call_operand.vmem [shape: f32[12,5,5], index: 9, kind: output, shape index: {1}]
  %10 = xla_tuple %s8, %s9
  %s11 = sld [smem:[#allocation0]]
  $region50: #{transformer_forward.1} parent=0
    _
  %s13 = ssub.s32 1, %s11
  %s14 = scalar_select 0, %s13, %s11
  $region1: #{transformer_forward.1} parent=0
    #allocation2 [shape = 'u8[4096]{0}', space=vmem, size = 0x1000, scoped, tag = 'output window, operand 0, single buffered']
    #allocation3 [shape = 's32[1]{0}', space=sflag, size = 0x4, scoped, tag = 'scoped memory for transformer_forward.1']
    %15 = vsyncpa [#allocation3], 0
    // Predicated region
    $region2: #{transformer_forward.1} parent=1 // pred_check
      _
    $region3: #{transformer_forward.1} parent=1 // pred_check_branch
      %17 = sbr.rel (0) target = $region5
    $region4: #{transformer_forward.1} parent=1 // pred_region
      _
    $region5: #{transformer_forward.1} parent=1 // pred_fallthru
      _
    // Predicated region
    $region6: #{transformer_forward.1} parent=1 // pred_check
      _
    $region7: #{transformer_forward.1} parent=1 // pred_check_branch
      %19 = sbr.rel (0) target = $region9
    $region8: #{transformer_forward.1} parent=1 // pred_region
      _
    $region9: #{transformer_forward.1} parent=1 // pred_fallthru
      _
    // Predicated region
    $region10: #{transformer_forward.1} parent=1 // pred_check
      _
    $region11: #{transformer_forward.1} parent=1 // pred_check_branch
      %21 = sbr.rel (0) target = $region13
    $region12: #{transformer_forward.1} parent=1 // pred_region
      _
    $region13: #{transformer_forward.1} parent=1 // pred_fallthru
      _
    // Predicated region
    $region14: #{transformer_forward.1} parent=1 // pred_check
      _
    $region15: #{transformer_forward.1} parent=1 // pred_check_branch
      %23 = sbr.rel (0) target = $region17
    $region16: #{transformer_forward.1} parent=1 // pred_region
      _
    $region17: #{transformer_forward.1} parent=1 // pred_fallthru
      _
    // Predicated region
    $region18: #{transformer_forward.1} parent=1 // pred_check
      _
    $region19: #{transformer_forward.1} parent=1 // pred_check_branch
      %25 = sbr.rel (0) target = $region21
    $region20: #{transformer_forward.1} parent=1 // pred_region
      _
    $region21: #{transformer_forward.1} parent=1 // pred_fallthru
      _
    // Predicated region
    $region22: #{transformer_forward.1} parent=1 // pred_check
      _
    $region23: #{transformer_forward.1} parent=1 // pred_check_branch
      %27 = sbr.rel (0) target = $region25
    $region24: #{transformer_forward.1} parent=1 // pred_region
      _
    $region25: #{transformer_forward.1} parent=1 // pred_fallthru
      _
    // Predicated region
    $region26: #{transformer_forward.1} parent=1 // pred_check
      _
    $region27: #{transformer_forward.1} parent=1 // pred_check_branch
      %29 = sbr.rel (0) target = $region29
    $region28: #{transformer_forward.1} parent=1 // pred_region
      _
    $region29: #{transformer_forward.1} parent=1 // pred_fallthru
      _
    // Predicated region
    $region30: #{transformer_forward.1} parent=1 // pred_check
      _
    $region31: #{transformer_forward.1} parent=1 // pred_check_branch
      %31 = sbr.rel (0) target = $region33
    $region32: #{transformer_forward.1} parent=1 // pred_region
      _
    $region33: #{transformer_forward.1} parent=1 // pred_fallthru
      _
    %v32 = vld [vmem:[%s2] sm:$0x1f]
    %vm33 = vcmp.gt.f32.partialorder %v32, 0.5
    %v34 = vld [vmem:[%s3] sm:$0x1f]
    %vm35 = vcmp.gt.f32.partialorder %v34, 0.5
    %v36 = vld [vmem:[%s4] sm:$0x1f]
    %vm37 = vcmp.gt.f32.partialorder %v36, 0.5
    %v38 = vld [vmem:[%s0] sm:$0x1f]
    %v39 = vld [vmem:[%s7 + $0x3] sm:$0x1]
    %v40 = vld [vmem:[%s5] sm:$0xff]
    %v41 = vld [vmem:[%s5 + $0x28] sm:$0xff]
    %v42 = vld [vmem:[%s7] sm:$0x1]
    %v43 = vld [vmem:[%s7 + $0x1] sm:$0x1]
    %v44 = vld [vmem:[%s7 + $0x2] sm:$0x1]
    %v45 = vlaneseq
    %v46 = vshrl.u32 %v45, 7
    %v47 = vsub.s32 0, %v46
    %v48 = vrot.slane %v42, %v47
    %vm49 = vcmask 130048
    %v51 = vsel %vm49, %v38, 0
    %53 = vmatprep.subr.mxu0 0.0
    %54 = vmatpush1.msra.mxu0 %v40
    %55 = vmatprep.subr.mxu0 0.0
    %56 = vmatpush1.msra.mxu0 %v41
    %57 = vmatprep.subr.mxu0 0.0
    %58 = vmatpush1.msra.mxu0 0.0
    %59 = vmatprep.subr.mxu0 0.0
    %60 = vmatpush1.msra.mxu0 0.0
    %61 = vmatprep.subr.mxu0 0.0
    %62 = vmatpush1.msra.mxu0 0.0
    %63 = vmatprep.subr.mxu0 0.0
    %64 = vmatpush1.msra.mxu0 0.0
    %65 = vmatprep.subr.mxu0 0.0
    %66 = vmatpush1.msra.mxu0 0.0
    %67 = vmatprep.subr.mxu0 0.0
    %68 = vmatpush1.msra.mxu0 0.0
    %69 = vmatprep.subr.mxu0 0.0
    %70 = vmatpush1.msra.mxu0 0.0
    %71 = vmatprep.subr.mxu0 0.0
    %72 = vmatpush1.msra.mxu0 0.0
    %73 = vmatprep.subr.mxu0 0.0
    %74 = vmatpush1.msra.mxu0 0.0
    %75 = vmatprep.subr.mxu0 0.0
    %76 = vmatpush1.msra.mxu0 0.0
    %77 = vmatprep.subr.mxu0 0.0
    %78 = vmatpush1.msra.mxu0 0.0
    %79 = vmatprep.subr.mxu0 0.0
    %80 = vmatpush1.msra.mxu0 0.0
    %81 = vmatprep.subr.mxu0 0.0
    %82 = vmatpush1.msra.mxu0 0.0
    %83 = vmatprep.subr.mxu0 0.0
    %84 = vmatpush1.msra.mxu0 0.0
    %85 = vmatprep.subr.mxu0 0.0
    %86 = vmatpush1.msra.mxu0 0.0
    %87 = vmatprep.subr.mxu0 0.0
    %88 = vmatpush1.msra.mxu0 0.0
    %89 = vmatprep.subr.mxu0 0.0
    %90 = vmatpush1.msra.mxu0 0.0
    %91 = vmatprep.subr.mxu0 0.0
    %92 = vmatpush1.msra.mxu0 0.0
    %93 = vmatprep.subr.mxu0 0.0
    %94 = vmatpush1.msra.mxu0 0.0
    %95 = vmatprep.subr.mxu0 0.0
    %96 = vmatpush1.msra.mxu0 0.0
    %97 = vmatprep.subr.mxu0 0.0
    %98 = vmatpush1.msra.mxu0 0.0
    %99 = vmatprep.subr.mxu0 0.0
    %100 = vmatpush1.msra.mxu0 0.0
    %101 = vmatprep.subr.mxu0 0.0
    %102 = vmatpush1.msra.mxu0 0.0
    %103 = vmatprep.subr.mxu0 0.0
    %104 = vmatpush1.msra.mxu0 0.0
    %105 = vmatprep.subr.mxu0 0.0
    %106 = vmatpush1.msra.mxu0 0.0
    %107 = vmatprep.subr.mxu0 0.0
    %108 = vmatpush1.msra.mxu0 0.0
    %109 = vmatprep.subr.mxu0 0.0
    %110 = vmatpush1.msra.mxu0 0.0
    %111 = vmatprep.subr.mxu0 0.0
    %112 = vmatpush1.msra.mxu0 0.0
    %113 = vmatprep.subr.mxu0 0.0
    %114 = vmatpush1.msra.mxu0 0.0
    %115 = vmatprep.subr.mxu0 0.0
    %116 = vmatpush1.msra.mxu0 0.0
    %117 = vmatprep.mubr.f32.mxu0 0.0
    %118 = vmatmul.mubr.f32.gmra.mrb[0].mxu0 %v51
    %v119 = vpop.f32.mrb[0].mxu0
    %v120 = vadd.f32 %v48, %v119
    %v121 = vpop.f32.mrb[0].mxu0
    %122 = vdwg.mxu0
    %v123 = vlaneseq
    %v124 = vshrl.u32 %v123, 7
    %v125 = vsub.s32 0, %v124
    %v126 = vrot.slane %v43, %v125
    %129 = vrot.lane.b32.xlu0 %v40, 112
    %v130 = vpop.permute.xlu0 %129
    %131 = vrot.lane.b32.xlu0 %v41, 112
    %v132 = vpop.permute.xlu0 %131
    %135 = vmatprep.subr.mxu0 0.0
    %136 = vmatpush1.msra.mxu0 %v130
    %137 = vmatprep.subr.mxu0 0.0
    %138 = vmatpush1.msra.mxu0 %v132
    %139 = vmatprep.subr.mxu0 0.0
    %140 = vmatpush1.msra.mxu0 0.0
    %141 = vmatprep.subr.mxu0 0.0
    %142 = vmatpush1.msra.mxu0 0.0
    %143 = vmatprep.subr.mxu0 0.0
    %144 = vmatpush1.msra.mxu0 0.0
    %145 = vmatprep.subr.mxu0 0.0
    %146 = vmatpush1.msra.mxu0 0.0
    %147 = vmatprep.subr.mxu0 0.0
    %148 = vmatpush1.msra.mxu0 0.0
    %149 = vmatprep.subr.mxu0 0.0
    %150 = vmatpush1.msra.mxu0 0.0
    %151 = vmatprep.subr.mxu0 0.0
    %152 = vmatpush1.msra.mxu0 0.0
    %153 = vmatprep.subr.mxu0 0.0
    %154 = vmatpush1.msra.mxu0 0.0
    %155 = vmatprep.subr.mxu0 0.0
    %156 = vmatpush1.msra.mxu0 0.0
    %157 = vmatprep.subr.mxu0 0.0
    %158 = vmatpush1.msra.mxu0 0.0
    %159 = vmatprep.subr.mxu0 0.0
    %160 = vmatpush1.msra.mxu0 0.0
    %161 = vmatprep.subr.mxu0 0.0
    %162 = vmatpush1.msra.mxu0 0.0
    %163 = vmatprep.subr.mxu0 0.0
    %164 = vmatpush1.msra.mxu0 0.0
    %165 = vmatprep.subr.mxu0 0.0
    %166 = vmatpush1.msra.mxu0 0.0
    %167 = vmatprep.subr.mxu0 0.0
    %168 = vmatpush1.msra.mxu0 0.0
    %169 = vmatprep.subr.mxu0 0.0
    %170 = vmatpush1.msra.mxu0 0.0
    %171 = vmatprep.subr.mxu0 0.0
    %172 = vmatpush1.msra.mxu0 0.0
    %173 = vmatprep.subr.mxu0 0.0
    %174 = vmatpush1.msra.mxu0 0.0
    %175 = vmatprep.subr.mxu0 0.0
    %176 = vmatpush1.msra.mxu0 0.0
    %177 = vmatprep.subr.mxu0 0.0
    %178 = vmatpush1.msra.mxu0 0.0
    %179 = vmatprep.subr.mxu0 0.0
    %180 = vmatpush1.msra.mxu0 0.0
    %181 = vmatprep.subr.mxu0 0.0
    %182 = vmatpush1.msra.mxu0 0.0
    %183 = vmatprep.subr.mxu0 0.0
    %184 = vmatpush1.msra.mxu0 0.0
    %185 = vmatprep.subr.mxu0 0.0
    %186 = vmatpush1.msra.mxu0 0.0
    %187 = vmatprep.subr.mxu0 0.0
    %188 = vmatpush1.msra.mxu0 0.0
    %189 = vmatprep.subr.mxu0 0.0
    %190 = vmatpush1.msra.mxu0 0.0
    %191 = vmatprep.subr.mxu0 0.0
    %192 = vmatpush1.msra.mxu0 0.0
    %193 = vmatprep.subr.mxu0 0.0
    %194 = vmatpush1.msra.mxu0 0.0
    %195 = vmatprep.subr.mxu0 0.0
    %196 = vmatpush1.msra.mxu0 0.0
    %197 = vmatprep.subr.mxu0 0.0
    %198 = vmatpush1.msra.mxu0 0.0
    %199 = vmatprep.mubr.f32.mxu0 0.0
    %200 = vmatmul.mubr.f32.gmra.mrb[0].mxu0 %v51
    %v201 = vpop.f32.mrb[0].mxu0
    %v202 = vadd.f32 %v126, %v201
    %v203 = vpop.f32.mrb[0].mxu0
    %204 = vdwg.mxu0
    %v205 = vlaneseq
    %v206 = vshrl.u32 %v205, 7
    %v207 = vsub.s32 0, %v206
    %v208 = vrot.slane %v44, %v207
    %209 = vrot.lane.b32.xlu0 %v40, 96
    %v210 = vpop.permute.xlu0 %209
    %211 = vrot.lane.b32.xlu0 %v41, 96
    %v212 = vpop.permute.xlu0 %211
    %215 = vmatprep.subr.mxu0 0.0
    %216 = vmatpush1.msra.mxu0 %v210
    %217 = vmatprep.subr.mxu0 0.0
    %218 = vmatpush1.msra.mxu0 %v212
    %219 = vmatprep.subr.mxu0 0.0
    %220 = vmatpush1.msra.mxu0 0.0
    %221 = vmatprep.subr.mxu0 0.0
    %222 = vmatpush1.msra.mxu0 0.0
    %223 = vmatprep.subr.mxu0 0.0
    %224 = vmatpush1.msra.mxu0 0.0
    %225 = vmatprep.subr.mxu0 0.0
    %226 = vmatpush1.msra.mxu0 0.0
    %227 = vmatprep.subr.mxu0 0.0
    %228 = vmatpush1.msra.mxu0 0.0
    %229 = vmatprep.subr.mxu0 0.0
    %230 = vmatpush1.msra.mxu0 0.0
    %231 = vmatprep.subr.mxu0 0.0
    %232 = vmatpush1.msra.mxu0 0.0
    %233 = vmatprep.subr.mxu0 0.0
    %234 = vmatpush1.msra.mxu0 0.0
    %235 = vmatprep.subr.mxu0 0.0
    %236 = vmatpush1.msra.mxu0 0.0
    %237 = vmatprep.subr.mxu0 0.0
    %238 = vmatpush1.msra.mxu0 0.0
    %239 = vmatprep.subr.mxu0 0.0
    %240 = vmatpush1.msra.mxu0 0.0
    %241 = vmatprep.subr.mxu0 0.0
    %242 = vmatpush1.msra.mxu0 0.0
    %243 = vmatprep.subr.mxu0 0.0
    %244 = vmatpush1.msra.mxu0 0.0
    %245 = vmatprep.subr.mxu0 0.0
    %246 = vmatpush1.msra.mxu0 0.0
    %247 = vmatprep.subr.mxu0 0.0
    %248 = vmatpush1.msra.mxu0 0.0
    %249 = vmatprep.subr.mxu0 0.0
    %250 = vmatpush1.msra.mxu0 0.0
    %251 = vmatprep.subr.mxu0 0.0
    %252 = vmatpush1.msra.mxu0 0.0
    %253 = vmatprep.subr.mxu0 0.0
    %254 = vmatpush1.msra.mxu0 0.0
    %255 = vmatprep.subr.mxu0 0.0
    %256 = vmatpush1.msra.mxu0 0.0
    %257 = vmatprep.subr.mxu0 0.0
    %258 = vmatpush1.msra.mxu0 0.0
    %259 = vmatprep.subr.mxu0 0.0
    %260 = vmatpush1.msra.mxu0 0.0
    %261 = vmatprep.subr.mxu0 0.0
    %262 = vmatpush1.msra.mxu0 0.0
    %263 = vmatprep.subr.mxu0 0.0
    %264 = vmatpush1.msra.mxu0 0.0
    %265 = vmatprep.subr.mxu0 0.0
    %266 = vmatpush1.msra.mxu0 0.0
    %267 = vmatprep.subr.mxu0 0.0
    %268 = vmatpush1.msra.mxu0 0.0
    %269 = vmatprep.subr.mxu0 0.0
    %270 = vmatpush1.msra.mxu0 0.0
    %271 = vmatprep.subr.mxu0 0.0
    %272 = vmatpush1.msra.mxu0 0.0
    %273 = vmatprep.subr.mxu0 0.0
    %274 = vmatpush1.msra.mxu0 0.0
    %275 = vmatprep.subr.mxu0 0.0
    %276 = vmatpush1.msra.mxu0 0.0
    %277 = vmatprep.subr.mxu0 0.0
    %278 = vmatpush1.msra.mxu0 0.0
    %279 = vmatprep.mubr.f32.mxu0 0.0
    %280 = vmatmul.mubr.f32.gmra.mrb[0].mxu0 %v51
    %v281 = vpop.f32.mrb[0].mxu0
    %v282 = vadd.f32 %v208, %v281
    %v283 = vpop.f32.mrb[0].mxu0
    %284 = vdwg.mxu0
    %vm285 = vcmask 64512
    %v287 = vsel %vm285, %v120, 0
    %v290 = vsel %vm285, %v202, 0
    %292 = vmatprep.subr.mxu0 0.0
    %293 = vmatpush1.xpose.msra.mxu0 %v290
    %294 = vmatprep.subr.mxu0 0.0
    %295 = vmatpush1.xpose.msra.mxu0 0.0
    %296 = vmatprep.subr.mxu0 0.0
    %297 = vmatpush1.xpose.msra.mxu0 0.0
    %298 = vmatprep.subr.mxu0 0.0
    %299 = vmatpush1.xpose.msra.mxu0 0.0
    %300 = vmatprep.subr.mxu0 0.0
    %301 = vmatpush1.xpose.msra.mxu0 0.0
    %302 = vmatprep.subr.mxu0 0.0
    %303 = vmatpush1.xpose.msra.mxu0 0.0
    %304 = vmatprep.subr.mxu0 0.0
    %305 = vmatpush1.xpose.msra.mxu0 0.0
    %306 = vmatprep.subr.mxu0 0.0
    %307 = vmatpush1.xpose.msra.mxu0 0.0
    %308 = vmatprep.subr.mxu0 0.0
    %309 = vmatpush1.xpose.msra.mxu0 0.0
    %310 = vmatprep.subr.mxu0 0.0
    %311 = vmatpush1.xpose.msra.mxu0 0.0
    %312 = vmatprep.subr.mxu0 0.0
    %313 = vmatpush1.xpose.msra.mxu0 0.0
    %314 = vmatprep.subr.mxu0 0.0
    %315 = vmatpush1.xpose.msra.mxu0 0.0
    %316 = vmatprep.subr.mxu0 0.0
    %317 = vmatpush1.xpose.msra.mxu0 0.0
    %318 = vmatprep.subr.mxu0 0.0
    %319 = vmatpush1.xpose.msra.mxu0 0.0
    %320 = vmatprep.subr.mxu0 0.0
    %321 = vmatpush1.xpose.msra.mxu0 0.0
    %322 = vmatprep.subr.mxu0 0.0
    %323 = vmatpush1.xpose.msra.mxu0 0.0
    %324 = vmatprep.subr.mxu0 0.0
    %325 = vmatpush1.xpose.msra.mxu0 0.0
    %326 = vmatprep.subr.mxu0 0.0
    %327 = vmatpush1.xpose.msra.mxu0 0.0
    %328 = vmatprep.subr.mxu0 0.0
    %329 = vmatpush1.xpose.msra.mxu0 0.0
    %330 = vmatprep.subr.mxu0 0.0
    %331 = vmatpush1.xpose.msra.mxu0 0.0
    %332 = vmatprep.subr.mxu0 0.0
    %333 = vmatpush1.xpose.msra.mxu0 0.0
    %334 = vmatprep.subr.mxu0 0.0
    %335 = vmatpush1.xpose.msra.mxu0 0.0
    %336 = vmatprep.subr.mxu0 0.0
    %337 = vmatpush1.xpose.msra.mxu0 0.0
    %338 = vmatprep.subr.mxu0 0.0
    %339 = vmatpush1.xpose.msra.mxu0 0.0
    %340 = vmatprep.subr.mxu0 0.0
    %341 = vmatpush1.xpose.msra.mxu0 0.0
    %342 = vmatprep.subr.mxu0 0.0
    %343 = vmatpush1.xpose.msra.mxu0 0.0
    %344 = vmatprep.subr.mxu0 0.0
    %345 = vmatpush1.xpose.msra.mxu0 0.0
    %346 = vmatprep.subr.mxu0 0.0
    %347 = vmatpush1.xpose.msra.mxu0 0.0
    %348 = vmatprep.subr.mxu0 0.0
    %349 = vmatpush1.xpose.msra.mxu0 0.0
    %350 = vmatprep.subr.mxu0 0.0
    %351 = vmatpush1.xpose.msra.mxu0 0.0
    %352 = vmatprep.subr.mxu0 0.0
    %353 = vmatpush1.xpose.msra.mxu0 0.0
    %354 = vmatprep.subr.mxu0 0.0
    %355 = vmatpush1.xpose.msra.mxu0 0.0
    %356 = vmatprep.mubr.f32.mxu0 0.0
    %357 = vmatmul.mubr.f32.gmra.mrb[0].mxu0 %v287
    %v358 = vpop.f32.mrb[0].mxu0
    %v359 = vadd.f32 0.0, %v358
    %v360 = vpop.f32.mrb[0].mxu0
    %361 = vdwg.mxu0
    %v362 = vmul.f32 %v359, 0.125
    %v363 = vsel %vm33, -1e+09, %v362
    %vm364 = vcmask 36864
    %v365 = vsel %vm364, %v363, -inf
    %366 = vmax.xlane.f32.xlu0 %v365
    %v367 = vpop.xlane.xlu0 %366
    %v368 = vsub.f32 %v363, %v367
    %v369 = vmul.f32 %v368, 1.442695
    %v370 = vpow.pop %v369
    %v371 = vsel %vm364, %v370, 0.0
    %372 = vadd.xlane.f32.xlu0 %v371
    %v373 = vpop.xlane.xlu0 %372
    %v374 = vrcp.pop %v373
    %v375 = vmul.f32 %v370, %v374
    %376 = vst.msk [vmem:[%s9] sm:$0x1f] %vm364, %v375
    %vm377 = vcmask 39936
    %v379 = vsel %vm377, %v363, 0
    %vm381 = vcmask 1044480
    %v383 = vsel %vm381, %v282, 0
    %385 = vmatprep.subr.mxu0 0.0
    %386 = vmatpush1.msra.mxu0 %v383
    %387 = vmatprep.subr.mxu0 0.0
    %388 = vmatpush1.msra.mxu0 0.0
    %389 = vmatprep.subr.mxu0 0.0
    %390 = vmatpush1.msra.mxu0 0.0
    %391 = vmatprep.subr.mxu0 0.0
    %392 = vmatpush1.msra.mxu0 0.0
    %393 = vmatprep.subr.mxu0 0.0
    %394 = vmatpush1.msra.mxu0 0.0
    %395 = vmatprep.subr.mxu0 0.0
    %396 = vmatpush1.msra.mxu0 0.0
    %397 = vmatprep.subr.mxu0 0.0
    %398 = vmatpush1.msra.mxu0 0.0
    %399 = vmatprep.subr.mxu0 0.0
    %400 = vmatpush1.msra.mxu0 0.0
    %401 = vmatprep.subr.mxu0 0.0
    %402 = vmatpush1.msra.mxu0 0.0
    %403 = vmatprep.subr.mxu0 0.0
    %404 = vmatpush1.msra.mxu0 0.0
    %405 = vmatprep.subr.mxu0 0.0
    %406 = vmatpush1.msra.mxu0 0.0
    %407 = vmatprep.subr.mxu0 0.0
    %408 = vmatpush1.msra.mxu0 0.0
    %409 = vmatprep.subr.mxu0 0.0
    %410 = vmatpush1.msra.mxu0 0.0
    %411 = vmatprep.subr.mxu0 0.0
    %412 = vmatpush1.msra.mxu0 0.0
    %413 = vmatprep.subr.mxu0 0.0
    %414 = vmatpush1.msra.mxu0 0.0
    %415 = vmatprep.subr.mxu0 0.0
    %416 = vmatpush1.msra.mxu0 0.0
    %417 = vmatprep.subr.mxu0 0.0
    %418 = vmatpush1.msra.mxu0 0.0
    %419 = vmatprep.subr.mxu0 0.0
    %420 = vmatpush1.msra.mxu0 0.0
    %421 = vmatprep.subr.mxu0 0.0
    %422 = vmatpush1.msra.mxu0 0.0
    %423 = vmatprep.subr.mxu0 0.0
    %424 = vmatpush1.msra.mxu0 0.0
    %425 = vmatprep.subr.mxu0 0.0
    %426 = vmatpush1.msra.mxu0 0.0
    %427 = vmatprep.subr.mxu0 0.0
    %428 = vmatpush1.msra.mxu0 0.0
    %429 = vmatprep.subr.mxu0 0.0
    %430 = vmatpush1.msra.mxu0 0.0
    %431 = vmatprep.subr.mxu0 0.0
    %432 = vmatpush1.msra.mxu0 0.0
    %433 = vmatprep.subr.mxu0 0.0
    %434 = vmatpush1.msra.mxu0 0.0
    %435 = vmatprep.subr.mxu0 0.0
    %436 = vmatpush1.msra.mxu0 0.0
    %437 = vmatprep.subr.mxu0 0.0
    %438 = vmatpush1.msra.mxu0 0.0
    %439 = vmatprep.subr.mxu0 0.0
    %440 = vmatpush1.msra.mxu0 0.0
    %441 = vmatprep.subr.mxu0 0.0
    %442 = vmatpush1.msra.mxu0 0.0
    %443 = vmatprep.subr.mxu0 0.0
    %444 = vmatpush1.msra.mxu0 0.0
    %445 = vmatprep.subr.mxu0 0.0
    %446 = vmatpush1.msra.mxu0 0.0
    %447 = vmatprep.subr.mxu0 0.0
    %448 = vmatpush1.msra.mxu0 0.0
    %449 = vmatprep.mubr.f32.mxu0 0.0
    %450 = vmatmul.mubr.f32.gmra.mrb[0].mxu0 %v379
    %v451 = vpop.f32.mrb[0].mxu0
    %v452 = vadd.f32 0.0, %v451
    %v453 = vpop.f32.mrb[0].mxu0
    %454 = vdwg.mxu0
    %455 = vrot.lane.b32.xlu0 %v40, 80
    %v456 = vpop.permute.xlu0 %455
    %v459 = vsel %vm285, %v452, 0
    %461 = vmatprep.subr.mxu0 0.0
    %462 = vmatpush1.msra.mxu0 %v456
    %463 = vmatprep.subr.mxu0 0.0
    %464 = vmatpush1.msra.mxu0 0.0
    %465 = vmatprep.subr.mxu0 0.0
    %466 = vmatpush1.msra.mxu0 0.0
    %467 = vmatprep.subr.mxu0 0.0
    %468 = vmatpush1.msra.mxu0 0.0
    %469 = vmatprep.subr.mxu0 0.0
    %470 = vmatpush1.msra.mxu0 0.0
    %471 = vmatprep.subr.mxu0 0.0
    %472 = vmatpush1.msra.mxu0 0.0
    %473 = vmatprep.subr.mxu0 0.0
    %474 = vmatpush1.msra.mxu0 0.0
    %475 = vmatprep.subr.mxu0 0.0
    %476 = vmatpush1.msra.mxu0 0.0
    %477 = vmatprep.subr.mxu0 0.0
    %478 = vmatpush1.msra.mxu0 0.0
    %479 = vmatprep.subr.mxu0 0.0
    %480 = vmatpush1.msra.mxu0 0.0
    %481 = vmatprep.subr.mxu0 0.0
    %482 = vmatpush1.msra.mxu0 0.0
    %483 = vmatprep.subr.mxu0 0.0
    %484 = vmatpush1.msra.mxu0 0.0
    %485 = vmatprep.subr.mxu0 0.0
    %486 = vmatpush1.msra.mxu0 0.0
    %487 = vmatprep.subr.mxu0 0.0
    %488 = vmatpush1.msra.mxu0 0.0
    %489 = vmatprep.subr.mxu0 0.0
    %490 = vmatpush1.msra.mxu0 0.0
    %491 = vmatprep.subr.mxu0 0.0
    %492 = vmatpush1.msra.mxu0 0.0
    %493 = vmatprep.subr.mxu0 0.0
    %494 = vmatpush1.msra.mxu0 0.0
    %495 = vmatprep.subr.mxu0 0.0
    %496 = vmatpush1.msra.mxu0 0.0
    %497 = vmatprep.subr.mxu0 0.0
    %498 = vmatpush1.msra.mxu0 0.0
    %499 = vmatprep.subr.mxu0 0.0
    %500 = vmatpush1.msra.mxu0 0.0
    %501 = vmatprep.subr.mxu0 0.0
    %502 = vmatpush1.msra.mxu0 0.0
    %503 = vmatprep.subr.mxu0 0.0
    %504 = vmatpush1.msra.mxu0 0.0
    %505 = vmatprep.subr.mxu0 0.0
    %506 = vmatpush1.msra.mxu0 0.0
    %507 = vmatprep.subr.mxu0 0.0
    %508 = vmatpush1.msra.mxu0 0.0
    %509 = vmatprep.subr.mxu0 0.0
    %510 = vmatpush1.msra.mxu0 0.0
    %511 = vmatprep.subr.mxu0 0.0
    %512 = vmatpush1.msra.mxu0 0.0
    %513 = vmatprep.subr.mxu0 0.0
    %514 = vmatpush1.msra.mxu0 0.0
    %515 = vmatprep.subr.mxu0 0.0
    %516 = vmatpush1.msra.mxu0 0.0
    %517 = vmatprep.subr.mxu0 0.0
    %518 = vmatpush1.msra.mxu0 0.0
    %519 = vmatprep.subr.mxu0 0.0
    %520 = vmatpush1.msra.mxu0 0.0
    %521 = vmatprep.subr.mxu0 0.0
    %522 = vmatpush1.msra.mxu0 0.0
    %523 = vmatprep.subr.mxu0 0.0
    %524 = vmatpush1.msra.mxu0 0.0
    %525 = vmatprep.mubr.f32.mxu0 0.0
    %526 = vmatmul.mubr.f32.gmra.mrb[0].mxu0 %v459
    %v527 = vpop.f32.mrb[0].mxu0
    %v528 = vadd.f32 0.0, %v527
    %v529 = vpop.f32.mrb[0].mxu0
    %530 = vdwg.mxu0
    %v531 = vlaneseq
    %v532 = vshrl.u32 %v531, 7
    %v533 = vsub.s32 0, %v532
    %v534 = vrot.slane %v39, %v533
    %v535 = vadd.f32 %v534, %v528
    %v536 = vld [vmem:[%s5] sm:$0xff]
    %v537 = vld [vmem:[%s5 + $0x28] sm:$0xff]
    %v538 = vld [vmem:[%s7] sm:$0x1]
    %v539 = vld [vmem:[%s7 + $0x1] sm:$0x1]
    %v540 = vld [vmem:[%s7 + $0x2] sm:$0x1]
    %v541 = vlaneseq
    %v542 = vshrl.u32 %v541, 7
    %v543 = vsub.s32 0, %v542
    %v544 = vrot.slane %v538, %v543
    %547 = vrot.lane.b32.xlu0 %v536, 120
    %v548 = vpop.permute.xlu0 %547
    %549 = vrot.lane.b32.xlu0 %v537, 120
    %v550 = vpop.permute.xlu0 %549
    %554 = vrot.lane.b32.xlu0 %v544, 120
    %v555 = vpop.permute.xlu0 %554
    %557 = vmatprep.subr.mxu0 0.0
    %558 = vmatpush1.msra.mxu0 %v548
    %559 = vmatprep.subr.mxu0 0.0
    %560 = vmatpush1.msra.mxu0 %v550
    %561 = vmatprep.subr.mxu0 0.0
    %562 = vmatpush1.msra.mxu0 0.0
    %563 = vmatprep.subr.mxu0 0.0
    %564 = vmatpush1.msra.mxu0 0.0
    %565 = vmatprep.subr.mxu0 0.0
    %566 = vmatpush1.msra.mxu0 0.0
    %567 = vmatprep.subr.mxu0 0.0
    %568 = vmatpush1.msra.mxu0 0.0
    %569 = vmatprep.subr.mxu0 0.0
    %570 = vmatpush1.msra.mxu0 0.0
    %571 = vmatprep.subr.mxu0 0.0
    %572 = vmatpush1.msra.mxu0 0.0
    %573 = vmatprep.subr.mxu0 0.0
    %574 = vmatpush1.msra.mxu0 0.0
    %575 = vmatprep.subr.mxu0 0.0
    %576 = vmatpush1.msra.mxu0 0.0
    %577 = vmatprep.subr.mxu0 0.0
    %578 = vmatpush1.msra.mxu0 0.0
    %579 = vmatprep.subr.mxu0 0.0
    %580 = vmatpush1.msra.mxu0 0.0
    %581 = vmatprep.subr.mxu0 0.0
    %582 = vmatpush1.msra.mxu0 0.0
    %583 = vmatprep.subr.mxu0 0.0
    %584 = vmatpush1.msra.mxu0 0.0
    %585 = vmatprep.subr.mxu0 0.0
    %586 = vmatpush1.msra.mxu0 0.0
    %587 = vmatprep.subr.mxu0 0.0
    %588 = vmatpush1.msra.mxu0 0.0
    %589 = vmatprep.subr.mxu0 0.0
    %590 = vmatpush1.msra.mxu0 0.0
    %591 = vmatprep.subr.mxu0 0.0
    %592 = vmatpush1.msra.mxu0 0.0
    %593 = vmatprep.subr.mxu0 0.0
    %594 = vmatpush1.msra.mxu0 0.0
    %595 = vmatprep.subr.mxu0 0.0
    %596 = vmatpush1.msra.mxu0 0.0
    %597 = vmatprep.subr.mxu0 0.0
    %598 = vmatpush1.msra.mxu0 0.0
    %599 = vmatprep.subr.mxu0 0.0
    %600 = vmatpush1.msra.mxu0 0.0
    %601 = vmatprep.subr.mxu0 0.0
    %602 = vmatpush1.msra.mxu0 0.0
    %603 = vmatprep.subr.mxu0 0.0
    %604 = vmatpush1.msra.mxu0 0.0
    %605 = vmatprep.subr.mxu0 0.0
    %606 = vmatpush1.msra.mxu0 0.0
    %607 = vmatprep.subr.mxu0 0.0
    %608 = vmatpush1.msra.mxu0 0.0
    %609 = vmatprep.subr.mxu0 0.0
    %610 = vmatpush1.msra.mxu0 0.0
    %611 = vmatprep.subr.mxu0 0.0
    %612 = vmatpush1.msra.mxu0 0.0
    %613 = vmatprep.subr.mxu0 0.0
    %614 = vmatpush1.msra.mxu0 0.0
    %615 = vmatprep.subr.mxu0 0.0
    %616 = vmatpush1.msra.mxu0 0.0
    %617 = vmatprep.subr.mxu0 0.0
    %618 = vmatpush1.msra.mxu0 0.0
    %619 = vmatprep.subr.mxu0 0.0
    %620 = vmatpush1.msra.mxu0 0.0
    %621 = vmatprep.mubr.f32.mxu0 0.0
    %622 = vmatmul.mubr.f32.gmra.mrb[0].mxu0 %v51
    %v623 = vpop.f32.mrb[0].mxu0
    %v624 = vadd.f32 %v555, %v623
    %v625 = vpop.f32.mrb[0].mxu0
    %626 = vdwg.mxu0
    %v627 = vlaneseq
    %v628 = vshrl.u32 %v627, 7
    %v629 = vsub.s32 0, %v628
    %v630 = vrot.slane %v539, %v629
    %631 = vrot.lane.b32.xlu0 %v536, 104
    %v632 = vpop.permute.xlu0 %631
    %633 = vrot.lane.b32.xlu0 %v537, 104
    %v634 = vpop.permute.xlu0 %633
    %638 = vrot.lane.b32.xlu0 %v630, 120
    %v639 = vpop.permute.xlu0 %638
    %641 = vmatprep.subr.mxu0 0.0
    %642 = vmatpush1.msra.mxu0 %v632
    %643 = vmatprep.subr.mxu0 0.0
    %644 = vmatpush1.msra.mxu0 %v634
    %645 = vmatprep.subr.mxu0 0.0
    %646 = vmatpush1.msra.mxu0 0.0
    %647 = vmatprep.subr.mxu0 0.0
    %648 = vmatpush1.msra.mxu0 0.0
    %649 = vmatprep.subr.mxu0 0.0
    %650 = vmatpush1.msra.mxu0 0.0
    %651 = vmatprep.subr.mxu0 0.0
    %652 = vmatpush1.msra.mxu0 0.0
    %653 = vmatprep.subr.mxu0 0.0
    %654 = vmatpush1.msra.mxu0 0.0
    %655 = vmatprep.subr.mxu0 0.0
    %656 = vmatpush1.msra.mxu0 0.0
    %657 = vmatprep.subr.mxu0 0.0
    %658 = vmatpush1.msra.mxu0 0.0
    %659 = vmatprep.subr.mxu0 0.0
    %660 = vmatpush1.msra.mxu0 0.0
    %661 = vmatprep.subr.mxu0 0.0
    %662 = vmatpush1.msra.mxu0 0.0
    %663 = vmatprep.subr.mxu0 0.0
    %664 = vmatpush1.msra.mxu0 0.0
    %665 = vmatprep.subr.mxu0 0.0
    %666 = vmatpush1.msra.mxu0 0.0
    %667 = vmatprep.subr.mxu0 0.0
    %668 = vmatpush1.msra.mxu0 0.0
    %669 = vmatprep.subr.mxu0 0.0
    %670 = vmatpush1.msra.mxu0 0.0
    %671 = vmatprep.subr.mxu0 0.0
    %672 = vmatpush1.msra.mxu0 0.0
    %673 = vmatprep.subr.mxu0 0.0
    %674 = vmatpush1.msra.mxu0 0.0
    %675 = vmatprep.subr.mxu0 0.0
    %676 = vmatpush1.msra.mxu0 0.0
    %677 = vmatprep.subr.mxu0 0.0
    %678 = vmatpush1.msra.mxu0 0.0
    %679 = vmatprep.subr.mxu0 0.0
    %680 = vmatpush1.msra.mxu0 0.0
    %681 = vmatprep.subr.mxu0 0.0
    %682 = vmatpush1.msra.mxu0 0.0
    %683 = vmatprep.subr.mxu0 0.0
    %684 = vmatpush1.msra.mxu0 0.0
    %685 = vmatprep.subr.mxu0 0.0
    %686 = vmatpush1.msra.mxu0 0.0
    %687 = vmatprep.subr.mxu0 0.0
    %688 = vmatpush1.msra.mxu0 0.0
    %689 = vmatprep.subr.mxu0 0.0
    %690 = vmatpush1.msra.mxu0 0.0
    %691 = vmatprep.subr.mxu0 0.0
    %692 = vmatpush1.msra.mxu0 0.0
    %693 = vmatprep.subr.mxu0 0.0
    %694 = vmatpush1.msra.mxu0 0.0
    %695 = vmatprep.subr.mxu0 0.0
    %696 = vmatpush1.msra.mxu0 0.0
    %697 = vmatprep.subr.mxu0 0.0
    %698 = vmatpush1.msra.mxu0 0.0
    %699 = vmatprep.subr.mxu0 0.0
    %700 = vmatpush1.msra.mxu0 0.0
    %701 = vmatprep.subr.mxu0 0.0
    %702 = vmatpush1.msra.mxu0 0.0
    %703 = vmatprep.subr.mxu0 0.0
    %704 = vmatpush1.msra.mxu0 0.0
    %705 = vmatprep.mubr.f32.mxu0 0.0
    %706 = vmatmul.mubr.f32.gmra.mrb[0].mxu0 %v51
    %v707 = vpop.f32.mrb[0].mxu0
    %v708 = vadd.f32 %v639, %v707
    %v709 = vpop.f32.mrb[0].mxu0
    %710 = vdwg.mxu0
    %v711 = vlaneseq
    %v712 = vshrl.u32 %v711, 7
    %v713 = vsub.s32 0, %v712
    %v714 = vrot.slane %v540, %v713
    %715 = vrot.lane.b32.xlu0 %v536, 88
    %v716 = vpop.permute.xlu0 %715
    %717 = vrot.lane.b32.xlu0 %v537, 88
    %v718 = vpop.permute.xlu0 %717
    %722 = vrot.lane.b32.xlu0 %v714, 120
    %v723 = vpop.permute.xlu0 %722
    %725 = vmatprep.subr.mxu0 0.0
    %726 = vmatpush1.msra.mxu0 %v716
    %727 = vmatprep.subr.mxu0 0.0
    %728 = vmatpush1.msra.mxu0 %v718
    %729 = vmatprep.subr.mxu0 0.0
    %730 = vmatpush1.msra.mxu0 0.0
    %731 = vmatprep.subr.mxu0 0.0
    %732 = vmatpush1.msra.mxu0 0.0
    %733 = vmatprep.subr.mxu0 0.0
    %734 = vmatpush1.msra.mxu0 0.0
    %735 = vmatprep.subr.mxu0 0.0
    %736 = vmatpush1.msra.mxu0 0.0
    %737 = vmatprep.subr.mxu0 0.0
    %738 = vmatpush1.msra.mxu0 0.0
    %739 = vmatprep.subr.mxu0 0.0
    %740 = vmatpush1.msra.mxu0 0.0
    %741 = vmatprep.subr.mxu0 0.0
    %742 = vmatpush1.msra.mxu0 0.0
    %743 = vmatprep.subr.mxu0 0.0
    %744 = vmatpush1.msra.mxu0 0.0
    %745 = vmatprep.subr.mxu0 0.0
    %746 = vmatpush1.msra.mxu0 0.0
    %747 = vmatprep.subr.mxu0 0.0
    %748 = vmatpush1.msra.mxu0 0.0
    %749 = vmatprep.subr.mxu0 0.0
    %750 = vmatpush1.msra.mxu0 0.0
    %751 = vmatprep.subr.mxu0 0.0
    %752 = vmatpush1.msra.mxu0 0.0
    %753 = vmatprep.subr.mxu0 0.0
    %754 = vmatpush1.msra.mxu0 0.0
    %755 = vmatprep.subr.mxu0 0.0
    %756 = vmatpush1.msra.mxu0 0.0
    %757 = vmatprep.subr.mxu0 0.0
    %758 = vmatpush1.msra.mxu0 0.0
    %759 = vmatprep.subr.mxu0 0.0
    %760 = vmatpush1.msra.mxu0 0.0
    %761 = vmatprep.subr.mxu0 0.0
    %762 = vmatpush1.msra.mxu0 0.0
    %763 = vmatprep.subr.mxu0 0.0
    %764 = vmatpush1.msra.mxu0 0.0
    %765 = vmatprep.subr.mxu0 0.0
    %766 = vmatpush1.msra.mxu0 0.0
    %767 = vmatprep.subr.mxu0 0.0
    %768 = vmatpush1.msra.mxu0 0.0
    %769 = vmatprep.subr.mxu0 0.0
    %770 = vmatpush1.msra.mxu0 0.0
    %771 = vmatprep.subr.mxu0 0.0
    %772 = vmatpush1.msra.mxu0 0.0
    %773 = vmatprep.subr.mxu0 0.0
    %774 = vmatpush1.msra.mxu0 0.0
    %775 = vmatprep.subr.mxu0 0.0
    %776 = vmatpush1.msra.mxu0 0.0
    %777 = vmatprep.subr.mxu0 0.0
    %778 = vmatpush1.msra.mxu0 0.0
    %779 = vmatprep.subr.mxu0 0.0
    %780 = vmatpush1.msra.mxu0 0.0
    %781 = vmatprep.subr.mxu0 0.0
    %782 = vmatpush1.msra.mxu0 0.0
    %783 = vmatprep.subr.mxu0 0.0
    %784 = vmatpush1.msra.mxu0 0.0
    %785 = vmatprep.subr.mxu0 0.0
    %786 = vmatpush1.msra.mxu0 0.0
    %787 = vmatprep.subr.mxu0 0.0
    %788 = vmatpush1.msra.mxu0 0.0
    %789 = vmatprep.mubr.f32.mxu0 0.0
    %790 = vmatmul.mubr.f32.gmra.mrb[0].mxu0 %v51
    %v791 = vpop.f32.mrb[0].mxu0
    %v792 = vadd.f32 %v723, %v791
    %v793 = vpop.f32.mrb[0].mxu0
    %794 = vdwg.mxu0
    %v796 = vsel %vm285, %v624, 0
    %v799 = vsel %vm285, %v708, 0
    %801 = vmatprep.subr.mxu0 0.0
    %802 = vmatpush1.xpose.msra.mxu0 %v799
    %803 = vmatprep.subr.mxu0 0.0
    %804 = vmatpush1.xpose.msra.mxu0 0.0
    %805 = vmatprep.subr.mxu0 0.0
    %806 = vmatpush1.xpose.msra.mxu0 0.0
    %807 = vmatprep.subr.mxu0 0.0
    %808 = vmatpush1.xpose.msra.mxu0 0.0
    %809 = vmatprep.subr.mxu0 0.0
    %810 = vmatpush1.xpose.msra.mxu0 0.0
    %811 = vmatprep.subr.mxu0 0.0
    %812 = vmatpush1.xpose.msra.mxu0 0.0
    %813 = vmatprep.subr.mxu0 0.0
    %814 = vmatpush1.xpose.msra.mxu0 0.0
    %815 = vmatprep.subr.mxu0 0.0
    %816 = vmatpush1.xpose.msra.mxu0 0.0
    %817 = vmatprep.subr.mxu0 0.0
    %818 = vmatpush1.xpose.msra.mxu0 0.0
    %819 = vmatprep.subr.mxu0 0.0
    %820 = vmatpush1.xpose.msra.mxu0 0.0
    %821 = vmatprep.subr.mxu0 0.0
    %822 = vmatpush1.xpose.msra.mxu0 0.0
    %823 = vmatprep.subr.mxu0 0.0
    %824 = vmatpush1.xpose.msra.mxu0 0.0
    %825 = vmatprep.subr.mxu0 0.0
    %826 = vmatpush1.xpose.msra.mxu0 0.0
    %827 = vmatprep.subr.mxu0 0.0
    %828 = vmatpush1.xpose.msra.mxu0 0.0
    %829 = vmatprep.subr.mxu0 0.0
    %830 = vmatpush1.xpose.msra.mxu0 0.0
    %831 = vmatprep.subr.mxu0 0.0
    %832 = vmatpush1.xpose.msra.mxu0 0.0
    %833 = vmatprep.subr.mxu0 0.0
    %834 = vmatpush1.xpose.msra.mxu0 0.0
    %835 = vmatprep.subr.mxu0 0.0
    %836 = vmatpush1.xpose.msra.mxu0 0.0
    %837 = vmatprep.subr.mxu0 0.0
    %838 = vmatpush1.xpose.msra.mxu0 0.0
    %839 = vmatprep.subr.mxu0 0.0
    %840 = vmatpush1.xpose.msra.mxu0 0.0
    %841 = vmatprep.subr.mxu0 0.0
    %842 = vmatpush1.xpose.msra.mxu0 0.0
    %843 = vmatprep.subr.mxu0 0.0
    %844 = vmatpush1.xpose.msra.mxu0 0.0
    %845 = vmatprep.subr.mxu0 0.0
    %846 = vmatpush1.xpose.msra.mxu0 0.0
    %847 = vmatprep.subr.mxu0 0.0
    %848 = vmatpush1.xpose.msra.mxu0 0.0
    %849 = vmatprep.subr.mxu0 0.0
    %850 = vmatpush1.xpose.msra.mxu0 0.0
    %851 = vmatprep.subr.mxu0 0.0
    %852 = vmatpush1.xpose.msra.mxu0 0.0
    %853 = vmatprep.subr.mxu0 0.0
    %854 = vmatpush1.xpose.msra.mxu0 0.0
    %855 = vmatprep.subr.mxu0 0.0
    %856 = vmatpush1.xpose.msra.mxu0 0.0
    %857 = vmatprep.subr.mxu0 0.0
    %858 = vmatpush1.xpose.msra.mxu0 0.0
    %859 = vmatprep.subr.mxu0 0.0
    %860 = vmatpush1.xpose.msra.mxu0 0.0
    %861 = vmatprep.subr.mxu0 0.0
    %862 = vmatpush1.xpose.msra.mxu0 0.0
    %863 = vmatprep.subr.mxu0 0.0
    %864 = vmatpush1.xpose.msra.mxu0 0.0
    %865 = vmatprep.mubr.f32.mxu0 0.0
    %866 = vmatmul.mubr.f32.gmra.mrb[0].mxu0 %v796
    %v867 = vpop.f32.mrb[0].mxu0
    %v868 = vadd.f32 0.0, %v867
    %v869 = vpop.f32.mrb[0].mxu0
    %870 = vdwg.mxu0
    %v871 = vmul.f32 %v868, 0.125
    %v872 = vsel %vm33, -1e+09, %v871
    %v873 = vsel %vm364, %v872, -inf
    %874 = vmax.xlane.f32.xlu0 %v873
    %v875 = vpop.xlane.xlu0 %874
    %v876 = vsub.f32 %v872, %v875
    %v877 = vmul.f32 %v876, 1.442695
    %v878 = vpow.pop %v877
    %v879 = vsel %vm364, %v878, 0.0
    %880 = vadd.xlane.f32.xlu0 %v879
    %v881 = vpop.xlane.xlu0 %880
    %v882 = vrcp.pop %v881
    %v883 = vmul.f32 %v878, %v882
    %s884 = scalar_lea.vmem %s9, 8
    %885 = vst.msk [vmem:[%s884] sm:$0x1f] %vm364, %v883
    %v887 = vsel %vm377, %v872, 0
    %v890 = vsel %vm381, %v792, 0
    %892 = vmatprep.subr.mxu0 0.0
    %893 = vmatpush1.msra.mxu0 %v890
    %894 = vmatprep.subr.mxu0 0.0
    %895 = vmatpush1.msra.mxu0 0.0
    %896 = vmatprep.subr.mxu0 0.0
    %897 = vmatpush1.msra.mxu0 0.0
    %898 = vmatprep.subr.mxu0 0.0
    %899 = vmatpush1.msra.mxu0 0.0
    %900 = vmatprep.subr.mxu0 0.0
    %901 = vmatpush1.msra.mxu0 0.0
    %902 = vmatprep.subr.mxu0 0.0
    %903 = vmatpush1.msra.mxu0 0.0
    %904 = vmatprep.subr.mxu0 0.0
    %905 = vmatpush1.msra.mxu0 0.0
    %906 = vmatprep.subr.mxu0 0.0
    %907 = vmatpush1.msra.mxu0 0.0
    %908 = vmatprep.subr.mxu0 0.0
    %909 = vmatpush1.msra.mxu0 0.0
    %910 = vmatprep.subr.mxu0 0.0
    %911 = vmatpush1.msra.mxu0 0.0
    %912 = vmatprep.subr.mxu0 0.0
    %913 = vmatpush1.msra.mxu0 0.0
    %914 = vmatprep.subr.mxu0 0.0
    %915 = vmatpush1.msra.mxu0 0.0
    %916 = vmatprep.subr.mxu0 0.0
    %917 = vmatpush1.msra.mxu0 0.0
    %918 = vmatprep.subr.mxu0 0.0
    %919 = vmatpush1.msra.mxu0 0.0
    %920 = vmatprep.subr.mxu0 0.0
    %921 = vmatpush1.msra.mxu0 0.0
    %922 = vmatprep.subr.mxu0 0.0
    %923 = vmatpush1.msra.mxu0 0.0
    %924 = vmatprep.subr.mxu0 0.0
    %925 = vmatpush1.msra.mxu0 0.0
    %926 = vmatprep.subr.mxu0 0.0
    %927 = vmatpush1.msra.mxu0 0.0
    %928 = vmatprep.subr.mxu0 0.0
    %929 = vmatpush1.msra.mxu0 0.0
    %930 = vmatprep.subr.mxu0 0.0
    %931 = vmatpush1.msra.mxu0 0.0
    %932 = vmatprep.subr.mxu0 0.0
    %933 = vmatpush1.msra.mxu0 0.0
    %934 = vmatprep.subr.mxu0 0.0
    %935 = vmatpush1.msra.mxu0 0.0
    %936 = vmatprep.subr.mxu0 0.0
    %937 = vmatpush1.msra.mxu0 0.0
    %938 = vmatprep.subr.mxu0 0.0
    %939 = vmatpush1.msra.mxu0 0.0
    %940 = vmatprep.subr.mxu0 0.0
    %941 = vmatpush1.msra.mxu0 0.0
    %942 = vmatprep.subr.mxu0 0.0
    %943 = vmatpush1.msra.mxu0 0.0
    %944 = vmatprep.subr.mxu0 0.0
    %945 = vmatpush1.msra.mxu0 0.0
    %946 = vmatprep.subr.mxu0 0.0
    %947 = vmatpush1.msra.mxu0 0.0
    %948 = vmatprep.subr.mxu0 0.0
    %949 = vmatpush1.msra.mxu0 0.0
    %950 = vmatprep.subr.mxu0 0.0
    %951 = vmatpush1.msra.mxu0 0.0
    %952 = vmatprep.subr.mxu0 0.0
    %953 = vmatpush1.msra.mxu0 0.0
    %954 = vmatprep.subr.mxu0 0.0
    %955 = vmatpush1.msra.mxu0 0.0
    %956 = vmatprep.mubr.f32.mxu0 0.0
    %957 = vmatmul.mubr.f32.gmra.mrb[0].mxu0 %v887
    %v958 = vpop.f32.mrb[0].mxu0
    %v959 = vadd.f32 0.0, %v958
    %v960 = vpop.f32.mrb[0].mxu0
    %961 = vdwg.mxu0
    %962 = vrot.lane.b32.xlu0 %v537, 80
    %v963 = vpop.permute.xlu0 %962
    %v966 = vsel %vm285, %v959, 0
    %968 = vmatprep.subr.mxu0 0.0
    %969 = vmatpush1.msra.mxu0 %v963
    %970 = vmatprep.subr.mxu0 0.0
    %971 = vmatpush1.msra.mxu0 0.0
    %972 = vmatprep.subr.mxu0 0.0
    %973 = vmatpush1.msra.mxu0 0.0
    %974 = vmatprep.subr.mxu0 0.0
    %975 = vmatpush1.msra.mxu0 0.0
    %976 = vmatprep.subr.mxu0 0.0
    %977 = vmatpush1.msra.mxu0 0.0
    %978 = vmatprep.subr.mxu0 0.0
    %979 = vmatpush1.msra.mxu0 0.0
    %980 = vmatprep.subr.mxu0 0.0
    %981 = vmatpush1.msra.mxu0 0.0
    %982 = vmatprep.subr.mxu0 0.0
    %983 = vmatpush1.msra.mxu0 0.0
    %984 = vmatprep.subr.mxu0 0.0
    %985 = vmatpush1.msra.mxu0 0.0
    %986 = vmatprep.subr.mxu0 0.0
    %987 = vmatpush1.msra.mxu0 0.0
    %988 = vmatprep.subr.mxu0 0.0
    %989 = vmatpush1.msra.mxu0 0.0
    %990 = vmatprep.subr.mxu0 0.0
    %991 = vmatpush1.msra.mxu0 0.0
    %992 = vmatprep.subr.mxu0 0.0
    %993 = vmatpush1.msra.mxu0 0.0
    %994 = vmatprep.subr.mxu0 0.0
    %995 = vmatpush1.msra.mxu0 0.0
    %996 = vmatprep.subr.mxu0 0.0
    %997 = vmatpush1.msra.mxu0 0.0
    %998 = vmatprep.subr.mxu0 0.0
    %999 = vmatpush1.msra.mxu0 0.0
    %1000 = vmatprep.subr.mxu0 0.0
    %1001 = vmatpush1.msra.mxu0 0.0
    %1002 = vmatprep.subr.mxu0 0.0
    %1003 = vmatpush1.msra.mxu0 0.0
    %1004 = vmatprep.subr.mxu0 0.0
    %1005 = vmatpush1.msra.mxu0 0.0
    %1006 = vmatprep.subr.mxu0 0.0
    %1007 = vmatpush1.msra.mxu0 0.0
    %1008 = vmatprep.subr.mxu0 0.0
    %1009 = vmatpush1.msra.mxu0 0.0
    %1010 = vmatprep.subr.mxu0 0.0
    %1011 = vmatpush1.msra.mxu0 0.0
    %1012 = vmatprep.subr.mxu0 0.0
    %1013 = vmatpush1.msra.mxu0 0.0
    %1014 = vmatprep.subr.mxu0 0.0
    %1015 = vmatpush1.msra.mxu0 0.0
    %1016 = vmatprep.subr.mxu0 0.0
    %1017 = vmatpush1.msra.mxu0 0.0
    %1018 = vmatprep.subr.mxu0 0.0
    %1019 = vmatpush1.msra.mxu0 0.0
    %1020 = vmatprep.subr.mxu0 0.0
    %1021 = vmatpush1.msra.mxu0 0.0
    %1022 = vmatprep.subr.mxu0 0.0
    %1023 = vmatpush1.msra.mxu0 0.0
    %1024 = vmatprep.subr.mxu0 0.0
    %1025 = vmatpush1.msra.mxu0 0.0
    %1026 = vmatprep.subr.mxu0 0.0
    %1027 = vmatpush1.msra.mxu0 0.0
    %1028 = vmatprep.subr.mxu0 0.0
    %1029 = vmatpush1.msra.mxu0 0.0
    %1030 = vmatprep.subr.mxu0 0.0
    %1031 = vmatpush1.msra.mxu0 0.0
    %1032 = vmatprep.mubr.f32.mxu0 0.0
    %1033 = vmatmul.mubr.f32.gmra.mrb[0].mxu0 %v966
    %v1034 = vpop.f32.mrb[0].mxu0
    %v1035 = vadd.f32 0.0, %v1034
    %v1036 = vpop.f32.mrb[0].mxu0
    %1037 = vdwg.mxu0
    %v1038 = vadd.f32 %v535, %v1035
    %v1039 = vld [vmem:[%s7 + $0x4] sm:$0x1]
    %v1040 = vld [vmem:[%s7 + $0x5] sm:$0x1]
    %v1041 = vadd.f32 %v1038, %v38
    %vm1042 = vcmask 126976
    %v1043 = vsel %vm1042, %v1041, 0.0
    %1044 = vadd.xlane.f32.xlu0 %v1043
    %v1045 = vpop.xlane.xlu0 %1044
    %v1046 = vrcp.pop 16.0
    %v1047 = vmul.f32 %v1045, %v1046
    %v1048 = vsub.f32 %v1041, %v1047
    %v1049 = vmul.f32 %v1048, %v1048
    %v1050 = vsel %vm1042, %v1049, 0.0
    %1051 = vadd.xlane.f32.xlu0 %v1050
    %v1052 = vpop.xlane.xlu0 %1051
    %v1053 = vmul.f32 %v1052, %v1046
    %v1054 = vadd.f32 %v1053, 1e-05
    %v1055 = vrsqrt.pop %v1054
    %v1056 = vmul.f32 %v1048, %v1055
    %v1057 = vlaneseq
    %v1058 = vshrl.u32 %v1057, 7
    %v1059 = vsub.s32 0, %v1058
    %v1060 = vrot.slane %v1039, %v1059
    %v1061 = vmul.f32 %v1056, %v1060
    %v1062 = vlaneseq
    %v1063 = vshrl.u32 %v1062, 7
    %v1064 = vsub.s32 0, %v1063
    %v1065 = vrot.slane %v1040, %v1064
    %v1066 = vadd.f32 %v1061, %v1065
    %v1067 = vld [vmem:[%s5 + $0x18] sm:$0xff]
    %v1068 = vld [vmem:[%s5 + $0x40] sm:$0xff]
    %v1069 = vld [vmem:[%s7 + $0x24] sm:$0x1]
    %v1070 = vld [vmem:[%s6] sm:$0xff]
    %v1071 = vld [vmem:[%s6 + $0x8] sm:$0xff]
    %v1072 = vld [vmem:[%s6 + $0x10] sm:$0xff]
    %v1073 = vld [vmem:[%s6 + $0x18] sm:$0xff]
    %v1074 = vld [vmem:[%s7 + $0x25] sm:$0x1]
    %v1075 = vld [vmem:[%s7 + $0x26] sm:$0x1]
    %v1076 = vld [vmem:[%s7 + $0x27] sm:$0x1]
    %v1077 = vlaneseq
    %v1078 = vshrl.u32 %v1077, 7
    %v1079 = vsub.s32 0, %v1078
    %v1080 = vrot.slane %v1069, %v1079
    %v1082 = vsel %vm49, %v1066, 0
    %1084 = vmatprep.subr.mxu0 0.0
    %1085 = vmatpush1.msra.mxu0 %v1067
    %1086 = vmatprep.subr.mxu0 0.0
    %1087 = vmatpush1.msra.mxu0 %v1068
    %1088 = vmatprep.subr.mxu0 0.0
    %1089 = vmatpush1.msra.mxu0 0.0
    %1090 = vmatprep.subr.mxu0 0.0
    %1091 = vmatpush1.msra.mxu0 0.0
    %1092 = vmatprep.subr.mxu0 0.0
    %1093 = vmatpush1.msra.mxu0 0.0
    %1094 = vmatprep.subr.mxu0 0.0
    %1095 = vmatpush1.msra.mxu0 0.0
    %1096 = vmatprep.subr.mxu0 0.0
    %1097 = vmatpush1.msra.mxu0 0.0
    %1098 = vmatprep.subr.mxu0 0.0
    %1099 = vmatpush1.msra.mxu0 0.0
    %1100 = vmatprep.subr.mxu0 0.0
    %1101 = vmatpush1.msra.mxu0 0.0
    %1102 = vmatprep.subr.mxu0 0.0
    %1103 = vmatpush1.msra.mxu0 0.0
    %1104 = vmatprep.subr.mxu0 0.0
    %1105 = vmatpush1.msra.mxu0 0.0
    %1106 = vmatprep.subr.mxu0 0.0
    %1107 = vmatpush1.msra.mxu0 0.0
    %1108 = vmatprep.subr.mxu0 0.0
    %1109 = vmatpush1.msra.mxu0 0.0
    %1110 = vmatprep.subr.mxu0 0.0
    %1111 = vmatpush1.msra.mxu0 0.0
    %1112 = vmatprep.subr.mxu0 0.0
    %1113 = vmatpush1.msra.mxu0 0.0
    %1114 = vmatprep.subr.mxu0 0.0
    %1115 = vmatpush1.msra.mxu0 0.0
    %1116 = vmatprep.subr.mxu0 0.0
    %1117 = vmatpush1.msra.mxu0 0.0
    %1118 = vmatprep.subr.mxu0 0.0
    %1119 = vmatpush1.msra.mxu0 0.0
    %1120 = vmatprep.subr.mxu0 0.0
    %1121 = vmatpush1.msra.mxu0 0.0
    %1122 = vmatprep.subr.mxu0 0.0
    %1123 = vmatpush1.msra.mxu0 0.0
    %1124 = vmatprep.subr.mxu0 0.0
    %1125 = vmatpush1.msra.mxu0 0.0
    %1126 = vmatprep.subr.mxu0 0.0
    %1127 = vmatpush1.msra.mxu0 0.0
    %1128 = vmatprep.subr.mxu0 0.0
    %1129 = vmatpush1.msra.mxu0 0.0
    %1130 = vmatprep.subr.mxu0 0.0
    %1131 = vmatpush1.msra.mxu0 0.0
    %1132 = vmatprep.subr.mxu0 0.0
    %1133 = vmatpush1.msra.mxu0 0.0
    %1134 = vmatprep.subr.mxu0 0.0
    %1135 = vmatpush1.msra.mxu0 0.0
    %1136 = vmatprep.subr.mxu0 0.0
    %1137 = vmatpush1.msra.mxu0 0.0
    %1138 = vmatprep.subr.mxu0 0.0
    %1139 = vmatpush1.msra.mxu0 0.0
    %1140 = vmatprep.subr.mxu0 0.0
    %1141 = vmatpush1.msra.mxu0 0.0
    %1142 = vmatprep.subr.mxu0 0.0
    %1143 = vmatpush1.msra.mxu0 0.0
    %1144 = vmatprep.subr.mxu0 0.0
    %1145 = vmatpush1.msra.mxu0 0.0
    %1146 = vmatprep.subr.mxu0 0.0
    %1147 = vmatpush1.msra.mxu0 0.0
    %1148 = vmatprep.mubr.f32.mxu0 0.0
    %1149 = vmatmul.mubr.f32.gmra.mrb[0].mxu0 %v1082
    %v1150 = vpop.f32.mrb[0].mxu0
    %v1151 = vadd.f32 %v1080, %v1150
    %v1152 = vpop.f32.mrb[0].mxu0
    %1153 = vdwg.mxu0
    %v1154 = vlaneseq
    %v1155 = vshrl.u32 %v1154, 7
    %v1156 = vsub.s32 0, %v1155
    %v1157 = vrot.slane %v1074, %v1156
    %vm1158 = vcmask 261120
    %v1160 = vsel %vm1158, %v1151, 0
    %1162 = vmatprep.subr.mxu0 0.0
    %1163 = vmatpush1.msra.mxu0 %v1070
    %1164 = vmatprep.subr.mxu0 0.0
    %1165 = vmatpush1.msra.mxu0 %v1071
    %1166 = vmatprep.subr.mxu0 0.0
    %1167 = vmatpush1.msra.mxu0 %v1072
    %1168 = vmatprep.subr.mxu0 0.0
    %1169 = vmatpush1.msra.mxu0 %v1073
    %1170 = vmatprep.subr.mxu0 0.0
    %1171 = vmatpush1.msra.mxu0 0.0
    %1172 = vmatprep.subr.mxu0 0.0
    %1173 = vmatpush1.msra.mxu0 0.0
    %1174 = vmatprep.subr.mxu0 0.0
    %1175 = vmatpush1.msra.mxu0 0.0
    %1176 = vmatprep.subr.mxu0 0.0
    %1177 = vmatpush1.msra.mxu0 0.0
    %1178 = vmatprep.subr.mxu0 0.0
    %1179 = vmatpush1.msra.mxu0 0.0
    %1180 = vmatprep.subr.mxu0 0.0
    %1181 = vmatpush1.msra.mxu0 0.0
    %1182 = vmatprep.subr.mxu0 0.0
    %1183 = vmatpush1.msra.mxu0 0.0
    %1184 = vmatprep.subr.mxu0 0.0
    %1185 = vmatpush1.msra.mxu0 0.0
    %1186 = vmatprep.subr.mxu0 0.0
    %1187 = vmatpush1.msra.mxu0 0.0
    %1188 = vmatprep.subr.mxu0 0.0
    %1189 = vmatpush1.msra.mxu0 0.0
    %1190 = vmatprep.subr.mxu0 0.0
    %1191 = vmatpush1.msra.mxu0 0.0
    %1192 = vmatprep.subr.mxu0 0.0
    %1193 = vmatpush1.msra.mxu0 0.0
    %1194 = vmatprep.subr.mxu0 0.0
    %1195 = vmatpush1.msra.mxu0 0.0
    %1196 = vmatprep.subr.mxu0 0.0
    %1197 = vmatpush1.msra.mxu0 0.0
    %1198 = vmatprep.subr.mxu0 0.0
    %1199 = vmatpush1.msra.mxu0 0.0
    %1200 = vmatprep.subr.mxu0 0.0
    %1201 = vmatpush1.msra.mxu0 0.0
    %1202 = vmatprep.subr.mxu0 0.0
    %1203 = vmatpush1.msra.mxu0 0.0
    %1204 = vmatprep.subr.mxu0 0.0
    %1205 = vmatpush1.msra.mxu0 0.0
    %1206 = vmatprep.subr.mxu0 0.0
    %1207 = vmatpush1.msra.mxu0 0.0
    %1208 = vmatprep.subr.mxu0 0.0
    %1209 = vmatpush1.msra.mxu0 0.0
    %1210 = vmatprep.subr.mxu0 0.0
    %1211 = vmatpush1.msra.mxu0 0.0
    %1212 = vmatprep.subr.mxu0 0.0
    %1213 = vmatpush1.msra.mxu0 0.0
    %1214 = vmatprep.subr.mxu0 0.0
    %1215 = vmatpush1.msra.mxu0 0.0
    %1216 = vmatprep.subr.mxu0 0.0
    %1217 = vmatpush1.msra.mxu0 0.0
    %1218 = vmatprep.subr.mxu0 0.0
    %1219 = vmatpush1.msra.mxu0 0.0
    %1220 = vmatprep.subr.mxu0 0.0
    %1221 = vmatpush1.msra.mxu0 0.0
    %1222 = vmatprep.subr.mxu0 0.0
    %1223 = vmatpush1.msra.mxu0 0.0
    %1224 = vmatprep.subr.mxu0 0.0
    %1225 = vmatpush1.msra.mxu0 0.0
    %1226 = vmatprep.mubr.f32.mxu0 0.0
    %1227 = vmatmul.mubr.f32.gmra.mrb[0].mxu0 %v1160
    %v1228 = vpop.f32.mrb[0].mxu0
    %v1229 = vadd.f32 %v1157, %v1228
    %v1230 = vpop.f32.mrb[0].mxu0
    %1231 = vdwg.mxu0
    %v1232 = vmax.f32 %v1229, 0.0
    %v1233 = vadd.f32 %v1232, %v1066
    %v1234 = vsel %vm1042, %v1233, 0.0
    %1235 = vadd.xlane.f32.xlu0 %v1234
    %v1236 = vpop.xlane.xlu0 %1235
    %v1237 = vmul.f32 %v1236, %v1046
    %v1238 = vsub.f32 %v1233, %v1237
    %v1239 = vmul.f32 %v1238, %v1238
    %v1240 = vsel %vm1042, %v1239, 0.0
    %1241 = vadd.xlane.f32.xlu0 %v1240
    %v1242 = vpop.xlane.xlu0 %1241
    %v1243 = vmul.f32 %v1242, %v1046
    %v1244 = vadd.f32 %v1243, 1e-05
    %v1245 = vrsqrt.pop %v1244
    %v1246 = vmul.f32 %v1238, %v1245
    %v1247 = vlaneseq
    %v1248 = vshrl.u32 %v1247, 7
    %v1249 = vsub.s32 0, %v1248
    %v1250 = vrot.slane %v1075, %v1249
    %v1251 = vmul.f32 %v1246, %v1250
    %v1252 = vlaneseq
    %v1253 = vshrl.u32 %v1252, 7
    %v1254 = vsub.s32 0, %v1253
    %v1255 = vrot.slane %v1076, %v1254
    %v1256 = vadd.f32 %v1251, %v1255
    %v1257 = vld [vmem:[%s7 + $0x9] sm:$0x1]
    %v1258 = vld [vmem:[%s5] sm:$0xff]
    %v1259 = vld [vmem:[%s5 + $0x28] sm:$0xff]
    %v1260 = vld [vmem:[%s7 + $0x6] sm:$0x1]
    %v1261 = vld [vmem:[%s7 + $0x7] sm:$0x1]
    %v1262 = vld [vmem:[%s7 + $0x8] sm:$0x1]
    %v1263 = vlaneseq
    %v1264 = vshrl.u32 %v1263, 7
    %v1265 = vsub.s32 0, %v1264
    %v1266 = vrot.slane %v1260, %v1265
    %1269 = vrot.lane.b32.xlu0 %v1258, 64
    %v1270 = vpop.permute.xlu0 %1269
    %1271 = vrot.lane.b32.xlu0 %v1259, 64
    %v1272 = vpop.permute.xlu0 %1271
    %v1276 = vsel %vm49, %v1256, 0
    %1278 = vmatprep.subr.mxu0 0.0
    %1279 = vmatpush1.msra.mxu0 %v1270
    %1280 = vmatprep.subr.mxu0 0.0
    %1281 = vmatpush1.msra.mxu0 %v1272
    %1282 = vmatprep.subr.mxu0 0.0
    %1283 = vmatpush1.msra.mxu0 0.0
    %1284 = vmatprep.subr.mxu0 0.0
    %1285 = vmatpush1.msra.mxu0 0.0
    %1286 = vmatprep.subr.mxu0 0.0
    %1287 = vmatpush1.msra.mxu0 0.0
    %1288 = vmatprep.subr.mxu0 0.0
    %1289 = vmatpush1.msra.mxu0 0.0
    %1290 = vmatprep.subr.mxu0 0.0
    %1291 = vmatpush1.msra.mxu0 0.0
    %1292 = vmatprep.subr.mxu0 0.0
    %1293 = vmatpush1.msra.mxu0 0.0
    %1294 = vmatprep.subr.mxu0 0.0
    %1295 = vmatpush1.msra.mxu0 0.0
    %1296 = vmatprep.subr.mxu0 0.0
    %1297 = vmatpush1.msra.mxu0 0.0
    %1298 = vmatprep.subr.mxu0 0.0
    %1299 = vmatpush1.msra.mxu0 0.0
    %1300 = vmatprep.subr.mxu0 0.0
    %1301 = vmatpush1.msra.mxu0 0.0
    %1302 = vmatprep.subr.mxu0 0.0
    %1303 = vmatpush1.msra.mxu0 0.0
    %1304 = vmatprep.subr.mxu0 0.0
    %1305 = vmatpush1.msra.mxu0 0.0
    %1306 = vmatprep.subr.mxu0 0.0
    %1307 = vmatpush1.msra.mxu0 0.0
    %1308 = vmatprep.subr.mxu0 0.0
    %1309 = vmatpush1.msra.mxu0 0.0
    %1310 = vmatprep.subr.mxu0 0.0
    %1311 = vmatpush1.msra.mxu0 0.0
    %1312 = vmatprep.subr.mxu0 0.0
    %1313 = vmatpush1.msra.mxu0 0.0
    %1314 = vmatprep.subr.mxu0 0.0
    %1315 = vmatpush1.msra.mxu0 0.0
    %1316 = vmatprep.subr.mxu0 0.0
    %1317 = vmatpush1.msra.mxu0 0.0
    %1318 = vmatprep.subr.mxu0 0.0
    %1319 = vmatpush1.msra.mxu0 0.0
    %1320 = vmatprep.subr.mxu0 0.0
    %1321 = vmatpush1.msra.mxu0 0.0
    %1322 = vmatprep.subr.mxu0 0.0
    %1323 = vmatpush1.msra.mxu0 0.0
    %1324 = vmatprep.subr.mxu0 0.0
    %1325 = vmatpush1.msra.mxu0 0.0
    %1326 = vmatprep.subr.mxu0 0.0
    %1327 = vmatpush1.msra.mxu0 0.0
    %1328 = vmatprep.subr.mxu0 0.0
    %1329 = vmatpush1.msra.mxu0 0.0
    %1330 = vmatprep.subr.mxu0 0.0
    %1331 = vmatpush1.msra.mxu0 0.0
    %1332 = vmatprep.subr.mxu0 0.0
    %1333 = vmatpush1.msra.mxu0 0.0
    %1334 = vmatprep.subr.mxu0 0.0
    %1335 = vmatpush1.msra.mxu0 0.0
    %1336 = vmatprep.subr.mxu0 0.0
    %1337 = vmatpush1.msra.mxu0 0.0
    %1338 = vmatprep.subr.mxu0 0.0
    %1339 = vmatpush1.msra.mxu0 0.0
    %1340 = vmatprep.subr.mxu0 0.0
    %1341 = vmatpush1.msra.mxu0 0.0
    %1342 = vmatprep.mubr.f32.mxu0 0.0
    %1343 = vmatmul.mubr.f32.gmra.mrb[0].mxu0 %v1276
    %v1344 = vpop.f32.mrb[0].mxu0
    %v1345 = vadd.f32 %v1266, %v1344
    %v1346 = vpop.f32.mrb[0].mxu0
    %1347 = vdwg.mxu0
    %v1348 = vlaneseq
    %v1349 = vshrl.u32 %v1348, 7
    %v1350 = vsub.s32 0, %v1349
    %v1351 = vrot.slane %v1261, %v1350
    %1352 = vrot.lane.b32.xlu0 %v1258, 48
    %v1353 = vpop.permute.xlu0 %1352
    %1354 = vrot.lane.b32.xlu0 %v1259, 48
    %v1355 = vpop.permute.xlu0 %1354
    %1358 = vmatprep.subr.mxu0 0.0
    %1359 = vmatpush1.msra.mxu0 %v1353
    %1360 = vmatprep.subr.mxu0 0.0
    %1361 = vmatpush1.msra.mxu0 %v1355
    %1362 = vmatprep.subr.mxu0 0.0
    %1363 = vmatpush1.msra.mxu0 0.0
    %1364 = vmatprep.subr.mxu0 0.0
    %1365 = vmatpush1.msra.mxu0 0.0
    %1366 = vmatprep.subr.mxu0 0.0
    %1367 = vmatpush1.msra.mxu0 0.0
    %1368 = vmatprep.subr.mxu0 0.0
    %1369 = vmatpush1.msra.mxu0 0.0
    %1370 = vmatprep.subr.mxu0 0.0
    %1371 = vmatpush1.msra.mxu0 0.0
    %1372 = vmatprep.subr.mxu0 0.0
    %1373 = vmatpush1.msra.mxu0 0.0
    %1374 = vmatprep.subr.mxu0 0.0
    %1375 = vmatpush1.msra.mxu0 0.0
    %1376 = vmatprep.subr.mxu0 0.0
    %1377 = vmatpush1.msra.mxu0 0.0
    %1378 = vmatprep.subr.mxu0 0.0
    %1379 = vmatpush1.msra.mxu0 0.0
    %1380 = vmatprep.subr.mxu0 0.0
    %1381 = vmatpush1.msra.mxu0 0.0
    %1382 = vmatprep.subr.mxu0 0.0
    %1383 = vmatpush1.msra.mxu0 0.0
    %1384 = vmatprep.subr.mxu0 0.0
    %1385 = vmatpush1.msra.mxu0 0.0
    %1386 = vmatprep.subr.mxu0 0.0
    %1387 = vmatpush1.msra.mxu0 0.0
    %1388 = vmatprep.subr.mxu0 0.0
    %1389 = vmatpush1.msra.mxu0 0.0
    %1390 = vmatprep.subr.mxu0 0.0
    %1391 = vmatpush1.msra.mxu0 0.0
    %1392 = vmatprep.subr.mxu0 0.0
    %1393 = vmatpush1.msra.mxu0 0.0
    %1394 = vmatprep.subr.mxu0 0.0
    %1395 = vmatpush1.msra.mxu0 0.0
    %1396 = vmatprep.subr.mxu0 0.0
    %1397 = vmatpush1.msra.mxu0 0.0
    %1398 = vmatprep.subr.mxu0 0.0
    %1399 = vmatpush1.msra.mxu0 0.0
    %1400 = vmatprep.subr.mxu0 0.0
    %1401 = vmatpush1.msra.mxu0 0.0
    %1402 = vmatprep.subr.mxu0 0.0
    %1403 = vmatpush1.msra.mxu0 0.0
    %1404 = vmatprep.subr.mxu0 0.0
    %1405 = vmatpush1.msra.mxu0 0.0
    %1406 = vmatprep.subr.mxu0 0.0
    %1407 = vmatpush1.msra.mxu0 0.0
    %1408 = vmatprep.subr.mxu0 0.0
    %1409 = vmatpush1.msra.mxu0 0.0
    %1410 = vmatprep.subr.mxu0 0.0
    %1411 = vmatpush1.msra.mxu0 0.0
    %1412 = vmatprep.subr.mxu0 0.0
    %1413 = vmatpush1.msra.mxu0 0.0
    %1414 = vmatprep.subr.mxu0 0.0
    %1415 = vmatpush1.msra.mxu0 0.0
    %1416 = vmatprep.subr.mxu0 0.0
    %1417 = vmatpush1.msra.mxu0 0.0
    %1418 = vmatprep.subr.mxu0 0.0
    %1419 = vmatpush1.msra.mxu0 0.0
    %1420 = vmatprep.subr.mxu0 0.0
    %1421 = vmatpush1.msra.mxu0 0.0
    %1422 = vmatprep.mubr.f32.mxu0 0.0
    %1423 = vmatmul.mubr.f32.gmra.mrb[0].mxu0 %v1276
    %v1424 = vpop.f32.mrb[0].mxu0
    %v1425 = vadd.f32 %v1351, %v1424
    %v1426 = vpop.f32.mrb[0].mxu0
    %1427 = vdwg.mxu0
    %v1428 = vlaneseq
    %v1429 = vshrl.u32 %v1428, 7
    %v1430 = vsub.s32 0, %v1429
    %v1431 = vrot.slane %v1262, %v1430
    %1432 = vrot.lane.b32.xlu0 %v1258, 32
    %v1433 = vpop.permute.xlu0 %1432
    %1434 = vrot.lane.b32.xlu0 %v1259, 32
    %v1435 = vpop.permute.xlu0 %1434
    %1438 = vmatprep.subr.mxu0 0.0
    %1439 = vmatpush1.msra.mxu0 %v1433
    %1440 = vmatprep.subr.mxu0 0.0
    %1441 = vmatpush1.msra.mxu0 %v1435
    %1442 = vmatprep.subr.mxu0 0.0
    %1443 = vmatpush1.msra.mxu0 0.0
    %1444 = vmatprep.subr.mxu0 0.0
    %1445 = vmatpush1.msra.mxu0 0.0
    %1446 = vmatprep.subr.mxu0 0.0
    %1447 = vmatpush1.msra.mxu0 0.0
    %1448 = vmatprep.subr.mxu0 0.0
    %1449 = vmatpush1.msra.mxu0 0.0
    %1450 = vmatprep.subr.mxu0 0.0
    %1451 = vmatpush1.msra.mxu0 0.0
    %1452 = vmatprep.subr.mxu0 0.0
    %1453 = vmatpush1.msra.mxu0 0.0
    %1454 = vmatprep.subr.mxu0 0.0
    %1455 = vmatpush1.msra.mxu0 0.0
    %1456 = vmatprep.subr.mxu0 0.0
    %1457 = vmatpush1.msra.mxu0 0.0
    %1458 = vmatprep.subr.mxu0 0.0
    %1459 = vmatpush1.msra.mxu0 0.0
    %1460 = vmatprep.subr.mxu0 0.0
    %1461 = vmatpush1.msra.mxu0 0.0
    %1462 = vmatprep.subr.mxu0 0.0
    %1463 = vmatpush1.msra.mxu0 0.0
    %1464 = vmatprep.subr.mxu0 0.0
    %1465 = vmatpush1.msra.mxu0 0.0
    %1466 = vmatprep.subr.mxu0 0.0
    %1467 = vmatpush1.msra.mxu0 0.0
    %1468 = vmatprep.subr.mxu0 0.0
    %1469 = vmatpush1.msra.mxu0 0.0
    %1470 = vmatprep.subr.mxu0 0.0
    %1471 = vmatpush1.msra.mxu0 0.0
    %1472 = vmatprep.subr.mxu0 0.0
    %1473 = vmatpush1.msra.mxu0 0.0
    %1474 = vmatprep.subr.mxu0 0.0
    %1475 = vmatpush1.msra.mxu0 0.0
    %1476 = vmatprep.subr.mxu0 0.0
    %1477 = vmatpush1.msra.mxu0 0.0
    %1478 = vmatprep.subr.mxu0 0.0
    %1479 = vmatpush1.msra.mxu0 0.0
    %1480 = vmatprep.subr.mxu0 0.0
    %1481 = vmatpush1.msra.mxu0 0.0
    %1482 = vmatprep.subr.mxu0 0.0
    %1483 = vmatpush1.msra.mxu0 0.0
    %1484 = vmatprep.subr.mxu0 0.0
    %1485 = vmatpush1.msra.mxu0 0.0
    %1486 = vmatprep.subr.mxu0 0.0
    %1487 = vmatpush1.msra.mxu0 0.0
    %1488 = vmatprep.subr.mxu0 0.0
    %1489 = vmatpush1.msra.mxu0 0.0
    %1490 = vmatprep.subr.mxu0 0.0
    %1491 = vmatpush1.msra.mxu0 0.0
    %1492 = vmatprep.subr.mxu0 0.0
    %1493 = vmatpush1.msra.mxu0 0.0
    %1494 = vmatprep.subr.mxu0 0.0
    %1495 = vmatpush1.msra.mxu0 0.0
    %1496 = vmatprep.subr.mxu0 0.0
    %1497 = vmatpush1.msra.mxu0 0.0
    %1498 = vmatprep.subr.mxu0 0.0
    %1499 = vmatpush1.msra.mxu0 0.0
    %1500 = vmatprep.subr.mxu0 0.0
    %1501 = vmatpush1.msra.mxu0 0.0
    %1502 = vmatprep.mubr.f32.mxu0 0.0
    %1503 = vmatmul.mubr.f32.gmra.mrb[0].mxu0 %v1276
    %v1504 = vpop.f32.mrb[0].mxu0
    %v1505 = vadd.f32 %v1431, %v1504
    %v1506 = vpop.f32.mrb[0].mxu0
    %1507 = vdwg.mxu0
    %v1509 = vsel %vm285, %v1345, 0
    %v1512 = vsel %vm285, %v1425, 0
    %1514 = vmatprep.subr.mxu0 0.0
    %1515 = vmatpush1.xpose.msra.mxu0 %v1512
    %1516 = vmatprep.subr.mxu0 0.0
    %1517 = vmatpush1.xpose.msra.mxu0 0.0
    %1518 = vmatprep.subr.mxu0 0.0
    %1519 = vmatpush1.xpose.msra.mxu0 0.0
    %1520 = vmatprep.subr.mxu0 0.0
    %1521 = vmatpush1.xpose.msra.mxu0 0.0
    %1522 = vmatprep.subr.mxu0 0.0
    %1523 = vmatpush1.xpose.msra.mxu0 0.0
    %1524 = vmatprep.subr.mxu0 0.0
    %1525 = vmatpush1.xpose.msra.mxu0 0.0
    %1526 = vmatprep.subr.mxu0 0.0
    %1527 = vmatpush1.xpose.msra.mxu0 0.0
    %1528 = vmatprep.subr.mxu0 0.0
    %1529 = vmatpush1.xpose.msra.mxu0 0.0
    %1530 = vmatprep.subr.mxu0 0.0
    %1531 = vmatpush1.xpose.msra.mxu0 0.0
    %1532 = vmatprep.subr.mxu0 0.0
    %1533 = vmatpush1.xpose.msra.mxu0 0.0
    %1534 = vmatprep.subr.mxu0 0.0
    %1535 = vmatpush1.xpose.msra.mxu0 0.0
    %1536 = vmatprep.subr.mxu0 0.0
    %1537 = vmatpush1.xpose.msra.mxu0 0.0
    %1538 = vmatprep.subr.mxu0 0.0
    %1539 = vmatpush1.xpose.msra.mxu0 0.0
    %1540 = vmatprep.subr.mxu0 0.0
    %1541 = vmatpush1.xpose.msra.mxu0 0.0
    %1542 = vmatprep.subr.mxu0 0.0
    %1543 = vmatpush1.xpose.msra.mxu0 0.0
    %1544 = vmatprep.subr.mxu0 0.0
    %1545 = vmatpush1.xpose.msra.mxu0 0.0
    %1546 = vmatprep.subr.mxu0 0.0
    %1547 = vmatpush1.xpose.msra.mxu0 0.0
    %1548 = vmatprep.subr.mxu0 0.0
    %1549 = vmatpush1.xpose.msra.mxu0 0.0
    %1550 = vmatprep.subr.mxu0 0.0
    %1551 = vmatpush1.xpose.msra.mxu0 0.0
    %1552 = vmatprep.subr.mxu0 0.0
    %1553 = vmatpush1.xpose.msra.mxu0 0.0
    %1554 = vmatprep.subr.mxu0 0.0
    %1555 = vmatpush1.xpose.msra.mxu0 0.0
    %1556 = vmatprep.subr.mxu0 0.0
    %1557 = vmatpush1.xpose.msra.mxu0 0.0
    %1558 = vmatprep.subr.mxu0 0.0
    %1559 = vmatpush1.xpose.msra.mxu0 0.0
    %1560 = vmatprep.subr.mxu0 0.0
    %1561 = vmatpush1.xpose.msra.mxu0 0.0
    %1562 = vmatprep.subr.mxu0 0.0
    %1563 = vmatpush1.xpose.msra.mxu0 0.0
    %1564 = vmatprep.subr.mxu0 0.0
    %1565 = vmatpush1.xpose.msra.mxu0 0.0
    %1566 = vmatprep.subr.mxu0 0.0
    %1567 = vmatpush1.xpose.msra.mxu0 0.0
    %1568 = vmatprep.subr.mxu0 0.0
    %1569 = vmatpush1.xpose.msra.mxu0 0.0
    %1570 = vmatprep.subr.mxu0 0.0
    %1571 = vmatpush1.xpose.msra.mxu0 0.0
    %1572 = vmatprep.subr.mxu0 0.0
    %1573 = vmatpush1.xpose.msra.mxu0 0.0
    %1574 = vmatprep.subr.mxu0 0.0
    %1575 = vmatpush1.xpose.msra.mxu0 0.0
    %1576 = vmatprep.subr.mxu0 0.0
    %1577 = vmatpush1.xpose.msra.mxu0 0.0
    %1578 = vmatprep.mubr.f32.mxu0 0.0
    %1579 = vmatmul.mubr.f32.gmra.mrb[0].mxu0 %v1509
    %v1580 = vpop.f32.mrb[0].mxu0
    %v1581 = vadd.f32 0.0, %v1580
    %v1582 = vpop.f32.mrb[0].mxu0
    %1583 = vdwg.mxu0
    %v1584 = vmul.f32 %v1581, 0.125
    %v1585 = vsel %vm33, -1e+09, %v1584
    %v1586 = vsel %vm364, %v1585, -inf
    %1587 = vmax.xlane.f32.xlu0 %v1586
    %v1588 = vpop.xlane.xlu0 %1587
    %v1589 = vsub.f32 %v1585, %v1588
    %v1590 = vmul.f32 %v1589, 1.442695
    %v1591 = vpow.pop %v1590
    %v1592 = vsel %vm364, %v1591, 0.0
    %1593 = vadd.xlane.f32.xlu0 %v1592
    %v1594 = vpop.xlane.xlu0 %1593
    %v1595 = vrcp.pop %v1594
    %v1596 = vmul.f32 %v1591, %v1595
    %s1597 = scalar_lea.vmem %s9, 16
    %1598 = vst.msk [vmem:[%s1597] sm:$0x1f] %vm364, %v1596
    %v1600 = vsel %vm377, %v1585, 0
    %v1603 = vsel %vm381, %v1505, 0
    %1605 = vmatprep.subr.mxu0 0.0
    %1606 = vmatpush1.msra.mxu0 %v1603
    %1607 = vmatprep.subr.mxu0 0.0
    %1608 = vmatpush1.msra.mxu0 0.0
    %1609 = vmatprep.subr.mxu0 0.0
    %1610 = vmatpush1.msra.mxu0 0.0
    %1611 = vmatprep.subr.mxu0 0.0
    %1612 = vmatpush1.msra.mxu0 0.0
    %1613 = vmatprep.subr.mxu0 0.0
    %1614 = vmatpush1.msra.mxu0 0.0
    %1615 = vmatprep.subr.mxu0 0.0
    %1616 = vmatpush1.msra.mxu0 0.0
    %1617 = vmatprep.subr.mxu0 0.0
    %1618 = vmatpush1.msra.mxu0 0.0
    %1619 = vmatprep.subr.mxu0 0.0
    %1620 = vmatpush1.msra.mxu0 0.0
    %1621 = vmatprep.subr.mxu0 0.0
    %1622 = vmatpush1.msra.mxu0 0.0
    %1623 = vmatprep.subr.mxu0 0.0
    %1624 = vmatpush1.msra.mxu0 0.0
    %1625 = vmatprep.subr.mxu0 0.0
    %1626 = vmatpush1.msra.mxu0 0.0
    %1627 = vmatprep.subr.mxu0 0.0
    %1628 = vmatpush1.msra.mxu0 0.0
    %1629 = vmatprep.subr.mxu0 0.0
    %1630 = vmatpush1.msra.mxu0 0.0
    %1631 = vmatprep.subr.mxu0 0.0
    %1632 = vmatpush1.msra.mxu0 0.0
    %1633 = vmatprep.subr.mxu0 0.0
    %1634 = vmatpush1.msra.mxu0 0.0
    %1635 = vmatprep.subr.mxu0 0.0
    %1636 = vmatpush1.msra.mxu0 0.0
    %1637 = vmatprep.subr.mxu0 0.0
    %1638 = vmatpush1.msra.mxu0 0.0
    %1639 = vmatprep.subr.mxu0 0.0
    %1640 = vmatpush1.msra.mxu0 0.0
    %1641 = vmatprep.subr.mxu0 0.0
    %1642 = vmatpush1.msra.mxu0 0.0
    %1643 = vmatprep.subr.mxu0 0.0
    %1644 = vmatpush1.msra.mxu0 0.0
    %1645 = vmatprep.subr.mxu0 0.0
    %1646 = vmatpush1.msra.mxu0 0.0
    %1647 = vmatprep.subr.mxu0 0.0
    %1648 = vmatpush1.msra.mxu0 0.0
    %1649 = vmatprep.subr.mxu0 0.0
    %1650 = vmatpush1.msra.mxu0 0.0
    %1651 = vmatprep.subr.mxu0 0.0
    %1652 = vmatpush1.msra.mxu0 0.0
    %1653 = vmatprep.subr.mxu0 0.0
    %1654 = vmatpush1.msra.mxu0 0.0
    %1655 = vmatprep.subr.mxu0 0.0
    %1656 = vmatpush1.msra.mxu0 0.0
    %1657 = vmatprep.subr.mxu0 0.0
    %1658 = vmatpush1.msra.mxu0 0.0
    %1659 = vmatprep.subr.mxu0 0.0
    %1660 = vmatpush1.msra.mxu0 0.0
    %1661 = vmatprep.subr.mxu0 0.0
    %1662 = vmatpush1.msra.mxu0 0.0
    %1663 = vmatprep.subr.mxu0 0.0
    %1664 = vmatpush1.msra.mxu0 0.0
    %1665 = vmatprep.subr.mxu0 0.0
    %1666 = vmatpush1.msra.mxu0 0.0
    %1667 = vmatprep.subr.mxu0 0.0
    %1668 = vmatpush1.msra.mxu0 0.0
    %1669 = vmatprep.mubr.f32.mxu0 0.0
    %1670 = vmatmul.mubr.f32.gmra.mrb[0].mxu0 %v1600
    %v1671 = vpop.f32.mrb[0].mxu0
    %v1672 = vadd.f32 0.0, %v1671
    %v1673 = vpop.f32.mrb[0].mxu0
    %1674 = vdwg.mxu0
    %1675 = vrot.lane.b32.xlu0 %v1258, 16
    %v1676 = vpop.permute.xlu0 %1675
    %v1679 = vsel %vm285, %v1672, 0
    %1681 = vmatprep.subr.mxu0 0.0
    %1682 = vmatpush1.msra.mxu0 %v1676
    %1683 = vmatprep.subr.mxu0 0.0
    %1684 = vmatpush1.msra.mxu0 0.0
    %1685 = vmatprep.subr.mxu0 0.0
    %1686 = vmatpush1.msra.mxu0 0.0
    %1687 = vmatprep.subr.mxu0 0.0
    %1688 = vmatpush1.msra.mxu0 0.0
    %1689 = vmatprep.subr.mxu0 0.0
    %1690 = vmatpush1.msra.mxu0 0.0
    %1691 = vmatprep.subr.mxu0 0.0
    %1692 = vmatpush1.msra.mxu0 0.0
    %1693 = vmatprep.subr.mxu0 0.0
    %1694 = vmatpush1.msra.mxu0 0.0
    %1695 = vmatprep.subr.mxu0 0.0
    %1696 = vmatpush1.msra.mxu0 0.0
    %1697 = vmatprep.subr.mxu0 0.0
    %1698 = vmatpush1.msra.mxu0 0.0
    %1699 = vmatprep.subr.mxu0 0.0
    %1700 = vmatpush1.msra.mxu0 0.0
    %1701 = vmatprep.subr.mxu0 0.0
    %1702 = vmatpush1.msra.mxu0 0.0
    %1703 = vmatprep.subr.mxu0 0.0
    %1704 = vmatpush1.msra.mxu0 0.0
    %1705 = vmatprep.subr.mxu0 0.0
    %1706 = vmatpush1.msra.mxu0 0.0
    %1707 = vmatprep.subr.mxu0 0.0
    %1708 = vmatpush1.msra.mxu0 0.0
    %1709 = vmatprep.subr.mxu0 0.0
    %1710 = vmatpush1.msra.mxu0 0.0
    %1711 = vmatprep.subr.mxu0 0.0
    %1712 = vmatpush1.msra.mxu0 0.0
    %1713 = vmatprep.subr.mxu0 0.0
    %1714 = vmatpush1.msra.mxu0 0.0
    %1715 = vmatprep.subr.mxu0 0.0
    %1716 = vmatpush1.msra.mxu0 0.0
    %1717 = vmatprep.subr.mxu0 0.0
    %1718 = vmatpush1.msra.mxu0 0.0
    %1719 = vmatprep.subr.mxu0 0.0
    %1720 = vmatpush1.msra.mxu0 0.0
    %1721 = vmatprep.subr.mxu0 0.0
    %1722 = vmatpush1.msra.mxu0 0.0
    %1723 = vmatprep.subr.mxu0 0.0
    %1724 = vmatpush1.msra.mxu0 0.0
    %1725 = vmatprep.subr.mxu0 0.0
    %1726 = vmatpush1.msra.mxu0 0.0
    %1727 = vmatprep.subr.mxu0 0.0
    %1728 = vmatpush1.msra.mxu0 0.0
    %1729 = vmatprep.subr.mxu0 0.0
    %1730 = vmatpush1.msra.mxu0 0.0
    %1731 = vmatprep.subr.mxu0 0.0
    %1732 = vmatpush1.msra.mxu0 0.0
    %1733 = vmatprep.subr.mxu0 0.0
    %1734 = vmatpush1.msra.mxu0 0.0
    %1735 = vmatprep.subr.mxu0 0.0
    %1736 = vmatpush1.msra.mxu0 0.0
    %1737 = vmatprep.subr.mxu0 0.0
    %1738 = vmatpush1.msra.mxu0 0.0
    %1739 = vmatprep.subr.mxu0 0.0
    %1740 = vmatpush1.msra.mxu0 0.0
    %1741 = vmatprep.subr.mxu0 0.0
    %1742 = vmatpush1.msra.mxu0 0.0
    %1743 = vmatprep.subr.mxu0 0.0
    %1744 = vmatpush1.msra.mxu0 0.0
    %1745 = vmatprep.mubr.f32.mxu0 0.0
    %1746 = vmatmul.mubr.f32.gmra.mrb[0].mxu0 %v1679
    %v1747 = vpop.f32.mrb[0].mxu0
    %v1748 = vadd.f32 0.0, %v1747
    %v1749 = vpop.f32.mrb[0].mxu0
    %1750 = vdwg.mxu0
    %v1751 = vlaneseq
    %v1752 = vshrl.u32 %v1751, 7
    %v1753 = vsub.s32 0, %v1752
    %v1754 = vrot.slane %v1257, %v1753
    %v1755 = vadd.f32 %v1754, %v1748
    %v1756 = vld [vmem:[%s5] sm:$0xff]
    %v1757 = vld [vmem:[%s5 + $0x28] sm:$0xff]
    %v1758 = vld [vmem:[%s7 + $0x6] sm:$0x1]
    %v1759 = vld [vmem:[%s7 + $0x7] sm:$0x1]
    %v1760 = vld [vmem:[%s7 + $0x8] sm:$0x1]
    %v1761 = vlaneseq
    %v1762 = vshrl.u32 %v1761, 7
    %v1763 = vsub.s32 0, %v1762
    %v1764 = vrot.slane %v1758, %v1763
    %1767 = vrot.lane.b32.xlu0 %v1756, 56
    %v1768 = vpop.permute.xlu0 %1767
    %1769 = vrot.lane.b32.xlu0 %v1757, 56
    %v1770 = vpop.permute.xlu0 %1769
    %1774 = vrot.lane.b32.xlu0 %v1764, 120
    %v1775 = vpop.permute.xlu0 %1774
    %1777 = vmatprep.subr.mxu0 0.0
    %1778 = vmatpush1.msra.mxu0 %v1768
    %1779 = vmatprep.subr.mxu0 0.0
    %1780 = vmatpush1.msra.mxu0 %v1770
    %1781 = vmatprep.subr.mxu0 0.0
    %1782 = vmatpush1.msra.mxu0 0.0
    %1783 = vmatprep.subr.mxu0 0.0
    %1784 = vmatpush1.msra.mxu0 0.0
    %1785 = vmatprep.subr.mxu0 0.0
    %1786 = vmatpush1.msra.mxu0 0.0
    %1787 = vmatprep.subr.mxu0 0.0
    %1788 = vmatpush1.msra.mxu0 0.0
    %1789 = vmatprep.subr.mxu0 0.0
    %1790 = vmatpush1.msra.mxu0 0.0
    %1791 = vmatprep.subr.mxu0 0.0
    %1792 = vmatpush1.msra.mxu0 0.0
    %1793 = vmatprep.subr.mxu0 0.0
    %1794 = vmatpush1.msra.mxu0 0.0
    %1795 = vmatprep.subr.mxu0 0.0
    %1796 = vmatpush1.msra.mxu0 0.0
    %1797 = vmatprep.subr.mxu0 0.0
    %1798 = vmatpush1.msra.mxu0 0.0
    %1799 = vmatprep.subr.mxu0 0.0
    %1800 = vmatpush1.msra.mxu0 0.0
    %1801 = vmatprep.subr.mxu0 0.0
    %1802 = vmatpush1.msra.mxu0 0.0
    %1803 = vmatprep.subr.mxu0 0.0
    %1804 = vmatpush1.msra.mxu0 0.0
    %1805 = vmatprep.subr.mxu0 0.0
    %1806 = vmatpush1.msra.mxu0 0.0
    %1807 = vmatprep.subr.mxu0 0.0
    %1808 = vmatpush1.msra.mxu0 0.0
    %1809 = vmatprep.subr.mxu0 0.0
    %1810 = vmatpush1.msra.mxu0 0.0
    %1811 = vmatprep.subr.mxu0 0.0
    %1812 = vmatpush1.msra.mxu0 0.0
    %1813 = vmatprep.subr.mxu0 0.0
    %1814 = vmatpush1.msra.mxu0 0.0
    %1815 = vmatprep.subr.mxu0 0.0
    %1816 = vmatpush1.msra.mxu0 0.0
    %1817 = vmatprep.subr.mxu0 0.0
    %1818 = vmatpush1.msra.mxu0 0.0
    %1819 = vmatprep.subr.mxu0 0.0
    %1820 = vmatpush1.msra.mxu0 0.0
    %1821 = vmatprep.subr.mxu0 0.0
    %1822 = vmatpush1.msra.mxu0 0.0
    %1823 = vmatprep.subr.mxu0 0.0
    %1824 = vmatpush1.msra.mxu0 0.0
    %1825 = vmatprep.subr.mxu0 0.0
    %1826 = vmatpush1.msra.mxu0 0.0
    %1827 = vmatprep.subr.mxu0 0.0
    %1828 = vmatpush1.msra.mxu0 0.0
    %1829 = vmatprep.subr.mxu0 0.0
    %1830 = vmatpush1.msra.mxu0 0.0
    %1831 = vmatprep.subr.mxu0 0.0
    %1832 = vmatpush1.msra.mxu0 0.0
    %1833 = vmatprep.subr.mxu0 0.0
    %1834 = vmatpush1.msra.mxu0 0.0
    %1835 = vmatprep.subr.mxu0 0.0
    %1836 = vmatpush1.msra.mxu0 0.0
    %1837 = vmatprep.subr.mxu0 0.0
    %1838 = vmatpush1.msra.mxu0 0.0
    %1839 = vmatprep.subr.mxu0 0.0
    %1840 = vmatpush1.msra.mxu0 0.0
    %1841 = vmatprep.mubr.f32.mxu0 0.0
    %1842 = vmatmul.mubr.f32.gmra.mrb[0].mxu0 %v1276
    %v1843 = vpop.f32.mrb[0].mxu0
    %v1844 = vadd.f32 %v1775, %v1843
    %v1845 = vpop.f32.mrb[0].mxu0
    %1846 = vdwg.mxu0
    %v1847 = vlaneseq
    %v1848 = vshrl.u32 %v1847, 7
    %v1849 = vsub.s32 0, %v1848
    %v1850 = vrot.slane %v1759, %v1849
    %1851 = vrot.lane.b32.xlu0 %v1756, 40
    %v1852 = vpop.permute.xlu0 %1851
    %1853 = vrot.lane.b32.xlu0 %v1757, 40
    %v1854 = vpop.permute.xlu0 %1853
    %1858 = vrot.lane.b32.xlu0 %v1850, 120
    %v1859 = vpop.permute.xlu0 %1858
    %1861 = vmatprep.subr.mxu0 0.0
    %1862 = vmatpush1.msra.mxu0 %v1852
    %1863 = vmatprep.subr.mxu0 0.0
    %1864 = vmatpush1.msra.mxu0 %v1854
    %1865 = vmatprep.subr.mxu0 0.0
    %1866 = vmatpush1.msra.mxu0 0.0
    %1867 = vmatprep.subr.mxu0 0.0
    %1868 = vmatpush1.msra.mxu0 0.0
    %1869 = vmatprep.subr.mxu0 0.0
    %1870 = vmatpush1.msra.mxu0 0.0
    %1871 = vmatprep.subr.mxu0 0.0
    %1872 = vmatpush1.msra.mxu0 0.0
    %1873 = vmatprep.subr.mxu0 0.0
    %1874 = vmatpush1.msra.mxu0 0.0
    %1875 = vmatprep.subr.mxu0 0.0
    %1876 = vmatpush1.msra.mxu0 0.0
    %1877 = vmatprep.subr.mxu0 0.0
    %1878 = vmatpush1.msra.mxu0 0.0
    %1879 = vmatprep.subr.mxu0 0.0
    %1880 = vmatpush1.msra.mxu0 0.0
    %1881 = vmatprep.subr.mxu0 0.0
    %1882 = vmatpush1.msra.mxu0 0.0
    %1883 = vmatprep.subr.mxu0 0.0
    %1884 = vmatpush1.msra.mxu0 0.0
    %1885 = vmatprep.subr.mxu0 0.0
    %1886 = vmatpush1.msra.mxu0 0.0
    %1887 = vmatprep.subr.mxu0 0.0
    %1888 = vmatpush1.msra.mxu0 0.0
    %1889 = vmatprep.subr.mxu0 0.0
    %1890 = vmatpush1.msra.mxu0 0.0
    %1891 = vmatprep.subr.mxu0 0.0
    %1892 = vmatpush1.msra.mxu0 0.0
    %1893 = vmatprep.subr.mxu0 0.0
    %1894 = vmatpush1.msra.mxu0 0.0
    %1895 = vmatprep.subr.mxu0 0.0
    %1896 = vmatpush1.msra.mxu0 0.0
    %1897 = vmatprep.subr.mxu0 0.0
    %1898 = vmatpush1.msra.mxu0 0.0
    %1899 = vmatprep.subr.mxu0 0.0
    %1900 = vmatpush1.msra.mxu0 0.0
    %1901 = vmatprep.subr.mxu0 0.0
    %1902 = vmatpush1.msra.mxu0 0.0
    %1903 = vmatprep.subr.mxu0 0.0
    %1904 = vmatpush1.msra.mxu0 0.0
    %1905 = vmatprep.subr.mxu0 0.0
    %1906 = vmatpush1.msra.mxu0 0.0
    %1907 = vmatprep.subr.mxu0 0.0
    %1908 = vmatpush1.msra.mxu0 0.0
    %1909 = vmatprep.subr.mxu0 0.0
    %1910 = vmatpush1.msra.mxu0 0.0
    %1911 = vmatprep.subr.mxu0 0.0
    %1912 = vmatpush1.msra.mxu0 0.0
    %1913 = vmatprep.subr.mxu0 0.0
    %1914 = vmatpush1.msra.mxu0 0.0
    %1915 = vmatprep.subr.mxu0 0.0
    %1916 = vmatpush1.msra.mxu0 0.0
    %1917 = vmatprep.subr.mxu0 0.0
    %1918 = vmatpush1.msra.mxu0 0.0
    %1919 = vmatprep.subr.mxu0 0.0
    %1920 = vmatpush1.msra.mxu0 0.0
    %1921 = vmatprep.subr.mxu0 0.0
    %1922 = vmatpush1.msra.mxu0 0.0
    %1923 = vmatprep.subr.mxu0 0.0
    %1924 = vmatpush1.msra.mxu0 0.0
    %1925 = vmatprep.mubr.f32.mxu0 0.0
    %1926 = vmatmul.mubr.f32.gmra.mrb[0].mxu0 %v1276
    %v1927 = vpop.f32.mrb[0].mxu0
    %v1928 = vadd.f32 %v1859, %v1927
    %v1929 = vpop.f32.mrb[0].mxu0
    %1930 = vdwg.mxu0
    %v1931 = vlaneseq
    %v1932 = vshrl.u32 %v1931, 7
    %v1933 = vsub.s32 0, %v1932
    %v1934 = vrot.slane %v1760, %v1933
    %1935 = vrot.lane.b32.xlu0 %v1756, 24
    %v1936 = vpop.permute.xlu0 %1935
    %1937 = vrot.lane.b32.xlu0 %v1757, 24
    %v1938 = vpop.permute.xlu0 %1937
    %1942 = vrot.lane.b32.xlu0 %v1934, 120
    %v1943 = vpop.permute.xlu0 %1942
    %1945 = vmatprep.subr.mxu0 0.0
    %1946 = vmatpush1.msra.mxu0 %v1936
    %1947 = vmatprep.subr.mxu0 0.0
    %1948 = vmatpush1.msra.mxu0 %v1938
    %1949 = vmatprep.subr.mxu0 0.0
    %1950 = vmatpush1.msra.mxu0 0.0
    %1951 = vmatprep.subr.mxu0 0.0
    %1952 = vmatpush1.msra.mxu0 0.0
    %1953 = vmatprep.subr.mxu0 0.0
    %1954 = vmatpush1.msra.mxu0 0.0
    %1955 = vmatprep.subr.mxu0 0.0
    %1956 = vmatpush1.msra.mxu0 0.0
    %1957 = vmatprep.subr.mxu0 0.0
    %1958 = vmatpush1.msra.mxu0 0.0
    %1959 = vmatprep.subr.mxu0 0.0
    %1960 = vmatpush1.msra.mxu0 0.0
    %1961 = vmatprep.subr.mxu0 0.0
    %1962 = vmatpush1.msra.mxu0 0.0
    %1963 = vmatprep.subr.mxu0 0.0
    %1964 = vmatpush1.msra.mxu0 0.0
    %1965 = vmatprep.subr.mxu0 0.0
    %1966 = vmatpush1.msra.mxu0 0.0
    %1967 = vmatprep.subr.mxu0 0.0
    %1968 = vmatpush1.msra.mxu0 0.0
    %1969 = vmatprep.subr.mxu0 0.0
    %1970 = vmatpush1.msra.mxu0 0.0
    %1971 = vmatprep.subr.mxu0 0.0
    %1972 = vmatpush1.msra.mxu0 0.0
    %1973 = vmatprep.subr.mxu0 0.0
    %1974 = vmatpush1.msra.mxu0 0.0
    %1975 = vmatprep.subr.mxu0 0.0
    %1976 = vmatpush1.msra.mxu0 0.0
    %1977 = vmatprep.subr.mxu0 0.0
    %1978 = vmatpush1.msra.mxu0 0.0
    %1979 = vmatprep.subr.mxu0 0.0
    %1980 = vmatpush1.msra.mxu0 0.0
    %1981 = vmatprep.subr.mxu0 0.0
    %1982 = vmatpush1.msra.mxu0 0.0
    %1983 = vmatprep.subr.mxu0 0.0
    %1984 = vmatpush1.msra.mxu0 0.0
    %1985 = vmatprep.subr.mxu0 0.0
    %1986 = vmatpush1.msra.mxu0 0.0
    %1987 = vmatprep.subr.mxu0 0.0
    %1988 = vmatpush1.msra.mxu0 0.0
    %1989 = vmatprep.subr.mxu0 0.0
    %1990 = vmatpush1.msra.mxu0 0.0
    %1991 = vmatprep.subr.mxu0 0.0
    %1992 = vmatpush1.msra.mxu0 0.0
    %1993 = vmatprep.subr.mxu0 0.0
    %1994 = vmatpush1.msra.mxu0 0.0
    %1995 = vmatprep.subr.mxu0 0.0
    %1996 = vmatpush1.msra.mxu0 0.0
    %1997 = vmatprep.subr.mxu0 0.0
    %1998 = vmatpush1.msra.mxu0 0.0
    %1999 = vmatprep.subr.mxu0 0.0
    %2000 = vmatpush1.msra.mxu0 0.0
    %2001 = vmatprep.subr.mxu0 0.0
    %2002 = vmatpush1.msra.mxu0 0.0
    %2003 = vmatprep.subr.mxu0 0.0
    %2004 = vmatpush1.msra.mxu0 0.0
    %2005 = vmatprep.subr.mxu0 0.0
    %2006 = vmatpush1.msra.mxu0 0.0
    %2007 = vmatprep.subr.mxu0 0.0
    %2008 = vmatpush1.msra.mxu0 0.0
    %2009 = vmatprep.mubr.f32.mxu0 0.0
    %2010 = vmatmul.mubr.f32.gmra.mrb[0].mxu0 %v1276
    %v2011 = vpop.f32.mrb[0].mxu0
    %v2012 = vadd.f32 %v1943, %v2011
    %v2013 = vpop.f32.mrb[0].mxu0
    %2014 = vdwg.mxu0
    %v2016 = vsel %vm285, %v1844, 0
    %v2019 = vsel %vm285, %v1928, 0
    %2021 = vmatprep.subr.mxu0 0.0
    %2022 = vmatpush1.xpose.msra.mxu0 %v2019
    %2023 = vmatprep.subr.mxu0 0.0
    %2024 = vmatpush1.xpose.msra.mxu0 0.0
    %2025 = vmatprep.subr.mxu0 0.0
    %2026 = vmatpush1.xpose.msra.mxu0 0.0
    %2027 = vmatprep.subr.mxu0 0.0
    %2028 = vmatpush1.xpose.msra.mxu0 0.0
    %2029 = vmatprep.subr.mxu0 0.0
    %2030 = vmatpush1.xpose.msra.mxu0 0.0
    %2031 = vmatprep.subr.mxu0 0.0
    %2032 = vmatpush1.xpose.msra.mxu0 0.0
    %2033 = vmatprep.subr.mxu0 0.0
    %2034 = vmatpush1.xpose.msra.mxu0 0.0
    %2035 = vmatprep.subr.mxu0 0.0
    %2036 = vmatpush1.xpose.msra.mxu0 0.0
    %2037 = vmatprep.subr.mxu0 0.0
    %2038 = vmatpush1.xpose.msra.mxu0 0.0
    %2039 = vmatprep.subr.mxu0 0.0
    %2040 = vmatpush1.xpose.msra.mxu0 0.0
    %2041 = vmatprep.subr.mxu0 0.0
    %2042 = vmatpush1.xpose.msra.mxu0 0.0
    %2043 = vmatprep.subr.mxu0 0.0
    %2044 = vmatpush1.xpose.msra.mxu0 0.0
    %2045 = vmatprep.subr.mxu0 0.0
    %2046 = vmatpush1.xpose.msra.mxu0 0.0
    %2047 = vmatprep.subr.mxu0 0.0
    %2048 = vmatpush1.xpose.msra.mxu0 0.0
    %2049 = vmatprep.subr.mxu0 0.0
    %2050 = vmatpush1.xpose.msra.mxu0 0.0
    %2051 = vmatprep.subr.mxu0 0.0
    %2052 = vmatpush1.xpose.msra.mxu0 0.0
    %2053 = vmatprep.subr.mxu0 0.0
    %2054 = vmatpush1.xpose.msra.mxu0 0.0
    %2055 = vmatprep.subr.mxu0 0.0
    %2056 = vmatpush1.xpose.msra.mxu0 0.0
    %2057 = vmatprep.subr.mxu0 0.0
    %2058 = vmatpush1.xpose.msra.mxu0 0.0
    %2059 = vmatprep.subr.mxu0 0.0
    %2060 = vmatpush1.xpose.msra.mxu0 0.0
    %2061 = vmatprep.subr.mxu0 0.0
    %2062 = vmatpush1.xpose.msra.mxu0 0.0
    %2063 = vmatprep.subr.mxu0 0.0
    %2064 = vmatpush1.xpose.msra.mxu0 0.0
    %2065 = vmatprep.subr.mxu0 0.0
    %2066 = vmatpush1.xpose.msra.mxu0 0.0
    %2067 = vmatprep.subr.mxu0 0.0
    %2068 = vmatpush1.xpose.msra.mxu0 0.0
    %2069 = vmatprep.subr.mxu0 0.0
    %2070 = vmatpush1.xpose.msra.mxu0 0.0
    %2071 = vmatprep.subr.mxu0 0.0
    %2072 = vmatpush1.xpose.msra.mxu0 0.0
    %2073 = vmatprep.subr.mxu0 0.0
    %2074 = vmatpush1.xpose.msra.mxu0 0.0
    %2075 = vmatprep.subr.mxu0 0.0
    %2076 = vmatpush1.xpose.msra.mxu0 0.0
    %2077 = vmatprep.subr.mxu0 0.0
    %2078 = vmatpush1.xpose.msra.mxu0 0.0
    %2079 = vmatprep.subr.mxu0 0.0
    %2080 = vmatpush1.xpose.msra.mxu0 0.0
    %2081 = vmatprep.subr.mxu0 0.0
    %2082 = vmatpush1.xpose.msra.mxu0 0.0
    %2083 = vmatprep.subr.mxu0 0.0
    %2084 = vmatpush1.xpose.msra.mxu0 0.0
    %2085 = vmatprep.mubr.f32.mxu0 0.0
    %2086 = vmatmul.mubr.f32.gmra.mrb[0].mxu0 %v2016
    %v2087 = vpop.f32.mrb[0].mxu0
    %v2088 = vadd.f32 0.0, %v2087
    %v2089 = vpop.f32.mrb[0].mxu0
    %2090 = vdwg.mxu0
    %v2091 = vmul.f32 %v2088, 0.125
    %v2092 = vsel %vm33, -1e+09, %v2091
    %v2093 = vsel %vm364, %v2092, -inf
    %2094 = vmax.xlane.f32.xlu0 %v2093
    %v2095 = vpop.xlane.xlu0 %2094
    %v2096 = vsub.f32 %v2092, %v2095
    %v2097 = vmul.f32 %v2096, 1.442695
    %v2098 = vpow.pop %v2097
    %v2099 = vsel %vm364, %v2098, 0.0
    %2100 = vadd.xlane.f32.xlu0 %v2099
    %v2101 = vpop.xlane.xlu0 %2100
    %v2102 = vrcp.pop %v2101
    %v2103 = vmul.f32 %v2098, %v2102
    %s2104 = scalar_lea.vmem %s9, 24
    %2105 = vst.msk [vmem:[%s2104] sm:$0x1f] %vm364, %v2103
    %v2107 = vsel %vm377, %v2092, 0
    %v2110 = vsel %vm381, %v2012, 0
    %2112 = vmatprep.subr.mxu0 0.0
    %2113 = vmatpush1.msra.mxu0 %v2110
    %2114 = vmatprep.subr.mxu0 0.0
    %2115 = vmatpush1.msra.mxu0 0.0
    %2116 = vmatprep.subr.mxu0 0.0
    %2117 = vmatpush1.msra.mxu0 0.0
    %2118 = vmatprep.subr.mxu0 0.0
    %2119 = vmatpush1.msra.mxu0 0.0
    %2120 = vmatprep.subr.mxu0 0.0
    %2121 = vmatpush1.msra.mxu0 0.0
    %2122 = vmatprep.subr.mxu0 0.0
    %2123 = vmatpush1.msra.mxu0 0.0
    %2124 = vmatprep.subr.mxu0 0.0
    %2125 = vmatpush1.msra.mxu0 0.0
    %2126 = vmatprep.subr.mxu0 0.0
    %2127 = vmatpush1.msra.mxu0 0.0
    %2128 = vmatprep.subr.mxu0 0.0
    %2129 = vmatpush1.msra.mxu0 0.0
    %2130 = vmatprep.subr.mxu0 0.0
    %2131 = vmatpush1.msra.mxu0 0.0
    %2132 = vmatprep.subr.mxu0 0.0
    %2133 = vmatpush1.msra.mxu0 0.0
    %2134 = vmatprep.subr.mxu0 0.0
    %2135 = vmatpush1.msra.mxu0 0.0
    %2136 = vmatprep.subr.mxu0 0.0
    %2137 = vmatpush1.msra.mxu0 0.0
    %2138 = vmatprep.subr.mxu0 0.0
    %2139 = vmatpush1.msra.mxu0 0.0
    %2140 = vmatprep.subr.mxu0 0.0
    %2141 = vmatpush1.msra.mxu0 0.0
    %2142 = vmatprep.subr.mxu0 0.0
    %2143 = vmatpush1.msra.mxu0 0.0
    %2144 = vmatprep.subr.mxu0 0.0
    %2145 = vmatpush1.msra.mxu0 0.0
    %2146 = vmatprep.subr.mxu0 0.0
    %2147 = vmatpush1.msra.mxu0 0.0
    %2148 = vmatprep.subr.mxu0 0.0
    %2149 = vmatpush1.msra.mxu0 0.0
    %2150 = vmatprep.subr.mxu0 0.0
    %2151 = vmatpush1.msra.mxu0 0.0
    %2152 = vmatprep.subr.mxu0 0.0
    %2153 = vmatpush1.msra.mxu0 0.0
    %2154 = vmatprep.subr.mxu0 0.0
    %2155 = vmatpush1.msra.mxu0 0.0
    %2156 = vmatprep.subr.mxu0 0.0
    %2157 = vmatpush1.msra.mxu0 0.0
    %2158 = vmatprep.subr.mxu0 0.0
    %2159 = vmatpush1.msra.mxu0 0.0
    %2160 = vmatprep.subr.mxu0 0.0
    %2161 = vmatpush1.msra.mxu0 0.0
    %2162 = vmatprep.subr.mxu0 0.0
    %2163 = vmatpush1.msra.mxu0 0.0
    %2164 = vmatprep.subr.mxu0 0.0
    %2165 = vmatpush1.msra.mxu0 0.0
    %2166 = vmatprep.subr.mxu0 0.0
    %2167 = vmatpush1.msra.mxu0 0.0
    %2168 = vmatprep.subr.mxu0 0.0
    %2169 = vmatpush1.msra.mxu0 0.0
    %2170 = vmatprep.subr.mxu0 0.0
    %2171 = vmatpush1.msra.mxu0 0.0
    %2172 = vmatprep.subr.mxu0 0.0
    %2173 = vmatpush1.msra.mxu0 0.0
    %2174 = vmatprep.subr.mxu0 0.0
    %2175 = vmatpush1.msra.mxu0 0.0
    %2176 = vmatprep.mubr.f32.mxu0 0.0
    %2177 = vmatmul.mubr.f32.gmra.mrb[0].mxu0 %v2107
    %v2178 = vpop.f32.mrb[0].mxu0
    %v2179 = vadd.f32 0.0, %v2178
    %v2180 = vpop.f32.mrb[0].mxu0
    %2181 = vdwg.mxu0
    %2182 = vrot.lane.b32.xlu0 %v1757, 16
    %v2183 = vpop.permute.xlu0 %2182
    %v2186 = vsel %vm285, %v2179, 0
    %2188 = vmatprep.subr.mxu0 0.0
    %2189 = vmatpush1.msra.mxu0 %v2183
    %2190 = vmatprep.subr.mxu0 0.0
    %2191 = vmatpush1.msra.mxu0 0.0
    %2192 = vmatprep.subr.mxu0 0.0
    %2193 = vmatpush1.msra.mxu0 0.0
    %2194 = vmatprep.subr.mxu0 0.0
    %2195 = vmatpush1.msra.mxu0 0.0
    %2196 = vmatprep.subr.mxu0 0.0
    %2197 = vmatpush1.msra.mxu0 0.0
    %2198 = vmatprep.subr.mxu0 0.0
    %2199 = vmatpush1.msra.mxu0 0.0
    %2200 = vmatprep.subr.mxu0 0.0
    %2201 = vmatpush1.msra.mxu0 0.0
    %2202 = vmatprep.subr.mxu0 0.0
    %2203 = vmatpush1.msra.mxu0 0.0
    %2204 = vmatprep.subr.mxu0 0.0
    %2205 = vmatpush1.msra.mxu0 0.0
    %2206 = vmatprep.subr.mxu0 0.0
    %2207 = vmatpush1.msra.mxu0 0.0
    %2208 = vmatprep.subr.mxu0 0.0
    %2209 = vmatpush1.msra.mxu0 0.0
    %2210 = vmatprep.subr.mxu0 0.0
    %2211 = vmatpush1.msra.mxu0 0.0
    %2212 = vmatprep.subr.mxu0 0.0
    %2213 = vmatpush1.msra.mxu0 0.0
    %2214 = vmatprep.subr.mxu0 0.0
    %2215 = vmatpush1.msra.mxu0 0.0
    %2216 = vmatprep.subr.mxu0 0.0
    %2217 = vmatpush1.msra.mxu0 0.0
    %2218 = vmatprep.subr.mxu0 0.0
    %2219 = vmatpush1.msra.mxu0 0.0
    %2220 = vmatprep.subr.mxu0 0.0
    %2221 = vmatpush1.msra.mxu0 0.0
    %2222 = vmatprep.subr.mxu0 0.0
    %2223 = vmatpush1.msra.mxu0 0.0
    %2224 = vmatprep.subr.mxu0 0.0
    %2225 = vmatpush1.msra.mxu0 0.0
    %2226 = vmatprep.subr.mxu0 0.0
    %2227 = vmatpush1.msra.mxu0 0.0
    %2228 = vmatprep.subr.mxu0 0.0
    %2229 = vmatpush1.msra.mxu0 0.0
    %2230 = vmatprep.subr.mxu0 0.0
    %2231 = vmatpush1.msra.mxu0 0.0
    %2232 = vmatprep.subr.mxu0 0.0
    %2233 = vmatpush1.msra.mxu0 0.0
    %2234 = vmatprep.subr.mxu0 0.0
    %2235 = vmatpush1.msra.mxu0 0.0
    %2236 = vmatprep.subr.mxu0 0.0
    %2237 = vmatpush1.msra.mxu0 0.0
    %2238 = vmatprep.subr.mxu0 0.0
    %2239 = vmatpush1.msra.mxu0 0.0
    %2240 = vmatprep.subr.mxu0 0.0
    %2241 = vmatpush1.msra.mxu0 0.0
    %2242 = vmatprep.subr.mxu0 0.0
    %2243 = vmatpush1.msra.mxu0 0.0
    %2244 = vmatprep.subr.mxu0 0.0
    %2245 = vmatpush1.msra.mxu0 0.0
    %2246 = vmatprep.subr.mxu0 0.0
    %2247 = vmatpush1.msra.mxu0 0.0
    %2248 = vmatprep.subr.mxu0 0.0
    %2249 = vmatpush1.msra.mxu0 0.0
    %2250 = vmatprep.subr.mxu0 0.0
    %2251 = vmatpush1.msra.mxu0 0.0
    %2252 = vmatprep.mubr.f32.mxu0 0.0
    %2253 = vmatmul.mubr.f32.gmra.mrb[0].mxu0 %v2186
    %v2254 = vpop.f32.mrb[0].mxu0
    %v2255 = vadd.f32 0.0, %v2254
    %v2256 = vpop.f32.mrb[0].mxu0
    %2257 = vdwg.mxu0
    %v2258 = vadd.f32 %v1755, %v2255
    %v2259 = vld [vmem:[%s7 + $0xa] sm:$0x1]
    %v2260 = vld [vmem:[%s7 + $0xb] sm:$0x1]
    %v2261 = vadd.f32 %v2258, %v1256
    %v2262 = vsel %vm1042, %v2261, 0.0
    %2263 = vadd.xlane.f32.xlu0 %v2262
    %v2264 = vpop.xlane.xlu0 %2263
    %v2265 = vmul.f32 %v2264, %v1046
    %v2266 = vsub.f32 %v2261, %v2265
    %v2267 = vmul.f32 %v2266, %v2266
    %v2268 = vsel %vm1042, %v2267, 0.0
    %2269 = vadd.xlane.f32.xlu0 %v2268
    %v2270 = vpop.xlane.xlu0 %2269
    %v2271 = vmul.f32 %v2270, %v1046
    %v2272 = vadd.f32 %v2271, 1e-05
    %v2273 = vrsqrt.pop %v2272
    %v2274 = vmul.f32 %v2266, %v2273
    %v2275 = vlaneseq
    %v2276 = vshrl.u32 %v2275, 7
    %v2277 = vsub.s32 0, %v2276
    %v2278 = vrot.slane %v2259, %v2277
    %v2279 = vmul.f32 %v2274, %v2278
    %v2280 = vlaneseq
    %v2281 = vshrl.u32 %v2280, 7
    %v2282 = vsub.s32 0, %v2281
    %v2283 = vrot.slane %v2260, %v2282
    %v2284 = vadd.f32 %v2279, %v2283
    %v2285 = vld [vmem:[%s5 + $0x18] sm:$0xff]
    %v2286 = vld [vmem:[%s5 + $0x40] sm:$0xff]
    %v2287 = vld [vmem:[%s7 + $0x28] sm:$0x1]
    %v2288 = vld [vmem:[%s6] sm:$0xff]
    %v2289 = vld [vmem:[%s6 + $0x8] sm:$0xff]
    %v2290 = vld [vmem:[%s6 + $0x10] sm:$0xff]
    %v2291 = vld [vmem:[%s6 + $0x18] sm:$0xff]
    %v2292 = vld [vmem:[%s7 + $0x29] sm:$0x1]
    %v2293 = vld [vmem:[%s7 + $0x2a] sm:$0x1]
    %v2294 = vld [vmem:[%s7 + $0x2b] sm:$0x1]
    %v2295 = vlaneseq
    %v2296 = vshrl.u32 %v2295, 7
    %v2297 = vsub.s32 0, %v2296
    %v2298 = vrot.slane %v2287, %v2297
    %2301 = vrot.lane.b32.xlu0 %v2285, 96
    %v2302 = vpop.permute.xlu0 %2301
    %2303 = vrot.lane.b32.xlu0 %v2286, 96
    %v2304 = vpop.permute.xlu0 %2303
    %v2308 = vsel %vm49, %v2284, 0
    %2310 = vmatprep.subr.mxu0 0.0
    %2311 = vmatpush1.msra.mxu0 %v2302
    %2312 = vmatprep.subr.mxu0 0.0
    %2313 = vmatpush1.msra.mxu0 %v2304
    %2314 = vmatprep.subr.mxu0 0.0
    %2315 = vmatpush1.msra.mxu0 0.0
    %2316 = vmatprep.subr.mxu0 0.0
    %2317 = vmatpush1.msra.mxu0 0.0
    %2318 = vmatprep.subr.mxu0 0.0
    %2319 = vmatpush1.msra.mxu0 0.0
    %2320 = vmatprep.subr.mxu0 0.0
    %2321 = vmatpush1.msra.mxu0 0.0
    %2322 = vmatprep.subr.mxu0 0.0
    %2323 = vmatpush1.msra.mxu0 0.0
    %2324 = vmatprep.subr.mxu0 0.0
    %2325 = vmatpush1.msra.mxu0 0.0
    %2326 = vmatprep.subr.mxu0 0.0
    %2327 = vmatpush1.msra.mxu0 0.0
    %2328 = vmatprep.subr.mxu0 0.0
    %2329 = vmatpush1.msra.mxu0 0.0
    %2330 = vmatprep.subr.mxu0 0.0
    %2331 = vmatpush1.msra.mxu0 0.0
    %2332 = vmatprep.subr.mxu0 0.0
    %2333 = vmatpush1.msra.mxu0 0.0
    %2334 = vmatprep.subr.mxu0 0.0
    %2335 = vmatpush1.msra.mxu0 0.0
    %2336 = vmatprep.subr.mxu0 0.0
    %2337 = vmatpush1.msra.mxu0 0.0
    %2338 = vmatprep.subr.mxu0 0.0
    %2339 = vmatpush1.msra.mxu0 0.0
    %2340 = vmatprep.subr.mxu0 0.0
    %2341 = vmatpush1.msra.mxu0 0.0
    %2342 = vmatprep.subr.mxu0 0.0
    %2343 = vmatpush1.msra.mxu0 0.0
    %2344 = vmatprep.subr.mxu0 0.0
    %2345 = vmatpush1.msra.mxu0 0.0
    %2346 = vmatprep.subr.mxu0 0.0
    %2347 = vmatpush1.msra.mxu0 0.0
    %2348 = vmatprep.subr.mxu0 0.0
    %2349 = vmatpush1.msra.mxu0 0.0
    %2350 = vmatprep.subr.mxu0 0.0
    %2351 = vmatpush1.msra.mxu0 0.0
    %2352 = vmatprep.subr.mxu0 0.0
    %2353 = vmatpush1.msra.mxu0 0.0
    %2354 = vmatprep.subr.mxu0 0.0
    %2355 = vmatpush1.msra.mxu0 0.0
    %2356 = vmatprep.subr.mxu0 0.0
    %2357 = vmatpush1.msra.mxu0 0.0
    %2358 = vmatprep.subr.mxu0 0.0
    %2359 = vmatpush1.msra.mxu0 0.0
    %2360 = vmatprep.subr.mxu0 0.0
    %2361 = vmatpush1.msra.mxu0 0.0
    %2362 = vmatprep.subr.mxu0 0.0
    %2363 = vmatpush1.msra.mxu0 0.0
    %2364 = vmatprep.subr.mxu0 0.0
    %2365 = vmatpush1.msra.mxu0 0.0
    %2366 = vmatprep.subr.mxu0 0.0
    %2367 = vmatpush1.msra.mxu0 0.0
    %2368 = vmatprep.subr.mxu0 0.0
    %2369 = vmatpush1.msra.mxu0 0.0
    %2370 = vmatprep.subr.mxu0 0.0
    %2371 = vmatpush1.msra.mxu0 0.0
    %2372 = vmatprep.subr.mxu0 0.0
    %2373 = vmatpush1.msra.mxu0 0.0
    %2374 = vmatprep.mubr.f32.mxu0 0.0
    %2375 = vmatmul.mubr.f32.gmra.mrb[0].mxu0 %v2308
    %v2376 = vpop.f32.mrb[0].mxu0
    %v2377 = vadd.f32 %v2298, %v2376
    %v2378 = vpop.f32.mrb[0].mxu0
    %2379 = vdwg.mxu0
    %v2380 = vlaneseq
    %v2381 = vshrl.u32 %v2380, 7
    %v2382 = vsub.s32 0, %v2381
    %v2383 = vrot.slane %v2292, %v2382
    %2388 = vrot.lane.b32.xlu0 %v2288, 112
    %v2389 = vpop.permute.xlu0 %2388
    %2390 = vrot.lane.b32.xlu0 %v2289, 112
    %v2391 = vpop.permute.xlu0 %2390
    %2392 = vrot.lane.b32.xlu0 %v2290, 112
    %v2393 = vpop.permute.xlu0 %2392
    %2394 = vrot.lane.b32.xlu0 %v2291, 112
    %v2395 = vpop.permute.xlu0 %2394
    %v2401 = vsel %vm1158, %v2377, 0
    %2403 = vmatprep.subr.mxu0 0.0
    %2404 = vmatpush1.msra.mxu0 %v2389
    %2405 = vmatprep.subr.mxu0 0.0
    %2406 = vmatpush1.msra.mxu0 %v2391
    %2407 = vmatprep.subr.mxu0 0.0
    %2408 = vmatpush1.msra.mxu0 %v2393
    %2409 = vmatprep.subr.mxu0 0.0
    %2410 = vmatpush1.msra.mxu0 %v2395
    %2411 = vmatprep.subr.mxu0 0.0
    %2412 = vmatpush1.msra.mxu0 0.0
    %2413 = vmatprep.subr.mxu0 0.0
    %2414 = vmatpush1.msra.mxu0 0.0
    %2415 = vmatprep.subr.mxu0 0.0
    %2416 = vmatpush1.msra.mxu0 0.0
    %2417 = vmatprep.subr.mxu0 0.0
    %2418 = vmatpush1.msra.mxu0 0.0
    %2419 = vmatprep.subr.mxu0 0.0
    %2420 = vmatpush1.msra.mxu0 0.0
    %2421 = vmatprep.subr.mxu0 0.0
    %2422 = vmatpush1.msra.mxu0 0.0
    %2423 = vmatprep.subr.mxu0 0.0
    %2424 = vmatpush1.msra.mxu0 0.0
    %2425 = vmatprep.subr.mxu0 0.0
    %2426 = vmatpush1.msra.mxu0 0.0
    %2427 = vmatprep.subr.mxu0 0.0
    %2428 = vmatpush1.msra.mxu0 0.0
    %2429 = vmatprep.subr.mxu0 0.0
    %2430 = vmatpush1.msra.mxu0 0.0
    %2431 = vmatprep.subr.mxu0 0.0
    %2432 = vmatpush1.msra.mxu0 0.0
    %2433 = vmatprep.subr.mxu0 0.0
    %2434 = vmatpush1.msra.mxu0 0.0
    %2435 = vmatprep.subr.mxu0 0.0
    %2436 = vmatpush1.msra.mxu0 0.0
    %2437 = vmatprep.subr.mxu0 0.0
    %2438 = vmatpush1.msra.mxu0 0.0
    %2439 = vmatprep.subr.mxu0 0.0
    %2440 = vmatpush1.msra.mxu0 0.0
    %2441 = vmatprep.subr.mxu0 0.0
    %2442 = vmatpush1.msra.mxu0 0.0
    %2443 = vmatprep.subr.mxu0 0.0
    %2444 = vmatpush1.msra.mxu0 0.0
    %2445 = vmatprep.subr.mxu0 0.0
    %2446 = vmatpush1.msra.mxu0 0.0
    %2447 = vmatprep.subr.mxu0 0.0
    %2448 = vmatpush1.msra.mxu0 0.0
    %2449 = vmatprep.subr.mxu0 0.0
    %2450 = vmatpush1.msra.mxu0 0.0
    %2451 = vmatprep.subr.mxu0 0.0
    %2452 = vmatpush1.msra.mxu0 0.0
    %2453 = vmatprep.subr.mxu0 0.0
    %2454 = vmatpush1.msra.mxu0 0.0
    %2455 = vmatprep.subr.mxu0 0.0
    %2456 = vmatpush1.msra.mxu0 0.0
    %2457 = vmatprep.subr.mxu0 0.0
    %2458 = vmatpush1.msra.mxu0 0.0
    %2459 = vmatprep.subr.mxu0 0.0
    %2460 = vmatpush1.msra.mxu0 0.0
    %2461 = vmatprep.subr.mxu0 0.0
    %2462 = vmatpush1.msra.mxu0 0.0
    %2463 = vmatprep.subr.mxu0 0.0
    %2464 = vmatpush1.msra.mxu0 0.0
    %2465 = vmatprep.subr.mxu0 0.0
    %2466 = vmatpush1.msra.mxu0 0.0
    %2467 = vmatprep.mubr.f32.mxu0 0.0
    %2468 = vmatmul.mubr.f32.gmra.mrb[0].mxu0 %v2401
    %v2469 = vpop.f32.mrb[0].mxu0
    %v2470 = vadd.f32 %v2383, %v2469
    %v2471 = vpop.f32.mrb[0].mxu0
    %2472 = vdwg.mxu0
    %v2473 = vmax.f32 %v2470, 0.0
    %v2474 = vadd.f32 %v2473, %v2284
    %v2475 = vsel %vm1042, %v2474, 0.0
    %2476 = vadd.xlane.f32.xlu0 %v2475
    %v2477 = vpop.xlane.xlu0 %2476
    %v2478 = vmul.f32 %v2477, %v1046
    %v2479 = vsub.f32 %v2474, %v2478
    %v2480 = vmul.f32 %v2479, %v2479
    %v2481 = vsel %vm1042, %v2480, 0.0
    %2482 = vadd.xlane.f32.xlu0 %v2481
    %v2483 = vpop.xlane.xlu0 %2482
    %v2484 = vmul.f32 %v2483, %v1046
    %v2485 = vadd.f32 %v2484, 1e-05
    %v2486 = vrsqrt.pop %v2485
    %v2487 = vmul.f32 %v2479, %v2486
    %v2488 = vlaneseq
    %v2489 = vshrl.u32 %v2488, 7
    %v2490 = vsub.s32 0, %v2489
    %v2491 = vrot.slane %v2293, %v2490
    %v2492 = vmul.f32 %v2487, %v2491
    %v2493 = vlaneseq
    %v2494 = vshrl.u32 %v2493, 7
    %v2495 = vsub.s32 0, %v2494
    %v2496 = vrot.slane %v2294, %v2495
    %v2497 = vadd.f32 %v2492, %v2496
    %v2498 = vld [vmem:[%s1] sm:$0x1f]
    %v2499 = vld [vmem:[%s7 + $0xf] sm:$0x1]
    %v2500 = vld [vmem:[%s5 + $0x8] sm:$0xff]
    %v2501 = vld [vmem:[%s5 + $0x30] sm:$0xff]
    %v2502 = vld [vmem:[%s7 + $0xc] sm:$0x1]
    %v2503 = vld [vmem:[%s7 + $0xd] sm:$0x1]
    %v2504 = vld [vmem:[%s7 + $0xe] sm:$0x1]
    %v2505 = vlaneseq
    %v2506 = vshrl.u32 %v2505, 7
    %v2507 = vsub.s32 0, %v2506
    %v2508 = vrot.slane %v2502, %v2507
    %v2510 = vsel %vm49, %v2498, 0
    %2512 = vmatprep.subr.mxu0 0.0
    %2513 = vmatpush1.msra.mxu0 %v2500
    %2514 = vmatprep.subr.mxu0 0.0
    %2515 = vmatpush1.msra.mxu0 %v2501
    %2516 = vmatprep.subr.mxu0 0.0
    %2517 = vmatpush1.msra.mxu0 0.0
    %2518 = vmatprep.subr.mxu0 0.0
    %2519 = vmatpush1.msra.mxu0 0.0
    %2520 = vmatprep.subr.mxu0 0.0
    %2521 = vmatpush1.msra.mxu0 0.0
    %2522 = vmatprep.subr.mxu0 0.0
    %2523 = vmatpush1.msra.mxu0 0.0
    %2524 = vmatprep.subr.mxu0 0.0
    %2525 = vmatpush1.msra.mxu0 0.0
    %2526 = vmatprep.subr.mxu0 0.0
    %2527 = vmatpush1.msra.mxu0 0.0
    %2528 = vmatprep.subr.mxu0 0.0
    %2529 = vmatpush1.msra.mxu0 0.0
    %2530 = vmatprep.subr.mxu0 0.0
    %2531 = vmatpush1.msra.mxu0 0.0
    %2532 = vmatprep.subr.mxu0 0.0
    %2533 = vmatpush1.msra.mxu0 0.0
    %2534 = vmatprep.subr.mxu0 0.0
    %2535 = vmatpush1.msra.mxu0 0.0
    %2536 = vmatprep.subr.mxu0 0.0
    %2537 = vmatpush1.msra.mxu0 0.0
    %2538 = vmatprep.subr.mxu0 0.0
    %2539 = vmatpush1.msra.mxu0 0.0
    %2540 = vmatprep.subr.mxu0 0.0
    %2541 = vmatpush1.msra.mxu0 0.0
    %2542 = vmatprep.subr.mxu0 0.0
    %2543 = vmatpush1.msra.mxu0 0.0
    %2544 = vmatprep.subr.mxu0 0.0
    %2545 = vmatpush1.msra.mxu0 0.0
    %2546 = vmatprep.subr.mxu0 0.0
    %2547 = vmatpush1.msra.mxu0 0.0
    %2548 = vmatprep.subr.mxu0 0.0
    %2549 = vmatpush1.msra.mxu0 0.0
    %2550 = vmatprep.subr.mxu0 0.0
    %2551 = vmatpush1.msra.mxu0 0.0
    %2552 = vmatprep.subr.mxu0 0.0
    %2553 = vmatpush1.msra.mxu0 0.0
    %2554 = vmatprep.subr.mxu0 0.0
    %2555 = vmatpush1.msra.mxu0 0.0
    %2556 = vmatprep.subr.mxu0 0.0
    %2557 = vmatpush1.msra.mxu0 0.0
    %2558 = vmatprep.subr.mxu0 0.0
    %2559 = vmatpush1.msra.mxu0 0.0
    %2560 = vmatprep.subr.mxu0 0.0
    %2561 = vmatpush1.msra.mxu0 0.0
    %2562 = vmatprep.subr.mxu0 0.0
    %2563 = vmatpush1.msra.mxu0 0.0
    %2564 = vmatprep.subr.mxu0 0.0
    %2565 = vmatpush1.msra.mxu0 0.0
    %2566 = vmatprep.subr.mxu0 0.0
    %2567 = vmatpush1.msra.mxu0 0.0
    %2568 = vmatprep.subr.mxu0 0.0
    %2569 = vmatpush1.msra.mxu0 0.0
    %2570 = vmatprep.subr.mxu0 0.0
    %2571 = vmatpush1.msra.mxu0 0.0
    %2572 = vmatprep.subr.mxu0 0.0
    %2573 = vmatpush1.msra.mxu0 0.0
    %2574 = vmatprep.subr.mxu0 0.0
    %2575 = vmatpush1.msra.mxu0 0.0
    %2576 = vmatprep.mubr.f32.mxu0 0.0
    %2577 = vmatmul.mubr.f32.gmra.mrb[0].mxu0 %v2510
    %v2578 = vpop.f32.mrb[0].mxu0
    %v2579 = vadd.f32 %v2508, %v2578
    %v2580 = vpop.f32.mrb[0].mxu0
    %2581 = vdwg.mxu0
    %v2582 = vlaneseq
    %v2583 = vshrl.u32 %v2582, 7
    %v2584 = vsub.s32 0, %v2583
    %v2585 = vrot.slane %v2503, %v2584
    %2588 = vrot.lane.b32.xlu0 %v2500, 112
    %v2589 = vpop.permute.xlu0 %2588
    %2590 = vrot.lane.b32.xlu0 %v2501, 112
    %v2591 = vpop.permute.xlu0 %2590
    %2594 = vmatprep.subr.mxu0 0.0
    %2595 = vmatpush1.msra.mxu0 %v2589
    %2596 = vmatprep.subr.mxu0 0.0
    %2597 = vmatpush1.msra.mxu0 %v2591
    %2598 = vmatprep.subr.mxu0 0.0
    %2599 = vmatpush1.msra.mxu0 0.0
    %2600 = vmatprep.subr.mxu0 0.0
    %2601 = vmatpush1.msra.mxu0 0.0
    %2602 = vmatprep.subr.mxu0 0.0
    %2603 = vmatpush1.msra.mxu0 0.0
    %2604 = vmatprep.subr.mxu0 0.0
    %2605 = vmatpush1.msra.mxu0 0.0
    %2606 = vmatprep.subr.mxu0 0.0
    %2607 = vmatpush1.msra.mxu0 0.0
    %2608 = vmatprep.subr.mxu0 0.0
    %2609 = vmatpush1.msra.mxu0 0.0
    %2610 = vmatprep.subr.mxu0 0.0
    %2611 = vmatpush1.msra.mxu0 0.0
    %2612 = vmatprep.subr.mxu0 0.0
    %2613 = vmatpush1.msra.mxu0 0.0
    %2614 = vmatprep.subr.mxu0 0.0
    %2615 = vmatpush1.msra.mxu0 0.0
    %2616 = vmatprep.subr.mxu0 0.0
    %2617 = vmatpush1.msra.mxu0 0.0
    %2618 = vmatprep.subr.mxu0 0.0
    %2619 = vmatpush1.msra.mxu0 0.0
    %2620 = vmatprep.subr.mxu0 0.0
    %2621 = vmatpush1.msra.mxu0 0.0
    %2622 = vmatprep.subr.mxu0 0.0
    %2623 = vmatpush1.msra.mxu0 0.0
    %2624 = vmatprep.subr.mxu0 0.0
    %2625 = vmatpush1.msra.mxu0 0.0
    %2626 = vmatprep.subr.mxu0 0.0
    %2627 = vmatpush1.msra.mxu0 0.0
    %2628 = vmatprep.subr.mxu0 0.0
    %2629 = vmatpush1.msra.mxu0 0.0
    %2630 = vmatprep.subr.mxu0 0.0
    %2631 = vmatpush1.msra.mxu0 0.0
    %2632 = vmatprep.subr.mxu0 0.0
    %2633 = vmatpush1.msra.mxu0 0.0
    %2634 = vmatprep.subr.mxu0 0.0
    %2635 = vmatpush1.msra.mxu0 0.0
    %2636 = vmatprep.subr.mxu0 0.0
    %2637 = vmatpush1.msra.mxu0 0.0
    %2638 = vmatprep.subr.mxu0 0.0
    %2639 = vmatpush1.msra.mxu0 0.0
    %2640 = vmatprep.subr.mxu0 0.0
    %2641 = vmatpush1.msra.mxu0 0.0
    %2642 = vmatprep.subr.mxu0 0.0
    %2643 = vmatpush1.msra.mxu0 0.0
    %2644 = vmatprep.subr.mxu0 0.0
    %2645 = vmatpush1.msra.mxu0 0.0
    %2646 = vmatprep.subr.mxu0 0.0
    %2647 = vmatpush1.msra.mxu0 0.0
    %2648 = vmatprep.subr.mxu0 0.0
    %2649 = vmatpush1.msra.mxu0 0.0
    %2650 = vmatprep.subr.mxu0 0.0
    %2651 = vmatpush1.msra.mxu0 0.0
    %2652 = vmatprep.subr.mxu0 0.0
    %2653 = vmatpush1.msra.mxu0 0.0
    %2654 = vmatprep.subr.mxu0 0.0
    %2655 = vmatpush1.msra.mxu0 0.0
    %2656 = vmatprep.subr.mxu0 0.0
    %2657 = vmatpush1.msra.mxu0 0.0
    %2658 = vmatprep.mubr.f32.mxu0 0.0
    %2659 = vmatmul.mubr.f32.gmra.mrb[0].mxu0 %v2510
    %v2660 = vpop.f32.mrb[0].mxu0
    %v2661 = vadd.f32 %v2585, %v2660
    %v2662 = vpop.f32.mrb[0].mxu0
    %2663 = vdwg.mxu0
    %v2664 = vlaneseq
    %v2665 = vshrl.u32 %v2664, 7
    %v2666 = vsub.s32 0, %v2665
    %v2667 = vrot.slane %v2504, %v2666
    %2668 = vrot.lane.b32.xlu0 %v2500, 96
    %v2669 = vpop.permute.xlu0 %2668
    %2670 = vrot.lane.b32.xlu0 %v2501, 96
    %v2671 = vpop.permute.xlu0 %2670
    %2674 = vmatprep.subr.mxu0 0.0
    %2675 = vmatpush1.msra.mxu0 %v2669
    %2676 = vmatprep.subr.mxu0 0.0
    %2677 = vmatpush1.msra.mxu0 %v2671
    %2678 = vmatprep.subr.mxu0 0.0
    %2679 = vmatpush1.msra.mxu0 0.0
    %2680 = vmatprep.subr.mxu0 0.0
    %2681 = vmatpush1.msra.mxu0 0.0
    %2682 = vmatprep.subr.mxu0 0.0
    %2683 = vmatpush1.msra.mxu0 0.0
    %2684 = vmatprep.subr.mxu0 0.0
    %2685 = vmatpush1.msra.mxu0 0.0
    %2686 = vmatprep.subr.mxu0 0.0
    %2687 = vmatpush1.msra.mxu0 0.0
    %2688 = vmatprep.subr.mxu0 0.0
    %2689 = vmatpush1.msra.mxu0 0.0
    %2690 = vmatprep.subr.mxu0 0.0
    %2691 = vmatpush1.msra.mxu0 0.0
    %2692 = vmatprep.subr.mxu0 0.0
    %2693 = vmatpush1.msra.mxu0 0.0
    %2694 = vmatprep.subr.mxu0 0.0
    %2695 = vmatpush1.msra.mxu0 0.0
    %2696 = vmatprep.subr.mxu0 0.0
    %2697 = vmatpush1.msra.mxu0 0.0
    %2698 = vmatprep.subr.mxu0 0.0
    %2699 = vmatpush1.msra.mxu0 0.0
    %2700 = vmatprep.subr.mxu0 0.0
    %2701 = vmatpush1.msra.mxu0 0.0
    %2702 = vmatprep.subr.mxu0 0.0
    %2703 = vmatpush1.msra.mxu0 0.0
    %2704 = vmatprep.subr.mxu0 0.0
    %2705 = vmatpush1.msra.mxu0 0.0
    %2706 = vmatprep.subr.mxu0 0.0
    %2707 = vmatpush1.msra.mxu0 0.0
    %2708 = vmatprep.subr.mxu0 0.0
    %2709 = vmatpush1.msra.mxu0 0.0
    %2710 = vmatprep.subr.mxu0 0.0
    %2711 = vmatpush1.msra.mxu0 0.0
    %2712 = vmatprep.subr.mxu0 0.0
    %2713 = vmatpush1.msra.mxu0 0.0
    %2714 = vmatprep.subr.mxu0 0.0
    %2715 = vmatpush1.msra.mxu0 0.0
    %2716 = vmatprep.subr.mxu0 0.0
    %2717 = vmatpush1.msra.mxu0 0.0
    %2718 = vmatprep.subr.mxu0 0.0
    %2719 = vmatpush1.msra.mxu0 0.0
    %2720 = vmatprep.subr.mxu0 0.0
    %2721 = vmatpush1.msra.mxu0 0.0
    %2722 = vmatprep.subr.mxu0 0.0
    %2723 = vmatpush1.msra.mxu0 0.0
    %2724 = vmatprep.subr.mxu0 0.0
    %2725 = vmatpush1.msra.mxu0 0.0
    %2726 = vmatprep.subr.mxu0 0.0
    %2727 = vmatpush1.msra.mxu0 0.0
    %2728 = vmatprep.subr.mxu0 0.0
    %2729 = vmatpush1.msra.mxu0 0.0
    %2730 = vmatprep.subr.mxu0 0.0
    %2731 = vmatpush1.msra.mxu0 0.0
    %2732 = vmatprep.subr.mxu0 0.0
    %2733 = vmatpush1.msra.mxu0 0.0
    %2734 = vmatprep.subr.mxu0 0.0
    %2735 = vmatpush1.msra.mxu0 0.0
    %2736 = vmatprep.subr.mxu0 0.0
    %2737 = vmatpush1.msra.mxu0 0.0
    %2738 = vmatprep.mubr.f32.mxu0 0.0
    %2739 = vmatmul.mubr.f32.gmra.mrb[0].mxu0 %v2510
    %v2740 = vpop.f32.mrb[0].mxu0
    %v2741 = vadd.f32 %v2667, %v2740
    %v2742 = vpop.f32.mrb[0].mxu0
    %2743 = vdwg.mxu0
    %v2745 = vsel %vm285, %v2579, 0
    %v2748 = vsel %vm285, %v2661, 0
    %2750 = vmatprep.subr.mxu0 0.0
    %2751 = vmatpush1.xpose.msra.mxu0 %v2748
    %2752 = vmatprep.subr.mxu0 0.0
    %2753 = vmatpush1.xpose.msra.mxu0 0.0
    %2754 = vmatprep.subr.mxu0 0.0
    %2755 = vmatpush1.xpose.msra.mxu0 0.0
    %2756 = vmatprep.subr.mxu0 0.0
    %2757 = vmatpush1.xpose.msra.mxu0 0.0
    %2758 = vmatprep.subr.mxu0 0.0
    %2759 = vmatpush1.xpose.msra.mxu0 0.0
    %2760 = vmatprep.subr.mxu0 0.0
    %2761 = vmatpush1.xpose.msra.mxu0 0.0
    %2762 = vmatprep.subr.mxu0 0.0
    %2763 = vmatpush1.xpose.msra.mxu0 0.0
    %2764 = vmatprep.subr.mxu0 0.0
    %2765 = vmatpush1.xpose.msra.mxu0 0.0
    %2766 = vmatprep.subr.mxu0 0.0
    %2767 = vmatpush1.xpose.msra.mxu0 0.0
    %2768 = vmatprep.subr.mxu0 0.0
    %2769 = vmatpush1.xpose.msra.mxu0 0.0
    %2770 = vmatprep.subr.mxu0 0.0
    %2771 = vmatpush1.xpose.msra.mxu0 0.0
    %2772 = vmatprep.subr.mxu0 0.0
    %2773 = vmatpush1.xpose.msra.mxu0 0.0
    %2774 = vmatprep.subr.mxu0 0.0
    %2775 = vmatpush1.xpose.msra.mxu0 0.0
    %2776 = vmatprep.subr.mxu0 0.0
    %2777 = vmatpush1.xpose.msra.mxu0 0.0
    %2778 = vmatprep.subr.mxu0 0.0
    %2779 = vmatpush1.xpose.msra.mxu0 0.0
    %2780 = vmatprep.subr.mxu0 0.0
    %2781 = vmatpush1.xpose.msra.mxu0 0.0
    %2782 = vmatprep.subr.mxu0 0.0
    %2783 = vmatpush1.xpose.msra.mxu0 0.0
    %2784 = vmatprep.subr.mxu0 0.0
    %2785 = vmatpush1.xpose.msra.mxu0 0.0
    %2786 = vmatprep.subr.mxu0 0.0
    %2787 = vmatpush1.xpose.msra.mxu0 0.0
    %2788 = vmatprep.subr.mxu0 0.0
    %2789 = vmatpush1.xpose.msra.mxu0 0.0
    %2790 = vmatprep.subr.mxu0 0.0
    %2791 = vmatpush1.xpose.msra.mxu0 0.0
    %2792 = vmatprep.subr.mxu0 0.0
    %2793 = vmatpush1.xpose.msra.mxu0 0.0
    %2794 = vmatprep.subr.mxu0 0.0
    %2795 = vmatpush1.xpose.msra.mxu0 0.0
    %2796 = vmatprep.subr.mxu0 0.0
    %2797 = vmatpush1.xpose.msra.mxu0 0.0
    %2798 = vmatprep.subr.mxu0 0.0
    %2799 = vmatpush1.xpose.msra.mxu0 0.0
    %2800 = vmatprep.subr.mxu0 0.0
    %2801 = vmatpush1.xpose.msra.mxu0 0.0
    %2802 = vmatprep.subr.mxu0 0.0
    %2803 = vmatpush1.xpose.msra.mxu0 0.0
    %2804 = vmatprep.subr.mxu0 0.0
    %2805 = vmatpush1.xpose.msra.mxu0 0.0
    %2806 = vmatprep.subr.mxu0 0.0
    %2807 = vmatpush1.xpose.msra.mxu0 0.0
    %2808 = vmatprep.subr.mxu0 0.0
    %2809 = vmatpush1.xpose.msra.mxu0 0.0
    %2810 = vmatprep.subr.mxu0 0.0
    %2811 = vmatpush1.xpose.msra.mxu0 0.0
    %2812 = vmatprep.subr.mxu0 0.0
    %2813 = vmatpush1.xpose.msra.mxu0 0.0
    %2814 = vmatprep.mubr.f32.mxu0 0.0
    %2815 = vmatmul.mubr.f32.gmra.mrb[0].mxu0 %v2745
    %v2816 = vpop.f32.mrb[0].mxu0
    %v2817 = vadd.f32 0.0, %v2816
    %v2818 = vpop.f32.mrb[0].mxu0
    %2819 = vdwg.mxu0
    %v2820 = vmul.f32 %v2817, 0.125
    %v2821 = vsel %vm35, -1e+09, %v2820
    %v2822 = vsel %vm364, %v2821, -inf
    %2823 = vmax.xlane.f32.xlu0 %v2822
    %v2824 = vpop.xlane.xlu0 %2823
    %v2825 = vsub.f32 %v2821, %v2824
    %v2826 = vmul.f32 %v2825, 1.442695
    %v2827 = vpow.pop %v2826
    %v2828 = vsel %vm364, %v2827, 0.0
    %2829 = vadd.xlane.f32.xlu0 %v2828
    %v2830 = vpop.xlane.xlu0 %2829
    %v2831 = vrcp.pop %v2830
    %v2832 = vmul.f32 %v2827, %v2831
    %s2833 = scalar_lea.vmem %s9, 32
    %2834 = vst.msk [vmem:[%s2833] sm:$0x1f] %vm364, %v2832
    %v2836 = vsel %vm377, %v2821, 0
    %v2839 = vsel %vm381, %v2741, 0
    %2841 = vmatprep.subr.mxu0 0.0
    %2842 = vmatpush1.msra.mxu0 %v2839
    %2843 = vmatprep.subr.mxu0 0.0
    %2844 = vmatpush1.msra.mxu0 0.0
    %2845 = vmatprep.subr.mxu0 0.0
    %2846 = vmatpush1.msra.mxu0 0.0
    %2847 = vmatprep.subr.mxu0 0.0
    %2848 = vmatpush1.msra.mxu0 0.0
    %2849 = vmatprep.subr.mxu0 0.0
    %2850 = vmatpush1.msra.mxu0 0.0
    %2851 = vmatprep.subr.mxu0 0.0
    %2852 = vmatpush1.msra.mxu0 0.0
    %2853 = vmatprep.subr.mxu0 0.0
    %2854 = vmatpush1.msra.mxu0 0.0
    %2855 = vmatprep.subr.mxu0 0.0
    %2856 = vmatpush1.msra.mxu0 0.0
    %2857 = vmatprep.subr.mxu0 0.0
    %2858 = vmatpush1.msra.mxu0 0.0
    %2859 = vmatprep.subr.mxu0 0.0
    %2860 = vmatpush1.msra.mxu0 0.0
    %2861 = vmatprep.subr.mxu0 0.0
    %2862 = vmatpush1.msra.mxu0 0.0
    %2863 = vmatprep.subr.mxu0 0.0
    %2864 = vmatpush1.msra.mxu0 0.0
    %2865 = vmatprep.subr.mxu0 0.0
    %2866 = vmatpush1.msra.mxu0 0.0
    %2867 = vmatprep.subr.mxu0 0.0
    %2868 = vmatpush1.msra.mxu0 0.0
    %2869 = vmatprep.subr.mxu0 0.0
    %2870 = vmatpush1.msra.mxu0 0.0
    %2871 = vmatprep.subr.mxu0 0.0
    %2872 = vmatpush1.msra.mxu0 0.0
    %2873 = vmatprep.subr.mxu0 0.0
    %2874 = vmatpush1.msra.mxu0 0.0
    %2875 = vmatprep.subr.mxu0 0.0
    %2876 = vmatpush1.msra.mxu0 0.0
    %2877 = vmatprep.subr.mxu0 0.0
    %2878 = vmatpush1.msra.mxu0 0.0
    %2879 = vmatprep.subr.mxu0 0.0
    %2880 = vmatpush1.msra.mxu0 0.0
    %2881 = vmatprep.subr.mxu0 0.0
    %2882 = vmatpush1.msra.mxu0 0.0
    %2883 = vmatprep.subr.mxu0 0.0
    %2884 = vmatpush1.msra.mxu0 0.0
    %2885 = vmatprep.subr.mxu0 0.0
    %2886 = vmatpush1.msra.mxu0 0.0
    %2887 = vmatprep.subr.mxu0 0.0
    %2888 = vmatpush1.msra.mxu0 0.0
    %2889 = vmatprep.subr.mxu0 0.0
    %2890 = vmatpush1.msra.mxu0 0.0
    %2891 = vmatprep.subr.mxu0 0.0
    %2892 = vmatpush1.msra.mxu0 0.0
    %2893 = vmatprep.subr.mxu0 0.0
    %2894 = vmatpush1.msra.mxu0 0.0
    %2895 = vmatprep.subr.mxu0 0.0
    %2896 = vmatpush1.msra.mxu0 0.0
    %2897 = vmatprep.subr.mxu0 0.0
    %2898 = vmatpush1.msra.mxu0 0.0
    %2899 = vmatprep.subr.mxu0 0.0
    %2900 = vmatpush1.msra.mxu0 0.0
    %2901 = vmatprep.subr.mxu0 0.0
    %2902 = vmatpush1.msra.mxu0 0.0
    %2903 = vmatprep.subr.mxu0 0.0
    %2904 = vmatpush1.msra.mxu0 0.0
    %2905 = vmatprep.mubr.f32.mxu0 0.0
    %2906 = vmatmul.mubr.f32.gmra.mrb[0].mxu0 %v2836
    %v2907 = vpop.f32.mrb[0].mxu0
    %v2908 = vadd.f32 0.0, %v2907
    %v2909 = vpop.f32.mrb[0].mxu0
    %2910 = vdwg.mxu0
    %2911 = vrot.lane.b32.xlu0 %v2500, 80
    %v2912 = vpop.permute.xlu0 %2911
    %v2915 = vsel %vm285, %v2908, 0
    %2917 = vmatprep.subr.mxu0 0.0
    %2918 = vmatpush1.msra.mxu0 %v2912
    %2919 = vmatprep.subr.mxu0 0.0
    %2920 = vmatpush1.msra.mxu0 0.0
    %2921 = vmatprep.subr.mxu0 0.0
    %2922 = vmatpush1.msra.mxu0 0.0
    %2923 = vmatprep.subr.mxu0 0.0
    %2924 = vmatpush1.msra.mxu0 0.0
    %2925 = vmatprep.subr.mxu0 0.0
    %2926 = vmatpush1.msra.mxu0 0.0
    %2927 = vmatprep.subr.mxu0 0.0
    %2928 = vmatpush1.msra.mxu0 0.0
    %2929 = vmatprep.subr.mxu0 0.0
    %2930 = vmatpush1.msra.mxu0 0.0
    %2931 = vmatprep.subr.mxu0 0.0
    %2932 = vmatpush1.msra.mxu0 0.0
    %2933 = vmatprep.subr.mxu0 0.0
    %2934 = vmatpush1.msra.mxu0 0.0
    %2935 = vmatprep.subr.mxu0 0.0
    %2936 = vmatpush1.msra.mxu0 0.0
    %2937 = vmatprep.subr.mxu0 0.0
    %2938 = vmatpush1.msra.mxu0 0.0
    %2939 = vmatprep.subr.mxu0 0.0
    %2940 = vmatpush1.msra.mxu0 0.0
    %2941 = vmatprep.subr.mxu0 0.0
    %2942 = vmatpush1.msra.mxu0 0.0
    %2943 = vmatprep.subr.mxu0 0.0
    %2944 = vmatpush1.msra.mxu0 0.0
    %2945 = vmatprep.subr.mxu0 0.0
    %2946 = vmatpush1.msra.mxu0 0.0
    %2947 = vmatprep.subr.mxu0 0.0
    %2948 = vmatpush1.msra.mxu0 0.0
    %2949 = vmatprep.subr.mxu0 0.0
    %2950 = vmatpush1.msra.mxu0 0.0
    %2951 = vmatprep.subr.mxu0 0.0
    %2952 = vmatpush1.msra.mxu0 0.0
    %2953 = vmatprep.subr.mxu0 0.0
    %2954 = vmatpush1.msra.mxu0 0.0
    %2955 = vmatprep.subr.mxu0 0.0
    %2956 = vmatpush1.msra.mxu0 0.0
    %2957 = vmatprep.subr.mxu0 0.0
    %2958 = vmatpush1.msra.mxu0 0.0
    %2959 = vmatprep.subr.mxu0 0.0
    %2960 = vmatpush1.msra.mxu0 0.0
    %2961 = vmatprep.subr.mxu0 0.0
    %2962 = vmatpush1.msra.mxu0 0.0
    %2963 = vmatprep.subr.mxu0 0.0
    %2964 = vmatpush1.msra.mxu0 0.0
    %2965 = vmatprep.subr.mxu0 0.0
    %2966 = vmatpush1.msra.mxu0 0.0
    %2967 = vmatprep.subr.mxu0 0.0
    %2968 = vmatpush1.msra.mxu0 0.0
    %2969 = vmatprep.subr.mxu0 0.0
    %2970 = vmatpush1.msra.mxu0 0.0
    %2971 = vmatprep.subr.mxu0 0.0
    %2972 = vmatpush1.msra.mxu0 0.0
    %2973 = vmatprep.subr.mxu0 0.0
    %2974 = vmatpush1.msra.mxu0 0.0
    %2975 = vmatprep.subr.mxu0 0.0
    %2976 = vmatpush1.msra.mxu0 0.0
    %2977 = vmatprep.subr.mxu0 0.0
    %2978 = vmatpush1.msra.mxu0 0.0
    %2979 = vmatprep.subr.mxu0 0.0
    %2980 = vmatpush1.msra.mxu0 0.0
    %2981 = vmatprep.mubr.f32.mxu0 0.0
    %2982 = vmatmul.mubr.f32.gmra.mrb[0].mxu0 %v2915
    %v2983 = vpop.f32.mrb[0].mxu0
    %v2984 = vadd.f32 0.0, %v2983
    %v2985 = vpop.f32.mrb[0].mxu0
    %2986 = vdwg.mxu0
    %v2987 = vlaneseq
    %v2988 = vshrl.u32 %v2987, 7
    %v2989 = vsub.s32 0, %v2988
    %v2990 = vrot.slane %v2499, %v2989
    %v2991 = vadd.f32 %v2990, %v2984
    %v2992 = vld [vmem:[%s5 + $0x8] sm:$0xff]
    %v2993 = vld [vmem:[%s5 + $0x30] sm:$0xff]
    %v2994 = vld [vmem:[%s7 + $0xc] sm:$0x1]
    %v2995 = vld [vmem:[%s7 + $0xd] sm:$0x1]
    %v2996 = vld [vmem:[%s7 + $0xe] sm:$0x1]
    %v2997 = vlaneseq
    %v2998 = vshrl.u32 %v2997, 7
    %v2999 = vsub.s32 0, %v2998
    %v3000 = vrot.slane %v2994, %v2999
    %3003 = vrot.lane.b32.xlu0 %v2992, 120
    %v3004 = vpop.permute.xlu0 %3003
    %3005 = vrot.lane.b32.xlu0 %v2993, 120
    %v3006 = vpop.permute.xlu0 %3005
    %3010 = vrot.lane.b32.xlu0 %v3000, 120
    %v3011 = vpop.permute.xlu0 %3010
    %3013 = vmatprep.subr.mxu0 0.0
    %3014 = vmatpush1.msra.mxu0 %v3004
    %3015 = vmatprep.subr.mxu0 0.0
    %3016 = vmatpush1.msra.mxu0 %v3006
    %3017 = vmatprep.subr.mxu0 0.0
    %3018 = vmatpush1.msra.mxu0 0.0
    %3019 = vmatprep.subr.mxu0 0.0
    %3020 = vmatpush1.msra.mxu0 0.0
    %3021 = vmatprep.subr.mxu0 0.0
    %3022 = vmatpush1.msra.mxu0 0.0
    %3023 = vmatprep.subr.mxu0 0.0
    %3024 = vmatpush1.msra.mxu0 0.0
    %3025 = vmatprep.subr.mxu0 0.0
    %3026 = vmatpush1.msra.mxu0 0.0
    %3027 = vmatprep.subr.mxu0 0.0
    %3028 = vmatpush1.msra.mxu0 0.0
    %3029 = vmatprep.subr.mxu0 0.0
    %3030 = vmatpush1.msra.mxu0 0.0
    %3031 = vmatprep.subr.mxu0 0.0
    %3032 = vmatpush1.msra.mxu0 0.0
    %3033 = vmatprep.subr.mxu0 0.0
    %3034 = vmatpush1.msra.mxu0 0.0
    %3035 = vmatprep.subr.mxu0 0.0
    %3036 = vmatpush1.msra.mxu0 0.0
    %3037 = vmatprep.subr.mxu0 0.0
    %3038 = vmatpush1.msra.mxu0 0.0
    %3039 = vmatprep.subr.mxu0 0.0
    %3040 = vmatpush1.msra.mxu0 0.0
    %3041 = vmatprep.subr.mxu0 0.0
    %3042 = vmatpush1.msra.mxu0 0.0
    %3043 = vmatprep.subr.mxu0 0.0
    %3044 = vmatpush1.msra.mxu0 0.0
    %3045 = vmatprep.subr.mxu0 0.0
    %3046 = vmatpush1.msra.mxu0 0.0
    %3047 = vmatprep.subr.mxu0 0.0
    %3048 = vmatpush1.msra.mxu0 0.0
    %3049 = vmatprep.subr.mxu0 0.0
    %3050 = vmatpush1.msra.mxu0 0.0
    %3051 = vmatprep.subr.mxu0 0.0
    %3052 = vmatpush1.msra.mxu0 0.0
    %3053 = vmatprep.subr.mxu0 0.0
    %3054 = vmatpush1.msra.mxu0 0.0
    %3055 = vmatprep.subr.mxu0 0.0
    %3056 = vmatpush1.msra.mxu0 0.0
    %3057 = vmatprep.subr.mxu0 0.0
    %3058 = vmatpush1.msra.mxu0 0.0
    %3059 = vmatprep.subr.mxu0 0.0
    %3060 = vmatpush1.msra.mxu0 0.0
    %3061 = vmatprep.subr.mxu0 0.0
    %3062 = vmatpush1.msra.mxu0 0.0
    %3063 = vmatprep.subr.mxu0 0.0
    %3064 = vmatpush1.msra.mxu0 0.0
    %3065 = vmatprep.subr.mxu0 0.0
    %3066 = vmatpush1.msra.mxu0 0.0
    %3067 = vmatprep.subr.mxu0 0.0
    %3068 = vmatpush1.msra.mxu0 0.0
    %3069 = vmatprep.subr.mxu0 0.0
    %3070 = vmatpush1.msra.mxu0 0.0
    %3071 = vmatprep.subr.mxu0 0.0
    %3072 = vmatpush1.msra.mxu0 0.0
    %3073 = vmatprep.subr.mxu0 0.0
    %3074 = vmatpush1.msra.mxu0 0.0
    %3075 = vmatprep.subr.mxu0 0.0
    %3076 = vmatpush1.msra.mxu0 0.0
    %3077 = vmatprep.mubr.f32.mxu0 0.0
    %3078 = vmatmul.mubr.f32.gmra.mrb[0].mxu0 %v2510
    %v3079 = vpop.f32.mrb[0].mxu0
    %v3080 = vadd.f32 %v3011, %v3079
    %v3081 = vpop.f32.mrb[0].mxu0
    %3082 = vdwg.mxu0
    %v3083 = vlaneseq
    %v3084 = vshrl.u32 %v3083, 7
    %v3085 = vsub.s32 0, %v3084
    %v3086 = vrot.slane %v2995, %v3085
    %3087 = vrot.lane.b32.xlu0 %v2992, 104
    %v3088 = vpop.permute.xlu0 %3087
    %3089 = vrot.lane.b32.xlu0 %v2993, 104
    %v3090 = vpop.permute.xlu0 %3089
    %3094 = vrot.lane.b32.xlu0 %v3086, 120
    %v3095 = vpop.permute.xlu0 %3094
    %3097 = vmatprep.subr.mxu0 0.0
    %3098 = vmatpush1.msra.mxu0 %v3088
    %3099 = vmatprep.subr.mxu0 0.0
    %3100 = vmatpush1.msra.mxu0 %v3090
    %3101 = vmatprep.subr.mxu0 0.0
    %3102 = vmatpush1.msra.mxu0 0.0
    %3103 = vmatprep.subr.mxu0 0.0
    %3104 = vmatpush1.msra.mxu0 0.0
    %3105 = vmatprep.subr.mxu0 0.0
    %3106 = vmatpush1.msra.mxu0 0.0
    %3107 = vmatprep.subr.mxu0 0.0
    %3108 = vmatpush1.msra.mxu0 0.0
    %3109 = vmatprep.subr.mxu0 0.0
    %3110 = vmatpush1.msra.mxu0 0.0
    %3111 = vmatprep.subr.mxu0 0.0
    %3112 = vmatpush1.msra.mxu0 0.0
    %3113 = vmatprep.subr.mxu0 0.0
    %3114 = vmatpush1.msra.mxu0 0.0
    %3115 = vmatprep.subr.mxu0 0.0
    %3116 = vmatpush1.msra.mxu0 0.0
    %3117 = vmatprep.subr.mxu0 0.0
    %3118 = vmatpush1.msra.mxu0 0.0
    %3119 = vmatprep.subr.mxu0 0.0
    %3120 = vmatpush1.msra.mxu0 0.0
    %3121 = vmatprep.subr.mxu0 0.0
    %3122 = vmatpush1.msra.mxu0 0.0
    %3123 = vmatprep.subr.mxu0 0.0
    %3124 = vmatpush1.msra.mxu0 0.0
    %3125 = vmatprep.subr.mxu0 0.0
    %3126 = vmatpush1.msra.mxu0 0.0
    %3127 = vmatprep.subr.mxu0 0.0
    %3128 = vmatpush1.msra.mxu0 0.0
    %3129 = vmatprep.subr.mxu0 0.0
    %3130 = vmatpush1.msra.mxu0 0.0
    %3131 = vmatprep.subr.mxu0 0.0
    %3132 = vmatpush1.msra.mxu0 0.0
    %3133 = vmatprep.subr.mxu0 0.0
    %3134 = vmatpush1.msra.mxu0 0.0
    %3135 = vmatprep.subr.mxu0 0.0
    %3136 = vmatpush1.msra.mxu0 0.0
    %3137 = vmatprep.subr.mxu0 0.0
    %3138 = vmatpush1.msra.mxu0 0.0
    %3139 = vmatprep.subr.mxu0 0.0
    %3140 = vmatpush1.msra.mxu0 0.0
    %3141 = vmatprep.subr.mxu0 0.0
    %3142 = vmatpush1.msra.mxu0 0.0
    %3143 = vmatprep.subr.mxu0 0.0
    %3144 = vmatpush1.msra.mxu0 0.0
    %3145 = vmatprep.subr.mxu0 0.0
    %3146 = vmatpush1.msra.mxu0 0.0
    %3147 = vmatprep.subr.mxu0 0.0
    %3148 = vmatpush1.msra.mxu0 0.0
    %3149 = vmatprep.subr.mxu0 0.0
    %3150 = vmatpush1.msra.mxu0 0.0
    %3151 = vmatprep.subr.mxu0 0.0
    %3152 = vmatpush1.msra.mxu0 0.0
    %3153 = vmatprep.subr.mxu0 0.0
    %3154 = vmatpush1.msra.mxu0 0.0
    %3155 = vmatprep.subr.mxu0 0.0
    %3156 = vmatpush1.msra.mxu0 0.0
    %3157 = vmatprep.subr.mxu0 0.0
    %3158 = vmatpush1.msra.mxu0 0.0
    %3159 = vmatprep.subr.mxu0 0.0
    %3160 = vmatpush1.msra.mxu0 0.0
    %3161 = vmatprep.mubr.f32.mxu0 0.0
    %3162 = vmatmul.mubr.f32.gmra.mrb[0].mxu0 %v2510
    %v3163 = vpop.f32.mrb[0].mxu0
    %v3164 = vadd.f32 %v3095, %v3163
    %v3165 = vpop.f32.mrb[0].mxu0
    %3166 = vdwg.mxu0
    %v3167 = vlaneseq
    %v3168 = vshrl.u32 %v3167, 7
    %v3169 = vsub.s32 0, %v3168
    %v3170 = vrot.slane %v2996, %v3169
    %3171 = vrot.lane.b32.xlu0 %v2992, 88
    %v3172 = vpop.permute.xlu0 %3171
    %3173 = vrot.lane.b32.xlu0 %v2993, 88
    %v3174 = vpop.permute.xlu0 %3173
    %3178 = vrot.lane.b32.xlu0 %v3170, 120
    %v3179 = vpop.permute.xlu0 %3178
    %3181 = vmatprep.subr.mxu0 0.0
    %3182 = vmatpush1.msra.mxu0 %v3172
    %3183 = vmatprep.subr.mxu0 0.0
    %3184 = vmatpush1.msra.mxu0 %v3174
    %3185 = vmatprep.subr.mxu0 0.0
    %3186 = vmatpush1.msra.mxu0 0.0
    %3187 = vmatprep.subr.mxu0 0.0
    %3188 = vmatpush1.msra.mxu0 0.0
    %3189 = vmatprep.subr.mxu0 0.0
    %3190 = vmatpush1.msra.mxu0 0.0
    %3191 = vmatprep.subr.mxu0 0.0
    %3192 = vmatpush1.msra.mxu0 0.0
    %3193 = vmatprep.subr.mxu0 0.0
    %3194 = vmatpush1.msra.mxu0 0.0
    %3195 = vmatprep.subr.mxu0 0.0
    %3196 = vmatpush1.msra.mxu0 0.0
    %3197 = vmatprep.subr.mxu0 0.0
    %3198 = vmatpush1.msra.mxu0 0.0
    %3199 = vmatprep.subr.mxu0 0.0
    %3200 = vmatpush1.msra.mxu0 0.0
    %3201 = vmatprep.subr.mxu0 0.0
    %3202 = vmatpush1.msra.mxu0 0.0
    %3203 = vmatprep.subr.mxu0 0.0
    %3204 = vmatpush1.msra.mxu0 0.0
    %3205 = vmatprep.subr.mxu0 0.0
    %3206 = vmatpush1.msra.mxu0 0.0
    %3207 = vmatprep.subr.mxu0 0.0
    %3208 = vmatpush1.msra.mxu0 0.0
    %3209 = vmatprep.subr.mxu0 0.0
    %3210 = vmatpush1.msra.mxu0 0.0
    %3211 = vmatprep.subr.mxu0 0.0
    %3212 = vmatpush1.msra.mxu0 0.0
    %3213 = vmatprep.subr.mxu0 0.0
    %3214 = vmatpush1.msra.mxu0 0.0
    %3215 = vmatprep.subr.mxu0 0.0
    %3216 = vmatpush1.msra.mxu0 0.0
    %3217 = vmatprep.subr.mxu0 0.0
    %3218 = vmatpush1.msra.mxu0 0.0
    %3219 = vmatprep.subr.mxu0 0.0
    %3220 = vmatpush1.msra.mxu0 0.0
    %3221 = vmatprep.subr.mxu0 0.0
    %3222 = vmatpush1.msra.mxu0 0.0
    %3223 = vmatprep.subr.mxu0 0.0
    %3224 = vmatpush1.msra.mxu0 0.0
    %3225 = vmatprep.subr.mxu0 0.0
    %3226 = vmatpush1.msra.mxu0 0.0
    %3227 = vmatprep.subr.mxu0 0.0
    %3228 = vmatpush1.msra.mxu0 0.0
    %3229 = vmatprep.subr.mxu0 0.0
    %3230 = vmatpush1.msra.mxu0 0.0
    %3231 = vmatprep.subr.mxu0 0.0
    %3232 = vmatpush1.msra.mxu0 0.0
    %3233 = vmatprep.subr.mxu0 0.0
    %3234 = vmatpush1.msra.mxu0 0.0
    %3235 = vmatprep.subr.mxu0 0.0
    %3236 = vmatpush1.msra.mxu0 0.0
    %3237 = vmatprep.subr.mxu0 0.0
    %3238 = vmatpush1.msra.mxu0 0.0
    %3239 = vmatprep.subr.mxu0 0.0
    %3240 = vmatpush1.msra.mxu0 0.0
    %3241 = vmatprep.subr.mxu0 0.0
    %3242 = vmatpush1.msra.mxu0 0.0
    %3243 = vmatprep.subr.mxu0 0.0
    %3244 = vmatpush1.msra.mxu0 0.0
    %3245 = vmatprep.mubr.f32.mxu0 0.0
    %3246 = vmatmul.mubr.f32.gmra.mrb[0].mxu0 %v2510
    %v3247 = vpop.f32.mrb[0].mxu0
    %v3248 = vadd.f32 %v3179, %v3247
    %v3249 = vpop.f32.mrb[0].mxu0
    %3250 = vdwg.mxu0
    %v3252 = vsel %vm285, %v3080, 0
    %v3255 = vsel %vm285, %v3164, 0
    %3257 = vmatprep.subr.mxu0 0.0
    %3258 = vmatpush1.xpose.msra.mxu0 %v3255
    %3259 = vmatprep.subr.mxu0 0.0
    %3260 = vmatpush1.xpose.msra.mxu0 0.0
    %3261 = vmatprep.subr.mxu0 0.0
    %3262 = vmatpush1.xpose.msra.mxu0 0.0
    %3263 = vmatprep.subr.mxu0 0.0
    %3264 = vmatpush1.xpose.msra.mxu0 0.0
    %3265 = vmatprep.subr.mxu0 0.0
    %3266 = vmatpush1.xpose.msra.mxu0 0.0
    %3267 = vmatprep.subr.mxu0 0.0
    %3268 = vmatpush1.xpose.msra.mxu0 0.0
    %3269 = vmatprep.subr.mxu0 0.0
    %3270 = vmatpush1.xpose.msra.mxu0 0.0
    %3271 = vmatprep.subr.mxu0 0.0
    %3272 = vmatpush1.xpose.msra.mxu0 0.0
    %3273 = vmatprep.subr.mxu0 0.0
    %3274 = vmatpush1.xpose.msra.mxu0 0.0
    %3275 = vmatprep.subr.mxu0 0.0
    %3276 = vmatpush1.xpose.msra.mxu0 0.0
    %3277 = vmatprep.subr.mxu0 0.0
    %3278 = vmatpush1.xpose.msra.mxu0 0.0
    %3279 = vmatprep.subr.mxu0 0.0
    %3280 = vmatpush1.xpose.msra.mxu0 0.0
    %3281 = vmatprep.subr.mxu0 0.0
    %3282 = vmatpush1.xpose.msra.mxu0 0.0
    %3283 = vmatprep.subr.mxu0 0.0
    %3284 = vmatpush1.xpose.msra.mxu0 0.0
    %3285 = vmatprep.subr.mxu0 0.0
    %3286 = vmatpush1.xpose.msra.mxu0 0.0
    %3287 = vmatprep.subr.mxu0 0.0
    %3288 = vmatpush1.xpose.msra.mxu0 0.0
    %3289 = vmatprep.subr.mxu0 0.0
    %3290 = vmatpush1.xpose.msra.mxu0 0.0
    %3291 = vmatprep.subr.mxu0 0.0
    %3292 = vmatpush1.xpose.msra.mxu0 0.0
    %3293 = vmatprep.subr.mxu0 0.0
    %3294 = vmatpush1.xpose.msra.mxu0 0.0
    %3295 = vmatprep.subr.mxu0 0.0
    %3296 = vmatpush1.xpose.msra.mxu0 0.0
    %3297 = vmatprep.subr.mxu0 0.0
    %3298 = vmatpush1.xpose.msra.mxu0 0.0
    %3299 = vmatprep.subr.mxu0 0.0
    %3300 = vmatpush1.xpose.msra.mxu0 0.0
    %3301 = vmatprep.subr.mxu0 0.0
    %3302 = vmatpush1.xpose.msra.mxu0 0.0
    %3303 = vmatprep.subr.mxu0 0.0
    %3304 = vmatpush1.xpose.msra.mxu0 0.0
    %3305 = vmatprep.subr.mxu0 0.0
    %3306 = vmatpush1.xpose.msra.mxu0 0.0
    %3307 = vmatprep.subr.mxu0 0.0
    %3308 = vmatpush1.xpose.msra.mxu0 0.0
    %3309 = vmatprep.subr.mxu0 0.0
    %3310 = vmatpush1.xpose.msra.mxu0 0.0
    %3311 = vmatprep.subr.mxu0 0.0
    %3312 = vmatpush1.xpose.msra.mxu0 0.0
    %3313 = vmatprep.subr.mxu0 0.0
    %3314 = vmatpush1.xpose.msra.mxu0 0.0
    %3315 = vmatprep.subr.mxu0 0.0
    %3316 = vmatpush1.xpose.msra.mxu0 0.0
    %3317 = vmatprep.subr.mxu0 0.0
    %3318 = vmatpush1.xpose.msra.mxu0 0.0
    %3319 = vmatprep.subr.mxu0 0.0
    %3320 = vmatpush1.xpose.msra.mxu0 0.0
    %3321 = vmatprep.mubr.f32.mxu0 0.0
    %3322 = vmatmul.mubr.f32.gmra.mrb[0].mxu0 %v3252
    %v3323 = vpop.f32.mrb[0].mxu0
    %v3324 = vadd.f32 0.0, %v3323
    %v3325 = vpop.f32.mrb[0].mxu0
    %3326 = vdwg.mxu0
    %v3327 = vmul.f32 %v3324, 0.125
    %v3328 = vsel %vm35, -1e+09, %v3327
    %v3329 = vsel %vm364, %v3328, -inf
    %3330 = vmax.xlane.f32.xlu0 %v3329
    %v3331 = vpop.xlane.xlu0 %3330
    %v3332 = vsub.f32 %v3328, %v3331
    %v3333 = vmul.f32 %v3332, 1.442695
    %v3334 = vpow.pop %v3333
    %v3335 = vsel %vm364, %v3334, 0.0
    %3336 = vadd.xlane.f32.xlu0 %v3335
    %v3337 = vpop.xlane.xlu0 %3336
    %v3338 = vrcp.pop %v3337
    %v3339 = vmul.f32 %v3334, %v3338
    %s3340 = scalar_lea.vmem %s9, 40
    %3341 = vst.msk [vmem:[%s3340] sm:$0x1f] %vm364, %v3339
    %v3343 = vsel %vm377, %v3328, 0
    %v3346 = vsel %vm381, %v3248, 0
    %3348 = vmatprep.subr.mxu0 0.0
    %3349 = vmatpush1.msra.mxu0 %v3346
    %3350 = vmatprep.subr.mxu0 0.0
    %3351 = vmatpush1.msra.mxu0 0.0
    %3352 = vmatprep.subr.mxu0 0.0
    %3353 = vmatpush1.msra.mxu0 0.0
    %3354 = vmatprep.subr.mxu0 0.0
    %3355 = vmatpush1.msra.mxu0 0.0
    %3356 = vmatprep.subr.mxu0 0.0
    %3357 = vmatpush1.msra.mxu0 0.0
    %3358 = vmatprep.subr.mxu0 0.0
    %3359 = vmatpush1.msra.mxu0 0.0
    %3360 = vmatprep.subr.mxu0 0.0
    %3361 = vmatpush1.msra.mxu0 0.0
    %3362 = vmatprep.subr.mxu0 0.0
    %3363 = vmatpush1.msra.mxu0 0.0
    %3364 = vmatprep.subr.mxu0 0.0
    %3365 = vmatpush1.msra.mxu0 0.0
    %3366 = vmatprep.subr.mxu0 0.0
    %3367 = vmatpush1.msra.mxu0 0.0
    %3368 = vmatprep.subr.mxu0 0.0
    %3369 = vmatpush1.msra.mxu0 0.0
    %3370 = vmatprep.subr.mxu0 0.0
    %3371 = vmatpush1.msra.mxu0 0.0
    %3372 = vmatprep.subr.mxu0 0.0
    %3373 = vmatpush1.msra.mxu0 0.0
    %3374 = vmatprep.subr.mxu0 0.0
    %3375 = vmatpush1.msra.mxu0 0.0
    %3376 = vmatprep.subr.mxu0 0.0
    %3377 = vmatpush1.msra.mxu0 0.0
    %3378 = vmatprep.subr.mxu0 0.0
    %3379 = vmatpush1.msra.mxu0 0.0
    %3380 = vmatprep.subr.mxu0 0.0
    %3381 = vmatpush1.msra.mxu0 0.0
    %3382 = vmatprep.subr.mxu0 0.0
    %3383 = vmatpush1.msra.mxu0 0.0
    %3384 = vmatprep.subr.mxu0 0.0
    %3385 = vmatpush1.msra.mxu0 0.0
    %3386 = vmatprep.subr.mxu0 0.0
    %3387 = vmatpush1.msra.mxu0 0.0
    %3388 = vmatprep.subr.mxu0 0.0
    %3389 = vmatpush1.msra.mxu0 0.0
    %3390 = vmatprep.subr.mxu0 0.0
    %3391 = vmatpush1.msra.mxu0 0.0
    %3392 = vmatprep.subr.mxu0 0.0
    %3393 = vmatpush1.msra.mxu0 0.0
    %3394 = vmatprep.subr.mxu0 0.0
    %3395 = vmatpush1.msra.mxu0 0.0
    %3396 = vmatprep.subr.mxu0 0.0
    %3397 = vmatpush1.msra.mxu0 0.0
    %3398 = vmatprep.subr.mxu0 0.0
    %3399 = vmatpush1.msra.mxu0 0.0
    %3400 = vmatprep.subr.mxu0 0.0
    %3401 = vmatpush1.msra.mxu0 0.0
    %3402 = vmatprep.subr.mxu0 0.0
    %3403 = vmatpush1.msra.mxu0 0.0
    %3404 = vmatprep.subr.mxu0 0.0
    %3405 = vmatpush1.msra.mxu0 0.0
    %3406 = vmatprep.subr.mxu0 0.0
    %3407 = vmatpush1.msra.mxu0 0.0
    %3408 = vmatprep.subr.mxu0 0.0
    %3409 = vmatpush1.msra.mxu0 0.0
    %3410 = vmatprep.subr.mxu0 0.0
    %3411 = vmatpush1.msra.mxu0 0.0
    %3412 = vmatprep.mubr.f32.mxu0 0.0
    %3413 = vmatmul.mubr.f32.gmra.mrb[0].mxu0 %v3343
    %v3414 = vpop.f32.mrb[0].mxu0
    %v3415 = vadd.f32 0.0, %v3414
    %v3416 = vpop.f32.mrb[0].mxu0
    %3417 = vdwg.mxu0
    %3418 = vrot.lane.b32.xlu0 %v2993, 80
    %v3419 = vpop.permute.xlu0 %3418
    %v3422 = vsel %vm285, %v3415, 0
    %3424 = vmatprep.subr.mxu0 0.0
    %3425 = vmatpush1.msra.mxu0 %v3419
    %3426 = vmatprep.subr.mxu0 0.0
    %3427 = vmatpush1.msra.mxu0 0.0
    %3428 = vmatprep.subr.mxu0 0.0
    %3429 = vmatpush1.msra.mxu0 0.0
    %3430 = vmatprep.subr.mxu0 0.0
    %3431 = vmatpush1.msra.mxu0 0.0
    %3432 = vmatprep.subr.mxu0 0.0
    %3433 = vmatpush1.msra.mxu0 0.0
    %3434 = vmatprep.subr.mxu0 0.0
    %3435 = vmatpush1.msra.mxu0 0.0
    %3436 = vmatprep.subr.mxu0 0.0
    %3437 = vmatpush1.msra.mxu0 0.0
    %3438 = vmatprep.subr.mxu0 0.0
    %3439 = vmatpush1.msra.mxu0 0.0
    %3440 = vmatprep.subr.mxu0 0.0
    %3441 = vmatpush1.msra.mxu0 0.0
    %3442 = vmatprep.subr.mxu0 0.0
    %3443 = vmatpush1.msra.mxu0 0.0
    %3444 = vmatprep.subr.mxu0 0.0
    %3445 = vmatpush1.msra.mxu0 0.0
    %3446 = vmatprep.subr.mxu0 0.0
    %3447 = vmatpush1.msra.mxu0 0.0
    %3448 = vmatprep.subr.mxu0 0.0
    %3449 = vmatpush1.msra.mxu0 0.0
    %3450 = vmatprep.subr.mxu0 0.0
    %3451 = vmatpush1.msra.mxu0 0.0
    %3452 = vmatprep.subr.mxu0 0.0
    %3453 = vmatpush1.msra.mxu0 0.0
    %3454 = vmatprep.subr.mxu0 0.0
    %3455 = vmatpush1.msra.mxu0 0.0
    %3456 = vmatprep.subr.mxu0 0.0
    %3457 = vmatpush1.msra.mxu0 0.0
    %3458 = vmatprep.subr.mxu0 0.0
    %3459 = vmatpush1.msra.mxu0 0.0
    %3460 = vmatprep.subr.mxu0 0.0
    %3461 = vmatpush1.msra.mxu0 0.0
    %3462 = vmatprep.subr.mxu0 0.0
    %3463 = vmatpush1.msra.mxu0 0.0
    %3464 = vmatprep.subr.mxu0 0.0
    %3465 = vmatpush1.msra.mxu0 0.0
    %3466 = vmatprep.subr.mxu0 0.0
    %3467 = vmatpush1.msra.mxu0 0.0
    %3468 = vmatprep.subr.mxu0 0.0
    %3469 = vmatpush1.msra.mxu0 0.0
    %3470 = vmatprep.subr.mxu0 0.0
    %3471 = vmatpush1.msra.mxu0 0.0
    %3472 = vmatprep.subr.mxu0 0.0
    %3473 = vmatpush1.msra.mxu0 0.0
    %3474 = vmatprep.subr.mxu0 0.0
    %3475 = vmatpush1.msra.mxu0 0.0
    %3476 = vmatprep.subr.mxu0 0.0
    %3477 = vmatpush1.msra.mxu0 0.0
    %3478 = vmatprep.subr.mxu0 0.0
    %3479 = vmatpush1.msra.mxu0 0.0
    %3480 = vmatprep.subr.mxu0 0.0
    %3481 = vmatpush1.msra.mxu0 0.0
    %3482 = vmatprep.subr.mxu0 0.0
    %3483 = vmatpush1.msra.mxu0 0.0
    %3484 = vmatprep.subr.mxu0 0.0
    %3485 = vmatpush1.msra.mxu0 0.0
    %3486 = vmatprep.subr.mxu0 0.0
    %3487 = vmatpush1.msra.mxu0 0.0
    %3488 = vmatprep.mubr.f32.mxu0 0.0
    %3489 = vmatmul.mubr.f32.gmra.mrb[0].mxu0 %v3422
    %v3490 = vpop.f32.mrb[0].mxu0
    %v3491 = vadd.f32 0.0, %v3490
    %v3492 = vpop.f32.mrb[0].mxu0
    %3493 = vdwg.mxu0
    %v3494 = vadd.f32 %v2991, %v3491
    %v3495 = vld [vmem:[%s7 + $0x10] sm:$0x1]
    %v3496 = vld [vmem:[%s7 + $0x11] sm:$0x1]
    %v3497 = vadd.f32 %v3494, %v2498
    %v3498 = vsel %vm1042, %v3497, 0.0
    %3499 = vadd.xlane.f32.xlu0 %v3498
    %v3500 = vpop.xlane.xlu0 %3499
    %v3501 = vmul.f32 %v3500, %v1046
    %v3502 = vsub.f32 %v3497, %v3501
    %v3503 = vmul.f32 %v3502, %v3502
    %v3504 = vsel %vm1042, %v3503, 0.0
    %3505 = vadd.xlane.f32.xlu0 %v3504
    %v3506 = vpop.xlane.xlu0 %3505
    %v3507 = vmul.f32 %v3506, %v1046
    %v3508 = vadd.f32 %v3507, 1e-05
    %v3509 = vrsqrt.pop %v3508
    %v3510 = vmul.f32 %v3502, %v3509
    %v3511 = vlaneseq
    %v3512 = vshrl.u32 %v3511, 7
    %v3513 = vsub.s32 0, %v3512
    %v3514 = vrot.slane %v3495, %v3513
    %v3515 = vmul.f32 %v3510, %v3514
    %v3516 = vlaneseq
    %v3517 = vshrl.u32 %v3516, 7
    %v3518 = vsub.s32 0, %v3517
    %v3519 = vrot.slane %v3496, %v3518
    %v3520 = vadd.f32 %v3515, %v3519
    %v3521 = vld [vmem:[%s7 + $0x15] sm:$0x1]
    %v3522 = vld [vmem:[%s5 + $0x8] sm:$0xff]
    %v3523 = vld [vmem:[%s5 + $0x30] sm:$0xff]
    %v3524 = vld [vmem:[%s7 + $0x12] sm:$0x1]
    %v3525 = vld [vmem:[%s7 + $0x13] sm:$0x1]
    %v3526 = vld [vmem:[%s7 + $0x14] sm:$0x1]
    %v3527 = vlaneseq
    %v3528 = vshrl.u32 %v3527, 7
    %v3529 = vsub.s32 0, %v3528
    %v3530 = vrot.slane %v3524, %v3529
    %3533 = vrot.lane.b32.xlu0 %v3522, 64
    %v3534 = vpop.permute.xlu0 %3533
    %3535 = vrot.lane.b32.xlu0 %v3523, 64
    %v3536 = vpop.permute.xlu0 %3535
    %v3540 = vsel %vm49, %v3520, 0
    %3542 = vmatprep.subr.mxu0 0.0
    %3543 = vmatpush1.msra.mxu0 %v3534
    %3544 = vmatprep.subr.mxu0 0.0
    %3545 = vmatpush1.msra.mxu0 %v3536
    %3546 = vmatprep.subr.mxu0 0.0
    %3547 = vmatpush1.msra.mxu0 0.0
    %3548 = vmatprep.subr.mxu0 0.0
    %3549 = vmatpush1.msra.mxu0 0.0
    %3550 = vmatprep.subr.mxu0 0.0
    %3551 = vmatpush1.msra.mxu0 0.0
    %3552 = vmatprep.subr.mxu0 0.0
    %3553 = vmatpush1.msra.mxu0 0.0
    %3554 = vmatprep.subr.mxu0 0.0
    %3555 = vmatpush1.msra.mxu0 0.0
    %3556 = vmatprep.subr.mxu0 0.0
    %3557 = vmatpush1.msra.mxu0 0.0
    %3558 = vmatprep.subr.mxu0 0.0
    %3559 = vmatpush1.msra.mxu0 0.0
    %3560 = vmatprep.subr.mxu0 0.0
    %3561 = vmatpush1.msra.mxu0 0.0
    %3562 = vmatprep.subr.mxu0 0.0
    %3563 = vmatpush1.msra.mxu0 0.0
    %3564 = vmatprep.subr.mxu0 0.0
    %3565 = vmatpush1.msra.mxu0 0.0
    %3566 = vmatprep.subr.mxu0 0.0
    %3567 = vmatpush1.msra.mxu0 0.0
    %3568 = vmatprep.subr.mxu0 0.0
    %3569 = vmatpush1.msra.mxu0 0.0
    %3570 = vmatprep.subr.mxu0 0.0
    %3571 = vmatpush1.msra.mxu0 0.0
    %3572 = vmatprep.subr.mxu0 0.0
    %3573 = vmatpush1.msra.mxu0 0.0
    %3574 = vmatprep.subr.mxu0 0.0
    %3575 = vmatpush1.msra.mxu0 0.0
    %3576 = vmatprep.subr.mxu0 0.0
    %3577 = vmatpush1.msra.mxu0 0.0
    %3578 = vmatprep.subr.mxu0 0.0
    %3579 = vmatpush1.msra.mxu0 0.0
    %3580 = vmatprep.subr.mxu0 0.0
    %3581 = vmatpush1.msra.mxu0 0.0
    %3582 = vmatprep.subr.mxu0 0.0
    %3583 = vmatpush1.msra.mxu0 0.0
    %3584 = vmatprep.subr.mxu0 0.0
    %3585 = vmatpush1.msra.mxu0 0.0
    %3586 = vmatprep.subr.mxu0 0.0
    %3587 = vmatpush1.msra.mxu0 0.0
    %3588 = vmatprep.subr.mxu0 0.0
    %3589 = vmatpush1.msra.mxu0 0.0
    %3590 = vmatprep.subr.mxu0 0.0
    %3591 = vmatpush1.msra.mxu0 0.0
    %3592 = vmatprep.subr.mxu0 0.0
    %3593 = vmatpush1.msra.mxu0 0.0
    %3594 = vmatprep.subr.mxu0 0.0
    %3595 = vmatpush1.msra.mxu0 0.0
    %3596 = vmatprep.subr.mxu0 0.0
    %3597 = vmatpush1.msra.mxu0 0.0
    %3598 = vmatprep.subr.mxu0 0.0
    %3599 = vmatpush1.msra.mxu0 0.0
    %3600 = vmatprep.subr.mxu0 0.0
    %3601 = vmatpush1.msra.mxu0 0.0
    %3602 = vmatprep.subr.mxu0 0.0
    %3603 = vmatpush1.msra.mxu0 0.0
    %3604 = vmatprep.subr.mxu0 0.0
    %3605 = vmatpush1.msra.mxu0 0.0
    %3606 = vmatprep.mubr.f32.mxu0 0.0
    %3607 = vmatmul.mubr.f32.gmra.mrb[0].mxu0 %v3540
    %v3608 = vpop.f32.mrb[0].mxu0
    %v3609 = vadd.f32 %v3530, %v3608
    %v3610 = vpop.f32.mrb[0].mxu0
    %3611 = vdwg.mxu0
    %v3612 = vlaneseq
    %v3613 = vshrl.u32 %v3612, 7
    %v3614 = vsub.s32 0, %v3613
    %v3615 = vrot.slane %v3525, %v3614
    %3616 = vrot.lane.b32.xlu0 %v3522, 48
    %v3617 = vpop.permute.xlu0 %3616
    %3618 = vrot.lane.b32.xlu0 %v3523, 48
    %v3619 = vpop.permute.xlu0 %3618
    %v3623 = vsel %vm49, %v2497, 0
    %3625 = vmatprep.subr.mxu0 0.0
    %3626 = vmatpush1.msra.mxu0 %v3617
    %3627 = vmatprep.subr.mxu0 0.0
    %3628 = vmatpush1.msra.mxu0 %v3619
    %3629 = vmatprep.subr.mxu0 0.0
    %3630 = vmatpush1.msra.mxu0 0.0
    %3631 = vmatprep.subr.mxu0 0.0
    %3632 = vmatpush1.msra.mxu0 0.0
    %3633 = vmatprep.subr.mxu0 0.0
    %3634 = vmatpush1.msra.mxu0 0.0
    %3635 = vmatprep.subr.mxu0 0.0
    %3636 = vmatpush1.msra.mxu0 0.0
    %3637 = vmatprep.subr.mxu0 0.0
    %3638 = vmatpush1.msra.mxu0 0.0
    %3639 = vmatprep.subr.mxu0 0.0
    %3640 = vmatpush1.msra.mxu0 0.0
    %3641 = vmatprep.subr.mxu0 0.0
    %3642 = vmatpush1.msra.mxu0 0.0
    %3643 = vmatprep.subr.mxu0 0.0
    %3644 = vmatpush1.msra.mxu0 0.0
    %3645 = vmatprep.subr.mxu0 0.0
    %3646 = vmatpush1.msra.mxu0 0.0
    %3647 = vmatprep.subr.mxu0 0.0
    %3648 = vmatpush1.msra.mxu0 0.0
    %3649 = vmatprep.subr.mxu0 0.0
    %3650 = vmatpush1.msra.mxu0 0.0
    %3651 = vmatprep.subr.mxu0 0.0
    %3652 = vmatpush1.msra.mxu0 0.0
    %3653 = vmatprep.subr.mxu0 0.0
    %3654 = vmatpush1.msra.mxu0 0.0
    %3655 = vmatprep.subr.mxu0 0.0
    %3656 = vmatpush1.msra.mxu0 0.0
    %3657 = vmatprep.subr.mxu0 0.0
    %3658 = vmatpush1.msra.mxu0 0.0
    %3659 = vmatprep.subr.mxu0 0.0
    %3660 = vmatpush1.msra.mxu0 0.0
    %3661 = vmatprep.subr.mxu0 0.0
    %3662 = vmatpush1.msra.mxu0 0.0
    %3663 = vmatprep.subr.mxu0 0.0
    %3664 = vmatpush1.msra.mxu0 0.0
    %3665 = vmatprep.subr.mxu0 0.0
    %3666 = vmatpush1.msra.mxu0 0.0
    %3667 = vmatprep.subr.mxu0 0.0
    %3668 = vmatpush1.msra.mxu0 0.0
    %3669 = vmatprep.subr.mxu0 0.0
    %3670 = vmatpush1.msra.mxu0 0.0
    %3671 = vmatprep.subr.mxu0 0.0
    %3672 = vmatpush1.msra.mxu0 0.0
    %3673 = vmatprep.subr.mxu0 0.0
    %3674 = vmatpush1.msra.mxu0 0.0
    %3675 = vmatprep.subr.mxu0 0.0
    %3676 = vmatpush1.msra.mxu0 0.0
    %3677 = vmatprep.subr.mxu0 0.0
    %3678 = vmatpush1.msra.mxu0 0.0
    %3679 = vmatprep.subr.mxu0 0.0
    %3680 = vmatpush1.msra.mxu0 0.0
    %3681 = vmatprep.subr.mxu0 0.0
    %3682 = vmatpush1.msra.mxu0 0.0
    %3683 = vmatprep.subr.mxu0 0.0
    %3684 = vmatpush1.msra.mxu0 0.0
    %3685 = vmatprep.subr.mxu0 0.0
    %3686 = vmatpush1.msra.mxu0 0.0
    %3687 = vmatprep.subr.mxu0 0.0
    %3688 = vmatpush1.msra.mxu0 0.0
    %3689 = vmatprep.mubr.f32.mxu0 0.0
    %3690 = vmatmul.mubr.f32.gmra.mrb[0].mxu0 %v3623
    %v3691 = vpop.f32.mrb[0].mxu0
    %v3692 = vadd.f32 %v3615, %v3691
    %v3693 = vpop.f32.mrb[0].mxu0
    %3694 = vdwg.mxu0
    %v3695 = vlaneseq
    %v3696 = vshrl.u32 %v3695, 7
    %v3697 = vsub.s32 0, %v3696
    %v3698 = vrot.slane %v3526, %v3697
    %3699 = vrot.lane.b32.xlu0 %v3522, 32
    %v3700 = vpop.permute.xlu0 %3699
    %3701 = vrot.lane.b32.xlu0 %v3523, 32
    %v3702 = vpop.permute.xlu0 %3701
    %3705 = vmatprep.subr.mxu0 0.0
    %3706 = vmatpush1.msra.mxu0 %v3700
    %3707 = vmatprep.subr.mxu0 0.0
    %3708 = vmatpush1.msra.mxu0 %v3702
    %3709 = vmatprep.subr.mxu0 0.0
    %3710 = vmatpush1.msra.mxu0 0.0
    %3711 = vmatprep.subr.mxu0 0.0
    %3712 = vmatpush1.msra.mxu0 0.0
    %3713 = vmatprep.subr.mxu0 0.0
    %3714 = vmatpush1.msra.mxu0 0.0
    %3715 = vmatprep.subr.mxu0 0.0
    %3716 = vmatpush1.msra.mxu0 0.0
    %3717 = vmatprep.subr.mxu0 0.0
    %3718 = vmatpush1.msra.mxu0 0.0
    %3719 = vmatprep.subr.mxu0 0.0
    %3720 = vmatpush1.msra.mxu0 0.0
    %3721 = vmatprep.subr.mxu0 0.0
    %3722 = vmatpush1.msra.mxu0 0.0
    %3723 = vmatprep.subr.mxu0 0.0
    %3724 = vmatpush1.msra.mxu0 0.0
    %3725 = vmatprep.subr.mxu0 0.0
    %3726 = vmatpush1.msra.mxu0 0.0
    %3727 = vmatprep.subr.mxu0 0.0
    %3728 = vmatpush1.msra.mxu0 0.0
    %3729 = vmatprep.subr.mxu0 0.0
    %3730 = vmatpush1.msra.mxu0 0.0
    %3731 = vmatprep.subr.mxu0 0.0
    %3732 = vmatpush1.msra.mxu0 0.0
    %3733 = vmatprep.subr.mxu0 0.0
    %3734 = vmatpush1.msra.mxu0 0.0
    %3735 = vmatprep.subr.mxu0 0.0
    %3736 = vmatpush1.msra.mxu0 0.0
    %3737 = vmatprep.subr.mxu0 0.0
    %3738 = vmatpush1.msra.mxu0 0.0
    %3739 = vmatprep.subr.mxu0 0.0
    %3740 = vmatpush1.msra.mxu0 0.0
    %3741 = vmatprep.subr.mxu0 0.0
    %3742 = vmatpush1.msra.mxu0 0.0
    %3743 = vmatprep.subr.mxu0 0.0
    %3744 = vmatpush1.msra.mxu0 0.0
    %3745 = vmatprep.subr.mxu0 0.0
    %3746 = vmatpush1.msra.mxu0 0.0
    %3747 = vmatprep.subr.mxu0 0.0
    %3748 = vmatpush1.msra.mxu0 0.0
    %3749 = vmatprep.subr.mxu0 0.0
    %3750 = vmatpush1.msra.mxu0 0.0
    %3751 = vmatprep.subr.mxu0 0.0
    %3752 = vmatpush1.msra.mxu0 0.0
    %3753 = vmatprep.subr.mxu0 0.0
    %3754 = vmatpush1.msra.mxu0 0.0
    %3755 = vmatprep.subr.mxu0 0.0
    %3756 = vmatpush1.msra.mxu0 0.0
    %3757 = vmatprep.subr.mxu0 0.0
    %3758 = vmatpush1.msra.mxu0 0.0
    %3759 = vmatprep.subr.mxu0 0.0
    %3760 = vmatpush1.msra.mxu0 0.0
    %3761 = vmatprep.subr.mxu0 0.0
    %3762 = vmatpush1.msra.mxu0 0.0
    %3763 = vmatprep.subr.mxu0 0.0
    %3764 = vmatpush1.msra.mxu0 0.0
    %3765 = vmatprep.subr.mxu0 0.0
    %3766 = vmatpush1.msra.mxu0 0.0
    %3767 = vmatprep.subr.mxu0 0.0
    %3768 = vmatpush1.msra.mxu0 0.0
    %3769 = vmatprep.mubr.f32.mxu0 0.0
    %3770 = vmatmul.mubr.f32.gmra.mrb[0].mxu0 %v3623
    %v3771 = vpop.f32.mrb[0].mxu0
    %v3772 = vadd.f32 %v3698, %v3771
    %v3773 = vpop.f32.mrb[0].mxu0
    %3774 = vdwg.mxu0
    %v3776 = vsel %vm285, %v3609, 0
    %v3779 = vsel %vm285, %v3692, 0
    %3781 = vmatprep.subr.mxu0 0.0
    %3782 = vmatpush1.xpose.msra.mxu0 %v3779
    %3783 = vmatprep.subr.mxu0 0.0
    %3784 = vmatpush1.xpose.msra.mxu0 0.0
    %3785 = vmatprep.subr.mxu0 0.0
    %3786 = vmatpush1.xpose.msra.mxu0 0.0
    %3787 = vmatprep.subr.mxu0 0.0
    %3788 = vmatpush1.xpose.msra.mxu0 0.0
    %3789 = vmatprep.subr.mxu0 0.0
    %3790 = vmatpush1.xpose.msra.mxu0 0.0
    %3791 = vmatprep.subr.mxu0 0.0
    %3792 = vmatpush1.xpose.msra.mxu0 0.0
    %3793 = vmatprep.subr.mxu0 0.0
    %3794 = vmatpush1.xpose.msra.mxu0 0.0
    %3795 = vmatprep.subr.mxu0 0.0
    %3796 = vmatpush1.xpose.msra.mxu0 0.0
    %3797 = vmatprep.subr.mxu0 0.0
    %3798 = vmatpush1.xpose.msra.mxu0 0.0
    %3799 = vmatprep.subr.mxu0 0.0
    %3800 = vmatpush1.xpose.msra.mxu0 0.0
    %3801 = vmatprep.subr.mxu0 0.0
    %3802 = vmatpush1.xpose.msra.mxu0 0.0
    %3803 = vmatprep.subr.mxu0 0.0
    %3804 = vmatpush1.xpose.msra.mxu0 0.0
    %3805 = vmatprep.subr.mxu0 0.0
    %3806 = vmatpush1.xpose.msra.mxu0 0.0
    %3807 = vmatprep.subr.mxu0 0.0
    %3808 = vmatpush1.xpose.msra.mxu0 0.0
    %3809 = vmatprep.subr.mxu0 0.0
    %3810 = vmatpush1.xpose.msra.mxu0 0.0
    %3811 = vmatprep.subr.mxu0 0.0
    %3812 = vmatpush1.xpose.msra.mxu0 0.0
    %3813 = vmatprep.subr.mxu0 0.0
    %3814 = vmatpush1.xpose.msra.mxu0 0.0
    %3815 = vmatprep.subr.mxu0 0.0
    %3816 = vmatpush1.xpose.msra.mxu0 0.0
    %3817 = vmatprep.subr.mxu0 0.0
    %3818 = vmatpush1.xpose.msra.mxu0 0.0
    %3819 = vmatprep.subr.mxu0 0.0
    %3820 = vmatpush1.xpose.msra.mxu0 0.0
    %3821 = vmatprep.subr.mxu0 0.0
    %3822 = vmatpush1.xpose.msra.mxu0 0.0
    %3823 = vmatprep.subr.mxu0 0.0
    %3824 = vmatpush1.xpose.msra.mxu0 0.0
    %3825 = vmatprep.subr.mxu0 0.0
    %3826 = vmatpush1.xpose.msra.mxu0 0.0
    %3827 = vmatprep.subr.mxu0 0.0
    %3828 = vmatpush1.xpose.msra.mxu0 0.0
    %3829 = vmatprep.subr.mxu0 0.0
    %3830 = vmatpush1.xpose.msra.mxu0 0.0
    %3831 = vmatprep.subr.mxu0 0.0
    %3832 = vmatpush1.xpose.msra.mxu0 0.0
    %3833 = vmatprep.subr.mxu0 0.0
    %3834 = vmatpush1.xpose.msra.mxu0 0.0
    %3835 = vmatprep.subr.mxu0 0.0
    %3836 = vmatpush1.xpose.msra.mxu0 0.0
    %3837 = vmatprep.subr.mxu0 0.0
    %3838 = vmatpush1.xpose.msra.mxu0 0.0
    %3839 = vmatprep.subr.mxu0 0.0
    %3840 = vmatpush1.xpose.msra.mxu0 0.0
    %3841 = vmatprep.subr.mxu0 0.0
    %3842 = vmatpush1.xpose.msra.mxu0 0.0
    %3843 = vmatprep.subr.mxu0 0.0
    %3844 = vmatpush1.xpose.msra.mxu0 0.0
    %3845 = vmatprep.mubr.f32.mxu0 0.0
    %3846 = vmatmul.mubr.f32.gmra.mrb[0].mxu0 %v3776
    %v3847 = vpop.f32.mrb[0].mxu0
    %v3848 = vadd.f32 0.0, %v3847
    %v3849 = vpop.f32.mrb[0].mxu0
    %3850 = vdwg.mxu0
    %v3851 = vmul.f32 %v3848, 0.125
    %v3852 = vsel %vm37, -1e+09, %v3851
    %v3853 = vsel %vm364, %v3852, -inf
    %3854 = vmax.xlane.f32.xlu0 %v3853
    %v3855 = vpop.xlane.xlu0 %3854
    %v3856 = vsub.f32 %v3852, %v3855
    %v3857 = vmul.f32 %v3856, 1.442695
    %v3858 = vpow.pop %v3857
    %v3859 = vsel %vm364, %v3858, 0.0
    %3860 = vadd.xlane.f32.xlu0 %v3859
    %v3861 = vpop.xlane.xlu0 %3860
    %v3862 = vrcp.pop %v3861
    %v3863 = vmul.f32 %v3858, %v3862
    %s3864 = scalar_lea.vmem %s9, 64
    %3865 = vst.msk [vmem:[%s3864] sm:$0x1f] %vm364, %v3863
    %v3867 = vsel %vm377, %v3852, 0
    %v3870 = vsel %vm381, %v3772, 0
    %3872 = vmatprep.subr.mxu0 0.0
    %3873 = vmatpush1.msra.mxu0 %v3870
    %3874 = vmatprep.subr.mxu0 0.0
    %3875 = vmatpush1.msra.mxu0 0.0
    %3876 = vmatprep.subr.mxu0 0.0
    %3877 = vmatpush1.msra.mxu0 0.0
    %3878 = vmatprep.subr.mxu0 0.0
    %3879 = vmatpush1.msra.mxu0 0.0
    %3880 = vmatprep.subr.mxu0 0.0
    %3881 = vmatpush1.msra.mxu0 0.0
    %3882 = vmatprep.subr.mxu0 0.0
    %3883 = vmatpush1.msra.mxu0 0.0
    %3884 = vmatprep.subr.mxu0 0.0
    %3885 = vmatpush1.msra.mxu0 0.0
    %3886 = vmatprep.subr.mxu0 0.0
    %3887 = vmatpush1.msra.mxu0 0.0
    %3888 = vmatprep.subr.mxu0 0.0
    %3889 = vmatpush1.msra.mxu0 0.0
    %3890 = vmatprep.subr.mxu0 0.0
    %3891 = vmatpush1.msra.mxu0 0.0
    %3892 = vmatprep.subr.mxu0 0.0
    %3893 = vmatpush1.msra.mxu0 0.0
    %3894 = vmatprep.subr.mxu0 0.0
    %3895 = vmatpush1.msra.mxu0 0.0
    %3896 = vmatprep.subr.mxu0 0.0
    %3897 = vmatpush1.msra.mxu0 0.0
    %3898 = vmatprep.subr.mxu0 0.0
    %3899 = vmatpush1.msra.mxu0 0.0
    %3900 = vmatprep.subr.mxu0 0.0
    %3901 = vmatpush1.msra.mxu0 0.0
    %3902 = vmatprep.subr.mxu0 0.0
    %3903 = vmatpush1.msra.mxu0 0.0
    %3904 = vmatprep.subr.mxu0 0.0
    %3905 = vmatpush1.msra.mxu0 0.0
    %3906 = vmatprep.subr.mxu0 0.0
    %3907 = vmatpush1.msra.mxu0 0.0
    %3908 = vmatprep.subr.mxu0 0.0
    %3909 = vmatpush1.msra.mxu0 0.0
    %3910 = vmatprep.subr.mxu0 0.0
    %3911 = vmatpush1.msra.mxu0 0.0
    %3912 = vmatprep.subr.mxu0 0.0
    %3913 = vmatpush1.msra.mxu0 0.0
    %3914 = vmatprep.subr.mxu0 0.0
    %3915 = vmatpush1.msra.mxu0 0.0
    %3916 = vmatprep.subr.mxu0 0.0
    %3917 = vmatpush1.msra.mxu0 0.0
    %3918 = vmatprep.subr.mxu0 0.0
    %3919 = vmatpush1.msra.mxu0 0.0
    %3920 = vmatprep.subr.mxu0 0.0
    %3921 = vmatpush1.msra.mxu0 0.0
    %3922 = vmatprep.subr.mxu0 0.0
    %3923 = vmatpush1.msra.mxu0 0.0
    %3924 = vmatprep.subr.mxu0 0.0
    %3925 = vmatpush1.msra.mxu0 0.0
    %3926 = vmatprep.subr.mxu0 0.0
    %3927 = vmatpush1.msra.mxu0 0.0
    %3928 = vmatprep.subr.mxu0 0.0
    %3929 = vmatpush1.msra.mxu0 0.0
    %3930 = vmatprep.subr.mxu0 0.0
    %3931 = vmatpush1.msra.mxu0 0.0
    %3932 = vmatprep.subr.mxu0 0.0
    %3933 = vmatpush1.msra.mxu0 0.0
    %3934 = vmatprep.subr.mxu0 0.0
    %3935 = vmatpush1.msra.mxu0 0.0
    %3936 = vmatprep.mubr.f32.mxu0 0.0
    %3937 = vmatmul.mubr.f32.gmra.mrb[0].mxu0 %v3867
    %v3938 = vpop.f32.mrb[0].mxu0
    %v3939 = vadd.f32 0.0, %v3938
    %v3940 = vpop.f32.mrb[0].mxu0
    %3941 = vdwg.mxu0
    %3942 = vrot.lane.b32.xlu0 %v3522, 16
    %v3943 = vpop.permute.xlu0 %3942
    %v3946 = vsel %vm285, %v3939, 0
    %3948 = vmatprep.subr.mxu0 0.0
    %3949 = vmatpush1.msra.mxu0 %v3943
    %3950 = vmatprep.subr.mxu0 0.0
    %3951 = vmatpush1.msra.mxu0 0.0
    %3952 = vmatprep.subr.mxu0 0.0
    %3953 = vmatpush1.msra.mxu0 0.0
    %3954 = vmatprep.subr.mxu0 0.0
    %3955 = vmatpush1.msra.mxu0 0.0
    %3956 = vmatprep.subr.mxu0 0.0
    %3957 = vmatpush1.msra.mxu0 0.0
    %3958 = vmatprep.subr.mxu0 0.0
    %3959 = vmatpush1.msra.mxu0 0.0
    %3960 = vmatprep.subr.mxu0 0.0
    %3961 = vmatpush1.msra.mxu0 0.0
    %3962 = vmatprep.subr.mxu0 0.0
    %3963 = vmatpush1.msra.mxu0 0.0
    %3964 = vmatprep.subr.mxu0 0.0
    %3965 = vmatpush1.msra.mxu0 0.0
    %3966 = vmatprep.subr.mxu0 0.0
    %3967 = vmatpush1.msra.mxu0 0.0
    %3968 = vmatprep.subr.mxu0 0.0
    %3969 = vmatpush1.msra.mxu0 0.0
    %3970 = vmatprep.subr.mxu0 0.0
    %3971 = vmatpush1.msra.mxu0 0.0
    %3972 = vmatprep.subr.mxu0 0.0
    %3973 = vmatpush1.msra.mxu0 0.0
    %3974 = vmatprep.subr.mxu0 0.0
    %3975 = vmatpush1.msra.mxu0 0.0
    %3976 = vmatprep.subr.mxu0 0.0
    %3977 = vmatpush1.msra.mxu0 0.0
    %3978 = vmatprep.subr.mxu0 0.0
    %3979 = vmatpush1.msra.mxu0 0.0
    %3980 = vmatprep.subr.mxu0 0.0
    %3981 = vmatpush1.msra.mxu0 0.0
    %3982 = vmatprep.subr.mxu0 0.0
    %3983 = vmatpush1.msra.mxu0 0.0
    %3984 = vmatprep.subr.mxu0 0.0
    %3985 = vmatpush1.msra.mxu0 0.0
    %3986 = vmatprep.subr.mxu0 0.0
    %3987 = vmatpush1.msra.mxu0 0.0
    %3988 = vmatprep.subr.mxu0 0.0
    %3989 = vmatpush1.msra.mxu0 0.0
    %3990 = vmatprep.subr.mxu0 0.0
    %3991 = vmatpush1.msra.mxu0 0.0
    %3992 = vmatprep.subr.mxu0 0.0
    %3993 = vmatpush1.msra.mxu0 0.0
    %3994 = vmatprep.subr.mxu0 0.0
    %3995 = vmatpush1.msra.mxu0 0.0
    %3996 = vmatprep.subr.mxu0 0.0
    %3997 = vmatpush1.msra.mxu0 0.0
    %3998 = vmatprep.subr.mxu0 0.0
    %3999 = vmatpush1.msra.mxu0 0.0
    %4000 = vmatprep.subr.mxu0 0.0
    %4001 = vmatpush1.msra.mxu0 0.0
    %4002 = vmatprep.subr.mxu0 0.0
    %4003 = vmatpush1.msra.mxu0 0.0
    %4004 = vmatprep.subr.mxu0 0.0
    %4005 = vmatpush1.msra.mxu0 0.0
    %4006 = vmatprep.subr.mxu0 0.0
    %4007 = vmatpush1.msra.mxu0 0.0
    %4008 = vmatprep.subr.mxu0 0.0
    %4009 = vmatpush1.msra.mxu0 0.0
    %4010 = vmatprep.subr.mxu0 0.0
    %4011 = vmatpush1.msra.mxu0 0.0
    %4012 = vmatprep.mubr.f32.mxu0 0.0
    %4013 = vmatmul.mubr.f32.gmra.mrb[0].mxu0 %v3946
    %v4014 = vpop.f32.mrb[0].mxu0
    %v4015 = vadd.f32 0.0, %v4014
    %v4016 = vpop.f32.mrb[0].mxu0
    %4017 = vdwg.mxu0
    %v4018 = vlaneseq
    %v4019 = vshrl.u32 %v4018, 7
    %v4020 = vsub.s32 0, %v4019
    %v4021 = vrot.slane %v3521, %v4020
    %v4022 = vadd.f32 %v4021, %v4015
    %v4023 = vld [vmem:[%s5 + $0x8] sm:$0xff]
    %v4024 = vld [vmem:[%s5 + $0x30] sm:$0xff]
    %v4025 = vld [vmem:[%s7 + $0x12] sm:$0x1]
    %v4026 = vld [vmem:[%s7 + $0x13] sm:$0x1]
    %v4027 = vld [vmem:[%s7 + $0x14] sm:$0x1]
    %v4028 = vlaneseq
    %v4029 = vshrl.u32 %v4028, 7
    %v4030 = vsub.s32 0, %v4029
    %v4031 = vrot.slane %v4025, %v4030
    %4034 = vrot.lane.b32.xlu0 %v4023, 56
    %v4035 = vpop.permute.xlu0 %4034
    %4036 = vrot.lane.b32.xlu0 %v4024, 56
    %v4037 = vpop.permute.xlu0 %4036
    %4041 = vrot.lane.b32.xlu0 %v4031, 120
    %v4042 = vpop.permute.xlu0 %4041
    %4044 = vmatprep.subr.mxu0 0.0
    %4045 = vmatpush1.msra.mxu0 %v4035
    %4046 = vmatprep.subr.mxu0 0.0
    %4047 = vmatpush1.msra.mxu0 %v4037
    %4048 = vmatprep.subr.mxu0 0.0
    %4049 = vmatpush1.msra.mxu0 0.0
    %4050 = vmatprep.subr.mxu0 0.0
    %4051 = vmatpush1.msra.mxu0 0.0
    %4052 = vmatprep.subr.mxu0 0.0
    %4053 = vmatpush1.msra.mxu0 0.0
    %4054 = vmatprep.subr.mxu0 0.0
    %4055 = vmatpush1.msra.mxu0 0.0
    %4056 = vmatprep.subr.mxu0 0.0
    %4057 = vmatpush1.msra.mxu0 0.0
    %4058 = vmatprep.subr.mxu0 0.0
    %4059 = vmatpush1.msra.mxu0 0.0
    %4060 = vmatprep.subr.mxu0 0.0
    %4061 = vmatpush1.msra.mxu0 0.0
    %4062 = vmatprep.subr.mxu0 0.0
    %4063 = vmatpush1.msra.mxu0 0.0
    %4064 = vmatprep.subr.mxu0 0.0
    %4065 = vmatpush1.msra.mxu0 0.0
    %4066 = vmatprep.subr.mxu0 0.0
    %4067 = vmatpush1.msra.mxu0 0.0
    %4068 = vmatprep.subr.mxu0 0.0
    %4069 = vmatpush1.msra.mxu0 0.0
    %4070 = vmatprep.subr.mxu0 0.0
    %4071 = vmatpush1.msra.mxu0 0.0
    %4072 = vmatprep.subr.mxu0 0.0
    %4073 = vmatpush1.msra.mxu0 0.0
    %4074 = vmatprep.subr.mxu0 0.0
    %4075 = vmatpush1.msra.mxu0 0.0
    %4076 = vmatprep.subr.mxu0 0.0
    %4077 = vmatpush1.msra.mxu0 0.0
    %4078 = vmatprep.subr.mxu0 0.0
    %4079 = vmatpush1.msra.mxu0 0.0
    %4080 = vmatprep.subr.mxu0 0.0
    %4081 = vmatpush1.msra.mxu0 0.0
    %4082 = vmatprep.subr.mxu0 0.0
    %4083 = vmatpush1.msra.mxu0 0.0
    %4084 = vmatprep.subr.mxu0 0.0
    %4085 = vmatpush1.msra.mxu0 0.0
    %4086 = vmatprep.subr.mxu0 0.0
    %4087 = vmatpush1.msra.mxu0 0.0
    %4088 = vmatprep.subr.mxu0 0.0
    %4089 = vmatpush1.msra.mxu0 0.0
    %4090 = vmatprep.subr.mxu0 0.0
    %4091 = vmatpush1.msra.mxu0 0.0
    %4092 = vmatprep.subr.mxu0 0.0
    %4093 = vmatpush1.msra.mxu0 0.0
    %4094 = vmatprep.subr.mxu0 0.0
    %4095 = vmatpush1.msra.mxu0 0.0
    %4096 = vmatprep.subr.mxu0 0.0
    %4097 = vmatpush1.msra.mxu0 0.0
    %4098 = vmatprep.subr.mxu0 0.0
    %4099 = vmatpush1.msra.mxu0 0.0
    %4100 = vmatprep.subr.mxu0 0.0
    %4101 = vmatpush1.msra.mxu0 0.0
    %4102 = vmatprep.subr.mxu0 0.0
    %4103 = vmatpush1.msra.mxu0 0.0
    %4104 = vmatprep.subr.mxu0 0.0
    %4105 = vmatpush1.msra.mxu0 0.0
    %4106 = vmatprep.subr.mxu0 0.0
    %4107 = vmatpush1.msra.mxu0 0.0
    %4108 = vmatprep.mubr.f32.mxu0 0.0
    %4109 = vmatmul.mubr.f32.gmra.mrb[0].mxu0 %v3540
    %v4110 = vpop.f32.mrb[0].mxu0
    %v4111 = vadd.f32 %v4042, %v4110
    %v4112 = vpop.f32.mrb[0].mxu0
    %4113 = vdwg.mxu0
    %v4114 = vlaneseq
    %v4115 = vshrl.u32 %v4114, 7
    %v4116 = vsub.s32 0, %v4115
    %v4117 = vrot.slane %v4026, %v4116
    %4118 = vrot.lane.b32.xlu0 %v4023, 40
    %v4119 = vpop.permute.xlu0 %4118
    %4120 = vrot.lane.b32.xlu0 %v4024, 40
    %v4121 = vpop.permute.xlu0 %4120
    %4125 = vrot.lane.b32.xlu0 %v4117, 120
    %v4126 = vpop.permute.xlu0 %4125
    %4128 = vmatprep.subr.mxu0 0.0
    %4129 = vmatpush1.msra.mxu0 %v4119
    %4130 = vmatprep.subr.mxu0 0.0
    %4131 = vmatpush1.msra.mxu0 %v4121
    %4132 = vmatprep.subr.mxu0 0.0
    %4133 = vmatpush1.msra.mxu0 0.0
    %4134 = vmatprep.subr.mxu0 0.0
    %4135 = vmatpush1.msra.mxu0 0.0
    %4136 = vmatprep.subr.mxu0 0.0
    %4137 = vmatpush1.msra.mxu0 0.0
    %4138 = vmatprep.subr.mxu0 0.0
    %4139 = vmatpush1.msra.mxu0 0.0
    %4140 = vmatprep.subr.mxu0 0.0
    %4141 = vmatpush1.msra.mxu0 0.0
    %4142 = vmatprep.subr.mxu0 0.0
    %4143 = vmatpush1.msra.mxu0 0.0
    %4144 = vmatprep.subr.mxu0 0.0
    %4145 = vmatpush1.msra.mxu0 0.0
    %4146 = vmatprep.subr.mxu0 0.0
    %4147 = vmatpush1.msra.mxu0 0.0
    %4148 = vmatprep.subr.mxu0 0.0
    %4149 = vmatpush1.msra.mxu0 0.0
    %4150 = vmatprep.subr.mxu0 0.0
    %4151 = vmatpush1.msra.mxu0 0.0
    %4152 = vmatprep.subr.mxu0 0.0
    %4153 = vmatpush1.msra.mxu0 0.0
    %4154 = vmatprep.subr.mxu0 0.0
    %4155 = vmatpush1.msra.mxu0 0.0
    %4156 = vmatprep.subr.mxu0 0.0
    %4157 = vmatpush1.msra.mxu0 0.0
    %4158 = vmatprep.subr.mxu0 0.0
    %4159 = vmatpush1.msra.mxu0 0.0
    %4160 = vmatprep.subr.mxu0 0.0
    %4161 = vmatpush1.msra.mxu0 0.0
    %4162 = vmatprep.subr.mxu0 0.0
    %4163 = vmatpush1.msra.mxu0 0.0
    %4164 = vmatprep.subr.mxu0 0.0
    %4165 = vmatpush1.msra.mxu0 0.0
    %4166 = vmatprep.subr.mxu0 0.0
    %4167 = vmatpush1.msra.mxu0 0.0
    %4168 = vmatprep.subr.mxu0 0.0
    %4169 = vmatpush1.msra.mxu0 0.0
    %4170 = vmatprep.subr.mxu0 0.0
    %4171 = vmatpush1.msra.mxu0 0.0
    %4172 = vmatprep.subr.mxu0 0.0
    %4173 = vmatpush1.msra.mxu0 0.0
    %4174 = vmatprep.subr.mxu0 0.0
    %4175 = vmatpush1.msra.mxu0 0.0
    %4176 = vmatprep.subr.mxu0 0.0
    %4177 = vmatpush1.msra.mxu0 0.0
    %4178 = vmatprep.subr.mxu0 0.0
    %4179 = vmatpush1.msra.mxu0 0.0
    %4180 = vmatprep.subr.mxu0 0.0
    %4181 = vmatpush1.msra.mxu0 0.0
    %4182 = vmatprep.subr.mxu0 0.0
    %4183 = vmatpush1.msra.mxu0 0.0
    %4184 = vmatprep.subr.mxu0 0.0
    %4185 = vmatpush1.msra.mxu0 0.0
    %4186 = vmatprep.subr.mxu0 0.0
    %4187 = vmatpush1.msra.mxu0 0.0
    %4188 = vmatprep.subr.mxu0 0.0
    %4189 = vmatpush1.msra.mxu0 0.0
    %4190 = vmatprep.subr.mxu0 0.0
    %4191 = vmatpush1.msra.mxu0 0.0
    %4192 = vmatprep.mubr.f32.mxu0 0.0
    %4193 = vmatmul.mubr.f32.gmra.mrb[0].mxu0 %v3623
    %v4194 = vpop.f32.mrb[0].mxu0
    %v4195 = vadd.f32 %v4126, %v4194
    %v4196 = vpop.f32.mrb[0].mxu0
    %4197 = vdwg.mxu0
    %v4198 = vlaneseq
    %v4199 = vshrl.u32 %v4198, 7
    %v4200 = vsub.s32 0, %v4199
    %v4201 = vrot.slane %v4027, %v4200
    %4202 = vrot.lane.b32.xlu0 %v4023, 24
    %v4203 = vpop.permute.xlu0 %4202
    %4204 = vrot.lane.b32.xlu0 %v4024, 24
    %v4205 = vpop.permute.xlu0 %4204
    %4209 = vrot.lane.b32.xlu0 %v4201, 120
    %v4210 = vpop.permute.xlu0 %4209
    %4212 = vmatprep.subr.mxu0 0.0
    %4213 = vmatpush1.msra.mxu0 %v4203
    %4214 = vmatprep.subr.mxu0 0.0
    %4215 = vmatpush1.msra.mxu0 %v4205
    %4216 = vmatprep.subr.mxu0 0.0
    %4217 = vmatpush1.msra.mxu0 0.0
    %4218 = vmatprep.subr.mxu0 0.0
    %4219 = vmatpush1.msra.mxu0 0.0
    %4220 = vmatprep.subr.mxu0 0.0
    %4221 = vmatpush1.msra.mxu0 0.0
    %4222 = vmatprep.subr.mxu0 0.0
    %4223 = vmatpush1.msra.mxu0 0.0
    %4224 = vmatprep.subr.mxu0 0.0
    %4225 = vmatpush1.msra.mxu0 0.0
    %4226 = vmatprep.subr.mxu0 0.0
    %4227 = vmatpush1.msra.mxu0 0.0
    %4228 = vmatprep.subr.mxu0 0.0
    %4229 = vmatpush1.msra.mxu0 0.0
    %4230 = vmatprep.subr.mxu0 0.0
    %4231 = vmatpush1.msra.mxu0 0.0
    %4232 = vmatprep.subr.mxu0 0.0
    %4233 = vmatpush1.msra.mxu0 0.0
    %4234 = vmatprep.subr.mxu0 0.0
    %4235 = vmatpush1.msra.mxu0 0.0
    %4236 = vmatprep.subr.mxu0 0.0
    %4237 = vmatpush1.msra.mxu0 0.0
    %4238 = vmatprep.subr.mxu0 0.0
    %4239 = vmatpush1.msra.mxu0 0.0
    %4240 = vmatprep.subr.mxu0 0.0
    %4241 = vmatpush1.msra.mxu0 0.0
    %4242 = vmatprep.subr.mxu0 0.0
    %4243 = vmatpush1.msra.mxu0 0.0
    %4244 = vmatprep.subr.mxu0 0.0
    %4245 = vmatpush1.msra.mxu0 0.0
    %4246 = vmatprep.subr.mxu0 0.0
    %4247 = vmatpush1.msra.mxu0 0.0
    %4248 = vmatprep.subr.mxu0 0.0
    %4249 = vmatpush1.msra.mxu0 0.0
    %4250 = vmatprep.subr.mxu0 0.0
    %4251 = vmatpush1.msra.mxu0 0.0
    %4252 = vmatprep.subr.mxu0 0.0
    %4253 = vmatpush1.msra.mxu0 0.0
    %4254 = vmatprep.subr.mxu0 0.0
    %4255 = vmatpush1.msra.mxu0 0.0
    %4256 = vmatprep.subr.mxu0 0.0
    %4257 = vmatpush1.msra.mxu0 0.0
    %4258 = vmatprep.subr.mxu0 0.0
    %4259 = vmatpush1.msra.mxu0 0.0
    %4260 = vmatprep.subr.mxu0 0.0
    %4261 = vmatpush1.msra.mxu0 0.0
    %4262 = vmatprep.subr.mxu0 0.0
    %4263 = vmatpush1.msra.mxu0 0.0
    %4264 = vmatprep.subr.mxu0 0.0
    %4265 = vmatpush1.msra.mxu0 0.0
    %4266 = vmatprep.subr.mxu0 0.0
    %4267 = vmatpush1.msra.mxu0 0.0
    %4268 = vmatprep.subr.mxu0 0.0
    %4269 = vmatpush1.msra.mxu0 0.0
    %4270 = vmatprep.subr.mxu0 0.0
    %4271 = vmatpush1.msra.mxu0 0.0
    %4272 = vmatprep.subr.mxu0 0.0
    %4273 = vmatpush1.msra.mxu0 0.0
    %4274 = vmatprep.subr.mxu0 0.0
    %4275 = vmatpush1.msra.mxu0 0.0
    %4276 = vmatprep.mubr.f32.mxu0 0.0
    %4277 = vmatmul.mubr.f32.gmra.mrb[0].mxu0 %v3623
    %v4278 = vpop.f32.mrb[0].mxu0
    %v4279 = vadd.f32 %v4210, %v4278
    %v4280 = vpop.f32.mrb[0].mxu0
    %4281 = vdwg.mxu0
    %v4283 = vsel %vm285, %v4111, 0
    %v4286 = vsel %vm285, %v4195, 0
    %4288 = vmatprep.subr.mxu0 0.0
    %4289 = vmatpush1.xpose.msra.mxu0 %v4286
    %4290 = vmatprep.subr.mxu0 0.0
    %4291 = vmatpush1.xpose.msra.mxu0 0.0
    %4292 = vmatprep.subr.mxu0 0.0
    %4293 = vmatpush1.xpose.msra.mxu0 0.0
    %4294 = vmatprep.subr.mxu0 0.0
    %4295 = vmatpush1.xpose.msra.mxu0 0.0
    %4296 = vmatprep.subr.mxu0 0.0
    %4297 = vmatpush1.xpose.msra.mxu0 0.0
    %4298 = vmatprep.subr.mxu0 0.0
    %4299 = vmatpush1.xpose.msra.mxu0 0.0
    %4300 = vmatprep.subr.mxu0 0.0
    %4301 = vmatpush1.xpose.msra.mxu0 0.0
    %4302 = vmatprep.subr.mxu0 0.0
    %4303 = vmatpush1.xpose.msra.mxu0 0.0
    %4304 = vmatprep.subr.mxu0 0.0
    %4305 = vmatpush1.xpose.msra.mxu0 0.0
    %4306 = vmatprep.subr.mxu0 0.0
    %4307 = vmatpush1.xpose.msra.mxu0 0.0
    %4308 = vmatprep.subr.mxu0 0.0
    %4309 = vmatpush1.xpose.msra.mxu0 0.0
    %4310 = vmatprep.subr.mxu0 0.0
    %4311 = vmatpush1.xpose.msra.mxu0 0.0
    %4312 = vmatprep.subr.mxu0 0.0
    %4313 = vmatpush1.xpose.msra.mxu0 0.0
    %4314 = vmatprep.subr.mxu0 0.0
    %4315 = vmatpush1.xpose.msra.mxu0 0.0
    %4316 = vmatprep.subr.mxu0 0.0
    %4317 = vmatpush1.xpose.msra.mxu0 0.0
    %4318 = vmatprep.subr.mxu0 0.0
    %4319 = vmatpush1.xpose.msra.mxu0 0.0
    %4320 = vmatprep.subr.mxu0 0.0
    %4321 = vmatpush1.xpose.msra.mxu0 0.0
    %4322 = vmatprep.subr.mxu0 0.0
    %4323 = vmatpush1.xpose.msra.mxu0 0.0
    %4324 = vmatprep.subr.mxu0 0.0
    %4325 = vmatpush1.xpose.msra.mxu0 0.0
    %4326 = vmatprep.subr.mxu0 0.0
    %4327 = vmatpush1.xpose.msra.mxu0 0.0
    %4328 = vmatprep.subr.mxu0 0.0
    %4329 = vmatpush1.xpose.msra.mxu0 0.0
    %4330 = vmatprep.subr.mxu0 0.0
    %4331 = vmatpush1.xpose.msra.mxu0 0.0
    %4332 = vmatprep.subr.mxu0 0.0
    %4333 = vmatpush1.xpose.msra.mxu0 0.0
    %4334 = vmatprep.subr.mxu0 0.0
    %4335 = vmatpush1.xpose.msra.mxu0 0.0
    %4336 = vmatprep.subr.mxu0 0.0
    %4337 = vmatpush1.xpose.msra.mxu0 0.0
    %4338 = vmatprep.subr.mxu0 0.0
    %4339 = vmatpush1.xpose.msra.mxu0 0.0
    %4340 = vmatprep.subr.mxu0 0.0
    %4341 = vmatpush1.xpose.msra.mxu0 0.0
    %4342 = vmatprep.subr.mxu0 0.0
    %4343 = vmatpush1.xpose.msra.mxu0 0.0
    %4344 = vmatprep.subr.mxu0 0.0
    %4345 = vmatpush1.xpose.msra.mxu0 0.0
    %4346 = vmatprep.subr.mxu0 0.0
    %4347 = vmatpush1.xpose.msra.mxu0 0.0
    %4348 = vmatprep.subr.mxu0 0.0
    %4349 = vmatpush1.xpose.msra.mxu0 0.0
    %4350 = vmatprep.subr.mxu0 0.0
    %4351 = vmatpush1.xpose.msra.mxu0 0.0
    %4352 = vmatprep.mubr.f32.mxu0 0.0
    %4353 = vmatmul.mubr.f32.gmra.mrb[0].mxu0 %v4283
    %v4354 = vpop.f32.mrb[0].mxu0
    %v4355 = vadd.f32 0.0, %v4354
    %v4356 = vpop.f32.mrb[0].mxu0
    %4357 = vdwg.mxu0
    %v4358 = vmul.f32 %v4355, 0.125
    %v4359 = vsel %vm37, -1e+09, %v4358
    %v4360 = vsel %vm364, %v4359, -inf
    %4361 = vmax.xlane.f32.xlu0 %v4360
    %v4362 = vpop.xlane.xlu0 %4361
    %v4363 = vsub.f32 %v4359, %v4362
    %v4364 = vmul.f32 %v4363, 1.442695
    %v4365 = vpow.pop %v4364
    %v4366 = vsel %vm364, %v4365, 0.0
    %4367 = vadd.xlane.f32.xlu0 %v4366
    %v4368 = vpop.xlane.xlu0 %4367
    %v4369 = vrcp.pop %v4368
    %v4370 = vmul.f32 %v4365, %v4369
    %s4371 = scalar_lea.vmem %s9, 72
    %4372 = vst.msk [vmem:[%s4371] sm:$0x1f] %vm364, %v4370
    %v4374 = vsel %vm377, %v4359, 0
    %v4377 = vsel %vm381, %v4279, 0
    %4379 = vmatprep.subr.mxu0 0.0
    %4380 = vmatpush1.msra.mxu0 %v4377
    %4381 = vmatprep.subr.mxu0 0.0
    %4382 = vmatpush1.msra.mxu0 0.0
    %4383 = vmatprep.subr.mxu0 0.0
    %4384 = vmatpush1.msra.mxu0 0.0
    %4385 = vmatprep.subr.mxu0 0.0
    %4386 = vmatpush1.msra.mxu0 0.0
    %4387 = vmatprep.subr.mxu0 0.0
    %4388 = vmatpush1.msra.mxu0 0.0
    %4389 = vmatprep.subr.mxu0 0.0
    %4390 = vmatpush1.msra.mxu0 0.0
    %4391 = vmatprep.subr.mxu0 0.0
    %4392 = vmatpush1.msra.mxu0 0.0
    %4393 = vmatprep.subr.mxu0 0.0
    %4394 = vmatpush1.msra.mxu0 0.0
    %4395 = vmatprep.subr.mxu0 0.0
    %4396 = vmatpush1.msra.mxu0 0.0
    %4397 = vmatprep.subr.mxu0 0.0
    %4398 = vmatpush1.msra.mxu0 0.0
    %4399 = vmatprep.subr.mxu0 0.0
    %4400 = vmatpush1.msra.mxu0 0.0
    %4401 = vmatprep.subr.mxu0 0.0
    %4402 = vmatpush1.msra.mxu0 0.0
    %4403 = vmatprep.subr.mxu0 0.0
    %4404 = vmatpush1.msra.mxu0 0.0
    %4405 = vmatprep.subr.mxu0 0.0
    %4406 = vmatpush1.msra.mxu0 0.0
    %4407 = vmatprep.subr.mxu0 0.0
    %4408 = vmatpush1.msra.mxu0 0.0
    %4409 = vmatprep.subr.mxu0 0.0
    %4410 = vmatpush1.msra.mxu0 0.0
    %4411 = vmatprep.subr.mxu0 0.0
    %4412 = vmatpush1.msra.mxu0 0.0
    %4413 = vmatprep.subr.mxu0 0.0
    %4414 = vmatpush1.msra.mxu0 0.0
    %4415 = vmatprep.subr.mxu0 0.0
    %4416 = vmatpush1.msra.mxu0 0.0
    %4417 = vmatprep.subr.mxu0 0.0
    %4418 = vmatpush1.msra.mxu0 0.0
    %4419 = vmatprep.subr.mxu0 0.0
    %4420 = vmatpush1.msra.mxu0 0.0
    %4421 = vmatprep.subr.mxu0 0.0
    %4422 = vmatpush1.msra.mxu0 0.0
    %4423 = vmatprep.subr.mxu0 0.0
    %4424 = vmatpush1.msra.mxu0 0.0
    %4425 = vmatprep.subr.mxu0 0.0
    %4426 = vmatpush1.msra.mxu0 0.0
    %4427 = vmatprep.subr.mxu0 0.0
    %4428 = vmatpush1.msra.mxu0 0.0
    %4429 = vmatprep.subr.mxu0 0.0
    %4430 = vmatpush1.msra.mxu0 0.0
    %4431 = vmatprep.subr.mxu0 0.0
    %4432 = vmatpush1.msra.mxu0 0.0
    %4433 = vmatprep.subr.mxu0 0.0
    %4434 = vmatpush1.msra.mxu0 0.0
    %4435 = vmatprep.subr.mxu0 0.0
    %4436 = vmatpush1.msra.mxu0 0.0
    %4437 = vmatprep.subr.mxu0 0.0
    %4438 = vmatpush1.msra.mxu0 0.0
    %4439 = vmatprep.subr.mxu0 0.0
    %4440 = vmatpush1.msra.mxu0 0.0
    %4441 = vmatprep.subr.mxu0 0.0
    %4442 = vmatpush1.msra.mxu0 0.0
    %4443 = vmatprep.mubr.f32.mxu0 0.0
    %4444 = vmatmul.mubr.f32.gmra.mrb[0].mxu0 %v4374
    %v4445 = vpop.f32.mrb[0].mxu0
    %v4446 = vadd.f32 0.0, %v4445
    %v4447 = vpop.f32.mrb[0].mxu0
    %4448 = vdwg.mxu0
    %4449 = vrot.lane.b32.xlu0 %v4024, 16
    %v4450 = vpop.permute.xlu0 %4449
    %v4453 = vsel %vm285, %v4446, 0
    %4455 = vmatprep.subr.mxu0 0.0
    %4456 = vmatpush1.msra.mxu0 %v4450
    %4457 = vmatprep.subr.mxu0 0.0
    %4458 = vmatpush1.msra.mxu0 0.0
    %4459 = vmatprep.subr.mxu0 0.0
    %4460 = vmatpush1.msra.mxu0 0.0
    %4461 = vmatprep.subr.mxu0 0.0
    %4462 = vmatpush1.msra.mxu0 0.0
    %4463 = vmatprep.subr.mxu0 0.0
    %4464 = vmatpush1.msra.mxu0 0.0
    %4465 = vmatprep.subr.mxu0 0.0
    %4466 = vmatpush1.msra.mxu0 0.0
    %4467 = vmatprep.subr.mxu0 0.0
    %4468 = vmatpush1.msra.mxu0 0.0
    %4469 = vmatprep.subr.mxu0 0.0
    %4470 = vmatpush1.msra.mxu0 0.0
    %4471 = vmatprep.subr.mxu0 0.0
    %4472 = vmatpush1.msra.mxu0 0.0
    %4473 = vmatprep.subr.mxu0 0.0
    %4474 = vmatpush1.msra.mxu0 0.0
    %4475 = vmatprep.subr.mxu0 0.0
    %4476 = vmatpush1.msra.mxu0 0.0
    %4477 = vmatprep.subr.mxu0 0.0
    %4478 = vmatpush1.msra.mxu0 0.0
    %4479 = vmatprep.subr.mxu0 0.0
    %4480 = vmatpush1.msra.mxu0 0.0
    %4481 = vmatprep.subr.mxu0 0.0
    %4482 = vmatpush1.msra.mxu0 0.0
    %4483 = vmatprep.subr.mxu0 0.0
    %4484 = vmatpush1.msra.mxu0 0.0
    %4485 = vmatprep.subr.mxu0 0.0
    %4486 = vmatpush1.msra.mxu0 0.0
    %4487 = vmatprep.subr.mxu0 0.0
    %4488 = vmatpush1.msra.mxu0 0.0
    %4489 = vmatprep.subr.mxu0 0.0
    %4490 = vmatpush1.msra.mxu0 0.0
    %4491 = vmatprep.subr.mxu0 0.0
    %4492 = vmatpush1.msra.mxu0 0.0
    %4493 = vmatprep.subr.mxu0 0.0
    %4494 = vmatpush1.msra.mxu0 0.0
    %4495 = vmatprep.subr.mxu0 0.0
    %4496 = vmatpush1.msra.mxu0 0.0
    %4497 = vmatprep.subr.mxu0 0.0
    %4498 = vmatpush1.msra.mxu0 0.0
    %4499 = vmatprep.subr.mxu0 0.0
    %4500 = vmatpush1.msra.mxu0 0.0
    %4501 = vmatprep.subr.mxu0 0.0
    %4502 = vmatpush1.msra.mxu0 0.0
    %4503 = vmatprep.subr.mxu0 0.0
    %4504 = vmatpush1.msra.mxu0 0.0
    %4505 = vmatprep.subr.mxu0 0.0
    %4506 = vmatpush1.msra.mxu0 0.0
    %4507 = vmatprep.subr.mxu0 0.0
    %4508 = vmatpush1.msra.mxu0 0.0
    %4509 = vmatprep.subr.mxu0 0.0
    %4510 = vmatpush1.msra.mxu0 0.0
    %4511 = vmatprep.subr.mxu0 0.0
    %4512 = vmatpush1.msra.mxu0 0.0
    %4513 = vmatprep.subr.mxu0 0.0
    %4514 = vmatpush1.msra.mxu0 0.0
    %4515 = vmatprep.subr.mxu0 0.0
    %4516 = vmatpush1.msra.mxu0 0.0
    %4517 = vmatprep.subr.mxu0 0.0
    %4518 = vmatpush1.msra.mxu0 0.0
    %4519 = vmatprep.mubr.f32.mxu0 0.0
    %4520 = vmatmul.mubr.f32.gmra.mrb[0].mxu0 %v4453
    %v4521 = vpop.f32.mrb[0].mxu0
    %v4522 = vadd.f32 0.0, %v4521
    %v4523 = vpop.f32.mrb[0].mxu0
    %4524 = vdwg.mxu0
    %v4525 = vadd.f32 %v4022, %v4522
    %v4526 = vld [vmem:[%s7 + $0x16] sm:$0x1]
    %v4527 = vld [vmem:[%s7 + $0x17] sm:$0x1]
    %v4528 = vadd.f32 %v4525, %v3520
    %v4529 = vsel %vm1042, %v4528, 0.0
    %4530 = vadd.xlane.f32.xlu0 %v4529
    %v4531 = vpop.xlane.xlu0 %4530
    %v4532 = vmul.f32 %v4531, %v1046
    %v4533 = vsub.f32 %v4528, %v4532
    %v4534 = vmul.f32 %v4533, %v4533
    %v4535 = vsel %vm1042, %v4534, 0.0
    %4536 = vadd.xlane.f32.xlu0 %v4535
    %v4537 = vpop.xlane.xlu0 %4536
    %v4538 = vmul.f32 %v4537, %v1046
    %v4539 = vadd.f32 %v4538, 1e-05
    %v4540 = vrsqrt.pop %v4539
    %v4541 = vmul.f32 %v4533, %v4540
    %v4542 = vlaneseq
    %v4543 = vshrl.u32 %v4542, 7
    %v4544 = vsub.s32 0, %v4543
    %v4545 = vrot.slane %v4526, %v4544
    %v4546 = vmul.f32 %v4541, %v4545
    %v4547 = vlaneseq
    %v4548 = vshrl.u32 %v4547, 7
    %v4549 = vsub.s32 0, %v4548
    %v4550 = vrot.slane %v4527, %v4549
    %v4551 = vadd.f32 %v4546, %v4550
    %v4552 = vld [vmem:[%s5 + $0x18] sm:$0xff]
    %v4553 = vld [vmem:[%s5 + $0x40] sm:$0xff]
    %v4554 = vld [vmem:[%s7 + $0x2c] sm:$0x1]
    %v4555 = vld [vmem:[%s6] sm:$0xff]
    %v4556 = vld [vmem:[%s6 + $0x8] sm:$0xff]
    %v4557 = vld [vmem:[%s6 + $0x10] sm:$0xff]
    %v4558 = vld [vmem:[%s6 + $0x18] sm:$0xff]
    %v4559 = vld [vmem:[%s7 + $0x2d] sm:$0x1]
    %v4560 = vld [vmem:[%s7 + $0x2e] sm:$0x1]
    %v4561 = vld [vmem:[%s7 + $0x2f] sm:$0x1]
    %v4562 = vlaneseq
    %v4563 = vshrl.u32 %v4562, 7
    %v4564 = vsub.s32 0, %v4563
    %v4565 = vrot.slane %v4554, %v4564
    %4568 = vrot.lane.b32.xlu0 %v4552, 64
    %v4569 = vpop.permute.xlu0 %4568
    %4570 = vrot.lane.b32.xlu0 %v4553, 64
    %v4571 = vpop.permute.xlu0 %4570
    %v4575 = vsel %vm49, %v4551, 0
    %4577 = vmatprep.subr.mxu0 0.0
    %4578 = vmatpush1.msra.mxu0 %v4569
    %4579 = vmatprep.subr.mxu0 0.0
    %4580 = vmatpush1.msra.mxu0 %v4571
    %4581 = vmatprep.subr.mxu0 0.0
    %4582 = vmatpush1.msra.mxu0 0.0
    %4583 = vmatprep.subr.mxu0 0.0
    %4584 = vmatpush1.msra.mxu0 0.0
    %4585 = vmatprep.subr.mxu0 0.0
    %4586 = vmatpush1.msra.mxu0 0.0
    %4587 = vmatprep.subr.mxu0 0.0
    %4588 = vmatpush1.msra.mxu0 0.0
    %4589 = vmatprep.subr.mxu0 0.0
    %4590 = vmatpush1.msra.mxu0 0.0
    %4591 = vmatprep.subr.mxu0 0.0
    %4592 = vmatpush1.msra.mxu0 0.0
    %4593 = vmatprep.subr.mxu0 0.0
    %4594 = vmatpush1.msra.mxu0 0.0
    %4595 = vmatprep.subr.mxu0 0.0
    %4596 = vmatpush1.msra.mxu0 0.0
    %4597 = vmatprep.subr.mxu0 0.0
    %4598 = vmatpush1.msra.mxu0 0.0
    %4599 = vmatprep.subr.mxu0 0.0
    %4600 = vmatpush1.msra.mxu0 0.0
    %4601 = vmatprep.subr.mxu0 0.0
    %4602 = vmatpush1.msra.mxu0 0.0
    %4603 = vmatprep.subr.mxu0 0.0
    %4604 = vmatpush1.msra.mxu0 0.0
    %4605 = vmatprep.subr.mxu0 0.0
    %4606 = vmatpush1.msra.mxu0 0.0
    %4607 = vmatprep.subr.mxu0 0.0
    %4608 = vmatpush1.msra.mxu0 0.0
    %4609 = vmatprep.subr.mxu0 0.0
    %4610 = vmatpush1.msra.mxu0 0.0
    %4611 = vmatprep.subr.mxu0 0.0
    %4612 = vmatpush1.msra.mxu0 0.0
    %4613 = vmatprep.subr.mxu0 0.0
    %4614 = vmatpush1.msra.mxu0 0.0
    %4615 = vmatprep.subr.mxu0 0.0
    %4616 = vmatpush1.msra.mxu0 0.0
    %4617 = vmatprep.subr.mxu0 0.0
    %4618 = vmatpush1.msra.mxu0 0.0
    %4619 = vmatprep.subr.mxu0 0.0
    %4620 = vmatpush1.msra.mxu0 0.0
    %4621 = vmatprep.subr.mxu0 0.0
    %4622 = vmatpush1.msra.mxu0 0.0
    %4623 = vmatprep.subr.mxu0 0.0
    %4624 = vmatpush1.msra.mxu0 0.0
    %4625 = vmatprep.subr.mxu0 0.0
    %4626 = vmatpush1.msra.mxu0 0.0
    %4627 = vmatprep.subr.mxu0 0.0
    %4628 = vmatpush1.msra.mxu0 0.0
    %4629 = vmatprep.subr.mxu0 0.0
    %4630 = vmatpush1.msra.mxu0 0.0
    %4631 = vmatprep.subr.mxu0 0.0
    %4632 = vmatpush1.msra.mxu0 0.0
    %4633 = vmatprep.subr.mxu0 0.0
    %4634 = vmatpush1.msra.mxu0 0.0
    %4635 = vmatprep.subr.mxu0 0.0
    %4636 = vmatpush1.msra.mxu0 0.0
    %4637 = vmatprep.subr.mxu0 0.0
    %4638 = vmatpush1.msra.mxu0 0.0
    %4639 = vmatprep.subr.mxu0 0.0
    %4640 = vmatpush1.msra.mxu0 0.0
    %4641 = vmatprep.mubr.f32.mxu0 0.0
    %4642 = vmatmul.mubr.f32.gmra.mrb[0].mxu0 %v4575
    %v4643 = vpop.f32.mrb[0].mxu0
    %v4644 = vadd.f32 %v4565, %v4643
    %v4645 = vpop.f32.mrb[0].mxu0
    %4646 = vdwg.mxu0
    %v4647 = vlaneseq
    %v4648 = vshrl.u32 %v4647, 7
    %v4649 = vsub.s32 0, %v4648
    %v4650 = vrot.slane %v4559, %v4649
    %4655 = vrot.lane.b32.xlu0 %v4555, 96
    %v4656 = vpop.permute.xlu0 %4655
    %4657 = vrot.lane.b32.xlu0 %v4556, 96
    %v4658 = vpop.permute.xlu0 %4657
    %4659 = vrot.lane.b32.xlu0 %v4557, 96
    %v4660 = vpop.permute.xlu0 %4659
    %4661 = vrot.lane.b32.xlu0 %v4558, 96
    %v4662 = vpop.permute.xlu0 %4661
    %v4668 = vsel %vm1158, %v4644, 0
    %4670 = vmatprep.subr.mxu0 0.0
    %4671 = vmatpush1.msra.mxu0 %v4656
    %4672 = vmatprep.subr.mxu0 0.0
    %4673 = vmatpush1.msra.mxu0 %v4658
    %4674 = vmatprep.subr.mxu0 0.0
    %4675 = vmatpush1.msra.mxu0 %v4660
    %4676 = vmatprep.subr.mxu0 0.0
    %4677 = vmatpush1.msra.mxu0 %v4662
    %4678 = vmatprep.subr.mxu0 0.0
    %4679 = vmatpush1.msra.mxu0 0.0
    %4680 = vmatprep.subr.mxu0 0.0
    %4681 = vmatpush1.msra.mxu0 0.0
    %4682 = vmatprep.subr.mxu0 0.0
    %4683 = vmatpush1.msra.mxu0 0.0
    %4684 = vmatprep.subr.mxu0 0.0
    %4685 = vmatpush1.msra.mxu0 0.0
    %4686 = vmatprep.subr.mxu0 0.0
    %4687 = vmatpush1.msra.mxu0 0.0
    %4688 = vmatprep.subr.mxu0 0.0
    %4689 = vmatpush1.msra.mxu0 0.0
    %4690 = vmatprep.subr.mxu0 0.0
    %4691 = vmatpush1.msra.mxu0 0.0
    %4692 = vmatprep.subr.mxu0 0.0
    %4693 = vmatpush1.msra.mxu0 0.0
    %4694 = vmatprep.subr.mxu0 0.0
    %4695 = vmatpush1.msra.mxu0 0.0
    %4696 = vmatprep.subr.mxu0 0.0
    %4697 = vmatpush1.msra.mxu0 0.0
    %4698 = vmatprep.subr.mxu0 0.0
    %4699 = vmatpush1.msra.mxu0 0.0
    %4700 = vmatprep.subr.mxu0 0.0
    %4701 = vmatpush1.msra.mxu0 0.0
    %4702 = vmatprep.subr.mxu0 0.0
    %4703 = vmatpush1.msra.mxu0 0.0
    %4704 = vmatprep.subr.mxu0 0.0
    %4705 = vmatpush1.msra.mxu0 0.0
    %4706 = vmatprep.subr.mxu0 0.0
    %4707 = vmatpush1.msra.mxu0 0.0
    %4708 = vmatprep.subr.mxu0 0.0
    %4709 = vmatpush1.msra.mxu0 0.0
    %4710 = vmatprep.subr.mxu0 0.0
    %4711 = vmatpush1.msra.mxu0 0.0
    %4712 = vmatprep.subr.mxu0 0.0
    %4713 = vmatpush1.msra.mxu0 0.0
    %4714 = vmatprep.subr.mxu0 0.0
    %4715 = vmatpush1.msra.mxu0 0.0
    %4716 = vmatprep.subr.mxu0 0.0
    %4717 = vmatpush1.msra.mxu0 0.0
    %4718 = vmatprep.subr.mxu0 0.0
    %4719 = vmatpush1.msra.mxu0 0.0
    %4720 = vmatprep.subr.mxu0 0.0
    %4721 = vmatpush1.msra.mxu0 0.0
    %4722 = vmatprep.subr.mxu0 0.0
    %4723 = vmatpush1.msra.mxu0 0.0
    %4724 = vmatprep.subr.mxu0 0.0
    %4725 = vmatpush1.msra.mxu0 0.0
    %4726 = vmatprep.subr.mxu0 0.0
    %4727 = vmatpush1.msra.mxu0 0.0
    %4728 = vmatprep.subr.mxu0 0.0
    %4729 = vmatpush1.msra.mxu0 0.0
    %4730 = vmatprep.subr.mxu0 0.0
    %4731 = vmatpush1.msra.mxu0 0.0
    %4732 = vmatprep.subr.mxu0 0.0
    %4733 = vmatpush1.msra.mxu0 0.0
    %4734 = vmatprep.mubr.f32.mxu0 0.0
    %4735 = vmatmul.mubr.f32.gmra.mrb[0].mxu0 %v4668
    %v4736 = vpop.f32.mrb[0].mxu0
    %v4737 = vadd.f32 %v4650, %v4736
    %v4738 = vpop.f32.mrb[0].mxu0
    %4739 = vdwg.mxu0
    %v4740 = vmax.f32 %v4737, 0.0
    %v4741 = vadd.f32 %v4740, %v4551
    %v4742 = vsel %vm1042, %v4741, 0.0
    %4743 = vadd.xlane.f32.xlu0 %v4742
    %v4744 = vpop.xlane.xlu0 %4743
    %v4745 = vmul.f32 %v4744, %v1046
    %v4746 = vsub.f32 %v4741, %v4745
    %v4747 = vmul.f32 %v4746, %v4746
    %v4748 = vsel %vm1042, %v4747, 0.0
    %4749 = vadd.xlane.f32.xlu0 %v4748
    %v4750 = vpop.xlane.xlu0 %4749
    %v4751 = vmul.f32 %v4750, %v1046
    %v4752 = vadd.f32 %v4751, 1e-05
    %v4753 = vrsqrt.pop %v4752
    %v4754 = vmul.f32 %v4746, %v4753
    %v4755 = vlaneseq
    %v4756 = vshrl.u32 %v4755, 7
    %v4757 = vsub.s32 0, %v4756
    %v4758 = vrot.slane %v4560, %v4757
    %v4759 = vmul.f32 %v4754, %v4758
    %v4760 = vlaneseq
    %v4761 = vshrl.u32 %v4760, 7
    %v4762 = vsub.s32 0, %v4761
    %v4763 = vrot.slane %v4561, %v4762
    %v4764 = vadd.f32 %v4759, %v4763
    %v4765 = vld [vmem:[%s7 + $0x1b] sm:$0x1]
    %v4766 = vld [vmem:[%s5 + $0x10] sm:$0xff]
    %v4767 = vld [vmem:[%s5 + $0x38] sm:$0xff]
    %v4768 = vld [vmem:[%s7 + $0x18] sm:$0x1]
    %v4769 = vld [vmem:[%s7 + $0x19] sm:$0x1]
    %v4770 = vld [vmem:[%s7 + $0x1a] sm:$0x1]
    %v4771 = vlaneseq
    %v4772 = vshrl.u32 %v4771, 7
    %v4773 = vsub.s32 0, %v4772
    %v4774 = vrot.slane %v4768, %v4773
    %v4776 = vsel %vm49, %v4764, 0
    %4778 = vmatprep.subr.mxu0 0.0
    %4779 = vmatpush1.msra.mxu0 %v4766
    %4780 = vmatprep.subr.mxu0 0.0
    %4781 = vmatpush1.msra.mxu0 %v4767
    %4782 = vmatprep.subr.mxu0 0.0
    %4783 = vmatpush1.msra.mxu0 0.0
    %4784 = vmatprep.subr.mxu0 0.0
    %4785 = vmatpush1.msra.mxu0 0.0
    %4786 = vmatprep.subr.mxu0 0.0
    %4787 = vmatpush1.msra.mxu0 0.0
    %4788 = vmatprep.subr.mxu0 0.0
    %4789 = vmatpush1.msra.mxu0 0.0
    %4790 = vmatprep.subr.mxu0 0.0
    %4791 = vmatpush1.msra.mxu0 0.0
    %4792 = vmatprep.subr.mxu0 0.0
    %4793 = vmatpush1.msra.mxu0 0.0
    %4794 = vmatprep.subr.mxu0 0.0
    %4795 = vmatpush1.msra.mxu0 0.0
    %4796 = vmatprep.subr.mxu0 0.0
    %4797 = vmatpush1.msra.mxu0 0.0
    %4798 = vmatprep.subr.mxu0 0.0
    %4799 = vmatpush1.msra.mxu0 0.0
    %4800 = vmatprep.subr.mxu0 0.0
    %4801 = vmatpush1.msra.mxu0 0.0
    %4802 = vmatprep.subr.mxu0 0.0
    %4803 = vmatpush1.msra.mxu0 0.0
    %4804 = vmatprep.subr.mxu0 0.0
    %4805 = vmatpush1.msra.mxu0 0.0
    %4806 = vmatprep.subr.mxu0 0.0
    %4807 = vmatpush1.msra.mxu0 0.0
    %4808 = vmatprep.subr.mxu0 0.0
    %4809 = vmatpush1.msra.mxu0 0.0
    %4810 = vmatprep.subr.mxu0 0.0
    %4811 = vmatpush1.msra.mxu0 0.0
    %4812 = vmatprep.subr.mxu0 0.0
    %4813 = vmatpush1.msra.mxu0 0.0
    %4814 = vmatprep.subr.mxu0 0.0
    %4815 = vmatpush1.msra.mxu0 0.0
    %4816 = vmatprep.subr.mxu0 0.0
    %4817 = vmatpush1.msra.mxu0 0.0
    %4818 = vmatprep.subr.mxu0 0.0
    %4819 = vmatpush1.msra.mxu0 0.0
    %4820 = vmatprep.subr.mxu0 0.0
    %4821 = vmatpush1.msra.mxu0 0.0
    %4822 = vmatprep.subr.mxu0 0.0
    %4823 = vmatpush1.msra.mxu0 0.0
    %4824 = vmatprep.subr.mxu0 0.0
    %4825 = vmatpush1.msra.mxu0 0.0
    %4826 = vmatprep.subr.mxu0 0.0
    %4827 = vmatpush1.msra.mxu0 0.0
    %4828 = vmatprep.subr.mxu0 0.0
    %4829 = vmatpush1.msra.mxu0 0.0
    %4830 = vmatprep.subr.mxu0 0.0
    %4831 = vmatpush1.msra.mxu0 0.0
    %4832 = vmatprep.subr.mxu0 0.0
    %4833 = vmatpush1.msra.mxu0 0.0
    %4834 = vmatprep.subr.mxu0 0.0
    %4835 = vmatpush1.msra.mxu0 0.0
    %4836 = vmatprep.subr.mxu0 0.0
    %4837 = vmatpush1.msra.mxu0 0.0
    %4838 = vmatprep.subr.mxu0 0.0
    %4839 = vmatpush1.msra.mxu0 0.0
    %4840 = vmatprep.subr.mxu0 0.0
    %4841 = vmatpush1.msra.mxu0 0.0
    %4842 = vmatprep.mubr.f32.mxu0 0.0
    %4843 = vmatmul.mubr.f32.gmra.mrb[0].mxu0 %v4776
    %v4844 = vpop.f32.mrb[0].mxu0
    %v4845 = vadd.f32 %v4774, %v4844
    %v4846 = vpop.f32.mrb[0].mxu0
    %4847 = vdwg.mxu0
    %v4848 = vlaneseq
    %v4849 = vshrl.u32 %v4848, 7
    %v4850 = vsub.s32 0, %v4849
    %v4851 = vrot.slane %v4769, %v4850
    %4854 = vrot.lane.b32.xlu0 %v4766, 112
    %v4855 = vpop.permute.xlu0 %4854
    %4856 = vrot.lane.b32.xlu0 %v4767, 112
    %v4857 = vpop.permute.xlu0 %4856
    %4860 = vmatprep.subr.mxu0 0.0
    %4861 = vmatpush1.msra.mxu0 %v4855
    %4862 = vmatprep.subr.mxu0 0.0
    %4863 = vmatpush1.msra.mxu0 %v4857
    %4864 = vmatprep.subr.mxu0 0.0
    %4865 = vmatpush1.msra.mxu0 0.0
    %4866 = vmatprep.subr.mxu0 0.0
    %4867 = vmatpush1.msra.mxu0 0.0
    %4868 = vmatprep.subr.mxu0 0.0
    %4869 = vmatpush1.msra.mxu0 0.0
    %4870 = vmatprep.subr.mxu0 0.0
    %4871 = vmatpush1.msra.mxu0 0.0
    %4872 = vmatprep.subr.mxu0 0.0
    %4873 = vmatpush1.msra.mxu0 0.0
    %4874 = vmatprep.subr.mxu0 0.0
    %4875 = vmatpush1.msra.mxu0 0.0
    %4876 = vmatprep.subr.mxu0 0.0
    %4877 = vmatpush1.msra.mxu0 0.0
    %4878 = vmatprep.subr.mxu0 0.0
    %4879 = vmatpush1.msra.mxu0 0.0
    %4880 = vmatprep.subr.mxu0 0.0
    %4881 = vmatpush1.msra.mxu0 0.0
    %4882 = vmatprep.subr.mxu0 0.0
    %4883 = vmatpush1.msra.mxu0 0.0
    %4884 = vmatprep.subr.mxu0 0.0
    %4885 = vmatpush1.msra.mxu0 0.0
    %4886 = vmatprep.subr.mxu0 0.0
    %4887 = vmatpush1.msra.mxu0 0.0
    %4888 = vmatprep.subr.mxu0 0.0
    %4889 = vmatpush1.msra.mxu0 0.0
    %4890 = vmatprep.subr.mxu0 0.0
    %4891 = vmatpush1.msra.mxu0 0.0
    %4892 = vmatprep.subr.mxu0 0.0
    %4893 = vmatpush1.msra.mxu0 0.0
    %4894 = vmatprep.subr.mxu0 0.0
    %4895 = vmatpush1.msra.mxu0 0.0
    %4896 = vmatprep.subr.mxu0 0.0
    %4897 = vmatpush1.msra.mxu0 0.0
    %4898 = vmatprep.subr.mxu0 0.0
    %4899 = vmatpush1.msra.mxu0 0.0
    %4900 = vmatprep.subr.mxu0 0.0
    %4901 = vmatpush1.msra.mxu0 0.0
    %4902 = vmatprep.subr.mxu0 0.0
    %4903 = vmatpush1.msra.mxu0 0.0
    %4904 = vmatprep.subr.mxu0 0.0
    %4905 = vmatpush1.msra.mxu0 0.0
    %4906 = vmatprep.subr.mxu0 0.0
    %4907 = vmatpush1.msra.mxu0 0.0
    %4908 = vmatprep.subr.mxu0 0.0
    %4909 = vmatpush1.msra.mxu0 0.0
    %4910 = vmatprep.subr.mxu0 0.0
    %4911 = vmatpush1.msra.mxu0 0.0
    %4912 = vmatprep.subr.mxu0 0.0
    %4913 = vmatpush1.msra.mxu0 0.0
    %4914 = vmatprep.subr.mxu0 0.0
    %4915 = vmatpush1.msra.mxu0 0.0
    %4916 = vmatprep.subr.mxu0 0.0
    %4917 = vmatpush1.msra.mxu0 0.0
    %4918 = vmatprep.subr.mxu0 0.0
    %4919 = vmatpush1.msra.mxu0 0.0
    %4920 = vmatprep.subr.mxu0 0.0
    %4921 = vmatpush1.msra.mxu0 0.0
    %4922 = vmatprep.subr.mxu0 0.0
    %4923 = vmatpush1.msra.mxu0 0.0
    %4924 = vmatprep.mubr.f32.mxu0 0.0
    %4925 = vmatmul.mubr.f32.gmra.mrb[0].mxu0 %v4776
    %v4926 = vpop.f32.mrb[0].mxu0
    %v4927 = vadd.f32 %v4851, %v4926
    %v4928 = vpop.f32.mrb[0].mxu0
    %4929 = vdwg.mxu0
    %v4930 = vlaneseq
    %v4931 = vshrl.u32 %v4930, 7
    %v4932 = vsub.s32 0, %v4931
    %v4933 = vrot.slane %v4770, %v4932
    %4934 = vrot.lane.b32.xlu0 %v4766, 96
    %v4935 = vpop.permute.xlu0 %4934
    %4936 = vrot.lane.b32.xlu0 %v4767, 96
    %v4937 = vpop.permute.xlu0 %4936
    %4940 = vmatprep.subr.mxu0 0.0
    %4941 = vmatpush1.msra.mxu0 %v4935
    %4942 = vmatprep.subr.mxu0 0.0
    %4943 = vmatpush1.msra.mxu0 %v4937
    %4944 = vmatprep.subr.mxu0 0.0
    %4945 = vmatpush1.msra.mxu0 0.0
    %4946 = vmatprep.subr.mxu0 0.0
    %4947 = vmatpush1.msra.mxu0 0.0
    %4948 = vmatprep.subr.mxu0 0.0
    %4949 = vmatpush1.msra.mxu0 0.0
    %4950 = vmatprep.subr.mxu0 0.0
    %4951 = vmatpush1.msra.mxu0 0.0
    %4952 = vmatprep.subr.mxu0 0.0
    %4953 = vmatpush1.msra.mxu0 0.0
    %4954 = vmatprep.subr.mxu0 0.0
    %4955 = vmatpush1.msra.mxu0 0.0
    %4956 = vmatprep.subr.mxu0 0.0
    %4957 = vmatpush1.msra.mxu0 0.0
    %4958 = vmatprep.subr.mxu0 0.0
    %4959 = vmatpush1.msra.mxu0 0.0
    %4960 = vmatprep.subr.mxu0 0.0
    %4961 = vmatpush1.msra.mxu0 0.0
    %4962 = vmatprep.subr.mxu0 0.0
    %4963 = vmatpush1.msra.mxu0 0.0
    %4964 = vmatprep.subr.mxu0 0.0
    %4965 = vmatpush1.msra.mxu0 0.0
    %4966 = vmatprep.subr.mxu0 0.0
    %4967 = vmatpush1.msra.mxu0 0.0
    %4968 = vmatprep.subr.mxu0 0.0
    %4969 = vmatpush1.msra.mxu0 0.0
    %4970 = vmatprep.subr.mxu0 0.0
    %4971 = vmatpush1.msra.mxu0 0.0
    %4972 = vmatprep.subr.mxu0 0.0
    %4973 = vmatpush1.msra.mxu0 0.0
    %4974 = vmatprep.subr.mxu0 0.0
    %4975 = vmatpush1.msra.mxu0 0.0
    %4976 = vmatprep.subr.mxu0 0.0
    %4977 = vmatpush1.msra.mxu0 0.0
    %4978 = vmatprep.subr.mxu0 0.0
    %4979 = vmatpush1.msra.mxu0 0.0
    %4980 = vmatprep.subr.mxu0 0.0
    %4981 = vmatpush1.msra.mxu0 0.0
    %4982 = vmatprep.subr.mxu0 0.0
    %4983 = vmatpush1.msra.mxu0 0.0
    %4984 = vmatprep.subr.mxu0 0.0
    %4985 = vmatpush1.msra.mxu0 0.0
    %4986 = vmatprep.subr.mxu0 0.0
    %4987 = vmatpush1.msra.mxu0 0.0
    %4988 = vmatprep.subr.mxu0 0.0
    %4989 = vmatpush1.msra.mxu0 0.0
    %4990 = vmatprep.subr.mxu0 0.0
    %4991 = vmatpush1.msra.mxu0 0.0
    %4992 = vmatprep.subr.mxu0 0.0
    %4993 = vmatpush1.msra.mxu0 0.0
    %4994 = vmatprep.subr.mxu0 0.0
    %4995 = vmatpush1.msra.mxu0 0.0
    %4996 = vmatprep.subr.mxu0 0.0
    %4997 = vmatpush1.msra.mxu0 0.0
    %4998 = vmatprep.subr.mxu0 0.0
    %4999 = vmatpush1.msra.mxu0 0.0
    %5000 = vmatprep.subr.mxu0 0.0
    %5001 = vmatpush1.msra.mxu0 0.0
    %5002 = vmatprep.subr.mxu0 0.0
    %5003 = vmatpush1.msra.mxu0 0.0
    %5004 = vmatprep.mubr.f32.mxu0 0.0
    %5005 = vmatmul.mubr.f32.gmra.mrb[0].mxu0 %v4776
    %v5006 = vpop.f32.mrb[0].mxu0
    %v5007 = vadd.f32 %v4933, %v5006
    %v5008 = vpop.f32.mrb[0].mxu0
    %5009 = vdwg.mxu0
    %v5011 = vsel %vm285, %v4845, 0
    %v5014 = vsel %vm285, %v4927, 0
    %5016 = vmatprep.subr.mxu0 0.0
    %5017 = vmatpush1.xpose.msra.mxu0 %v5014
    %5018 = vmatprep.subr.mxu0 0.0
    %5019 = vmatpush1.xpose.msra.mxu0 0.0
    %5020 = vmatprep.subr.mxu0 0.0
    %5021 = vmatpush1.xpose.msra.mxu0 0.0
    %5022 = vmatprep.subr.mxu0 0.0
    %5023 = vmatpush1.xpose.msra.mxu0 0.0
    %5024 = vmatprep.subr.mxu0 0.0
    %5025 = vmatpush1.xpose.msra.mxu0 0.0
    %5026 = vmatprep.subr.mxu0 0.0
    %5027 = vmatpush1.xpose.msra.mxu0 0.0
    %5028 = vmatprep.subr.mxu0 0.0
    %5029 = vmatpush1.xpose.msra.mxu0 0.0
    %5030 = vmatprep.subr.mxu0 0.0
    %5031 = vmatpush1.xpose.msra.mxu0 0.0
    %5032 = vmatprep.subr.mxu0 0.0
    %5033 = vmatpush1.xpose.msra.mxu0 0.0
    %5034 = vmatprep.subr.mxu0 0.0
    %5035 = vmatpush1.xpose.msra.mxu0 0.0
    %5036 = vmatprep.subr.mxu0 0.0
    %5037 = vmatpush1.xpose.msra.mxu0 0.0
    %5038 = vmatprep.subr.mxu0 0.0
    %5039 = vmatpush1.xpose.msra.mxu0 0.0
    %5040 = vmatprep.subr.mxu0 0.0
    %5041 = vmatpush1.xpose.msra.mxu0 0.0
    %5042 = vmatprep.subr.mxu0 0.0
    %5043 = vmatpush1.xpose.msra.mxu0 0.0
    %5044 = vmatprep.subr.mxu0 0.0
    %5045 = vmatpush1.xpose.msra.mxu0 0.0
    %5046 = vmatprep.subr.mxu0 0.0
    %5047 = vmatpush1.xpose.msra.mxu0 0.0
    %5048 = vmatprep.subr.mxu0 0.0
    %5049 = vmatpush1.xpose.msra.mxu0 0.0
    %5050 = vmatprep.subr.mxu0 0.0
    %5051 = vmatpush1.xpose.msra.mxu0 0.0
    %5052 = vmatprep.subr.mxu0 0.0
    %5053 = vmatpush1.xpose.msra.mxu0 0.0
    %5054 = vmatprep.subr.mxu0 0.0
    %5055 = vmatpush1.xpose.msra.mxu0 0.0
    %5056 = vmatprep.subr.mxu0 0.0
    %5057 = vmatpush1.xpose.msra.mxu0 0.0
    %5058 = vmatprep.subr.mxu0 0.0
    %5059 = vmatpush1.xpose.msra.mxu0 0.0
    %5060 = vmatprep.subr.mxu0 0.0
    %5061 = vmatpush1.xpose.msra.mxu0 0.0
    %5062 = vmatprep.subr.mxu0 0.0
    %5063 = vmatpush1.xpose.msra.mxu0 0.0
    %5064 = vmatprep.subr.mxu0 0.0
    %5065 = vmatpush1.xpose.msra.mxu0 0.0
    %5066 = vmatprep.subr.mxu0 0.0
    %5067 = vmatpush1.xpose.msra.mxu0 0.0
    %5068 = vmatprep.subr.mxu0 0.0
    %5069 = vmatpush1.xpose.msra.mxu0 0.0
    %5070 = vmatprep.subr.mxu0 0.0
    %5071 = vmatpush1.xpose.msra.mxu0 0.0
    %5072 = vmatprep.subr.mxu0 0.0
    %5073 = vmatpush1.xpose.msra.mxu0 0.0
    %5074 = vmatprep.subr.mxu0 0.0
    %5075 = vmatpush1.xpose.msra.mxu0 0.0
    %5076 = vmatprep.subr.mxu0 0.0
    %5077 = vmatpush1.xpose.msra.mxu0 0.0
    %5078 = vmatprep.subr.mxu0 0.0
    %5079 = vmatpush1.xpose.msra.mxu0 0.0
    %5080 = vmatprep.mubr.f32.mxu0 0.0
    %5081 = vmatmul.mubr.f32.gmra.mrb[0].mxu0 %v5011
    %v5082 = vpop.f32.mrb[0].mxu0
    %v5083 = vadd.f32 0.0, %v5082
    %v5084 = vpop.f32.mrb[0].mxu0
    %5085 = vdwg.mxu0
    %v5086 = vmul.f32 %v5083, 0.125
    %v5087 = vsel %vm35, -1e+09, %v5086
    %v5088 = vsel %vm364, %v5087, -inf
    %5089 = vmax.xlane.f32.xlu0 %v5088
    %v5090 = vpop.xlane.xlu0 %5089
    %v5091 = vsub.f32 %v5087, %v5090
    %v5092 = vmul.f32 %v5091, 1.442695
    %v5093 = vpow.pop %v5092
    %v5094 = vsel %vm364, %v5093, 0.0
    %5095 = vadd.xlane.f32.xlu0 %v5094
    %v5096 = vpop.xlane.xlu0 %5095
    %v5097 = vrcp.pop %v5096
    %v5098 = vmul.f32 %v5093, %v5097
    %s5099 = scalar_lea.vmem %s9, 48
    %5100 = vst.msk [vmem:[%s5099] sm:$0x1f] %vm364, %v5098
    %v5102 = vsel %vm377, %v5087, 0
    %v5105 = vsel %vm381, %v5007, 0
    %5107 = vmatprep.subr.mxu0 0.0
    %5108 = vmatpush1.msra.mxu0 %v5105
    %5109 = vmatprep.subr.mxu0 0.0
    %5110 = vmatpush1.msra.mxu0 0.0
    %5111 = vmatprep.subr.mxu0 0.0
    %5112 = vmatpush1.msra.mxu0 0.0
    %5113 = vmatprep.subr.mxu0 0.0
    %5114 = vmatpush1.msra.mxu0 0.0
    %5115 = vmatprep.subr.mxu0 0.0
    %5116 = vmatpush1.msra.mxu0 0.0
    %5117 = vmatprep.subr.mxu0 0.0
    %5118 = vmatpush1.msra.mxu0 0.0
    %5119 = vmatprep.subr.mxu0 0.0
    %5120 = vmatpush1.msra.mxu0 0.0
    %5121 = vmatprep.subr.mxu0 0.0
    %5122 = vmatpush1.msra.mxu0 0.0
    %5123 = vmatprep.subr.mxu0 0.0
    %5124 = vmatpush1.msra.mxu0 0.0
    %5125 = vmatprep.subr.mxu0 0.0
    %5126 = vmatpush1.msra.mxu0 0.0
    %5127 = vmatprep.subr.mxu0 0.0
    %5128 = vmatpush1.msra.mxu0 0.0
    %5129 = vmatprep.subr.mxu0 0.0
    %5130 = vmatpush1.msra.mxu0 0.0
    %5131 = vmatprep.subr.mxu0 0.0
    %5132 = vmatpush1.msra.mxu0 0.0
    %5133 = vmatprep.subr.mxu0 0.0
    %5134 = vmatpush1.msra.mxu0 0.0
    %5135 = vmatprep.subr.mxu0 0.0
    %5136 = vmatpush1.msra.mxu0 0.0
    %5137 = vmatprep.subr.mxu0 0.0
    %5138 = vmatpush1.msra.mxu0 0.0
    %5139 = vmatprep.subr.mxu0 0.0
    %5140 = vmatpush1.msra.mxu0 0.0
    %5141 = vmatprep.subr.mxu0 0.0
    %5142 = vmatpush1.msra.mxu0 0.0
    %5143 = vmatprep.subr.mxu0 0.0
    %5144 = vmatpush1.msra.mxu0 0.0
    %5145 = vmatprep.subr.mxu0 0.0
    %5146 = vmatpush1.msra.mxu0 0.0
    %5147 = vmatprep.subr.mxu0 0.0
    %5148 = vmatpush1.msra.mxu0 0.0
    %5149 = vmatprep.subr.mxu0 0.0
    %5150 = vmatpush1.msra.mxu0 0.0
    %5151 = vmatprep.subr.mxu0 0.0
    %5152 = vmatpush1.msra.mxu0 0.0
    %5153 = vmatprep.subr.mxu0 0.0
    %5154 = vmatpush1.msra.mxu0 0.0
    %5155 = vmatprep.subr.mxu0 0.0
    %5156 = vmatpush1.msra.mxu0 0.0
    %5157 = vmatprep.subr.mxu0 0.0
    %5158 = vmatpush1.msra.mxu0 0.0
    %5159 = vmatprep.subr.mxu0 0.0
    %5160 = vmatpush1.msra.mxu0 0.0
    %5161 = vmatprep.subr.mxu0 0.0
    %5162 = vmatpush1.msra.mxu0 0.0
    %5163 = vmatprep.subr.mxu0 0.0
    %5164 = vmatpush1.msra.mxu0 0.0
    %5165 = vmatprep.subr.mxu0 0.0
    %5166 = vmatpush1.msra.mxu0 0.0
    %5167 = vmatprep.subr.mxu0 0.0
    %5168 = vmatpush1.msra.mxu0 0.0
    %5169 = vmatprep.subr.mxu0 0.0
    %5170 = vmatpush1.msra.mxu0 0.0
    %5171 = vmatprep.mubr.f32.mxu0 0.0
    %5172 = vmatmul.mubr.f32.gmra.mrb[0].mxu0 %v5102
    %v5173 = vpop.f32.mrb[0].mxu0
    %v5174 = vadd.f32 0.0, %v5173
    %v5175 = vpop.f32.mrb[0].mxu0
    %5176 = vdwg.mxu0
    %5177 = vrot.lane.b32.xlu0 %v4766, 80
    %v5178 = vpop.permute.xlu0 %5177
    %v5181 = vsel %vm285, %v5174, 0
    %5183 = vmatprep.subr.mxu0 0.0
    %5184 = vmatpush1.msra.mxu0 %v5178
    %5185 = vmatprep.subr.mxu0 0.0
    %5186 = vmatpush1.msra.mxu0 0.0
    %5187 = vmatprep.subr.mxu0 0.0
    %5188 = vmatpush1.msra.mxu0 0.0
    %5189 = vmatprep.subr.mxu0 0.0
    %5190 = vmatpush1.msra.mxu0 0.0
    %5191 = vmatprep.subr.mxu0 0.0
    %5192 = vmatpush1.msra.mxu0 0.0
    %5193 = vmatprep.subr.mxu0 0.0
    %5194 = vmatpush1.msra.mxu0 0.0
    %5195 = vmatprep.subr.mxu0 0.0
    %5196 = vmatpush1.msra.mxu0 0.0
    %5197 = vmatprep.subr.mxu0 0.0
    %5198 = vmatpush1.msra.mxu0 0.0
    %5199 = vmatprep.subr.mxu0 0.0
    %5200 = vmatpush1.msra.mxu0 0.0
    %5201 = vmatprep.subr.mxu0 0.0
    %5202 = vmatpush1.msra.mxu0 0.0
    %5203 = vmatprep.subr.mxu0 0.0
    %5204 = vmatpush1.msra.mxu0 0.0
    %5205 = vmatprep.subr.mxu0 0.0
    %5206 = vmatpush1.msra.mxu0 0.0
    %5207 = vmatprep.subr.mxu0 0.0
    %5208 = vmatpush1.msra.mxu0 0.0
    %5209 = vmatprep.subr.mxu0 0.0
    %5210 = vmatpush1.msra.mxu0 0.0
    %5211 = vmatprep.subr.mxu0 0.0
    %5212 = vmatpush1.msra.mxu0 0.0
    %5213 = vmatprep.subr.mxu0 0.0
    %5214 = vmatpush1.msra.mxu0 0.0
    %5215 = vmatprep.subr.mxu0 0.0
    %5216 = vmatpush1.msra.mxu0 0.0
    %5217 = vmatprep.subr.mxu0 0.0
    %5218 = vmatpush1.msra.mxu0 0.0
    %5219 = vmatprep.subr.mxu0 0.0
    %5220 = vmatpush1.msra.mxu0 0.0
    %5221 = vmatprep.subr.mxu0 0.0
    %5222 = vmatpush1.msra.mxu0 0.0
    %5223 = vmatprep.subr.mxu0 0.0
    %5224 = vmatpush1.msra.mxu0 0.0
    %5225 = vmatprep.subr.mxu0 0.0
    %5226 = vmatpush1.msra.mxu0 0.0
    %5227 = vmatprep.subr.mxu0 0.0
    %5228 = vmatpush1.msra.mxu0 0.0
    %5229 = vmatprep.subr.mxu0 0.0
    %5230 = vmatpush1.msra.mxu0 0.0
    %5231 = vmatprep.subr.mxu0 0.0
    %5232 = vmatpush1.msra.mxu0 0.0
    %5233 = vmatprep.subr.mxu0 0.0
    %5234 = vmatpush1.msra.mxu0 0.0
    %5235 = vmatprep.subr.mxu0 0.0
    %5236 = vmatpush1.msra.mxu0 0.0
    %5237 = vmatprep.subr.mxu0 0.0
    %5238 = vmatpush1.msra.mxu0 0.0
    %5239 = vmatprep.subr.mxu0 0.0
    %5240 = vmatpush1.msra.mxu0 0.0
    %5241 = vmatprep.subr.mxu0 0.0
    %5242 = vmatpush1.msra.mxu0 0.0
    %5243 = vmatprep.subr.mxu0 0.0
    %5244 = vmatpush1.msra.mxu0 0.0
    %5245 = vmatprep.subr.mxu0 0.0
    %5246 = vmatpush1.msra.mxu0 0.0
    %5247 = vmatprep.mubr.f32.mxu0 0.0
    %5248 = vmatmul.mubr.f32.gmra.mrb[0].mxu0 %v5181
    %v5249 = vpop.f32.mrb[0].mxu0
    %v5250 = vadd.f32 0.0, %v5249
    %v5251 = vpop.f32.mrb[0].mxu0
    %5252 = vdwg.mxu0
    %v5253 = vlaneseq
    %v5254 = vshrl.u32 %v5253, 7
    %v5255 = vsub.s32 0, %v5254
    %v5256 = vrot.slane %v4765, %v5255
    %v5257 = vadd.f32 %v5256, %v5250
    %v5258 = vld [vmem:[%s5 + $0x10] sm:$0xff]
    %v5259 = vld [vmem:[%s5 + $0x38] sm:$0xff]
    %v5260 = vld [vmem:[%s7 + $0x18] sm:$0x1]
    %v5261 = vld [vmem:[%s7 + $0x19] sm:$0x1]
    %v5262 = vld [vmem:[%s7 + $0x1a] sm:$0x1]
    %v5263 = vlaneseq
    %v5264 = vshrl.u32 %v5263, 7
    %v5265 = vsub.s32 0, %v5264
    %v5266 = vrot.slane %v5260, %v5265
    %5269 = vrot.lane.b32.xlu0 %v5258, 120
    %v5270 = vpop.permute.xlu0 %5269
    %5271 = vrot.lane.b32.xlu0 %v5259, 120
    %v5272 = vpop.permute.xlu0 %5271
    %5276 = vrot.lane.b32.xlu0 %v5266, 120
    %v5277 = vpop.permute.xlu0 %5276
    %5279 = vmatprep.subr.mxu0 0.0
    %5280 = vmatpush1.msra.mxu0 %v5270
    %5281 = vmatprep.subr.mxu0 0.0
    %5282 = vmatpush1.msra.mxu0 %v5272
    %5283 = vmatprep.subr.mxu0 0.0
    %5284 = vmatpush1.msra.mxu0 0.0
    %5285 = vmatprep.subr.mxu0 0.0
    %5286 = vmatpush1.msra.mxu0 0.0
    %5287 = vmatprep.subr.mxu0 0.0
    %5288 = vmatpush1.msra.mxu0 0.0
    %5289 = vmatprep.subr.mxu0 0.0
    %5290 = vmatpush1.msra.mxu0 0.0
    %5291 = vmatprep.subr.mxu0 0.0
    %5292 = vmatpush1.msra.mxu0 0.0
    %5293 = vmatprep.subr.mxu0 0.0
    %5294 = vmatpush1.msra.mxu0 0.0
    %5295 = vmatprep.subr.mxu0 0.0
    %5296 = vmatpush1.msra.mxu0 0.0
    %5297 = vmatprep.subr.mxu0 0.0
    %5298 = vmatpush1.msra.mxu0 0.0
    %5299 = vmatprep.subr.mxu0 0.0
    %5300 = vmatpush1.msra.mxu0 0.0
    %5301 = vmatprep.subr.mxu0 0.0
    %5302 = vmatpush1.msra.mxu0 0.0
    %5303 = vmatprep.subr.mxu0 0.0
    %5304 = vmatpush1.msra.mxu0 0.0
    %5305 = vmatprep.subr.mxu0 0.0
    %5306 = vmatpush1.msra.mxu0 0.0
    %5307 = vmatprep.subr.mxu0 0.0
    %5308 = vmatpush1.msra.mxu0 0.0
    %5309 = vmatprep.subr.mxu0 0.0
    %5310 = vmatpush1.msra.mxu0 0.0
    %5311 = vmatprep.subr.mxu0 0.0
    %5312 = vmatpush1.msra.mxu0 0.0
    %5313 = vmatprep.subr.mxu0 0.0
    %5314 = vmatpush1.msra.mxu0 0.0
    %5315 = vmatprep.subr.mxu0 0.0
    %5316 = vmatpush1.msra.mxu0 0.0
    %5317 = vmatprep.subr.mxu0 0.0
    %5318 = vmatpush1.msra.mxu0 0.0
    %5319 = vmatprep.subr.mxu0 0.0
    %5320 = vmatpush1.msra.mxu0 0.0
    %5321 = vmatprep.subr.mxu0 0.0
    %5322 = vmatpush1.msra.mxu0 0.0
    %5323 = vmatprep.subr.mxu0 0.0
    %5324 = vmatpush1.msra.mxu0 0.0
    %5325 = vmatprep.subr.mxu0 0.0
    %5326 = vmatpush1.msra.mxu0 0.0
    %5327 = vmatprep.subr.mxu0 0.0
    %5328 = vmatpush1.msra.mxu0 0.0
    %5329 = vmatprep.subr.mxu0 0.0
    %5330 = vmatpush1.msra.mxu0 0.0
    %5331 = vmatprep.subr.mxu0 0.0
    %5332 = vmatpush1.msra.mxu0 0.0
    %5333 = vmatprep.subr.mxu0 0.0
    %5334 = vmatpush1.msra.mxu0 0.0
    %5335 = vmatprep.subr.mxu0 0.0
    %5336 = vmatpush1.msra.mxu0 0.0
    %5337 = vmatprep.subr.mxu0 0.0
    %5338 = vmatpush1.msra.mxu0 0.0
    %5339 = vmatprep.subr.mxu0 0.0
    %5340 = vmatpush1.msra.mxu0 0.0
    %5341 = vmatprep.subr.mxu0 0.0
    %5342 = vmatpush1.msra.mxu0 0.0
    %5343 = vmatprep.mubr.f32.mxu0 0.0
    %5344 = vmatmul.mubr.f32.gmra.mrb[0].mxu0 %v4776
    %v5345 = vpop.f32.mrb[0].mxu0
    %v5346 = vadd.f32 %v5277, %v5345
    %v5347 = vpop.f32.mrb[0].mxu0
    %5348 = vdwg.mxu0
    %v5349 = vlaneseq
    %v5350 = vshrl.u32 %v5349, 7
    %v5351 = vsub.s32 0, %v5350
    %v5352 = vrot.slane %v5261, %v5351
    %5353 = vrot.lane.b32.xlu0 %v5258, 104
    %v5354 = vpop.permute.xlu0 %5353
    %5355 = vrot.lane.b32.xlu0 %v5259, 104
    %v5356 = vpop.permute.xlu0 %5355
    %5360 = vrot.lane.b32.xlu0 %v5352, 120
    %v5361 = vpop.permute.xlu0 %5360
    %5363 = vmatprep.subr.mxu0 0.0
    %5364 = vmatpush1.msra.mxu0 %v5354
    %5365 = vmatprep.subr.mxu0 0.0
    %5366 = vmatpush1.msra.mxu0 %v5356
    %5367 = vmatprep.subr.mxu0 0.0
    %5368 = vmatpush1.msra.mxu0 0.0
    %5369 = vmatprep.subr.mxu0 0.0
    %5370 = vmatpush1.msra.mxu0 0.0
    %5371 = vmatprep.subr.mxu0 0.0
    %5372 = vmatpush1.msra.mxu0 0.0
    %5373 = vmatprep.subr.mxu0 0.0
    %5374 = vmatpush1.msra.mxu0 0.0
    %5375 = vmatprep.subr.mxu0 0.0
    %5376 = vmatpush1.msra.mxu0 0.0
    %5377 = vmatprep.subr.mxu0 0.0
    %5378 = vmatpush1.msra.mxu0 0.0
    %5379 = vmatprep.subr.mxu0 0.0
    %5380 = vmatpush1.msra.mxu0 0.0
    %5381 = vmatprep.subr.mxu0 0.0
    %5382 = vmatpush1.msra.mxu0 0.0
    %5383 = vmatprep.subr.mxu0 0.0
    %5384 = vmatpush1.msra.mxu0 0.0
    %5385 = vmatprep.subr.mxu0 0.0
    %5386 = vmatpush1.msra.mxu0 0.0
    %5387 = vmatprep.subr.mxu0 0.0
    %5388 = vmatpush1.msra.mxu0 0.0
    %5389 = vmatprep.subr.mxu0 0.0
    %5390 = vmatpush1.msra.mxu0 0.0
    %5391 = vmatprep.subr.mxu0 0.0
    %5392 = vmatpush1.msra.mxu0 0.0
    %5393 = vmatprep.subr.mxu0 0.0
    %5394 = vmatpush1.msra.mxu0 0.0
    %5395 = vmatprep.subr.mxu0 0.0
    %5396 = vmatpush1.msra.mxu0 0.0
    %5397 = vmatprep.subr.mxu0 0.0
    %5398 = vmatpush1.msra.mxu0 0.0
    %5399 = vmatprep.subr.mxu0 0.0
    %5400 = vmatpush1.msra.mxu0 0.0
    %5401 = vmatprep.subr.mxu0 0.0
    %5402 = vmatpush1.msra.mxu0 0.0
    %5403 = vmatprep.subr.mxu0 0.0
    %5404 = vmatpush1.msra.mxu0 0.0
    %5405 = vmatprep.subr.mxu0 0.0
    %5406 = vmatpush1.msra.mxu0 0.0
    %5407 = vmatprep.subr.mxu0 0.0
    %5408 = vmatpush1.msra.mxu0 0.0
    %5409 = vmatprep.subr.mxu0 0.0
    %5410 = vmatpush1.msra.mxu0 0.0
    %5411 = vmatprep.subr.mxu0 0.0
    %5412 = vmatpush1.msra.mxu0 0.0
    %5413 = vmatprep.subr.mxu0 0.0
    %5414 = vmatpush1.msra.mxu0 0.0
    %5415 = vmatprep.subr.mxu0 0.0
    %5416 = vmatpush1.msra.mxu0 0.0
    %5417 = vmatprep.subr.mxu0 0.0
    %5418 = vmatpush1.msra.mxu0 0.0
    %5419 = vmatprep.subr.mxu0 0.0
    %5420 = vmatpush1.msra.mxu0 0.0
    %5421 = vmatprep.subr.mxu0 0.0
    %5422 = vmatpush1.msra.mxu0 0.0
    %5423 = vmatprep.subr.mxu0 0.0
    %5424 = vmatpush1.msra.mxu0 0.0
    %5425 = vmatprep.subr.mxu0 0.0
    %5426 = vmatpush1.msra.mxu0 0.0
    %5427 = vmatprep.mubr.f32.mxu0 0.0
    %5428 = vmatmul.mubr.f32.gmra.mrb[0].mxu0 %v4776
    %v5429 = vpop.f32.mrb[0].mxu0
    %v5430 = vadd.f32 %v5361, %v5429
    %v5431 = vpop.f32.mrb[0].mxu0
    %5432 = vdwg.mxu0
    %v5433 = vlaneseq
    %v5434 = vshrl.u32 %v5433, 7
    %v5435 = vsub.s32 0, %v5434
    %v5436 = vrot.slane %v5262, %v5435
    %5437 = vrot.lane.b32.xlu0 %v5258, 88
    %v5438 = vpop.permute.xlu0 %5437
    %5439 = vrot.lane.b32.xlu0 %v5259, 88
    %v5440 = vpop.permute.xlu0 %5439
    %5444 = vrot.lane.b32.xlu0 %v5436, 120
    %v5445 = vpop.permute.xlu0 %5444
    %5447 = vmatprep.subr.mxu0 0.0
    %5448 = vmatpush1.msra.mxu0 %v5438
    %5449 = vmatprep.subr.mxu0 0.0
    %5450 = vmatpush1.msra.mxu0 %v5440
    %5451 = vmatprep.subr.mxu0 0.0
    %5452 = vmatpush1.msra.mxu0 0.0
    %5453 = vmatprep.subr.mxu0 0.0
    %5454 = vmatpush1.msra.mxu0 0.0
    %5455 = vmatprep.subr.mxu0 0.0
    %5456 = vmatpush1.msra.mxu0 0.0
    %5457 = vmatprep.subr.mxu0 0.0
    %5458 = vmatpush1.msra.mxu0 0.0
    %5459 = vmatprep.subr.mxu0 0.0
    %5460 = vmatpush1.msra.mxu0 0.0
    %5461 = vmatprep.subr.mxu0 0.0
    %5462 = vmatpush1.msra.mxu0 0.0
    %5463 = vmatprep.subr.mxu0 0.0
    %5464 = vmatpush1.msra.mxu0 0.0
    %5465 = vmatprep.subr.mxu0 0.0
    %5466 = vmatpush1.msra.mxu0 0.0
    %5467 = vmatprep.subr.mxu0 0.0
    %5468 = vmatpush1.msra.mxu0 0.0
    %5469 = vmatprep.subr.mxu0 0.0
    %5470 = vmatpush1.msra.mxu0 0.0
    %5471 = vmatprep.subr.mxu0 0.0
    %5472 = vmatpush1.msra.mxu0 0.0
    %5473 = vmatprep.subr.mxu0 0.0
    %5474 = vmatpush1.msra.mxu0 0.0
    %5475 = vmatprep.subr.mxu0 0.0
    %5476 = vmatpush1.msra.mxu0 0.0
    %5477 = vmatprep.subr.mxu0 0.0
    %5478 = vmatpush1.msra.mxu0 0.0
    %5479 = vmatprep.subr.mxu0 0.0
    %5480 = vmatpush1.msra.mxu0 0.0
    %5481 = vmatprep.subr.mxu0 0.0
    %5482 = vmatpush1.msra.mxu0 0.0
    %5483 = vmatprep.subr.mxu0 0.0
    %5484 = vmatpush1.msra.mxu0 0.0
    %5485 = vmatprep.subr.mxu0 0.0
    %5486 = vmatpush1.msra.mxu0 0.0
    %5487 = vmatprep.subr.mxu0 0.0
    %5488 = vmatpush1.msra.mxu0 0.0
    %5489 = vmatprep.subr.mxu0 0.0
    %5490 = vmatpush1.msra.mxu0 0.0
    %5491 = vmatprep.subr.mxu0 0.0
    %5492 = vmatpush1.msra.mxu0 0.0
    %5493 = vmatprep.subr.mxu0 0.0
    %5494 = vmatpush1.msra.mxu0 0.0
    %5495 = vmatprep.subr.mxu0 0.0
    %5496 = vmatpush1.msra.mxu0 0.0
    %5497 = vmatprep.subr.mxu0 0.0
    %5498 = vmatpush1.msra.mxu0 0.0
    %5499 = vmatprep.subr.mxu0 0.0
    %5500 = vmatpush1.msra.mxu0 0.0
    %5501 = vmatprep.subr.mxu0 0.0
    %5502 = vmatpush1.msra.mxu0 0.0
    %5503 = vmatprep.subr.mxu0 0.0
    %5504 = vmatpush1.msra.mxu0 0.0
    %5505 = vmatprep.subr.mxu0 0.0
    %5506 = vmatpush1.msra.mxu0 0.0
    %5507 = vmatprep.subr.mxu0 0.0
    %5508 = vmatpush1.msra.mxu0 0.0
    %5509 = vmatprep.subr.mxu0 0.0
    %5510 = vmatpush1.msra.mxu0 0.0
    %5511 = vmatprep.mubr.f32.mxu0 0.0
    %5512 = vmatmul.mubr.f32.gmra.mrb[0].mxu0 %v4776
    %v5513 = vpop.f32.mrb[0].mxu0
    %v5514 = vadd.f32 %v5445, %v5513
    %v5515 = vpop.f32.mrb[0].mxu0
    %5516 = vdwg.mxu0
    %v5518 = vsel %vm285, %v5346, 0
    %v5521 = vsel %vm285, %v5430, 0
    %5523 = vmatprep.subr.mxu0 0.0
    %5524 = vmatpush1.xpose.msra.mxu0 %v5521
    %5525 = vmatprep.subr.mxu0 0.0
    %5526 = vmatpush1.xpose.msra.mxu0 0.0
    %5527 = vmatprep.subr.mxu0 0.0
    %5528 = vmatpush1.xpose.msra.mxu0 0.0
    %5529 = vmatprep.subr.mxu0 0.0
    %5530 = vmatpush1.xpose.msra.mxu0 0.0
    %5531 = vmatprep.subr.mxu0 0.0
    %5532 = vmatpush1.xpose.msra.mxu0 0.0
    %5533 = vmatprep.subr.mxu0 0.0
    %5534 = vmatpush1.xpose.msra.mxu0 0.0
    %5535 = vmatprep.subr.mxu0 0.0
    %5536 = vmatpush1.xpose.msra.mxu0 0.0
    %5537 = vmatprep.subr.mxu0 0.0
    %5538 = vmatpush1.xpose.msra.mxu0 0.0
    %5539 = vmatprep.subr.mxu0 0.0
    %5540 = vmatpush1.xpose.msra.mxu0 0.0
    %5541 = vmatprep.subr.mxu0 0.0
    %5542 = vmatpush1.xpose.msra.mxu0 0.0
    %5543 = vmatprep.subr.mxu0 0.0
    %5544 = vmatpush1.xpose.msra.mxu0 0.0
    %5545 = vmatprep.subr.mxu0 0.0
    %5546 = vmatpush1.xpose.msra.mxu0 0.0
    %5547 = vmatprep.subr.mxu0 0.0
    %5548 = vmatpush1.xpose.msra.mxu0 0.0
    %5549 = vmatprep.subr.mxu0 0.0
    %5550 = vmatpush1.xpose.msra.mxu0 0.0
    %5551 = vmatprep.subr.mxu0 0.0
    %5552 = vmatpush1.xpose.msra.mxu0 0.0
    %5553 = vmatprep.subr.mxu0 0.0
    %5554 = vmatpush1.xpose.msra.mxu0 0.0
    %5555 = vmatprep.subr.mxu0 0.0
    %5556 = vmatpush1.xpose.msra.mxu0 0.0
    %5557 = vmatprep.subr.mxu0 0.0
    %5558 = vmatpush1.xpose.msra.mxu0 0.0
    %5559 = vmatprep.subr.mxu0 0.0
    %5560 = vmatpush1.xpose.msra.mxu0 0.0
    %5561 = vmatprep.subr.mxu0 0.0
    %5562 = vmatpush1.xpose.msra.mxu0 0.0
    %5563 = vmatprep.subr.mxu0 0.0
    %5564 = vmatpush1.xpose.msra.mxu0 0.0
    %5565 = vmatprep.subr.mxu0 0.0
    %5566 = vmatpush1.xpose.msra.mxu0 0.0
    %5567 = vmatprep.subr.mxu0 0.0
    %5568 = vmatpush1.xpose.msra.mxu0 0.0
    %5569 = vmatprep.subr.mxu0 0.0
    %5570 = vmatpush1.xpose.msra.mxu0 0.0
    %5571 = vmatprep.subr.mxu0 0.0
    %5572 = vmatpush1.xpose.msra.mxu0 0.0
    %5573 = vmatprep.subr.mxu0 0.0
    %5574 = vmatpush1.xpose.msra.mxu0 0.0
    %5575 = vmatprep.subr.mxu0 0.0
    %5576 = vmatpush1.xpose.msra.mxu0 0.0
    %5577 = vmatprep.subr.mxu0 0.0
    %5578 = vmatpush1.xpose.msra.mxu0 0.0
    %5579 = vmatprep.subr.mxu0 0.0
    %5580 = vmatpush1.xpose.msra.mxu0 0.0
    %5581 = vmatprep.subr.mxu0 0.0
    %5582 = vmatpush1.xpose.msra.mxu0 0.0
    %5583 = vmatprep.subr.mxu0 0.0
    %5584 = vmatpush1.xpose.msra.mxu0 0.0
    %5585 = vmatprep.subr.mxu0 0.0
    %5586 = vmatpush1.xpose.msra.mxu0 0.0
    %5587 = vmatprep.mubr.f32.mxu0 0.0
    %5588 = vmatmul.mubr.f32.gmra.mrb[0].mxu0 %v5518
    %v5589 = vpop.f32.mrb[0].mxu0
    %v5590 = vadd.f32 0.0, %v5589
    %v5591 = vpop.f32.mrb[0].mxu0
    %5592 = vdwg.mxu0
    %v5593 = vmul.f32 %v5590, 0.125
    %v5594 = vsel %vm35, -1e+09, %v5593
    %v5595 = vsel %vm364, %v5594, -inf
    %5596 = vmax.xlane.f32.xlu0 %v5595
    %v5597 = vpop.xlane.xlu0 %5596
    %v5598 = vsub.f32 %v5594, %v5597
    %v5599 = vmul.f32 %v5598, 1.442695
    %v5600 = vpow.pop %v5599
    %v5601 = vsel %vm364, %v5600, 0.0
    %5602 = vadd.xlane.f32.xlu0 %v5601
    %v5603 = vpop.xlane.xlu0 %5602
    %v5604 = vrcp.pop %v5603
    %v5605 = vmul.f32 %v5600, %v5604
    %s5606 = scalar_lea.vmem %s9, 56
    %5607 = vst.msk [vmem:[%s5606] sm:$0x1f] %vm364, %v5605
    %v5609 = vsel %vm377, %v5594, 0
    %v5612 = vsel %vm381, %v5514, 0
    %5614 = vmatprep.subr.mxu0 0.0
    %5615 = vmatpush1.msra.mxu0 %v5612
    %5616 = vmatprep.subr.mxu0 0.0
    %5617 = vmatpush1.msra.mxu0 0.0
    %5618 = vmatprep.subr.mxu0 0.0
    %5619 = vmatpush1.msra.mxu0 0.0
    %5620 = vmatprep.subr.mxu0 0.0
    %5621 = vmatpush1.msra.mxu0 0.0
    %5622 = vmatprep.subr.mxu0 0.0
    %5623 = vmatpush1.msra.mxu0 0.0
    %5624 = vmatprep.subr.mxu0 0.0
    %5625 = vmatpush1.msra.mxu0 0.0
    %5626 = vmatprep.subr.mxu0 0.0
    %5627 = vmatpush1.msra.mxu0 0.0
    %5628 = vmatprep.subr.mxu0 0.0
    %5629 = vmatpush1.msra.mxu0 0.0
    %5630 = vmatprep.subr.mxu0 0.0
    %5631 = vmatpush1.msra.mxu0 0.0
    %5632 = vmatprep.subr.mxu0 0.0
    %5633 = vmatpush1.msra.mxu0 0.0
    %5634 = vmatprep.subr.mxu0 0.0
    %5635 = vmatpush1.msra.mxu0 0.0
    %5636 = vmatprep.subr.mxu0 0.0
    %5637 = vmatpush1.msra.mxu0 0.0
    %5638 = vmatprep.subr.mxu0 0.0
    %5639 = vmatpush1.msra.mxu0 0.0
    %5640 = vmatprep.subr.mxu0 0.0
    %5641 = vmatpush1.msra.mxu0 0.0
    %5642 = vmatprep.subr.mxu0 0.0
    %5643 = vmatpush1.msra.mxu0 0.0
    %5644 = vmatprep.subr.mxu0 0.0
    %5645 = vmatpush1.msra.mxu0 0.0
    %5646 = vmatprep.subr.mxu0 0.0
    %5647 = vmatpush1.msra.mxu0 0.0
    %5648 = vmatprep.subr.mxu0 0.0
    %5649 = vmatpush1.msra.mxu0 0.0
    %5650 = vmatprep.subr.mxu0 0.0
    %5651 = vmatpush1.msra.mxu0 0.0
    %5652 = vmatprep.subr.mxu0 0.0
    %5653 = vmatpush1.msra.mxu0 0.0
    %5654 = vmatprep.subr.mxu0 0.0
    %5655 = vmatpush1.msra.mxu0 0.0
    %5656 = vmatprep.subr.mxu0 0.0
    %5657 = vmatpush1.msra.mxu0 0.0
    %5658 = vmatprep.subr.mxu0 0.0
    %5659 = vmatpush1.msra.mxu0 0.0
    %5660 = vmatprep.subr.mxu0 0.0
    %5661 = vmatpush1.msra.mxu0 0.0
    %5662 = vmatprep.subr.mxu0 0.0
    %5663 = vmatpush1.msra.mxu0 0.0
    %5664 = vmatprep.subr.mxu0 0.0
    %5665 = vmatpush1.msra.mxu0 0.0
    %5666 = vmatprep.subr.mxu0 0.0
    %5667 = vmatpush1.msra.mxu0 0.0
    %5668 = vmatprep.subr.mxu0 0.0
    %5669 = vmatpush1.msra.mxu0 0.0
    %5670 = vmatprep.subr.mxu0 0.0
    %5671 = vmatpush1.msra.mxu0 0.0
    %5672 = vmatprep.subr.mxu0 0.0
    %5673 = vmatpush1.msra.mxu0 0.0
    %5674 = vmatprep.subr.mxu0 0.0
    %5675 = vmatpush1.msra.mxu0 0.0
    %5676 = vmatprep.subr.mxu0 0.0
    %5677 = vmatpush1.msra.mxu0 0.0
    %5678 = vmatprep.mubr.f32.mxu0 0.0
    %5679 = vmatmul.mubr.f32.gmra.mrb[0].mxu0 %v5609
    %v5680 = vpop.f32.mrb[0].mxu0
    %v5681 = vadd.f32 0.0, %v5680
    %v5682 = vpop.f32.mrb[0].mxu0
    %5683 = vdwg.mxu0
    %5684 = vrot.lane.b32.xlu0 %v5259, 80
    %v5685 = vpop.permute.xlu0 %5684
    %v5688 = vsel %vm285, %v5681, 0
    %5690 = vmatprep.subr.mxu0 0.0
    %5691 = vmatpush1.msra.mxu0 %v5685
    %5692 = vmatprep.subr.mxu0 0.0
    %5693 = vmatpush1.msra.mxu0 0.0
    %5694 = vmatprep.subr.mxu0 0.0
    %5695 = vmatpush1.msra.mxu0 0.0
    %5696 = vmatprep.subr.mxu0 0.0
    %5697 = vmatpush1.msra.mxu0 0.0
    %5698 = vmatprep.subr.mxu0 0.0
    %5699 = vmatpush1.msra.mxu0 0.0
    %5700 = vmatprep.subr.mxu0 0.0
    %5701 = vmatpush1.msra.mxu0 0.0
    %5702 = vmatprep.subr.mxu0 0.0
    %5703 = vmatpush1.msra.mxu0 0.0
    %5704 = vmatprep.subr.mxu0 0.0
    %5705 = vmatpush1.msra.mxu0 0.0
    %5706 = vmatprep.subr.mxu0 0.0
    %5707 = vmatpush1.msra.mxu0 0.0
    %5708 = vmatprep.subr.mxu0 0.0
    %5709 = vmatpush1.msra.mxu0 0.0
    %5710 = vmatprep.subr.mxu0 0.0
    %5711 = vmatpush1.msra.mxu0 0.0
    %5712 = vmatprep.subr.mxu0 0.0
    %5713 = vmatpush1.msra.mxu0 0.0
    %5714 = vmatprep.subr.mxu0 0.0
    %5715 = vmatpush1.msra.mxu0 0.0
    %5716 = vmatprep.subr.mxu0 0.0
    %5717 = vmatpush1.msra.mxu0 0.0
    %5718 = vmatprep.subr.mxu0 0.0
    %5719 = vmatpush1.msra.mxu0 0.0
    %5720 = vmatprep.subr.mxu0 0.0
    %5721 = vmatpush1.msra.mxu0 0.0
    %5722 = vmatprep.subr.mxu0 0.0
    %5723 = vmatpush1.msra.mxu0 0.0
    %5724 = vmatprep.subr.mxu0 0.0
    %5725 = vmatpush1.msra.mxu0 0.0
    %5726 = vmatprep.subr.mxu0 0.0
    %5727 = vmatpush1.msra.mxu0 0.0
    %5728 = vmatprep.subr.mxu0 0.0
    %5729 = vmatpush1.msra.mxu0 0.0
    %5730 = vmatprep.subr.mxu0 0.0
    %5731 = vmatpush1.msra.mxu0 0.0
    %5732 = vmatprep.subr.mxu0 0.0
    %5733 = vmatpush1.msra.mxu0 0.0
    %5734 = vmatprep.subr.mxu0 0.0
    %5735 = vmatpush1.msra.mxu0 0.0
    %5736 = vmatprep.subr.mxu0 0.0
    %5737 = vmatpush1.msra.mxu0 0.0
    %5738 = vmatprep.subr.mxu0 0.0
    %5739 = vmatpush1.msra.mxu0 0.0
    %5740 = vmatprep.subr.mxu0 0.0
    %5741 = vmatpush1.msra.mxu0 0.0
    %5742 = vmatprep.subr.mxu0 0.0
    %5743 = vmatpush1.msra.mxu0 0.0
    %5744 = vmatprep.subr.mxu0 0.0
    %5745 = vmatpush1.msra.mxu0 0.0
    %5746 = vmatprep.subr.mxu0 0.0
    %5747 = vmatpush1.msra.mxu0 0.0
    %5748 = vmatprep.subr.mxu0 0.0
    %5749 = vmatpush1.msra.mxu0 0.0
    %5750 = vmatprep.subr.mxu0 0.0
    %5751 = vmatpush1.msra.mxu0 0.0
    %5752 = vmatprep.subr.mxu0 0.0
    %5753 = vmatpush1.msra.mxu0 0.0
    %5754 = vmatprep.mubr.f32.mxu0 0.0
    %5755 = vmatmul.mubr.f32.gmra.mrb[0].mxu0 %v5688
    %v5756 = vpop.f32.mrb[0].mxu0
    %v5757 = vadd.f32 0.0, %v5756
    %v5758 = vpop.f32.mrb[0].mxu0
    %5759 = vdwg.mxu0
    %v5760 = vadd.f32 %v5257, %v5757
    %v5761 = vld [vmem:[%s7 + $0x1c] sm:$0x1]
    %v5762 = vld [vmem:[%s7 + $0x1d] sm:$0x1]
    %v5763 = vadd.f32 %v5760, %v4764
    %v5764 = vsel %vm1042, %v5763, 0.0
    %5765 = vadd.xlane.f32.xlu0 %v5764
    %v5766 = vpop.xlane.xlu0 %5765
    %v5767 = vmul.f32 %v5766, %v1046
    %v5768 = vsub.f32 %v5763, %v5767
    %v5769 = vmul.f32 %v5768, %v5768
    %v5770 = vsel %vm1042, %v5769, 0.0
    %5771 = vadd.xlane.f32.xlu0 %v5770
    %v5772 = vpop.xlane.xlu0 %5771
    %v5773 = vmul.f32 %v5772, %v1046
    %v5774 = vadd.f32 %v5773, 1e-05
    %v5775 = vrsqrt.pop %v5774
    %v5776 = vmul.f32 %v5768, %v5775
    %v5777 = vlaneseq
    %v5778 = vshrl.u32 %v5777, 7
    %v5779 = vsub.s32 0, %v5778
    %v5780 = vrot.slane %v5761, %v5779
    %v5781 = vmul.f32 %v5776, %v5780
    %v5782 = vlaneseq
    %v5783 = vshrl.u32 %v5782, 7
    %v5784 = vsub.s32 0, %v5783
    %v5785 = vrot.slane %v5762, %v5784
    %v5786 = vadd.f32 %v5781, %v5785
    %v5787 = vld [vmem:[%s7 + $0x21] sm:$0x1]
    %v5788 = vld [vmem:[%s5 + $0x10] sm:$0xff]
    %v5789 = vld [vmem:[%s5 + $0x38] sm:$0xff]
    %v5790 = vld [vmem:[%s7 + $0x1e] sm:$0x1]
    %v5791 = vld [vmem:[%s7 + $0x1f] sm:$0x1]
    %v5792 = vld [vmem:[%s7 + $0x20] sm:$0x1]
    %v5793 = vlaneseq
    %v5794 = vshrl.u32 %v5793, 7
    %v5795 = vsub.s32 0, %v5794
    %v5796 = vrot.slane %v5790, %v5795
    %5799 = vrot.lane.b32.xlu0 %v5788, 64
    %v5800 = vpop.permute.xlu0 %5799
    %5801 = vrot.lane.b32.xlu0 %v5789, 64
    %v5802 = vpop.permute.xlu0 %5801
    %v5806 = vsel %vm49, %v5786, 0
    %5808 = vmatprep.subr.mxu0 0.0
    %5809 = vmatpush1.msra.mxu0 %v5800
    %5810 = vmatprep.subr.mxu0 0.0
    %5811 = vmatpush1.msra.mxu0 %v5802
    %5812 = vmatprep.subr.mxu0 0.0
    %5813 = vmatpush1.msra.mxu0 0.0
    %5814 = vmatprep.subr.mxu0 0.0
    %5815 = vmatpush1.msra.mxu0 0.0
    %5816 = vmatprep.subr.mxu0 0.0
    %5817 = vmatpush1.msra.mxu0 0.0
    %5818 = vmatprep.subr.mxu0 0.0
    %5819 = vmatpush1.msra.mxu0 0.0
    %5820 = vmatprep.subr.mxu0 0.0
    %5821 = vmatpush1.msra.mxu0 0.0
    %5822 = vmatprep.subr.mxu0 0.0
    %5823 = vmatpush1.msra.mxu0 0.0
    %5824 = vmatprep.subr.mxu0 0.0
    %5825 = vmatpush1.msra.mxu0 0.0
    %5826 = vmatprep.subr.mxu0 0.0
    %5827 = vmatpush1.msra.mxu0 0.0
    %5828 = vmatprep.subr.mxu0 0.0
    %5829 = vmatpush1.msra.mxu0 0.0
    %5830 = vmatprep.subr.mxu0 0.0
    %5831 = vmatpush1.msra.mxu0 0.0
    %5832 = vmatprep.subr.mxu0 0.0
    %5833 = vmatpush1.msra.mxu0 0.0
    %5834 = vmatprep.subr.mxu0 0.0
    %5835 = vmatpush1.msra.mxu0 0.0
    %5836 = vmatprep.subr.mxu0 0.0
    %5837 = vmatpush1.msra.mxu0 0.0
    %5838 = vmatprep.subr.mxu0 0.0
    %5839 = vmatpush1.msra.mxu0 0.0
    %5840 = vmatprep.subr.mxu0 0.0
    %5841 = vmatpush1.msra.mxu0 0.0
    %5842 = vmatprep.subr.mxu0 0.0
    %5843 = vmatpush1.msra.mxu0 0.0
    %5844 = vmatprep.subr.mxu0 0.0
    %5845 = vmatpush1.msra.mxu0 0.0
    %5846 = vmatprep.subr.mxu0 0.0
    %5847 = vmatpush1.msra.mxu0 0.0
    %5848 = vmatprep.subr.mxu0 0.0
    %5849 = vmatpush1.msra.mxu0 0.0
    %5850 = vmatprep.subr.mxu0 0.0
    %5851 = vmatpush1.msra.mxu0 0.0
    %5852 = vmatprep.subr.mxu0 0.0
    %5853 = vmatpush1.msra.mxu0 0.0
    %5854 = vmatprep.subr.mxu0 0.0
    %5855 = vmatpush1.msra.mxu0 0.0
    %5856 = vmatprep.subr.mxu0 0.0
    %5857 = vmatpush1.msra.mxu0 0.0
    %5858 = vmatprep.subr.mxu0 0.0
    %5859 = vmatpush1.msra.mxu0 0.0
    %5860 = vmatprep.subr.mxu0 0.0
    %5861 = vmatpush1.msra.mxu0 0.0
    %5862 = vmatprep.subr.mxu0 0.0
    %5863 = vmatpush1.msra.mxu0 0.0
    %5864 = vmatprep.subr.mxu0 0.0
    %5865 = vmatpush1.msra.mxu0 0.0
    %5866 = vmatprep.subr.mxu0 0.0
    %5867 = vmatpush1.msra.mxu0 0.0
    %5868 = vmatprep.subr.mxu0 0.0
    %5869 = vmatpush1.msra.mxu0 0.0
    %5870 = vmatprep.subr.mxu0 0.0
    %5871 = vmatpush1.msra.mxu0 0.0
    %5872 = vmatprep.mubr.f32.mxu0 0.0
    %5873 = vmatmul.mubr.f32.gmra.mrb[0].mxu0 %v5806
    %v5874 = vpop.f32.mrb[0].mxu0
    %v5875 = vadd.f32 %v5796, %v5874
    %v5876 = vpop.f32.mrb[0].mxu0
    %5877 = vdwg.mxu0
    %v5878 = vlaneseq
    %v5879 = vshrl.u32 %v5878, 7
    %v5880 = vsub.s32 0, %v5879
    %v5881 = vrot.slane %v5791, %v5880
    %5882 = vrot.lane.b32.xlu0 %v5788, 48
    %v5883 = vpop.permute.xlu0 %5882
    %5884 = vrot.lane.b32.xlu0 %v5789, 48
    %v5885 = vpop.permute.xlu0 %5884
    %5888 = vmatprep.subr.mxu0 0.0
    %5889 = vmatpush1.msra.mxu0 %v5883
    %5890 = vmatprep.subr.mxu0 0.0
    %5891 = vmatpush1.msra.mxu0 %v5885
    %5892 = vmatprep.subr.mxu0 0.0
    %5893 = vmatpush1.msra.mxu0 0.0
    %5894 = vmatprep.subr.mxu0 0.0
    %5895 = vmatpush1.msra.mxu0 0.0
    %5896 = vmatprep.subr.mxu0 0.0
    %5897 = vmatpush1.msra.mxu0 0.0
    %5898 = vmatprep.subr.mxu0 0.0
    %5899 = vmatpush1.msra.mxu0 0.0
    %5900 = vmatprep.subr.mxu0 0.0
    %5901 = vmatpush1.msra.mxu0 0.0
    %5902 = vmatprep.subr.mxu0 0.0
    %5903 = vmatpush1.msra.mxu0 0.0
    %5904 = vmatprep.subr.mxu0 0.0
    %5905 = vmatpush1.msra.mxu0 0.0
    %5906 = vmatprep.subr.mxu0 0.0
    %5907 = vmatpush1.msra.mxu0 0.0
    %5908 = vmatprep.subr.mxu0 0.0
    %5909 = vmatpush1.msra.mxu0 0.0
    %5910 = vmatprep.subr.mxu0 0.0
    %5911 = vmatpush1.msra.mxu0 0.0
    %5912 = vmatprep.subr.mxu0 0.0
    %5913 = vmatpush1.msra.mxu0 0.0
    %5914 = vmatprep.subr.mxu0 0.0
    %5915 = vmatpush1.msra.mxu0 0.0
    %5916 = vmatprep.subr.mxu0 0.0
    %5917 = vmatpush1.msra.mxu0 0.0
    %5918 = vmatprep.subr.mxu0 0.0
    %5919 = vmatpush1.msra.mxu0 0.0
    %5920 = vmatprep.subr.mxu0 0.0
    %5921 = vmatpush1.msra.mxu0 0.0
    %5922 = vmatprep.subr.mxu0 0.0
    %5923 = vmatpush1.msra.mxu0 0.0
    %5924 = vmatprep.subr.mxu0 0.0
    %5925 = vmatpush1.msra.mxu0 0.0
    %5926 = vmatprep.subr.mxu0 0.0
    %5927 = vmatpush1.msra.mxu0 0.0
    %5928 = vmatprep.subr.mxu0 0.0
    %5929 = vmatpush1.msra.mxu0 0.0
    %5930 = vmatprep.subr.mxu0 0.0
    %5931 = vmatpush1.msra.mxu0 0.0
    %5932 = vmatprep.subr.mxu0 0.0
    %5933 = vmatpush1.msra.mxu0 0.0
    %5934 = vmatprep.subr.mxu0 0.0
    %5935 = vmatpush1.msra.mxu0 0.0
    %5936 = vmatprep.subr.mxu0 0.0
    %5937 = vmatpush1.msra.mxu0 0.0
    %5938 = vmatprep.subr.mxu0 0.0
    %5939 = vmatpush1.msra.mxu0 0.0
    %5940 = vmatprep.subr.mxu0 0.0
    %5941 = vmatpush1.msra.mxu0 0.0
    %5942 = vmatprep.subr.mxu0 0.0
    %5943 = vmatpush1.msra.mxu0 0.0
    %5944 = vmatprep.subr.mxu0 0.0
    %5945 = vmatpush1.msra.mxu0 0.0
    %5946 = vmatprep.subr.mxu0 0.0
    %5947 = vmatpush1.msra.mxu0 0.0
    %5948 = vmatprep.subr.mxu0 0.0
    %5949 = vmatpush1.msra.mxu0 0.0
    %5950 = vmatprep.subr.mxu0 0.0
    %5951 = vmatpush1.msra.mxu0 0.0
    %5952 = vmatprep.mubr.f32.mxu0 0.0
    %5953 = vmatmul.mubr.f32.gmra.mrb[0].mxu0 %v3623
    %v5954 = vpop.f32.mrb[0].mxu0
    %v5955 = vadd.f32 %v5881, %v5954
    %v5956 = vpop.f32.mrb[0].mxu0
    %5957 = vdwg.mxu0
    %v5958 = vlaneseq
    %v5959 = vshrl.u32 %v5958, 7
    %v5960 = vsub.s32 0, %v5959
    %v5961 = vrot.slane %v5792, %v5960
    %5962 = vrot.lane.b32.xlu0 %v5788, 32
    %v5963 = vpop.permute.xlu0 %5962
    %5964 = vrot.lane.b32.xlu0 %v5789, 32
    %v5965 = vpop.permute.xlu0 %5964
    %5968 = vmatprep.subr.mxu0 0.0
    %5969 = vmatpush1.msra.mxu0 %v5963
    %5970 = vmatprep.subr.mxu0 0.0
    %5971 = vmatpush1.msra.mxu0 %v5965
    %5972 = vmatprep.subr.mxu0 0.0
    %5973 = vmatpush1.msra.mxu0 0.0
    %5974 = vmatprep.subr.mxu0 0.0
    %5975 = vmatpush1.msra.mxu0 0.0
    %5976 = vmatprep.subr.mxu0 0.0
    %5977 = vmatpush1.msra.mxu0 0.0
    %5978 = vmatprep.subr.mxu0 0.0
    %5979 = vmatpush1.msra.mxu0 0.0
    %5980 = vmatprep.subr.mxu0 0.0
    %5981 = vmatpush1.msra.mxu0 0.0
    %5982 = vmatprep.subr.mxu0 0.0
    %5983 = vmatpush1.msra.mxu0 0.0
    %5984 = vmatprep.subr.mxu0 0.0
    %5985 = vmatpush1.msra.mxu0 0.0
    %5986 = vmatprep.subr.mxu0 0.0
    %5987 = vmatpush1.msra.mxu0 0.0
    %5988 = vmatprep.subr.mxu0 0.0
    %5989 = vmatpush1.msra.mxu0 0.0
    %5990 = vmatprep.subr.mxu0 0.0
    %5991 = vmatpush1.msra.mxu0 0.0
    %5992 = vmatprep.subr.mxu0 0.0
    %5993 = vmatpush1.msra.mxu0 0.0
    %5994 = vmatprep.subr.mxu0 0.0
    %5995 = vmatpush1.msra.mxu0 0.0
    %5996 = vmatprep.subr.mxu0 0.0
    %5997 = vmatpush1.msra.mxu0 0.0
    %5998 = vmatprep.subr.mxu0 0.0
    %5999 = vmatpush1.msra.mxu0 0.0
    %6000 = vmatprep.subr.mxu0 0.0
    %6001 = vmatpush1.msra.mxu0 0.0
    %6002 = vmatprep.subr.mxu0 0.0
    %6003 = vmatpush1.msra.mxu0 0.0
    %6004 = vmatprep.subr.mxu0 0.0
    %6005 = vmatpush1.msra.mxu0 0.0
    %6006 = vmatprep.subr.mxu0 0.0
    %6007 = vmatpush1.msra.mxu0 0.0
    %6008 = vmatprep.subr.mxu0 0.0
    %6009 = vmatpush1.msra.mxu0 0.0
    %6010 = vmatprep.subr.mxu0 0.0
    %6011 = vmatpush1.msra.mxu0 0.0
    %6012 = vmatprep.subr.mxu0 0.0
    %6013 = vmatpush1.msra.mxu0 0.0
    %6014 = vmatprep.subr.mxu0 0.0
    %6015 = vmatpush1.msra.mxu0 0.0
    %6016 = vmatprep.subr.mxu0 0.0
    %6017 = vmatpush1.msra.mxu0 0.0
    %6018 = vmatprep.subr.mxu0 0.0
    %6019 = vmatpush1.msra.mxu0 0.0
    %6020 = vmatprep.subr.mxu0 0.0
    %6021 = vmatpush1.msra.mxu0 0.0
    %6022 = vmatprep.subr.mxu0 0.0
    %6023 = vmatpush1.msra.mxu0 0.0
    %6024 = vmatprep.subr.mxu0 0.0
    %6025 = vmatpush1.msra.mxu0 0.0
    %6026 = vmatprep.subr.mxu0 0.0
    %6027 = vmatpush1.msra.mxu0 0.0
    %6028 = vmatprep.subr.mxu0 0.0
    %6029 = vmatpush1.msra.mxu0 0.0
    %6030 = vmatprep.subr.mxu0 0.0
    %6031 = vmatpush1.msra.mxu0 0.0
    %6032 = vmatprep.mubr.f32.mxu0 0.0
    %6033 = vmatmul.mubr.f32.gmra.mrb[0].mxu0 %v3623
    %v6034 = vpop.f32.mrb[0].mxu0
    %v6035 = vadd.f32 %v5961, %v6034
    %v6036 = vpop.f32.mrb[0].mxu0
    %6037 = vdwg.mxu0
    %v6039 = vsel %vm285, %v5875, 0
    %v6042 = vsel %vm285, %v5955, 0
    %6044 = vmatprep.subr.mxu0 0.0
    %6045 = vmatpush1.xpose.msra.mxu0 %v6042
    %6046 = vmatprep.subr.mxu0 0.0
    %6047 = vmatpush1.xpose.msra.mxu0 0.0
    %6048 = vmatprep.subr.mxu0 0.0
    %6049 = vmatpush1.xpose.msra.mxu0 0.0
    %6050 = vmatprep.subr.mxu0 0.0
    %6051 = vmatpush1.xpose.msra.mxu0 0.0
    %6052 = vmatprep.subr.mxu0 0.0
    %6053 = vmatpush1.xpose.msra.mxu0 0.0
    %6054 = vmatprep.subr.mxu0 0.0
    %6055 = vmatpush1.xpose.msra.mxu0 0.0
    %6056 = vmatprep.subr.mxu0 0.0
    %6057 = vmatpush1.xpose.msra.mxu0 0.0
    %6058 = vmatprep.subr.mxu0 0.0
    %6059 = vmatpush1.xpose.msra.mxu0 0.0
    %6060 = vmatprep.subr.mxu0 0.0
    %6061 = vmatpush1.xpose.msra.mxu0 0.0
    %6062 = vmatprep.subr.mxu0 0.0
    %6063 = vmatpush1.xpose.msra.mxu0 0.0
    %6064 = vmatprep.subr.mxu0 0.0
    %6065 = vmatpush1.xpose.msra.mxu0 0.0
    %6066 = vmatprep.subr.mxu0 0.0
    %6067 = vmatpush1.xpose.msra.mxu0 0.0
    %6068 = vmatprep.subr.mxu0 0.0
    %6069 = vmatpush1.xpose.msra.mxu0 0.0
    %6070 = vmatprep.subr.mxu0 0.0
    %6071 = vmatpush1.xpose.msra.mxu0 0.0
    %6072 = vmatprep.subr.mxu0 0.0
    %6073 = vmatpush1.xpose.msra.mxu0 0.0
    %6074 = vmatprep.subr.mxu0 0.0
    %6075 = vmatpush1.xpose.msra.mxu0 0.0
    %6076 = vmatprep.subr.mxu0 0.0
    %6077 = vmatpush1.xpose.msra.mxu0 0.0
    %6078 = vmatprep.subr.mxu0 0.0
    %6079 = vmatpush1.xpose.msra.mxu0 0.0
    %6080 = vmatprep.subr.mxu0 0.0
    %6081 = vmatpush1.xpose.msra.mxu0 0.0
    %6082 = vmatprep.subr.mxu0 0.0
    %6083 = vmatpush1.xpose.msra.mxu0 0.0
    %6084 = vmatprep.subr.mxu0 0.0
    %6085 = vmatpush1.xpose.msra.mxu0 0.0
    %6086 = vmatprep.subr.mxu0 0.0
    %6087 = vmatpush1.xpose.msra.mxu0 0.0
    %6088 = vmatprep.subr.mxu0 0.0
    %6089 = vmatpush1.xpose.msra.mxu0 0.0
    %6090 = vmatprep.subr.mxu0 0.0
    %6091 = vmatpush1.xpose.msra.mxu0 0.0
    %6092 = vmatprep.subr.mxu0 0.0
    %6093 = vmatpush1.xpose.msra.mxu0 0.0
    %6094 = vmatprep.subr.mxu0 0.0
    %6095 = vmatpush1.xpose.msra.mxu0 0.0
    %6096 = vmatprep.subr.mxu0 0.0
    %6097 = vmatpush1.xpose.msra.mxu0 0.0
    %6098 = vmatprep.subr.mxu0 0.0
    %6099 = vmatpush1.xpose.msra.mxu0 0.0
    %6100 = vmatprep.subr.mxu0 0.0
    %6101 = vmatpush1.xpose.msra.mxu0 0.0
    %6102 = vmatprep.subr.mxu0 0.0
    %6103 = vmatpush1.xpose.msra.mxu0 0.0
    %6104 = vmatprep.subr.mxu0 0.0
    %6105 = vmatpush1.xpose.msra.mxu0 0.0
    %6106 = vmatprep.subr.mxu0 0.0
    %6107 = vmatpush1.xpose.msra.mxu0 0.0
    %6108 = vmatprep.mubr.f32.mxu0 0.0
    %6109 = vmatmul.mubr.f32.gmra.mrb[0].mxu0 %v6039
    %v6110 = vpop.f32.mrb[0].mxu0
    %v6111 = vadd.f32 0.0, %v6110
    %v6112 = vpop.f32.mrb[0].mxu0
    %6113 = vdwg.mxu0
    %v6114 = vmul.f32 %v6111, 0.125
    %v6115 = vsel %vm37, -1e+09, %v6114
    %v6116 = vsel %vm364, %v6115, -inf
    %6117 = vmax.xlane.f32.xlu0 %v6116
    %v6118 = vpop.xlane.xlu0 %6117
    %v6119 = vsub.f32 %v6115, %v6118
    %v6120 = vmul.f32 %v6119, 1.442695
    %v6121 = vpow.pop %v6120
    %v6122 = vsel %vm364, %v6121, 0.0
    %6123 = vadd.xlane.f32.xlu0 %v6122
    %v6124 = vpop.xlane.xlu0 %6123
    %v6125 = vrcp.pop %v6124
    %v6126 = vmul.f32 %v6121, %v6125
    %s6127 = scalar_lea.vmem %s9, 80
    %6128 = vst.msk [vmem:[%s6127] sm:$0x1f] %vm364, %v6126
    %v6130 = vsel %vm377, %v6115, 0
    %v6133 = vsel %vm381, %v6035, 0
    %6135 = vmatprep.subr.mxu0 0.0
    %6136 = vmatpush1.msra.mxu0 %v6133
    %6137 = vmatprep.subr.mxu0 0.0
    %6138 = vmatpush1.msra.mxu0 0.0
    %6139 = vmatprep.subr.mxu0 0.0
    %6140 = vmatpush1.msra.mxu0 0.0
    %6141 = vmatprep.subr.mxu0 0.0
    %6142 = vmatpush1.msra.mxu0 0.0
    %6143 = vmatprep.subr.mxu0 0.0
    %6144 = vmatpush1.msra.mxu0 0.0
    %6145 = vmatprep.subr.mxu0 0.0
    %6146 = vmatpush1.msra.mxu0 0.0
    %6147 = vmatprep.subr.mxu0 0.0
    %6148 = vmatpush1.msra.mxu0 0.0
    %6149 = vmatprep.subr.mxu0 0.0
    %6150 = vmatpush1.msra.mxu0 0.0
    %6151 = vmatprep.subr.mxu0 0.0
    %6152 = vmatpush1.msra.mxu0 0.0
    %6153 = vmatprep.subr.mxu0 0.0
    %6154 = vmatpush1.msra.mxu0 0.0
    %6155 = vmatprep.subr.mxu0 0.0
    %6156 = vmatpush1.msra.mxu0 0.0
    %6157 = vmatprep.subr.mxu0 0.0
    %6158 = vmatpush1.msra.mxu0 0.0
    %6159 = vmatprep.subr.mxu0 0.0
    %6160 = vmatpush1.msra.mxu0 0.0
    %6161 = vmatprep.subr.mxu0 0.0
    %6162 = vmatpush1.msra.mxu0 0.0
    %6163 = vmatprep.subr.mxu0 0.0
    %6164 = vmatpush1.msra.mxu0 0.0
    %6165 = vmatprep.subr.mxu0 0.0
    %6166 = vmatpush1.msra.mxu0 0.0
    %6167 = vmatprep.subr.mxu0 0.0
    %6168 = vmatpush1.msra.mxu0 0.0
    %6169 = vmatprep.subr.mxu0 0.0
    %6170 = vmatpush1.msra.mxu0 0.0
    %6171 = vmatprep.subr.mxu0 0.0
    %6172 = vmatpush1.msra.mxu0 0.0
    %6173 = vmatprep.subr.mxu0 0.0
    %6174 = vmatpush1.msra.mxu0 0.0
    %6175 = vmatprep.subr.mxu0 0.0
    %6176 = vmatpush1.msra.mxu0 0.0
    %6177 = vmatprep.subr.mxu0 0.0
    %6178 = vmatpush1.msra.mxu0 0.0
    %6179 = vmatprep.subr.mxu0 0.0
    %6180 = vmatpush1.msra.mxu0 0.0
    %6181 = vmatprep.subr.mxu0 0.0
    %6182 = vmatpush1.msra.mxu0 0.0
    %6183 = vmatprep.subr.mxu0 0.0
    %6184 = vmatpush1.msra.mxu0 0.0
    %6185 = vmatprep.subr.mxu0 0.0
    %6186 = vmatpush1.msra.mxu0 0.0
    %6187 = vmatprep.subr.mxu0 0.0
    %6188 = vmatpush1.msra.mxu0 0.0
    %6189 = vmatprep.subr.mxu0 0.0
    %6190 = vmatpush1.msra.mxu0 0.0
    %6191 = vmatprep.subr.mxu0 0.0
    %6192 = vmatpush1.msra.mxu0 0.0
    %6193 = vmatprep.subr.mxu0 0.0
    %6194 = vmatpush1.msra.mxu0 0.0
    %6195 = vmatprep.subr.mxu0 0.0
    %6196 = vmatpush1.msra.mxu0 0.0
    %6197 = vmatprep.subr.mxu0 0.0
    %6198 = vmatpush1.msra.mxu0 0.0
    %6199 = vmatprep.mubr.f32.mxu0 0.0
    %6200 = vmatmul.mubr.f32.gmra.mrb[0].mxu0 %v6130
    %v6201 = vpop.f32.mrb[0].mxu0
    %v6202 = vadd.f32 0.0, %v6201
    %v6203 = vpop.f32.mrb[0].mxu0
    %6204 = vdwg.mxu0
    %6205 = vrot.lane.b32.xlu0 %v5788, 16
    %v6206 = vpop.permute.xlu0 %6205
    %v6209 = vsel %vm285, %v6202, 0
    %6211 = vmatprep.subr.mxu0 0.0
    %6212 = vmatpush1.msra.mxu0 %v6206
    %6213 = vmatprep.subr.mxu0 0.0
    %6214 = vmatpush1.msra.mxu0 0.0
    %6215 = vmatprep.subr.mxu0 0.0
    %6216 = vmatpush1.msra.mxu0 0.0
    %6217 = vmatprep.subr.mxu0 0.0
    %6218 = vmatpush1.msra.mxu0 0.0
    %6219 = vmatprep.subr.mxu0 0.0
    %6220 = vmatpush1.msra.mxu0 0.0
    %6221 = vmatprep.subr.mxu0 0.0
    %6222 = vmatpush1.msra.mxu0 0.0
    %6223 = vmatprep.subr.mxu0 0.0
    %6224 = vmatpush1.msra.mxu0 0.0
    %6225 = vmatprep.subr.mxu0 0.0
    %6226 = vmatpush1.msra.mxu0 0.0
    %6227 = vmatprep.subr.mxu0 0.0
    %6228 = vmatpush1.msra.mxu0 0.0
    %6229 = vmatprep.subr.mxu0 0.0
    %6230 = vmatpush1.msra.mxu0 0.0
    %6231 = vmatprep.subr.mxu0 0.0
    %6232 = vmatpush1.msra.mxu0 0.0
    %6233 = vmatprep.subr.mxu0 0.0
    %6234 = vmatpush1.msra.mxu0 0.0
    %6235 = vmatprep.subr.mxu0 0.0
    %6236 = vmatpush1.msra.mxu0 0.0
    %6237 = vmatprep.subr.mxu0 0.0
    %6238 = vmatpush1.msra.mxu0 0.0
    %6239 = vmatprep.subr.mxu0 0.0
    %6240 = vmatpush1.msra.mxu0 0.0
    %6241 = vmatprep.subr.mxu0 0.0
    %6242 = vmatpush1.msra.mxu0 0.0
    %6243 = vmatprep.subr.mxu0 0.0
    %6244 = vmatpush1.msra.mxu0 0.0
    %6245 = vmatprep.subr.mxu0 0.0
    %6246 = vmatpush1.msra.mxu0 0.0
    %6247 = vmatprep.subr.mxu0 0.0
    %6248 = vmatpush1.msra.mxu0 0.0
    %6249 = vmatprep.subr.mxu0 0.0
    %6250 = vmatpush1.msra.mxu0 0.0
    %6251 = vmatprep.subr.mxu0 0.0
    %6252 = vmatpush1.msra.mxu0 0.0
    %6253 = vmatprep.subr.mxu0 0.0
    %6254 = vmatpush1.msra.mxu0 0.0
    %6255 = vmatprep.subr.mxu0 0.0
    %6256 = vmatpush1.msra.mxu0 0.0
    %6257 = vmatprep.subr.mxu0 0.0
    %6258 = vmatpush1.msra.mxu0 0.0
    %6259 = vmatprep.subr.mxu0 0.0
    %6260 = vmatpush1.msra.mxu0 0.0
    %6261 = vmatprep.subr.mxu0 0.0
    %6262 = vmatpush1.msra.mxu0 0.0
    %6263 = vmatprep.subr.mxu0 0.0
    %6264 = vmatpush1.msra.mxu0 0.0
    %6265 = vmatprep.subr.mxu0 0.0
    %6266 = vmatpush1.msra.mxu0 0.0
    %6267 = vmatprep.subr.mxu0 0.0
    %6268 = vmatpush1.msra.mxu0 0.0
    %6269 = vmatprep.subr.mxu0 0.0
    %6270 = vmatpush1.msra.mxu0 0.0
    %6271 = vmatprep.subr.mxu0 0.0
    %6272 = vmatpush1.msra.mxu0 0.0
    %6273 = vmatprep.subr.mxu0 0.0
    %6274 = vmatpush1.msra.mxu0 0.0
    %6275 = vmatprep.mubr.f32.mxu0 0.0
    %6276 = vmatmul.mubr.f32.gmra.mrb[0].mxu0 %v6209
    %v6277 = vpop.f32.mrb[0].mxu0
    %v6278 = vadd.f32 0.0, %v6277
    %v6279 = vpop.f32.mrb[0].mxu0
    %6280 = vdwg.mxu0
    %v6281 = vlaneseq
    %v6282 = vshrl.u32 %v6281, 7
    %v6283 = vsub.s32 0, %v6282
    %v6284 = vrot.slane %v5787, %v6283
    %v6285 = vadd.f32 %v6284, %v6278
    %v6286 = vld [vmem:[%s5 + $0x10] sm:$0xff]
    %v6287 = vld [vmem:[%s5 + $0x38] sm:$0xff]
    %v6288 = vld [vmem:[%s7 + $0x1e] sm:$0x1]
    %v6289 = vld [vmem:[%s7 + $0x1f] sm:$0x1]
    %v6290 = vld [vmem:[%s7 + $0x20] sm:$0x1]
    %v6291 = vlaneseq
    %v6292 = vshrl.u32 %v6291, 7
    %v6293 = vsub.s32 0, %v6292
    %v6294 = vrot.slane %v6288, %v6293
    %6297 = vrot.lane.b32.xlu0 %v6286, 56
    %v6298 = vpop.permute.xlu0 %6297
    %6299 = vrot.lane.b32.xlu0 %v6287, 56
    %v6300 = vpop.permute.xlu0 %6299
    %6304 = vrot.lane.b32.xlu0 %v6294, 120
    %v6305 = vpop.permute.xlu0 %6304
    %6307 = vmatprep.subr.mxu0 0.0
    %6308 = vmatpush1.msra.mxu0 %v6298
    %6309 = vmatprep.subr.mxu0 0.0
    %6310 = vmatpush1.msra.mxu0 %v6300
    %6311 = vmatprep.subr.mxu0 0.0
    %6312 = vmatpush1.msra.mxu0 0.0
    %6313 = vmatprep.subr.mxu0 0.0
    %6314 = vmatpush1.msra.mxu0 0.0
    %6315 = vmatprep.subr.mxu0 0.0
    %6316 = vmatpush1.msra.mxu0 0.0
    %6317 = vmatprep.subr.mxu0 0.0
    %6318 = vmatpush1.msra.mxu0 0.0
    %6319 = vmatprep.subr.mxu0 0.0
    %6320 = vmatpush1.msra.mxu0 0.0
    %6321 = vmatprep.subr.mxu0 0.0
    %6322 = vmatpush1.msra.mxu0 0.0
    %6323 = vmatprep.subr.mxu0 0.0
    %6324 = vmatpush1.msra.mxu0 0.0
    %6325 = vmatprep.subr.mxu0 0.0
    %6326 = vmatpush1.msra.mxu0 0.0
    %6327 = vmatprep.subr.mxu0 0.0
    %6328 = vmatpush1.msra.mxu0 0.0
    %6329 = vmatprep.subr.mxu0 0.0
    %6330 = vmatpush1.msra.mxu0 0.0
    %6331 = vmatprep.subr.mxu0 0.0
    %6332 = vmatpush1.msra.mxu0 0.0
    %6333 = vmatprep.subr.mxu0 0.0
    %6334 = vmatpush1.msra.mxu0 0.0
    %6335 = vmatprep.subr.mxu0 0.0
    %6336 = vmatpush1.msra.mxu0 0.0
    %6337 = vmatprep.subr.mxu0 0.0
    %6338 = vmatpush1.msra.mxu0 0.0
    %6339 = vmatprep.subr.mxu0 0.0
    %6340 = vmatpush1.msra.mxu0 0.0
    %6341 = vmatprep.subr.mxu0 0.0
    %6342 = vmatpush1.msra.mxu0 0.0
    %6343 = vmatprep.subr.mxu0 0.0
    %6344 = vmatpush1.msra.mxu0 0.0
    %6345 = vmatprep.subr.mxu0 0.0
    %6346 = vmatpush1.msra.mxu0 0.0
    %6347 = vmatprep.subr.mxu0 0.0
    %6348 = vmatpush1.msra.mxu0 0.0
    %6349 = vmatprep.subr.mxu0 0.0
    %6350 = vmatpush1.msra.mxu0 0.0
    %6351 = vmatprep.subr.mxu0 0.0
    %6352 = vmatpush1.msra.mxu0 0.0
    %6353 = vmatprep.subr.mxu0 0.0
    %6354 = vmatpush1.msra.mxu0 0.0
    %6355 = vmatprep.subr.mxu0 0.0
    %6356 = vmatpush1.msra.mxu0 0.0
    %6357 = vmatprep.subr.mxu0 0.0
    %6358 = vmatpush1.msra.mxu0 0.0
    %6359 = vmatprep.subr.mxu0 0.0
    %6360 = vmatpush1.msra.mxu0 0.0
    %6361 = vmatprep.subr.mxu0 0.0
    %6362 = vmatpush1.msra.mxu0 0.0
    %6363 = vmatprep.subr.mxu0 0.0
    %6364 = vmatpush1.msra.mxu0 0.0
    %6365 = vmatprep.subr.mxu0 0.0
    %6366 = vmatpush1.msra.mxu0 0.0
    %6367 = vmatprep.subr.mxu0 0.0
    %6368 = vmatpush1.msra.mxu0 0.0
    %6369 = vmatprep.subr.mxu0 0.0
    %6370 = vmatpush1.msra.mxu0 0.0
    %6371 = vmatprep.mubr.f32.mxu0 0.0
    %6372 = vmatmul.mubr.f32.gmra.mrb[0].mxu0 %v5806
    %v6373 = vpop.f32.mrb[0].mxu0
    %v6374 = vadd.f32 %v6305, %v6373
    %v6375 = vpop.f32.mrb[0].mxu0
    %6376 = vdwg.mxu0
    %v6377 = vlaneseq
    %v6378 = vshrl.u32 %v6377, 7
    %v6379 = vsub.s32 0, %v6378
    %v6380 = vrot.slane %v6289, %v6379
    %6381 = vrot.lane.b32.xlu0 %v6286, 40
    %v6382 = vpop.permute.xlu0 %6381
    %6383 = vrot.lane.b32.xlu0 %v6287, 40
    %v6384 = vpop.permute.xlu0 %6383
    %6388 = vrot.lane.b32.xlu0 %v6380, 120
    %v6389 = vpop.permute.xlu0 %6388
    %6391 = vmatprep.subr.mxu0 0.0
    %6392 = vmatpush1.msra.mxu0 %v6382
    %6393 = vmatprep.subr.mxu0 0.0
    %6394 = vmatpush1.msra.mxu0 %v6384
    %6395 = vmatprep.subr.mxu0 0.0
    %6396 = vmatpush1.msra.mxu0 0.0
    %6397 = vmatprep.subr.mxu0 0.0
    %6398 = vmatpush1.msra.mxu0 0.0
    %6399 = vmatprep.subr.mxu0 0.0
    %6400 = vmatpush1.msra.mxu0 0.0
    %6401 = vmatprep.subr.mxu0 0.0
    %6402 = vmatpush1.msra.mxu0 0.0
    %6403 = vmatprep.subr.mxu0 0.0
    %6404 = vmatpush1.msra.mxu0 0.0
    %6405 = vmatprep.subr.mxu0 0.0
    %6406 = vmatpush1.msra.mxu0 0.0
    %6407 = vmatprep.subr.mxu0 0.0
    %6408 = vmatpush1.msra.mxu0 0.0
    %6409 = vmatprep.subr.mxu0 0.0
    %6410 = vmatpush1.msra.mxu0 0.0
    %6411 = vmatprep.subr.mxu0 0.0
    %6412 = vmatpush1.msra.mxu0 0.0
    %6413 = vmatprep.subr.mxu0 0.0
    %6414 = vmatpush1.msra.mxu0 0.0
    %6415 = vmatprep.subr.mxu0 0.0
    %6416 = vmatpush1.msra.mxu0 0.0
    %6417 = vmatprep.subr.mxu0 0.0
    %6418 = vmatpush1.msra.mxu0 0.0
    %6419 = vmatprep.subr.mxu0 0.0
    %6420 = vmatpush1.msra.mxu0 0.0
    %6421 = vmatprep.subr.mxu0 0.0
    %6422 = vmatpush1.msra.mxu0 0.0
    %6423 = vmatprep.subr.mxu0 0.0
    %6424 = vmatpush1.msra.mxu0 0.0
    %6425 = vmatprep.subr.mxu0 0.0
    %6426 = vmatpush1.msra.mxu0 0.0
    %6427 = vmatprep.subr.mxu0 0.0
    %6428 = vmatpush1.msra.mxu0 0.0
    %6429 = vmatprep.subr.mxu0 0.0
    %6430 = vmatpush1.msra.mxu0 0.0
    %6431 = vmatprep.subr.mxu0 0.0
    %6432 = vmatpush1.msra.mxu0 0.0
    %6433 = vmatprep.subr.mxu0 0.0
    %6434 = vmatpush1.msra.mxu0 0.0
    %6435 = vmatprep.subr.mxu0 0.0
    %6436 = vmatpush1.msra.mxu0 0.0
    %6437 = vmatprep.subr.mxu0 0.0
    %6438 = vmatpush1.msra.mxu0 0.0
    %6439 = vmatprep.subr.mxu0 0.0
    %6440 = vmatpush1.msra.mxu0 0.0
    %6441 = vmatprep.subr.mxu0 0.0
    %6442 = vmatpush1.msra.mxu0 0.0
    %6443 = vmatprep.subr.mxu0 0.0
    %6444 = vmatpush1.msra.mxu0 0.0
    %6445 = vmatprep.subr.mxu0 0.0
    %6446 = vmatpush1.msra.mxu0 0.0
    %6447 = vmatprep.subr.mxu0 0.0
    %6448 = vmatpush1.msra.mxu0 0.0
    %6449 = vmatprep.subr.mxu0 0.0
    %6450 = vmatpush1.msra.mxu0 0.0
    %6451 = vmatprep.subr.mxu0 0.0
    %6452 = vmatpush1.msra.mxu0 0.0
    %6453 = vmatprep.subr.mxu0 0.0
    %6454 = vmatpush1.msra.mxu0 0.0
    %6455 = vmatprep.mubr.f32.mxu0 0.0
    %6456 = vmatmul.mubr.f32.gmra.mrb[0].mxu0 %v3623
    %v6457 = vpop.f32.mrb[0].mxu0
    %v6458 = vadd.f32 %v6389, %v6457
    %v6459 = vpop.f32.mrb[0].mxu0
    %6460 = vdwg.mxu0
    %v6461 = vlaneseq
    %v6462 = vshrl.u32 %v6461, 7
    %v6463 = vsub.s32 0, %v6462
    %v6464 = vrot.slane %v6290, %v6463
    %6465 = vrot.lane.b32.xlu0 %v6286, 24
    %v6466 = vpop.permute.xlu0 %6465
    %6467 = vrot.lane.b32.xlu0 %v6287, 24
    %v6468 = vpop.permute.xlu0 %6467
    %6472 = vrot.lane.b32.xlu0 %v6464, 120
    %v6473 = vpop.permute.xlu0 %6472
    %6475 = vmatprep.subr.mxu0 0.0
    %6476 = vmatpush1.msra.mxu0 %v6466
    %6477 = vmatprep.subr.mxu0 0.0
    %6478 = vmatpush1.msra.mxu0 %v6468
    %6479 = vmatprep.subr.mxu0 0.0
    %6480 = vmatpush1.msra.mxu0 0.0
    %6481 = vmatprep.subr.mxu0 0.0
    %6482 = vmatpush1.msra.mxu0 0.0
    %6483 = vmatprep.subr.mxu0 0.0
    %6484 = vmatpush1.msra.mxu0 0.0
    %6485 = vmatprep.subr.mxu0 0.0
    %6486 = vmatpush1.msra.mxu0 0.0
    %6487 = vmatprep.subr.mxu0 0.0
    %6488 = vmatpush1.msra.mxu0 0.0
    %6489 = vmatprep.subr.mxu0 0.0
    %6490 = vmatpush1.msra.mxu0 0.0
    %6491 = vmatprep.subr.mxu0 0.0
    %6492 = vmatpush1.msra.mxu0 0.0
    %6493 = vmatprep.subr.mxu0 0.0
    %6494 = vmatpush1.msra.mxu0 0.0
    %6495 = vmatprep.subr.mxu0 0.0
    %6496 = vmatpush1.msra.mxu0 0.0
    %6497 = vmatprep.subr.mxu0 0.0
    %6498 = vmatpush1.msra.mxu0 0.0
    %6499 = vmatprep.subr.mxu0 0.0
    %6500 = vmatpush1.msra.mxu0 0.0
    %6501 = vmatprep.subr.mxu0 0.0
    %6502 = vmatpush1.msra.mxu0 0.0
    %6503 = vmatprep.subr.mxu0 0.0
    %6504 = vmatpush1.msra.mxu0 0.0
    %6505 = vmatprep.subr.mxu0 0.0
    %6506 = vmatpush1.msra.mxu0 0.0
    %6507 = vmatprep.subr.mxu0 0.0
    %6508 = vmatpush1.msra.mxu0 0.0
    %6509 = vmatprep.subr.mxu0 0.0
    %6510 = vmatpush1.msra.mxu0 0.0
    %6511 = vmatprep.subr.mxu0 0.0
    %6512 = vmatpush1.msra.mxu0 0.0
    %6513 = vmatprep.subr.mxu0 0.0
    %6514 = vmatpush1.msra.mxu0 0.0
    %6515 = vmatprep.subr.mxu0 0.0
    %6516 = vmatpush1.msra.mxu0 0.0
    %6517 = vmatprep.subr.mxu0 0.0
    %6518 = vmatpush1.msra.mxu0 0.0
    %6519 = vmatprep.subr.mxu0 0.0
    %6520 = vmatpush1.msra.mxu0 0.0
    %6521 = vmatprep.subr.mxu0 0.0
    %6522 = vmatpush1.msra.mxu0 0.0
    %6523 = vmatprep.subr.mxu0 0.0
    %6524 = vmatpush1.msra.mxu0 0.0
    %6525 = vmatprep.subr.mxu0 0.0
    %6526 = vmatpush1.msra.mxu0 0.0
    %6527 = vmatprep.subr.mxu0 0.0
    %6528 = vmatpush1.msra.mxu0 0.0
    %6529 = vmatprep.subr.mxu0 0.0
    %6530 = vmatpush1.msra.mxu0 0.0
    %6531 = vmatprep.subr.mxu0 0.0
    %6532 = vmatpush1.msra.mxu0 0.0
    %6533 = vmatprep.subr.mxu0 0.0
    %6534 = vmatpush1.msra.mxu0 0.0
    %6535 = vmatprep.subr.mxu0 0.0
    %6536 = vmatpush1.msra.mxu0 0.0
    %6537 = vmatprep.subr.mxu0 0.0
    %6538 = vmatpush1.msra.mxu0 0.0
    %6539 = vmatprep.mubr.f32.mxu0 0.0
    %6540 = vmatmul.mubr.f32.gmra.mrb[0].mxu0 %v3623
    %v6541 = vpop.f32.mrb[0].mxu0
    %v6542 = vadd.f32 %v6473, %v6541
    %v6543 = vpop.f32.mrb[0].mxu0
    %6544 = vdwg.mxu0
    %v6546 = vsel %vm285, %v6374, 0
    %v6549 = vsel %vm285, %v6458, 0
    %6551 = vmatprep.subr.mxu0 0.0
    %6552 = vmatpush1.xpose.msra.mxu0 %v6549
    %6553 = vmatprep.subr.mxu0 0.0
    %6554 = vmatpush1.xpose.msra.mxu0 0.0
    %6555 = vmatprep.subr.mxu0 0.0
    %6556 = vmatpush1.xpose.msra.mxu0 0.0
    %6557 = vmatprep.subr.mxu0 0.0
    %6558 = vmatpush1.xpose.msra.mxu0 0.0
    %6559 = vmatprep.subr.mxu0 0.0
    %6560 = vmatpush1.xpose.msra.mxu0 0.0
    %6561 = vmatprep.subr.mxu0 0.0
    %6562 = vmatpush1.xpose.msra.mxu0 0.0
    %6563 = vmatprep.subr.mxu0 0.0
    %6564 = vmatpush1.xpose.msra.mxu0 0.0
    %6565 = vmatprep.subr.mxu0 0.0
    %6566 = vmatpush1.xpose.msra.mxu0 0.0
    %6567 = vmatprep.subr.mxu0 0.0
    %6568 = vmatpush1.xpose.msra.mxu0 0.0
    %6569 = vmatprep.subr.mxu0 0.0
    %6570 = vmatpush1.xpose.msra.mxu0 0.0
    %6571 = vmatprep.subr.mxu0 0.0
    %6572 = vmatpush1.xpose.msra.mxu0 0.0
    %6573 = vmatprep.subr.mxu0 0.0
    %6574 = vmatpush1.xpose.msra.mxu0 0.0
    %6575 = vmatprep.subr.mxu0 0.0
    %6576 = vmatpush1.xpose.msra.mxu0 0.0
    %6577 = vmatprep.subr.mxu0 0.0
    %6578 = vmatpush1.xpose.msra.mxu0 0.0
    %6579 = vmatprep.subr.mxu0 0.0
    %6580 = vmatpush1.xpose.msra.mxu0 0.0
    %6581 = vmatprep.subr.mxu0 0.0
    %6582 = vmatpush1.xpose.msra.mxu0 0.0
    %6583 = vmatprep.subr.mxu0 0.0
    %6584 = vmatpush1.xpose.msra.mxu0 0.0
    %6585 = vmatprep.subr.mxu0 0.0
    %6586 = vmatpush1.xpose.msra.mxu0 0.0
    %6587 = vmatprep.subr.mxu0 0.0
    %6588 = vmatpush1.xpose.msra.mxu0 0.0
    %6589 = vmatprep.subr.mxu0 0.0
    %6590 = vmatpush1.xpose.msra.mxu0 0.0
    %6591 = vmatprep.subr.mxu0 0.0
    %6592 = vmatpush1.xpose.msra.mxu0 0.0
    %6593 = vmatprep.subr.mxu0 0.0
    %6594 = vmatpush1.xpose.msra.mxu0 0.0
    %6595 = vmatprep.subr.mxu0 0.0
    %6596 = vmatpush1.xpose.msra.mxu0 0.0
    %6597 = vmatprep.subr.mxu0 0.0
    %6598 = vmatpush1.xpose.msra.mxu0 0.0
    %6599 = vmatprep.subr.mxu0 0.0
    %6600 = vmatpush1.xpose.msra.mxu0 0.0
    %6601 = vmatprep.subr.mxu0 0.0
    %6602 = vmatpush1.xpose.msra.mxu0 0.0
    %6603 = vmatprep.subr.mxu0 0.0
    %6604 = vmatpush1.xpose.msra.mxu0 0.0
    %6605 = vmatprep.subr.mxu0 0.0
    %6606 = vmatpush1.xpose.msra.mxu0 0.0
    %6607 = vmatprep.subr.mxu0 0.0
    %6608 = vmatpush1.xpose.msra.mxu0 0.0
    %6609 = vmatprep.subr.mxu0 0.0
    %6610 = vmatpush1.xpose.msra.mxu0 0.0
    %6611 = vmatprep.subr.mxu0 0.0
    %6612 = vmatpush1.xpose.msra.mxu0 0.0
    %6613 = vmatprep.subr.mxu0 0.0
    %6614 = vmatpush1.xpose.msra.mxu0 0.0
    %6615 = vmatprep.mubr.f32.mxu0 0.0
    %6616 = vmatmul.mubr.f32.gmra.mrb[0].mxu0 %v6546
    %v6617 = vpop.f32.mrb[0].mxu0
    %v6618 = vadd.f32 0.0, %v6617
    %v6619 = vpop.f32.mrb[0].mxu0
    %6620 = vdwg.mxu0
    %v6621 = vmul.f32 %v6618, 0.125
    %v6622 = vsel %vm37, -1e+09, %v6621
    %v6623 = vsel %vm364, %v6622, -inf
    %6624 = vmax.xlane.f32.xlu0 %v6623
    %v6625 = vpop.xlane.xlu0 %6624
    %v6626 = vsub.f32 %v6622, %v6625
    %v6627 = vmul.f32 %v6626, 1.442695
    %v6628 = vpow.pop %v6627
    %v6629 = vsel %vm364, %v6628, 0.0
    %6630 = vadd.xlane.f32.xlu0 %v6629
    %v6631 = vpop.xlane.xlu0 %6630
    %v6632 = vrcp.pop %v6631
    %v6633 = vmul.f32 %v6628, %v6632
    %s6634 = scalar_lea.vmem %s9, 88
    %6635 = vst.msk [vmem:[%s6634] sm:$0x1f] %vm364, %v6633
    %v6637 = vsel %vm377, %v6622, 0
    %v6640 = vsel %vm381, %v6542, 0
    %6642 = vmatprep.subr.mxu0 0.0
    %6643 = vmatpush1.msra.mxu0 %v6640
    %6644 = vmatprep.subr.mxu0 0.0
    %6645 = vmatpush1.msra.mxu0 0.0
    %6646 = vmatprep.subr.mxu0 0.0
    %6647 = vmatpush1.msra.mxu0 0.0
    %6648 = vmatprep.subr.mxu0 0.0
    %6649 = vmatpush1.msra.mxu0 0.0
    %6650 = vmatprep.subr.mxu0 0.0
    %6651 = vmatpush1.msra.mxu0 0.0
    %6652 = vmatprep.subr.mxu0 0.0
    %6653 = vmatpush1.msra.mxu0 0.0
    %6654 = vmatprep.subr.mxu0 0.0
    %6655 = vmatpush1.msra.mxu0 0.0
    %6656 = vmatprep.subr.mxu0 0.0
    %6657 = vmatpush1.msra.mxu0 0.0
    %6658 = vmatprep.subr.mxu0 0.0
    %6659 = vmatpush1.msra.mxu0 0.0
    %6660 = vmatprep.subr.mxu0 0.0
    %6661 = vmatpush1.msra.mxu0 0.0
    %6662 = vmatprep.subr.mxu0 0.0
    %6663 = vmatpush1.msra.mxu0 0.0
    %6664 = vmatprep.subr.mxu0 0.0
    %6665 = vmatpush1.msra.mxu0 0.0
    %6666 = vmatprep.subr.mxu0 0.0
    %6667 = vmatpush1.msra.mxu0 0.0
    %6668 = vmatprep.subr.mxu0 0.0
    %6669 = vmatpush1.msra.mxu0 0.0
    %6670 = vmatprep.subr.mxu0 0.0
    %6671 = vmatpush1.msra.mxu0 0.0
    %6672 = vmatprep.subr.mxu0 0.0
    %6673 = vmatpush1.msra.mxu0 0.0
    %6674 = vmatprep.subr.mxu0 0.0
    %6675 = vmatpush1.msra.mxu0 0.0
    %6676 = vmatprep.subr.mxu0 0.0
    %6677 = vmatpush1.msra.mxu0 0.0
    %6678 = vmatprep.subr.mxu0 0.0
    %6679 = vmatpush1.msra.mxu0 0.0
    %6680 = vmatprep.subr.mxu0 0.0
    %6681 = vmatpush1.msra.mxu0 0.0
    %6682 = vmatprep.subr.mxu0 0.0
    %6683 = vmatpush1.msra.mxu0 0.0
    %6684 = vmatprep.subr.mxu0 0.0
    %6685 = vmatpush1.msra.mxu0 0.0
    %6686 = vmatprep.subr.mxu0 0.0
    %6687 = vmatpush1.msra.mxu0 0.0
    %6688 = vmatprep.subr.mxu0 0.0
    %6689 = vmatpush1.msra.mxu0 0.0
    %6690 = vmatprep.subr.mxu0 0.0
    %6691 = vmatpush1.msra.mxu0 0.0
    %6692 = vmatprep.subr.mxu0 0.0
    %6693 = vmatpush1.msra.mxu0 0.0
    %6694 = vmatprep.subr.mxu0 0.0
    %6695 = vmatpush1.msra.mxu0 0.0
    %6696 = vmatprep.subr.mxu0 0.0
    %6697 = vmatpush1.msra.mxu0 0.0
    %6698 = vmatprep.subr.mxu0 0.0
    %6699 = vmatpush1.msra.mxu0 0.0
    %6700 = vmatprep.subr.mxu0 0.0
    %6701 = vmatpush1.msra.mxu0 0.0
    %6702 = vmatprep.subr.mxu0 0.0
    %6703 = vmatpush1.msra.mxu0 0.0
    %6704 = vmatprep.subr.mxu0 0.0
    %6705 = vmatpush1.msra.mxu0 0.0
    %6706 = vmatprep.mubr.f32.mxu0 0.0
    %6707 = vmatmul.mubr.f32.gmra.mrb[0].mxu0 %v6637
    %v6708 = vpop.f32.mrb[0].mxu0
    %v6709 = vadd.f32 0.0, %v6708
    %v6710 = vpop.f32.mrb[0].mxu0
    %6711 = vdwg.mxu0
    %6712 = vrot.lane.b32.xlu0 %v6287, 16
    %v6713 = vpop.permute.xlu0 %6712
    %v6716 = vsel %vm285, %v6709, 0
    %6718 = vmatprep.subr.mxu0 0.0
    %6719 = vmatpush1.msra.mxu0 %v6713
    %6720 = vmatprep.subr.mxu0 0.0
    %6721 = vmatpush1.msra.mxu0 0.0
    %6722 = vmatprep.subr.mxu0 0.0
    %6723 = vmatpush1.msra.mxu0 0.0
    %6724 = vmatprep.subr.mxu0 0.0
    %6725 = vmatpush1.msra.mxu0 0.0
    %6726 = vmatprep.subr.mxu0 0.0
    %6727 = vmatpush1.msra.mxu0 0.0
    %6728 = vmatprep.subr.mxu0 0.0
    %6729 = vmatpush1.msra.mxu0 0.0
    %6730 = vmatprep.subr.mxu0 0.0
    %6731 = vmatpush1.msra.mxu0 0.0
    %6732 = vmatprep.subr.mxu0 0.0
    %6733 = vmatpush1.msra.mxu0 0.0
    %6734 = vmatprep.subr.mxu0 0.0
    %6735 = vmatpush1.msra.mxu0 0.0
    %6736 = vmatprep.subr.mxu0 0.0
    %6737 = vmatpush1.msra.mxu0 0.0
    %6738 = vmatprep.subr.mxu0 0.0
    %6739 = vmatpush1.msra.mxu0 0.0
    %6740 = vmatprep.subr.mxu0 0.0
    %6741 = vmatpush1.msra.mxu0 0.0
    %6742 = vmatprep.subr.mxu0 0.0
    %6743 = vmatpush1.msra.mxu0 0.0
    %6744 = vmatprep.subr.mxu0 0.0
    %6745 = vmatpush1.msra.mxu0 0.0
    %6746 = vmatprep.subr.mxu0 0.0
    %6747 = vmatpush1.msra.mxu0 0.0
    %6748 = vmatprep.subr.mxu0 0.0
    %6749 = vmatpush1.msra.mxu0 0.0
    %6750 = vmatprep.subr.mxu0 0.0
    %6751 = vmatpush1.msra.mxu0 0.0
    %6752 = vmatprep.subr.mxu0 0.0
    %6753 = vmatpush1.msra.mxu0 0.0
    %6754 = vmatprep.subr.mxu0 0.0
    %6755 = vmatpush1.msra.mxu0 0.0
    %6756 = vmatprep.subr.mxu0 0.0
    %6757 = vmatpush1.msra.mxu0 0.0
    %6758 = vmatprep.subr.mxu0 0.0
    %6759 = vmatpush1.msra.mxu0 0.0
    %6760 = vmatprep.subr.mxu0 0.0
    %6761 = vmatpush1.msra.mxu0 0.0
    %6762 = vmatprep.subr.mxu0 0.0
    %6763 = vmatpush1.msra.mxu0 0.0
    %6764 = vmatprep.subr.mxu0 0.0
    %6765 = vmatpush1.msra.mxu0 0.0
    %6766 = vmatprep.subr.mxu0 0.0
    %6767 = vmatpush1.msra.mxu0 0.0
    %6768 = vmatprep.subr.mxu0 0.0
    %6769 = vmatpush1.msra.mxu0 0.0
    %6770 = vmatprep.subr.mxu0 0.0
    %6771 = vmatpush1.msra.mxu0 0.0
    %6772 = vmatprep.subr.mxu0 0.0
    %6773 = vmatpush1.msra.mxu0 0.0
    %6774 = vmatprep.subr.mxu0 0.0
    %6775 = vmatpush1.msra.mxu0 0.0
    %6776 = vmatprep.subr.mxu0 0.0
    %6777 = vmatpush1.msra.mxu0 0.0
    %6778 = vmatprep.subr.mxu0 0.0
    %6779 = vmatpush1.msra.mxu0 0.0
    %6780 = vmatprep.subr.mxu0 0.0
    %6781 = vmatpush1.msra.mxu0 0.0
    %6782 = vmatprep.mubr.f32.mxu0 0.0
    %6783 = vmatmul.mubr.f32.gmra.mrb[0].mxu0 %v6716
    %v6784 = vpop.f32.mrb[0].mxu0
    %v6785 = vadd.f32 0.0, %v6784
    %v6786 = vpop.f32.mrb[0].mxu0
    %6787 = vdwg.mxu0
    %v6788 = vadd.f32 %v6285, %v6785
    %v6789 = vld [vmem:[%s7 + $0x22] sm:$0x1]
    %v6790 = vld [vmem:[%s7 + $0x23] sm:$0x1]
    %v6791 = vadd.f32 %v6788, %v5786
    %v6792 = vsel %vm1042, %v6791, 0.0
    %6793 = vadd.xlane.f32.xlu0 %v6792
    %v6794 = vpop.xlane.xlu0 %6793
    %v6795 = vmul.f32 %v6794, %v1046
    %v6796 = vsub.f32 %v6791, %v6795
    %v6797 = vmul.f32 %v6796, %v6796
    %v6798 = vsel %vm1042, %v6797, 0.0
    %6799 = vadd.xlane.f32.xlu0 %v6798
    %v6800 = vpop.xlane.xlu0 %6799
    %v6801 = vmul.f32 %v6800, %v1046
    %v6802 = vadd.f32 %v6801, 1e-05
    %v6803 = vrsqrt.pop %v6802
    %v6804 = vmul.f32 %v6796, %v6803
    %v6805 = vlaneseq
    %v6806 = vshrl.u32 %v6805, 7
    %v6807 = vsub.s32 0, %v6806
    %v6808 = vrot.slane %v6789, %v6807
    %v6809 = vmul.f32 %v6804, %v6808
    %v6810 = vlaneseq
    %v6811 = vshrl.u32 %v6810, 7
    %v6812 = vsub.s32 0, %v6811
    %v6813 = vrot.slane %v6790, %v6812
    %v6814 = vadd.f32 %v6809, %v6813
    %v6815 = vld [vmem:[%s5 + $0x18] sm:$0xff]
    %v6816 = vld [vmem:[%s5 + $0x40] sm:$0xff]
    %v6817 = vld [vmem:[%s7 + $0x30] sm:$0x1]
    %v6818 = vld [vmem:[%s6] sm:$0xff]
    %v6819 = vld [vmem:[%s6 + $0x8] sm:$0xff]
    %v6820 = vld [vmem:[%s6 + $0x10] sm:$0xff]
    %v6821 = vld [vmem:[%s6 + $0x18] sm:$0xff]
    %v6822 = vld [vmem:[%s7 + $0x31] sm:$0x1]
    %v6823 = vld [vmem:[%s7 + $0x32] sm:$0x1]
    %v6824 = vld [vmem:[%s7 + $0x33] sm:$0x1]
    %v6825 = vlaneseq
    %v6826 = vshrl.u32 %v6825, 7
    %v6827 = vsub.s32 0, %v6826
    %v6828 = vrot.slane %v6817, %v6827
    %6831 = vrot.lane.b32.xlu0 %v6815, 32
    %v6832 = vpop.permute.xlu0 %6831
    %6833 = vrot.lane.b32.xlu0 %v6816, 32
    %v6834 = vpop.permute.xlu0 %6833
    %v6838 = vsel %vm49, %v6814, 0
    %6840 = vmatprep.subr.mxu0 0.0
    %6841 = vmatpush1.msra.mxu0 %v6832
    %6842 = vmatprep.subr.mxu0 0.0
    %6843 = vmatpush1.msra.mxu0 %v6834
    %6844 = vmatprep.subr.mxu0 0.0
    %6845 = vmatpush1.msra.mxu0 0.0
    %6846 = vmatprep.subr.mxu0 0.0
    %6847 = vmatpush1.msra.mxu0 0.0
    %6848 = vmatprep.subr.mxu0 0.0
    %6849 = vmatpush1.msra.mxu0 0.0
    %6850 = vmatprep.subr.mxu0 0.0
    %6851 = vmatpush1.msra.mxu0 0.0
    %6852 = vmatprep.subr.mxu0 0.0
    %6853 = vmatpush1.msra.mxu0 0.0
    %6854 = vmatprep.subr.mxu0 0.0
    %6855 = vmatpush1.msra.mxu0 0.0
    %6856 = vmatprep.subr.mxu0 0.0
    %6857 = vmatpush1.msra.mxu0 0.0
    %6858 = vmatprep.subr.mxu0 0.0
    %6859 = vmatpush1.msra.mxu0 0.0
    %6860 = vmatprep.subr.mxu0 0.0
    %6861 = vmatpush1.msra.mxu0 0.0
    %6862 = vmatprep.subr.mxu0 0.0
    %6863 = vmatpush1.msra.mxu0 0.0
    %6864 = vmatprep.subr.mxu0 0.0
    %6865 = vmatpush1.msra.mxu0 0.0
    %6866 = vmatprep.subr.mxu0 0.0
    %6867 = vmatpush1.msra.mxu0 0.0
    %6868 = vmatprep.subr.mxu0 0.0
    %6869 = vmatpush1.msra.mxu0 0.0
    %6870 = vmatprep.subr.mxu0 0.0
    %6871 = vmatpush1.msra.mxu0 0.0
    %6872 = vmatprep.subr.mxu0 0.0
    %6873 = vmatpush1.msra.mxu0 0.0
    %6874 = vmatprep.subr.mxu0 0.0
    %6875 = vmatpush1.msra.mxu0 0.0
    %6876 = vmatprep.subr.mxu0 0.0
    %6877 = vmatpush1.msra.mxu0 0.0
    %6878 = vmatprep.subr.mxu0 0.0
    %6879 = vmatpush1.msra.mxu0 0.0
    %6880 = vmatprep.subr.mxu0 0.0
    %6881 = vmatpush1.msra.mxu0 0.0
    %6882 = vmatprep.subr.mxu0 0.0
    %6883 = vmatpush1.msra.mxu0 0.0
    %6884 = vmatprep.subr.mxu0 0.0
    %6885 = vmatpush1.msra.mxu0 0.0
    %6886 = vmatprep.subr.mxu0 0.0
    %6887 = vmatpush1.msra.mxu0 0.0
    %6888 = vmatprep.subr.mxu0 0.0
    %6889 = vmatpush1.msra.mxu0 0.0
    %6890 = vmatprep.subr.mxu0 0.0
    %6891 = vmatpush1.msra.mxu0 0.0
    %6892 = vmatprep.subr.mxu0 0.0
    %6893 = vmatpush1.msra.mxu0 0.0
    %6894 = vmatprep.subr.mxu0 0.0
    %6895 = vmatpush1.msra.mxu0 0.0
    %6896 = vmatprep.subr.mxu0 0.0
    %6897 = vmatpush1.msra.mxu0 0.0
    %6898 = vmatprep.subr.mxu0 0.0
    %6899 = vmatpush1.msra.mxu0 0.0
    %6900 = vmatprep.subr.mxu0 0.0
    %6901 = vmatpush1.msra.mxu0 0.0
    %6902 = vmatprep.subr.mxu0 0.0
    %6903 = vmatpush1.msra.mxu0 0.0
    %6904 = vmatprep.mubr.f32.mxu0 0.0
    %6905 = vmatmul.mubr.f32.gmra.mrb[0].mxu0 %v6838
    %v6906 = vpop.f32.mrb[0].mxu0
    %v6907 = vadd.f32 %v6828, %v6906
    %v6908 = vpop.f32.mrb[0].mxu0
    %6909 = vdwg.mxu0
    %v6910 = vlaneseq
    %v6911 = vshrl.u32 %v6910, 7
    %v6912 = vsub.s32 0, %v6911
    %v6913 = vrot.slane %v6822, %v6912
    %6918 = vrot.lane.b32.xlu0 %v6818, 80
    %v6919 = vpop.permute.xlu0 %6918
    %6920 = vrot.lane.b32.xlu0 %v6819, 80
    %v6921 = vpop.permute.xlu0 %6920
    %6922 = vrot.lane.b32.xlu0 %v6820, 80
    %v6923 = vpop.permute.xlu0 %6922
    %6924 = vrot.lane.b32.xlu0 %v6821, 80
    %v6925 = vpop.permute.xlu0 %6924
    %v6931 = vsel %vm1158, %v6907, 0
    %6933 = vmatprep.subr.mxu0 0.0
    %6934 = vmatpush1.msra.mxu0 %v6919
    %6935 = vmatprep.subr.mxu0 0.0
    %6936 = vmatpush1.msra.mxu0 %v6921
    %6937 = vmatprep.subr.mxu0 0.0
    %6938 = vmatpush1.msra.mxu0 %v6923
    %6939 = vmatprep.subr.mxu0 0.0
    %6940 = vmatpush1.msra.mxu0 %v6925
    %6941 = vmatprep.subr.mxu0 0.0
    %6942 = vmatpush1.msra.mxu0 0.0
    %6943 = vmatprep.subr.mxu0 0.0
    %6944 = vmatpush1.msra.mxu0 0.0
    %6945 = vmatprep.subr.mxu0 0.0
    %6946 = vmatpush1.msra.mxu0 0.0
    %6947 = vmatprep.subr.mxu0 0.0
    %6948 = vmatpush1.msra.mxu0 0.0
    %6949 = vmatprep.subr.mxu0 0.0
    %6950 = vmatpush1.msra.mxu0 0.0
    %6951 = vmatprep.subr.mxu0 0.0
    %6952 = vmatpush1.msra.mxu0 0.0
    %6953 = vmatprep.subr.mxu0 0.0
    %6954 = vmatpush1.msra.mxu0 0.0
    %6955 = vmatprep.subr.mxu0 0.0
    %6956 = vmatpush1.msra.mxu0 0.0
    %6957 = vmatprep.subr.mxu0 0.0
    %6958 = vmatpush1.msra.mxu0 0.0
    %6959 = vmatprep.subr.mxu0 0.0
    %6960 = vmatpush1.msra.mxu0 0.0
    %6961 = vmatprep.subr.mxu0 0.0
    %6962 = vmatpush1.msra.mxu0 0.0
    %6963 = vmatprep.subr.mxu0 0.0
    %6964 = vmatpush1.msra.mxu0 0.0
    %6965 = vmatprep.subr.mxu0 0.0
    %6966 = vmatpush1.msra.mxu0 0.0
    %6967 = vmatprep.subr.mxu0 0.0
    %6968 = vmatpush1.msra.mxu0 0.0
    %6969 = vmatprep.subr.mxu0 0.0
    %6970 = vmatpush1.msra.mxu0 0.0
    %6971 = vmatprep.subr.mxu0 0.0
    %6972 = vmatpush1.msra.mxu0 0.0
    %6973 = vmatprep.subr.mxu0 0.0
    %6974 = vmatpush1.msra.mxu0 0.0
    %6975 = vmatprep.subr.mxu0 0.0
    %6976 = vmatpush1.msra.mxu0 0.0
    %6977 = vmatprep.subr.mxu0 0.0
    %6978 = vmatpush1.msra.mxu0 0.0
    %6979 = vmatprep.subr.mxu0 0.0
    %6980 = vmatpush1.msra.mxu0 0.0
    %6981 = vmatprep.subr.mxu0 0.0
    %6982 = vmatpush1.msra.mxu0 0.0
    %6983 = vmatprep.subr.mxu0 0.0
    %6984 = vmatpush1.msra.mxu0 0.0
    %6985 = vmatprep.subr.mxu0 0.0
    %6986 = vmatpush1.msra.mxu0 0.0
    %6987 = vmatprep.subr.mxu0 0.0
    %6988 = vmatpush1.msra.mxu0 0.0
    %6989 = vmatprep.subr.mxu0 0.0
    %6990 = vmatpush1.msra.mxu0 0.0
    %6991 = vmatprep.subr.mxu0 0.0
    %6992 = vmatpush1.msra.mxu0 0.0
    %6993 = vmatprep.subr.mxu0 0.0
    %6994 = vmatpush1.msra.mxu0 0.0
    %6995 = vmatprep.subr.mxu0 0.0
    %6996 = vmatpush1.msra.mxu0 0.0
    %6997 = vmatprep.mubr.f32.mxu0 0.0
    %6998 = vmatmul.mubr.f32.gmra.mrb[0].mxu0 %v6931
    %v6999 = vpop.f32.mrb[0].mxu0
    %v7000 = vadd.f32 %v6913, %v6999
    %v7001 = vpop.f32.mrb[0].mxu0
    %7002 = vdwg.mxu0
    %v7003 = vmax.f32 %v7000, 0.0
    %v7004 = vadd.f32 %v7003, %v6814
    %v7005 = vsel %vm1042, %v7004, 0.0
    %7006 = vadd.xlane.f32.xlu0 %v7005
    %v7007 = vpop.xlane.xlu0 %7006
    %v7008 = vmul.f32 %v7007, %v1046
    %v7009 = vsub.f32 %v7004, %v7008
    %v7010 = vmul.f32 %v7009, %v7009
    %v7011 = vsel %vm1042, %v7010, 0.0
    %7012 = vadd.xlane.f32.xlu0 %v7011
    %v7013 = vpop.xlane.xlu0 %7012
    %v7014 = vmul.f32 %v7013, %v1046
    %v7015 = vadd.f32 %v7014, 1e-05
    %v7016 = vrsqrt.pop %v7015
    %v7017 = vmul.f32 %v7009, %v7016
    %v7018 = vlaneseq
    %v7019 = vshrl.u32 %v7018, 7
    %v7020 = vsub.s32 0, %v7019
    %v7021 = vrot.slane %v6823, %v7020
    %v7022 = vmul.f32 %v7017, %v7021
    %v7023 = vlaneseq
    %v7024 = vshrl.u32 %v7023, 7
    %v7025 = vsub.s32 0, %v7024
    %v7026 = vrot.slane %v6824, %v7025
    %v7027 = vadd.f32 %v7022, %v7026
    %v7028 = vld [vmem:[%s5 + $0x20] sm:$0xff]
    %v7029 = vld [vmem:[%s5 + $0x48] sm:$0xff]
    %v7030 = vld [vmem:[%s7 + $0x34] sm:$0x1]
    %v7031 = vlaneseq
    %v7032 = vshrl.u32 %v7031, 7
    %v7033 = vsub.s32 0, %v7032
    %v7034 = vrot.slane %v7030, %v7033
    %v7036 = vsel %vm49, %v7027, 0
    %7038 = vmatprep.subr.mxu0 0.0
    %7039 = vmatpush1.msra.mxu0 %v7028
    %7040 = vmatprep.subr.mxu0 0.0
    %7041 = vmatpush1.msra.mxu0 %v7029
    %7042 = vmatprep.subr.mxu0 0.0
    %7043 = vmatpush1.msra.mxu0 0.0
    %7044 = vmatprep.subr.mxu0 0.0
    %7045 = vmatpush1.msra.mxu0 0.0
    %7046 = vmatprep.subr.mxu0 0.0
    %7047 = vmatpush1.msra.mxu0 0.0
    %7048 = vmatprep.subr.mxu0 0.0
    %7049 = vmatpush1.msra.mxu0 0.0
    %7050 = vmatprep.subr.mxu0 0.0
    %7051 = vmatpush1.msra.mxu0 0.0
    %7052 = vmatprep.subr.mxu0 0.0
    %7053 = vmatpush1.msra.mxu0 0.0
    %7054 = vmatprep.subr.mxu0 0.0
    %7055 = vmatpush1.msra.mxu0 0.0
    %7056 = vmatprep.subr.mxu0 0.0
    %7057 = vmatpush1.msra.mxu0 0.0
    %7058 = vmatprep.subr.mxu0 0.0
    %7059 = vmatpush1.msra.mxu0 0.0
    %7060 = vmatprep.subr.mxu0 0.0
    %7061 = vmatpush1.msra.mxu0 0.0
    %7062 = vmatprep.subr.mxu0 0.0
    %7063 = vmatpush1.msra.mxu0 0.0
    %7064 = vmatprep.subr.mxu0 0.0
    %7065 = vmatpush1.msra.mxu0 0.0
    %7066 = vmatprep.subr.mxu0 0.0
    %7067 = vmatpush1.msra.mxu0 0.0
    %7068 = vmatprep.subr.mxu0 0.0
    %7069 = vmatpush1.msra.mxu0 0.0
    %7070 = vmatprep.subr.mxu0 0.0
    %7071 = vmatpush1.msra.mxu0 0.0
    %7072 = vmatprep.subr.mxu0 0.0
    %7073 = vmatpush1.msra.mxu0 0.0
    %7074 = vmatprep.subr.mxu0 0.0
    %7075 = vmatpush1.msra.mxu0 0.0
    %7076 = vmatprep.subr.mxu0 0.0
    %7077 = vmatpush1.msra.mxu0 0.0
    %7078 = vmatprep.subr.mxu0 0.0
    %7079 = vmatpush1.msra.mxu0 0.0
    %7080 = vmatprep.subr.mxu0 0.0
    %7081 = vmatpush1.msra.mxu0 0.0
    %7082 = vmatprep.subr.mxu0 0.0
    %7083 = vmatpush1.msra.mxu0 0.0
    %7084 = vmatprep.subr.mxu0 0.0
    %7085 = vmatpush1.msra.mxu0 0.0
    %7086 = vmatprep.subr.mxu0 0.0
    %7087 = vmatpush1.msra.mxu0 0.0
    %7088 = vmatprep.subr.mxu0 0.0
    %7089 = vmatpush1.msra.mxu0 0.0
    %7090 = vmatprep.subr.mxu0 0.0
    %7091 = vmatpush1.msra.mxu0 0.0
    %7092 = vmatprep.subr.mxu0 0.0
    %7093 = vmatpush1.msra.mxu0 0.0
    %7094 = vmatprep.subr.mxu0 0.0
    %7095 = vmatpush1.msra.mxu0 0.0
    %7096 = vmatprep.subr.mxu0 0.0
    %7097 = vmatpush1.msra.mxu0 0.0
    %7098 = vmatprep.subr.mxu0 0.0
    %7099 = vmatpush1.msra.mxu0 0.0
    %7100 = vmatprep.subr.mxu0 0.0
    %7101 = vmatpush1.msra.mxu0 0.0
    %7102 = vmatprep.mubr.f32.mxu0 0.0
    %7103 = vmatmul.mubr.f32.gmra.mrb[0].mxu0 %v7036
    %v7104 = vpop.f32.mrb[0].mxu0
    %v7105 = vadd.f32 %v7034, %v7104
    %v7106 = vpop.f32.mrb[0].mxu0
    %7107 = vdwg.mxu0
    %vm7108 = vcmask 69632
    %7109 = vst.msk [vmem:[#allocation2] sm:$0x1f] %vm7108, %v7105
    // Predicated region
    $region34: #{transformer_forward.1} parent=1 // pred_check
      _
    $region35: #{transformer_forward.1} parent=1 // pred_check_branch
      %7111 = sbr.rel (0) target = $region37
    $region36: #{transformer_forward.1} parent=1 // pred_region
      %s7113 = ssub.s32 128, 128
      %7114 = vsyncadd [#allocation3], %s7113
      %s7116 = sshll.u32 [#allocation2], 4
      %s7117 = int_to_ptr.vmem [resolvable:$true] %s7116
      %7119 = dma.vmem_to_hbm [thread:$0]  %s7117, 128, %s8, [#allocation3]
    $region37: #{transformer_forward.1} parent=1 // pred_fallthru
      _
    // Predicated region
    $region38: #{transformer_forward.1} parent=1 // pred_check
      _
    $region39: #{transformer_forward.1} parent=1 // pred_check_branch
      %7121 = sbr.rel (0) target = $region41
    $region40: #{transformer_forward.1} parent=1 // pred_region
      _
    $region41: #{transformer_forward.1} parent=1 // pred_fallthru
      _
    // Predicated region
    $region42: #{transformer_forward.1} parent=1 // pred_check
      _
    $region43: #{transformer_forward.1} parent=1 // pred_check_branch
      %7123 = sbr.rel (0) target = $region45
    $region44: #{transformer_forward.1} parent=1 // pred_region
      %7124 = dma.done [#allocation3], 128
    $region45: #{transformer_forward.1} parent=1 // pred_fallthru
      _
    // Predicated region
    $region46: #{transformer_forward.1} parent=1 // pred_check
      _
    $region47: #{transformer_forward.1} parent=1 // pred_check_branch
      %7126 = sbr.rel (0) target = $region49
    $region48: #{transformer_forward.1} parent=1 // pred_region
      _
    $region49: #{transformer_forward.1} parent=1 // pred_fallthru
      _
    %7127 = vsyncpa [#allocation3], 1

</llo_original>
